<compile_context>
chip_gen: v7x
topology: tpu7x:2x2x1
jax: 0.10.0
libtpu: 0.0.40
codegen_flags: <defaults>
</compile_context>

<pallas_src>
import math

import jax
import jax.numpy as jnp
from jax.experimental import pallas as pl
from jax.experimental.pallas import tpu as pltpu

# ---------------- small synthetic config ----------------
IMAGES_PER_GPU = 2
NUM_ROIS = 8
NUM_CLASSES = 8
POOL_SIZE = 2
IMAGE_MAX_DIM = 128
FPN_CHANNELS = 256
HIDDEN = 1024
BN_EPS = 1e-3
HEAD_LANES = 128               # lane-dense fused head / output slab width
BBOX_DIM = NUM_CLASSES * 4     # 32


# ---------------- ROIAlign (plain-JAX glue) ----------------
def crop_and_resize(fm, boxes, crop_size):
    """TF-style crop_and_resize.  fm: [C, H, W]; boxes: [N,4]=(y1,x1,y2,x2) normalized."""
    C, H, W = fm.shape
    y1, x1, y2, x2 = boxes[:, 0], boxes[:, 1], boxes[:, 2], boxes[:, 3]
    steps = jnp.arange(crop_size, dtype=jnp.float32)
    denom = float(max(crop_size - 1, 1))
    ys = y1[:, None] * (H - 1) + steps[None, :] * ((y2 - y1) * (H - 1) / denom)[:, None]
    xs = x1[:, None] * (W - 1) + steps[None, :] * ((x2 - x1) * (W - 1) / denom)[:, None]
    y0 = jnp.floor(ys)
    x0 = jnp.floor(xs)
    wy = (ys - y0)[:, None, :, None]  # [N,1,P,1]
    wx = (xs - x0)[:, None, None, :]  # [N,1,1,P]
    y0i = jnp.clip(y0, 0, H - 1).astype(jnp.int32)
    y1i = jnp.clip(y0 + 1, 0, H - 1).astype(jnp.int32)
    x0i = jnp.clip(x0, 0, W - 1).astype(jnp.int32)
    x1i = jnp.clip(x0 + 1, 0, W - 1).astype(jnp.int32)

    def gather(yi, xi):
        g = fm[:, yi[:, :, None], xi[:, None, :]]  # [C, N, P, P]
        return jnp.transpose(g, (1, 0, 2, 3))      # [N, C, P, P]

    v00, v01 = gather(y0i, x0i), gather(y0i, x1i)
    v10, v11 = gather(y1i, x0i), gather(y1i, x1i)
    top = v00 * (1.0 - wx) + v01 * wx
    bot = v10 * (1.0 - wx) + v11 * wx
    return top * (1.0 - wy) + bot * wy


def roi_align_jax(feature_maps, rois, pool_size, image_max_dim):
    """feature_maps: list of 4 arrays [B, C, H_l, W_l] (levels 2..5).
    rois: [B, R, 4] in pixel coords (x1, y1, x2, y2).
    Returns pooled [B, R, C, pool, pool] (matches the PyTorch reference)."""
    B, R, _ = rois.shape
    rois_flat = rois.reshape(B * R, 4)
    x1, y1, x2, y2 = (rois_flat[:, i] for i in range(4))
    roi_level = jnp.log(jnp.sqrt((y2 - y1) * (x2 - x1)) / 224.0) / math.log(2.0)
    roi_level = jnp.clip(jnp.round(roi_level) + 4.0, 2.0, 5.0)
    # reference reorders columns [1,0,3,2] -> (y1, x1, y2, x2), normalized.
    boxes_norm = jnp.stack([y1, x1, y2, x2], axis=1) / float(image_max_dim)
    crops = []
    for i in range(4):
        # reference passes box_indices == 0 for every box -> always image 0.
        crops.append(crop_and_resize(feature_maps[i][0], boxes_norm, pool_size))
    crops = jnp.stack(crops, axis=0)  # [4, N, C, P, P]
    sel = (roi_level[None, :] == jnp.arange(2, 6, dtype=roi_level.dtype)[:, None])
    pooled = jnp.einsum('ln,lnchw->nchw', sel.astype(crops.dtype), crops)
    return pooled.reshape(B, R, FPN_CHANNELS, pool_size, pool_size)


# ---------------- Pallas kernel: conv(as matmul) + BN + MLP + fused heads ----------------
def rcnn_head_kernel(x_ref, wconv_ref, wfc1_ref, wfc2_ref, whead_ref,
                     bias5_ref, bhead_ref, out_ref):
    # bias5 rows: 0=conv_b, 1=bn_gamma, 2=bn_beta, 3=fc1_b, 4=fc2_b  (each (1,1024))
    x = x_ref[...].astype(jnp.bfloat16)  # (N, 256*P*P)

    # conv1 (full-extent kernel, valid padding -> 1x1 output) == matmul
    y = jnp.dot(x, wconv_ref[...], preferred_element_type=jnp.float32) + bias5_ref[0:1, :]

    # BatchNorm2d, training-mode batch statistics (biased var), eps=1e-3.
    # One pass over y: m = E[y], v = E[y^2] - m^2, pre-folded affine.
    m = jnp.mean(y, axis=0, keepdims=True)
    v = jnp.mean(y * y, axis=0, keepdims=True) - m * m
    s = bias5_ref[1:2, :] * jax.lax.rsqrt(v + BN_EPS)
    y = y * s + (bias5_ref[2:3, :] - m * s)

    # fc1 + ReLU, fc2 + ReLU (bf16 operands, f32 accumulation)
    h = jnp.maximum(
        jnp.dot(y.astype(jnp.bfloat16), wfc1_ref[...],
                preferred_element_type=jnp.float32) + bias5_ref[3:4, :], 0.0)
    h = jnp.maximum(
        jnp.dot(h.astype(jnp.bfloat16), wfc2_ref[...],
                preferred_element_type=jnp.float32) + bias5_ref[4:5, :], 0.0)

    # fused class-logits + bbox head: one (1024, 128) lane-dense matmul
    head = jnp.dot(h.astype(jnp.bfloat16), whead_ref[...],
                   preferred_element_type=jnp.float32) + bhead_ref[...]
    logits = head[:, 0:NUM_CLASSES]
    bbox = head[:, NUM_CLASSES:NUM_CLASSES + BBOX_DIM]

    # softmax over the 8 class logits (f32; reciprocal on the EUP slot)
    mx = jnp.max(logits, axis=-1, keepdims=True)
    e = jnp.exp(logits - mx)
    probs = e * pl.reciprocal(jnp.sum(e, axis=-1, keepdims=True), approx=True)

    # single lane-dense output slab: [logits(8) | probs(8) | bbox(32) | pad(80)]
    n = x_ref.shape[0]
    pad = jnp.zeros((n, HEAD_LANES - 2 * NUM_CLASSES - BBOX_DIM), jnp.float32)
    out_ref[...] = jnp.concatenate([logits, probs, bbox, pad], axis=-1)


def rcnn_head_forward(feature_maps, rpn_rois, params):
    pooled = roi_align_jax(feature_maps, rpn_rois, POOL_SIZE, IMAGE_MAX_DIM)
    B, R = pooled.shape[0], pooled.shape[1]
    N = B * R
    K = FPN_CHANNELS * POOL_SIZE * POOL_SIZE
    x_flat = pooled.reshape(N, K)  # flatten (cin, ky, kx) -> K (matches conv weight flatten)

    # glue: pre-transpose weights to (in, out) and cast to bf16 (f32 accumulation in-kernel)
    wconv_t = params['conv_w'].reshape(HIDDEN, K).T.astype(jnp.bfloat16)
    wfc1_t = params['fc1_w'].T.astype(jnp.bfloat16)
    wfc2_t = params['fc2_w'].T.astype(jnp.bfloat16)

    # fused cls+bbox head padded to 128 lanes: cols 0:8 = cls, 8:40 = bbox, rest 0
    w_head = jnp.zeros((HIDDEN, HEAD_LANES), jnp.float32)
    w_head = w_head.at[:, :NUM_CLASSES].set(params['cls_w'].T)
    w_head = w_head.at[:, NUM_CLASSES:NUM_CLASSES + BBOX_DIM].set(params['bbox_w'].T)
    w_head = w_head.astype(jnp.bfloat16)
    b_head = jnp.zeros((1, HEAD_LANES), jnp.float32)
    b_head = b_head.at[0, :NUM_CLASSES].set(params['cls_b'])
    b_head = b_head.at[0, NUM_CLASSES:NUM_CLASSES + BBOX_DIM].set(params['bbox_b'])

    # coalesced per-feature params: one (5, 1024) input instead of 5 tiny ones
    bias5 = jnp.stack([params['conv_b'], params['bn_gamma'], params['bn_beta'],
                       params['fc1_b'], params['fc2_b']], axis=0)

    args = (x_flat, wconv_t, wfc1_t, wfc2_t, w_head, bias5, b_head)

    cost = pl.CostEstimate(
        flops=2 * N * (K * HIDDEN + 2 * HIDDEN * HIDDEN + HIDDEN * HEAD_LANES),
        transcendentals=N * (NUM_CLASSES + 2),
        bytes_accessed=2 * (wconv_t.size + wfc1_t.size + wfc2_t.size + w_head.size)
                       + 4 * (x_flat.size + bias5.size + b_head.size + N * HEAD_LANES),
    )

    slab = pl.pallas_call(
        rcnn_head_kernel,
        out_shape=jax.ShapeDtypeStruct((N, HEAD_LANES), jnp.float32),
        in_specs=[pl.BlockSpec(memory_space=pltpu.MemorySpace.VMEM)] * len(args),
        out_specs=pl.BlockSpec(memory_space=pltpu.MemorySpace.VMEM),
        compiler_params=pltpu.CompilerParams(vmem_limit_bytes=32 * 1024 * 1024),
        cost_estimate=cost,
    )(*args)

    rcnn_class_logits = slab[:, :NUM_CLASSES].reshape(B, R, NUM_CLASSES)
    rcnn_probs = slab[:, NUM_CLASSES:2 * NUM_CLASSES].reshape(B, R, NUM_CLASSES)
    rcnn_bbox = slab[:, 2 * NUM_CLASSES:2 * NUM_CLASSES + BBOX_DIM].reshape(B, R, NUM_CLASSES, 4)
    return rcnn_class_logits, rcnn_probs, rcnn_bbox


# ---------------- deterministic parameter init ----------------
def init_params(key):
    ks = jax.random.split(key, 10)

    def lin(kw, kb, fan_in, fan_out):
        bound = 1.0 / math.sqrt(fan_in)
        w = jax.random.uniform(kw, (fan_out, fan_in), jnp.float32, -bound, bound)
        b = jax.random.uniform(kb, (fan_out,), jnp.float32, -bound, bound)
        return w, b

    conv_fan_in = FPN_CHANNELS * POOL_SIZE * POOL_SIZE
    cbound = 1.0 / math.sqrt(conv_fan_in)
    conv_w = jax.random.uniform(ks[0], (HIDDEN, FPN_CHANNELS, POOL_SIZE, POOL_SIZE),
                                jnp.float32, -cbound, cbound)
    conv_b = jax.random.uniform(ks[1], (HIDDEN,), jnp.float32, -cbound, cbound)
    fc1_w, fc1_b = lin(ks[2], ks[3], 1024, 1024)
    fc2_w, fc2_b = lin(ks[4], ks[5], 1024, 1024)
    cls_w, cls_b = lin(ks[6], ks[7], 1024, NUM_CLASSES)
    bbox_w, bbox_b = lin(ks[8], ks[9], 1024, NUM_CLASSES * 4)
    return dict(
        conv_w=conv_w, conv_b=conv_b,
        bn_gamma=jnp.ones((HIDDEN,), jnp.float32), bn_beta=jnp.zeros((HIDDEN,), jnp.float32),
        fc1_w=fc1_w, fc1_b=fc1_b, fc2_w=fc2_w, fc2_b=fc2_b,
        cls_w=cls_w, cls_b=cls_b, bbox_w=bbox_w, bbox_b=bbox_b,
    )


if __name__ == "__main__":
    key = jax.random.PRNGKey(0)
    k_fm, k_roi1, k_roi2, k_par = jax.random.split(key, 4)

    # FPN feature maps, NCHW, levels 2..5 (spatial = IMAGE_MAX_DIM / 2^level)
    feature_maps = []
    for level in range(2, 6):
        hw = IMAGE_MAX_DIM // (2 ** level)
        k_fm, sub = jax.random.split(k_fm)
        feature_maps.append(
            jax.random.normal(sub, (IMAGES_PER_GPU, FPN_CHANNELS, hw, hw), jnp.float32))

    # rois in pixel coords (x1, y1, x2, y2), strictly positive size, inside the image
    xy1 = jax.random.uniform(k_roi1, (IMAGES_PER_GPU, NUM_ROIS, 2),
                             minval=0.0, maxval=IMAGE_MAX_DIM * 0.5)
    wh = jax.random.uniform(k_roi2, (IMAGES_PER_GPU, NUM_ROIS, 2),
                            minval=8.0, maxval=IMAGE_MAX_DIM * 0.5 - 1.0)
    rpn_rois = jnp.concatenate([xy1, xy1 + wh], axis=-1)

    params = init_params(k_par)

    logits, probs, bbox = rcnn_head_forward(feature_maps, rpn_rois, params)
    jax.block_until_ready((logits, probs, bbox))

    assert logits.shape == (IMAGES_PER_GPU, NUM_ROIS, NUM_CLASSES)
    assert probs.shape == (IMAGES_PER_GPU, NUM_ROIS, NUM_CLASSES)
    assert bbox.shape == (IMAGES_PER_GPU, NUM_ROIS, NUM_CLASSES, 4)
    print("KERNEL_OK")
</pallas_src>

<mosaic_0001>
module attributes {stable_mosaic.version = 11 : i64} {
  func.func @rcnn_head_kernel(%arg0: memref<16x1024xf32, #tpu.memory_space<vmem>>, %arg1: memref<1024x1024xbf16, #tpu.memory_space<vmem>>, %arg2: memref<1024x1024xbf16, #tpu.memory_space<vmem>>, %arg3: memref<1024x1024xbf16, #tpu.memory_space<vmem>>, %arg4: memref<1024x128xbf16, #tpu.memory_space<vmem>>, %arg5: memref<5x1024xf32, #tpu.memory_space<vmem>>, %arg6: memref<1x128xf32, #tpu.memory_space<vmem>>, %arg7: memref<16x128xf32, #tpu.memory_space<vmem>>) attributes {dimension_semantics = [], scalar_prefetch = 0 : i64, scratch_operands = 0 : i64, tpu.core_type = #tpu.core_type<tc>} {
    %c0 = arith.constant 0 : index
    %c0_0 = arith.constant 0 : index
    %0 = vector.load %arg0[%c0, %c0_0] : memref<16x1024xf32, #tpu.memory_space<vmem>>, vector<16x1024xf32>
    %1 = arith.truncf %0 : vector<16x1024xf32> to vector<16x1024xbf16>
    %c0_1 = arith.constant 0 : index
    %c0_2 = arith.constant 0 : index
    %2 = vector.load %arg1[%c0_1, %c0_2] : memref<1024x1024xbf16, #tpu.memory_space<vmem>>, vector<1024x1024xbf16>
    %cst = arith.constant dense<0.000000e+00> : vector<16x1024xf32>
    %3 = tpu.matmul %1, %2, %cst {dimension_numbers = #tpu.dot_dimension_numbers<[1], [0], [0], [1], [0, 0, 1, 1], [], []>} : vector<16x1024xbf16>, vector<1024x1024xbf16>, vector<16x1024xf32> -> vector<16x1024xf32>
    %c0_3 = arith.constant 0 : index
    %c0_4 = arith.constant 0 : index
    %4 = vector.load %arg5[%c0_3, %c0_4] : memref<5x1024xf32, #tpu.memory_space<vmem>>, vector<1x1024xf32>
    %5 = vector.broadcast %4 : vector<1x1024xf32> to vector<16x1024xf32>
    %6 = arith.addf %3, %5 : vector<16x1024xf32>
    %cst_5 = arith.constant dense<0.000000e+00> : vector<1024xf32>
    %7 = vector.multi_reduction <add>, %6, %cst_5 [0] : vector<16x1024xf32> to vector<1024xf32>
    %8 = vector.shape_cast %7 : vector<1024xf32> to vector<1x1024xf32>
    %cst_6 = arith.constant 1.600000e+01 : f32
    %9 = vector.broadcast %cst_6 : f32 to vector<1x1024xf32>
    %10 = arith.divf %8, %9 : vector<1x1024xf32>
    %11 = arith.mulf %6, %6 : vector<16x1024xf32>
    %cst_7 = arith.constant dense<0.000000e+00> : vector<1024xf32>
    %12 = vector.multi_reduction <add>, %11, %cst_7 [0] : vector<16x1024xf32> to vector<1024xf32>
    %13 = vector.shape_cast %12 : vector<1024xf32> to vector<1x1024xf32>
    %cst_8 = arith.constant 1.600000e+01 : f32
    %14 = vector.broadcast %cst_8 : f32 to vector<1x1024xf32>
    %15 = arith.divf %13, %14 : vector<1x1024xf32>
    %16 = arith.mulf %10, %10 : vector<1x1024xf32>
    %17 = arith.subf %15, %16 : vector<1x1024xf32>
    %c1 = arith.constant 1 : index
    %c0_9 = arith.constant 0 : index
    %18 = vector.load %arg5[%c1, %c0_9] : memref<5x1024xf32, #tpu.memory_space<vmem>>, vector<1x1024xf32>
    %cst_10 = arith.constant 1.000000e-03 : f32
    %19 = vector.broadcast %cst_10 : f32 to vector<1x1024xf32>
    %20 = arith.addf %17, %19 : vector<1x1024xf32>
    %21 = math.rsqrt %20 : vector<1x1024xf32>
    %22 = arith.mulf %18, %21 : vector<1x1024xf32>
    %23 = vector.broadcast %22 : vector<1x1024xf32> to vector<16x1024xf32>
    %24 = arith.mulf %6, %23 : vector<16x1024xf32>
    %c2 = arith.constant 2 : index
    %c0_11 = arith.constant 0 : index
    %25 = vector.load %arg5[%c2, %c0_11] : memref<5x1024xf32, #tpu.memory_space<vmem>>, vector<1x1024xf32>
    %26 = arith.mulf %10, %22 : vector<1x1024xf32>
    %27 = arith.subf %25, %26 : vector<1x1024xf32>
    %28 = vector.broadcast %27 : vector<1x1024xf32> to vector<16x1024xf32>
    %29 = arith.addf %24, %28 : vector<16x1024xf32>
    %30 = arith.truncf %29 : vector<16x1024xf32> to vector<16x1024xbf16>
    %c0_12 = arith.constant 0 : index
    %c0_13 = arith.constant 0 : index
    %31 = vector.load %arg2[%c0_12, %c0_13] : memref<1024x1024xbf16, #tpu.memory_space<vmem>>, vector<1024x1024xbf16>
    %cst_14 = arith.constant dense<0.000000e+00> : vector<16x1024xf32>
    %32 = tpu.matmul %30, %31, %cst_14 {dimension_numbers = #tpu.dot_dimension_numbers<[1], [0], [0], [1], [0, 0, 1, 1], [], []>} : vector<16x1024xbf16>, vector<1024x1024xbf16>, vector<16x1024xf32> -> vector<16x1024xf32>
    %c3 = arith.constant 3 : index
    %c0_15 = arith.constant 0 : index
    %33 = vector.load %arg5[%c3, %c0_15] : memref<5x1024xf32, #tpu.memory_space<vmem>>, vector<1x1024xf32>
    %34 = vector.broadcast %33 : vector<1x1024xf32> to vector<16x1024xf32>
    %35 = arith.addf %32, %34 : vector<16x1024xf32>
    %cst_16 = arith.constant 0.000000e+00 : f32
    %36 = vector.broadcast %cst_16 : f32 to vector<16x1024xf32>
    %37 = arith.maximumf %35, %36 : vector<16x1024xf32>
    %38 = arith.truncf %37 : vector<16x1024xf32> to vector<16x1024xbf16>
    %c0_17 = arith.constant 0 : index
    %c0_18 = arith.constant 0 : index
    %39 = vector.load %arg3[%c0_17, %c0_18] : memref<1024x1024xbf16, #tpu.memory_space<vmem>>, vector<1024x1024xbf16>
    %cst_19 = arith.constant dense<0.000000e+00> : vector<16x1024xf32>
    %40 = tpu.matmul %38, %39, %cst_19 {dimension_numbers = #tpu.dot_dimension_numbers<[1], [0], [0], [1], [0, 0, 1, 1], [], []>} : vector<16x1024xbf16>, vector<1024x1024xbf16>, vector<16x1024xf32> -> vector<16x1024xf32>
    %c4 = arith.constant 4 : index
    %c0_20 = arith.constant 0 : index
    %41 = vector.load %arg5[%c4, %c0_20] : memref<5x1024xf32, #tpu.memory_space<vmem>>, vector<1x1024xf32>
    %42 = vector.broadcast %41 : vector<1x1024xf32> to vector<16x1024xf32>
    %43 = arith.addf %40, %42 : vector<16x1024xf32>
    %cst_21 = arith.constant 0.000000e+00 : f32
    %44 = vector.broadcast %cst_21 : f32 to vector<16x1024xf32>
    %45 = arith.maximumf %43, %44 : vector<16x1024xf32>
    %46 = arith.truncf %45 : vector<16x1024xf32> to vector<16x1024xbf16>
    %c0_22 = arith.constant 0 : index
    %c0_23 = arith.constant 0 : index
    %47 = vector.load %arg4[%c0_22, %c0_23] : memref<1024x128xbf16, #tpu.memory_space<vmem>>, vector<1024x128xbf16>
    %cst_24 = arith.constant dense<0.000000e+00> : vector<16x128xf32>
    %48 = tpu.matmul %46, %47, %cst_24 {dimension_numbers = #tpu.dot_dimension_numbers<[1], [0], [0], [1], [0, 0, 1, 1], [], []>} : vector<16x1024xbf16>, vector<1024x128xbf16>, vector<16x128xf32> -> vector<16x128xf32>
    %c0_25 = arith.constant 0 : index
    %c0_26 = arith.constant 0 : index
    %49 = vector.load %arg6[%c0_25, %c0_26] : memref<1x128xf32, #tpu.memory_space<vmem>>, vector<1x128xf32>
    %50 = vector.broadcast %49 : vector<1x128xf32> to vector<16x128xf32>
    %51 = arith.addf %48, %50 : vector<16x128xf32>
    %52 = vector.extract_strided_slice %51 {offsets = [0, 0], sizes = [16, 8], strides = [1, 1]} : vector<16x128xf32> to vector<16x8xf32>
    %53 = vector.extract_strided_slice %51 {offsets = [0, 8], sizes = [16, 32], strides = [1, 1]} : vector<16x128xf32> to vector<16x32xf32>
    %cst_27 = arith.constant dense<0xFF800000> : vector<16xf32>
    %54 = vector.multi_reduction <maximumf>, %52, %cst_27 [1] : vector<16x8xf32> to vector<16xf32>
    %55 = vector.shape_cast %54 : vector<16xf32> to vector<16x1xf32>
    %56 = vector.broadcast %55 : vector<16x1xf32> to vector<16x8xf32>
    %57 = arith.subf %52, %56 : vector<16x8xf32>
    %58 = math.exp %57 : vector<16x8xf32>
    %cst_28 = arith.constant dense<0.000000e+00> : vector<16xf32>
    %59 = vector.multi_reduction <add>, %58, %cst_28 [1] : vector<16x8xf32> to vector<16xf32>
    %60 = vector.shape_cast %59 : vector<16xf32> to vector<16x1xf32>
    %61 = tpu.reciprocal %60 {approx = true} : vector<16x1xf32> -> vector<16x1xf32>
    %62 = vector.broadcast %61 : vector<16x1xf32> to vector<16x8xf32>
    %63 = arith.mulf %58, %62 : vector<16x8xf32>
    %cst_29 = arith.constant 0.000000e+00 : f32
    %64 = vector.broadcast %cst_29 : f32 to vector<16x80xf32>
    %65 = tpu.concatenate %52, %63, %53, %64 in 1 : vector<16x8xf32>, vector<16x8xf32>, vector<16x32xf32>, vector<16x80xf32> -> vector<16x128xf32>
    %c0_30 = arith.constant 0 : index
    %c0_31 = arith.constant 0 : index
    %66 = vector.load %arg7[%c0_30, %c0_31] : memref<16x128xf32, #tpu.memory_space<vmem>>, vector<16x128xf32>
    tpu.vector_store %arg7[%c0_30, %c0_31], %65 {strides = array<i32>} : memref<16x128xf32, #tpu.memory_space<vmem>>, vector<16x128xf32>,
    return
  }
}

</mosaic_0001>

<llo_original>
// kernel: tpu_custom_call.1
$region0: #{tpu_custom_call.1}
  #allocation0 [shape = 'u32[]', space=smem, size = 0x4, offset = 0x4, fixed_abs, tag = 'smem constant byte address 0x4 - core index']
  #allocation1 [shape = 'u32[144,128]{1,0:T(1,128)}', space=vmem, size = 0x12000, scoped, tag = 'internal scratch']
  %s0 = inlined_call_operand.hbm [shape: f32[16,1024], index: 0, kind: input, shape index: {}]
  %s1 = inlined_call_operand.hbm [shape: bf16[1024,1024], index: 1, kind: input, shape index: {}]
  %s2 = inlined_call_operand.hbm [shape: bf16[1024,1024], index: 2, kind: input, shape index: {}]
  %s3 = inlined_call_operand.hbm [shape: bf16[1024,1024], index: 3, kind: input, shape index: {}]
  %s4 = inlined_call_operand.hbm [shape: bf16[1024,128], index: 4, kind: input, shape index: {}]
  %s5 = inlined_call_operand.hbm [shape: f32[5,1024], index: 5, kind: input, shape index: {}]
  %s6 = inlined_call_operand.hbm [shape: f32[1,128], index: 6, kind: input, shape index: {}]
  %s7 = inlined_call_operand.hbm [shape: f32[16,128], index: 7, kind: output, shape index: {}]
  %s8 = sld [smem:[#allocation0]]
  $region66: #{tpu_custom_call.1} parent=0
    _
  %s10 = ssub.s32 1, %s8
  %s11 = scalar_select 0, %s10, %s8
  $region1: #{tpu_custom_call.1} parent=0
    #allocation2 [shape = 'u8[65536]{0}', space=vmem, size = 0x10000, scoped, tag = 'input window, operand 0, single buffered']
    #allocation3 [shape = 's32[1]{0}', space=sflag, size = 0x4, scoped, tag = 'scoped memory for tpu_custom_call.1']
    #allocation4 [shape = 's32[1]{0}', space=sflag, size = 0x4, scoped, tag = 'scoped memory for tpu_custom_call.1']
    #allocation5 [shape = 'u8[2097152]{0}', space=vmem, size = 0x200000, scoped, tag = 'input window, operand 1, single buffered']
    #allocation6 [shape = 's32[1]{0}', space=sflag, size = 0x4, scoped, tag = 'scoped memory for tpu_custom_call.1']
    #allocation7 [shape = 'u8[2097152]{0}', space=vmem, size = 0x200000, scoped, tag = 'input window, operand 2, single buffered']
    #allocation8 [shape = 'u8[2097152]{0}', space=vmem, size = 0x200000, scoped, tag = 'input window, operand 3, single buffered']
    #allocation9 [shape = 's32[1]{0}', space=sflag, size = 0x4, scoped, tag = 'scoped memory for tpu_custom_call.1']
    #allocation10 [shape = 'u8[262144]{0}', space=vmem, size = 0x40000, scoped, tag = 'input window, operand 4, single buffered']
    #allocation11 [shape = 'u8[32768]{0}', space=vmem, size = 0x8000, scoped, tag = 'input window, operand 5, single buffered']
    #allocation12 [shape = 's32[1]{0}', space=sflag, size = 0x4, scoped, tag = 'scoped memory for tpu_custom_call.1']
    #allocation13 [shape = 'u8[512]{0}', space=vmem, size = 0x400, scoped, tag = 'input window, operand 6, single buffered']
    #allocation14 [shape = 'u8[8192]{0}', space=vmem, size = 0x2000, scoped, tag = 'output window, operand 0, single buffered']
    %12 = vsyncpa [#allocation3], 0
    %13 = vsyncpa [#allocation6], 0
    %14 = vsyncpa [#allocation9], 0
    %15 = vsyncpa [#allocation12], 0
    %16 = vsyncpa [#allocation4], 0
    // Predicated region
    $region2: #{tpu_custom_call.1} parent=1 // pred_check
      _
    $region3: #{tpu_custom_call.1} parent=1 // pred_check_branch
      %18 = sbr.rel (0) target = $region5
    $region4: #{tpu_custom_call.1} parent=1 // pred_region
      %s20 = ssub.s32 2048, 2048
      %21 = vsyncadd [#allocation3], %s20
      %s22 = sshll.u32 [#allocation2], 4
      %s23 = int_to_ptr.vmem [resolvable:$true] %s22
      %28 = dma.hbm_to_vmem [thread:$0]  %s0, 2048, %s23, [#allocation3], 1024, 1024, 64
    $region5: #{tpu_custom_call.1} parent=1 // pred_fallthru
      _
    // Predicated region
    $region6: #{tpu_custom_call.1} parent=1 // pred_check
      _
    $region7: #{tpu_custom_call.1} parent=1 // pred_check_branch
      %30 = sbr.rel (0) target = $region9
    $region8: #{tpu_custom_call.1} parent=1 // pred_region
      %s32 = ssub.s32 65536, 65536
      %33 = vsyncadd [#allocation6], %s32
      %s34 = sshll.u32 [#allocation5], 4
      %s35 = int_to_ptr.vmem [resolvable:$true] %s34
      %40 = dma.hbm_to_vmem [thread:$0]  %s1, 65536, %s35, [#allocation6], 512, 512, 32
    $region9: #{tpu_custom_call.1} parent=1 // pred_fallthru
      _
    // Predicated region
    $region10: #{tpu_custom_call.1} parent=1 // pred_check
      _
    $region11: #{tpu_custom_call.1} parent=1 // pred_check_branch
      %42 = sbr.rel (0) target = $region13
    $region12: #{tpu_custom_call.1} parent=1 // pred_region
      %s44 = ssub.s32 65536, 65536
      %45 = vsyncadd [#allocation6], %s44
      %s46 = sshll.u32 [#allocation7], 4
      %s47 = int_to_ptr.vmem [resolvable:$true] %s46
      %52 = dma.hbm_to_vmem [thread:$0]  %s2, 65536, %s47, [#allocation6], 512, 512, 32
    $region13: #{tpu_custom_call.1} parent=1 // pred_fallthru
      _
    // Predicated region
    $region14: #{tpu_custom_call.1} parent=1 // pred_check
      _
    $region15: #{tpu_custom_call.1} parent=1 // pred_check_branch
      %54 = sbr.rel (0) target = $region17
    $region16: #{tpu_custom_call.1} parent=1 // pred_region
      %s56 = ssub.s32 65536, 65536
      %57 = vsyncadd [#allocation9], %s56
      %s58 = sshll.u32 [#allocation8], 4
      %s59 = int_to_ptr.vmem [resolvable:$true] %s58
      %64 = dma.hbm_to_vmem [thread:$0]  %s3, 65536, %s59, [#allocation9], 512, 512, 32
    $region17: #{tpu_custom_call.1} parent=1 // pred_fallthru
      _
    // Predicated region
    $region18: #{tpu_custom_call.1} parent=1 // pred_check
      _
    $region19: #{tpu_custom_call.1} parent=1 // pred_check_branch
      %66 = sbr.rel (0) target = $region21
    $region20: #{tpu_custom_call.1} parent=1 // pred_region
      %s68 = ssub.s32 8192, 8192
      %69 = vsyncadd [#allocation9], %s68
      %s70 = sshll.u32 [#allocation10], 4
      %s71 = int_to_ptr.vmem [resolvable:$true] %s70
      %76 = dma.hbm_to_vmem [thread:$0]  %s4, 8192, %s71, [#allocation9], 64, 64, 4
    $region21: #{tpu_custom_call.1} parent=1 // pred_fallthru
      _
    // Predicated region
    $region22: #{tpu_custom_call.1} parent=1 // pred_check
      _
    $region23: #{tpu_custom_call.1} parent=1 // pred_check_branch
      %78 = sbr.rel (0) target = $region25
    $region24: #{tpu_custom_call.1} parent=1 // pred_region
      %s80 = ssub.s32 1024, 1024
      %81 = vsyncadd [#allocation12], %s80
      %s83 = sshll.u32 [#allocation11], 4
      %s84 = int_to_ptr.vmem [resolvable:$true] %s83
      %86 = dma.hbm_to_vmem [thread:$0]  %s5, 1024, %s84, [#allocation12]
    $region25: #{tpu_custom_call.1} parent=1 // pred_fallthru
      _
    // Predicated region
    $region26: #{tpu_custom_call.1} parent=1 // pred_check
      _
    $region27: #{tpu_custom_call.1} parent=1 // pred_check_branch
      %88 = sbr.rel (0) target = $region29
    $region28: #{tpu_custom_call.1} parent=1 // pred_region
      %s90 = ssub.s32 16, 16
      %91 = vsyncadd [#allocation12], %s90
      %s93 = sshll.u32 [#allocation13], 4
      %s94 = int_to_ptr.vmem [resolvable:$true] %s93
      %96 = dma.hbm_to_vmem [thread:$0]  %s6, 16, %s94, [#allocation12]
    $region29: #{tpu_custom_call.1} parent=1 // pred_fallthru
      _
    // Predicated region
    $region30: #{tpu_custom_call.1} parent=1 // pred_check
      _
    $region31: #{tpu_custom_call.1} parent=1 // pred_check_branch
      %98 = sbr.rel (0) target = $region33
    $region32: #{tpu_custom_call.1} parent=1 // pred_region
      %99 = dma.done [#allocation3], 2048
    $region33: #{tpu_custom_call.1} parent=1 // pred_fallthru
      _
    // Predicated region
    $region34: #{tpu_custom_call.1} parent=1 // pred_check
      _
    $region35: #{tpu_custom_call.1} parent=1 // pred_check_branch
      %101 = sbr.rel (0) target = $region37
    $region36: #{tpu_custom_call.1} parent=1 // pred_region
      %102 = dma.done [#allocation6], 65536
    $region37: #{tpu_custom_call.1} parent=1 // pred_fallthru
      _
    // Predicated region
    $region38: #{tpu_custom_call.1} parent=1 // pred_check
      _
    $region39: #{tpu_custom_call.1} parent=1 // pred_check_branch
      %104 = sbr.rel (0) target = $region41
    $region40: #{tpu_custom_call.1} parent=1 // pred_region
      %105 = dma.done [#allocation6], 65536
    $region41: #{tpu_custom_call.1} parent=1 // pred_fallthru
      _
    // Predicated region
    $region42: #{tpu_custom_call.1} parent=1 // pred_check
      _
    $region43: #{tpu_custom_call.1} parent=1 // pred_check_branch
      %107 = sbr.rel (0) target = $region45
    $region44: #{tpu_custom_call.1} parent=1 // pred_region
      %108 = dma.done [#allocation9], 65536
    $region45: #{tpu_custom_call.1} parent=1 // pred_fallthru
      _
    // Predicated region
    $region46: #{tpu_custom_call.1} parent=1 // pred_check
      _
    $region47: #{tpu_custom_call.1} parent=1 // pred_check_branch
      %110 = sbr.rel (0) target = $region49
    $region48: #{tpu_custom_call.1} parent=1 // pred_region
      %111 = dma.done [#allocation9], 8192
    $region49: #{tpu_custom_call.1} parent=1 // pred_fallthru
      _
    // Predicated region
    $region50: #{tpu_custom_call.1} parent=1 // pred_check
      _
    $region51: #{tpu_custom_call.1} parent=1 // pred_check_branch
      %113 = sbr.rel (0) target = $region53
    $region52: #{tpu_custom_call.1} parent=1 // pred_region
      %114 = dma.done [#allocation12], 1024
    $region53: #{tpu_custom_call.1} parent=1 // pred_fallthru
      _
    // Predicated region
    $region54: #{tpu_custom_call.1} parent=1 // pred_check
      _
    $region55: #{tpu_custom_call.1} parent=1 // pred_check_branch
      %116 = sbr.rel (0) target = $region57
    $region56: #{tpu_custom_call.1} parent=1 // pred_region
      %117 = dma.done [#allocation12], 16
    $region57: #{tpu_custom_call.1} parent=1 // pred_fallthru
      _
    %v119 = vld [vmem:[#allocation2] sm:$0xff]
    %v120 = vld [vmem:[#allocation2 + $0x8] sm:$0xff]
    %v121 = vld [vmem:[#allocation2 + $0x10] sm:$0xff]
    %v122 = vld [vmem:[#allocation2 + $0x18] sm:$0xff]
    %v123 = vld [vmem:[#allocation2 + $0x20] sm:$0xff]
    %v124 = vld [vmem:[#allocation2 + $0x28] sm:$0xff]
    %v125 = vld [vmem:[#allocation2 + $0x30] sm:$0xff]
    %v126 = vld [vmem:[#allocation2 + $0x38] sm:$0xff]
    %v127 = vld [vmem:[#allocation2 + $0x40] sm:$0xff]
    %v128 = vld [vmem:[#allocation2 + $0x48] sm:$0xff]
    %v129 = vld [vmem:[#allocation2 + $0x50] sm:$0xff]
    %v130 = vld [vmem:[#allocation2 + $0x58] sm:$0xff]
    %v131 = vld [vmem:[#allocation2 + $0x60] sm:$0xff]
    %v132 = vld [vmem:[#allocation2 + $0x68] sm:$0xff]
    %v133 = vld [vmem:[#allocation2 + $0x70] sm:$0xff]
    %v134 = vld [vmem:[#allocation2 + $0x78] sm:$0xff]
    %v135 = vpack.c.bf16 %v127, %v119
    %v136 = vpack.c.bf16 %v128, %v120
    %v137 = vpack.c.bf16 %v129, %v121
    %v138 = vpack.c.bf16 %v130, %v122
    %v139 = vpack.c.bf16 %v131, %v123
    %v140 = vpack.c.bf16 %v132, %v124
    %v141 = vpack.c.bf16 %v133, %v125
    %v142 = vpack.c.bf16 %v134, %v126
    %v143 = vld [vmem:[#allocation5] sm:$0xff]
    %v144 = vld [vmem:[#allocation5 + $0x8] sm:$0xff]
    %v145 = vld [vmem:[#allocation5 + $0x10] sm:$0xff]
    %v146 = vld [vmem:[#allocation5 + $0x18] sm:$0xff]
    %v147 = vld [vmem:[#allocation5 + $0x20] sm:$0xff]
    %v148 = vld [vmem:[#allocation5 + $0x28] sm:$0xff]
    %v149 = vld [vmem:[#allocation5 + $0x30] sm:$0xff]
    %v150 = vld [vmem:[#allocation5 + $0x38] sm:$0xff]
    %v151 = vld [vmem:[#allocation5 + $0x40] sm:$0xff]
    %v152 = vld [vmem:[#allocation5 + $0x48] sm:$0xff]
    %v153 = vld [vmem:[#allocation5 + $0x50] sm:$0xff]
    %v154 = vld [vmem:[#allocation5 + $0x58] sm:$0xff]
    %v155 = vld [vmem:[#allocation5 + $0x60] sm:$0xff]
    %v156 = vld [vmem:[#allocation5 + $0x68] sm:$0xff]
    %v157 = vld [vmem:[#allocation5 + $0x70] sm:$0xff]
    %v158 = vld [vmem:[#allocation5 + $0x78] sm:$0xff]
    %v159 = vld [vmem:[#allocation5 + $0x80] sm:$0xff]
    %v160 = vld [vmem:[#allocation5 + $0x88] sm:$0xff]
    %v161 = vld [vmem:[#allocation5 + $0x90] sm:$0xff]
    %v162 = vld [vmem:[#allocation5 + $0x98] sm:$0xff]
    %v163 = vld [vmem:[#allocation5 + $0xa0] sm:$0xff]
    %v164 = vld [vmem:[#allocation5 + $0xa8] sm:$0xff]
    %v165 = vld [vmem:[#allocation5 + $0xb0] sm:$0xff]
    %v166 = vld [vmem:[#allocation5 + $0xb8] sm:$0xff]
    %v167 = vld [vmem:[#allocation5 + $0xc0] sm:$0xff]
    %v168 = vld [vmem:[#allocation5 + $0xc8] sm:$0xff]
    %v169 = vld [vmem:[#allocation5 + $0xd0] sm:$0xff]
    %v170 = vld [vmem:[#allocation5 + $0xd8] sm:$0xff]
    %v171 = vld [vmem:[#allocation5 + $0xe0] sm:$0xff]
    %v172 = vld [vmem:[#allocation5 + $0xe8] sm:$0xff]
    %v173 = vld [vmem:[#allocation5 + $0xf0] sm:$0xff]
    %v174 = vld [vmem:[#allocation5 + $0xf8] sm:$0xff]
    %v175 = vld [vmem:[#allocation5 + $0x100] sm:$0xff]
    %v176 = vld [vmem:[#allocation5 + $0x108] sm:$0xff]
    %v177 = vld [vmem:[#allocation5 + $0x110] sm:$0xff]
    %v178 = vld [vmem:[#allocation5 + $0x118] sm:$0xff]
    %v179 = vld [vmem:[#allocation5 + $0x120] sm:$0xff]
    %v180 = vld [vmem:[#allocation5 + $0x128] sm:$0xff]
    %v181 = vld [vmem:[#allocation5 + $0x130] sm:$0xff]
    %v182 = vld [vmem:[#allocation5 + $0x138] sm:$0xff]
    %v183 = vld [vmem:[#allocation5 + $0x140] sm:$0xff]
    %v184 = vld [vmem:[#allocation5 + $0x148] sm:$0xff]
    %v185 = vld [vmem:[#allocation5 + $0x150] sm:$0xff]
    %v186 = vld [vmem:[#allocation5 + $0x158] sm:$0xff]
    %v187 = vld [vmem:[#allocation5 + $0x160] sm:$0xff]
    %v188 = vld [vmem:[#allocation5 + $0x168] sm:$0xff]
    %v189 = vld [vmem:[#allocation5 + $0x170] sm:$0xff]
    %v190 = vld [vmem:[#allocation5 + $0x178] sm:$0xff]
    %v191 = vld [vmem:[#allocation5 + $0x180] sm:$0xff]
    %v192 = vld [vmem:[#allocation5 + $0x188] sm:$0xff]
    %v193 = vld [vmem:[#allocation5 + $0x190] sm:$0xff]
    %v194 = vld [vmem:[#allocation5 + $0x198] sm:$0xff]
    %v195 = vld [vmem:[#allocation5 + $0x1a0] sm:$0xff]
    %v196 = vld [vmem:[#allocation5 + $0x1a8] sm:$0xff]
    %v197 = vld [vmem:[#allocation5 + $0x1b0] sm:$0xff]
    %v198 = vld [vmem:[#allocation5 + $0x1b8] sm:$0xff]
    %v199 = vld [vmem:[#allocation5 + $0x1c0] sm:$0xff]
    %v200 = vld [vmem:[#allocation5 + $0x1c8] sm:$0xff]
    %v201 = vld [vmem:[#allocation5 + $0x1d0] sm:$0xff]
    %v202 = vld [vmem:[#allocation5 + $0x1d8] sm:$0xff]
    %v203 = vld [vmem:[#allocation5 + $0x1e0] sm:$0xff]
    %v204 = vld [vmem:[#allocation5 + $0x1e8] sm:$0xff]
    %v205 = vld [vmem:[#allocation5 + $0x1f0] sm:$0xff]
    %v206 = vld [vmem:[#allocation5 + $0x1f8] sm:$0xff]
    %v207 = vld [vmem:[#allocation5 + $0x200] sm:$0xff]
    %v208 = vld [vmem:[#allocation5 + $0x208] sm:$0xff]
    %v209 = vld [vmem:[#allocation5 + $0x210] sm:$0xff]
    %v210 = vld [vmem:[#allocation5 + $0x218] sm:$0xff]
    %v211 = vld [vmem:[#allocation5 + $0x220] sm:$0xff]
    %v212 = vld [vmem:[#allocation5 + $0x228] sm:$0xff]
    %v213 = vld [vmem:[#allocation5 + $0x230] sm:$0xff]
    %v214 = vld [vmem:[#allocation5 + $0x238] sm:$0xff]
    %v215 = vld [vmem:[#allocation5 + $0x240] sm:$0xff]
    %v216 = vld [vmem:[#allocation5 + $0x248] sm:$0xff]
    %v217 = vld [vmem:[#allocation5 + $0x250] sm:$0xff]
    %v218 = vld [vmem:[#allocation5 + $0x258] sm:$0xff]
    %v219 = vld [vmem:[#allocation5 + $0x260] sm:$0xff]
    %v220 = vld [vmem:[#allocation5 + $0x268] sm:$0xff]
    %v221 = vld [vmem:[#allocation5 + $0x270] sm:$0xff]
    %v222 = vld [vmem:[#allocation5 + $0x278] sm:$0xff]
    %v223 = vld [vmem:[#allocation5 + $0x280] sm:$0xff]
    %v224 = vld [vmem:[#allocation5 + $0x288] sm:$0xff]
    %v225 = vld [vmem:[#allocation5 + $0x290] sm:$0xff]
    %v226 = vld [vmem:[#allocation5 + $0x298] sm:$0xff]
    %v227 = vld [vmem:[#allocation5 + $0x2a0] sm:$0xff]
    %v228 = vld [vmem:[#allocation5 + $0x2a8] sm:$0xff]
    %v229 = vld [vmem:[#allocation5 + $0x2b0] sm:$0xff]
    %v230 = vld [vmem:[#allocation5 + $0x2b8] sm:$0xff]
    %v231 = vld [vmem:[#allocation5 + $0x2c0] sm:$0xff]
    %v232 = vld [vmem:[#allocation5 + $0x2c8] sm:$0xff]
    %v233 = vld [vmem:[#allocation5 + $0x2d0] sm:$0xff]
    %v234 = vld [vmem:[#allocation5 + $0x2d8] sm:$0xff]
    %v235 = vld [vmem:[#allocation5 + $0x2e0] sm:$0xff]
    %v236 = vld [vmem:[#allocation5 + $0x2e8] sm:$0xff]
    %v237 = vld [vmem:[#allocation5 + $0x2f0] sm:$0xff]
    %v238 = vld [vmem:[#allocation5 + $0x2f8] sm:$0xff]
    %v239 = vld [vmem:[#allocation5 + $0x300] sm:$0xff]
    %v240 = vld [vmem:[#allocation5 + $0x308] sm:$0xff]
    %v241 = vld [vmem:[#allocation5 + $0x310] sm:$0xff]
    %v242 = vld [vmem:[#allocation5 + $0x318] sm:$0xff]
    %v243 = vld [vmem:[#allocation5 + $0x320] sm:$0xff]
    %v244 = vld [vmem:[#allocation5 + $0x328] sm:$0xff]
    %v245 = vld [vmem:[#allocation5 + $0x330] sm:$0xff]
    %v246 = vld [vmem:[#allocation5 + $0x338] sm:$0xff]
    %v247 = vld [vmem:[#allocation5 + $0x340] sm:$0xff]
    %v248 = vld [vmem:[#allocation5 + $0x348] sm:$0xff]
    %v249 = vld [vmem:[#allocation5 + $0x350] sm:$0xff]
    %v250 = vld [vmem:[#allocation5 + $0x358] sm:$0xff]
    %v251 = vld [vmem:[#allocation5 + $0x360] sm:$0xff]
    %v252 = vld [vmem:[#allocation5 + $0x368] sm:$0xff]
    %v253 = vld [vmem:[#allocation5 + $0x370] sm:$0xff]
    %v254 = vld [vmem:[#allocation5 + $0x378] sm:$0xff]
    %v255 = vld [vmem:[#allocation5 + $0x380] sm:$0xff]
    %v256 = vld [vmem:[#allocation5 + $0x388] sm:$0xff]
    %v257 = vld [vmem:[#allocation5 + $0x390] sm:$0xff]
    %v258 = vld [vmem:[#allocation5 + $0x398] sm:$0xff]
    %v259 = vld [vmem:[#allocation5 + $0x3a0] sm:$0xff]
    %v260 = vld [vmem:[#allocation5 + $0x3a8] sm:$0xff]
    %v261 = vld [vmem:[#allocation5 + $0x3b0] sm:$0xff]
    %v262 = vld [vmem:[#allocation5 + $0x3b8] sm:$0xff]
    %v263 = vld [vmem:[#allocation5 + $0x3c0] sm:$0xff]
    %v264 = vld [vmem:[#allocation5 + $0x3c8] sm:$0xff]
    %v265 = vld [vmem:[#allocation5 + $0x3d0] sm:$0xff]
    %v266 = vld [vmem:[#allocation5 + $0x3d8] sm:$0xff]
    %v267 = vld [vmem:[#allocation5 + $0x3e0] sm:$0xff]
    %v268 = vld [vmem:[#allocation5 + $0x3e8] sm:$0xff]
    %v269 = vld [vmem:[#allocation5 + $0x3f0] sm:$0xff]
    %v270 = vld [vmem:[#allocation5 + $0x3f8] sm:$0xff]
    %v271 = vld [vmem:[#allocation5 + $0x400] sm:$0xff]
    %v272 = vld [vmem:[#allocation5 + $0x408] sm:$0xff]
    %v273 = vld [vmem:[#allocation5 + $0x410] sm:$0xff]
    %v274 = vld [vmem:[#allocation5 + $0x418] sm:$0xff]
    %v275 = vld [vmem:[#allocation5 + $0x420] sm:$0xff]
    %v276 = vld [vmem:[#allocation5 + $0x428] sm:$0xff]
    %v277 = vld [vmem:[#allocation5 + $0x430] sm:$0xff]
    %v278 = vld [vmem:[#allocation5 + $0x438] sm:$0xff]
    %v279 = vld [vmem:[#allocation5 + $0x440] sm:$0xff]
    %v280 = vld [vmem:[#allocation5 + $0x448] sm:$0xff]
    %v281 = vld [vmem:[#allocation5 + $0x450] sm:$0xff]
    %v282 = vld [vmem:[#allocation5 + $0x458] sm:$0xff]
    %v283 = vld [vmem:[#allocation5 + $0x460] sm:$0xff]
    %v284 = vld [vmem:[#allocation5 + $0x468] sm:$0xff]
    %v285 = vld [vmem:[#allocation5 + $0x470] sm:$0xff]
    %v286 = vld [vmem:[#allocation5 + $0x478] sm:$0xff]
    %v287 = vld [vmem:[#allocation5 + $0x480] sm:$0xff]
    %v288 = vld [vmem:[#allocation5 + $0x488] sm:$0xff]
    %v289 = vld [vmem:[#allocation5 + $0x490] sm:$0xff]
    %v290 = vld [vmem:[#allocation5 + $0x498] sm:$0xff]
    %v291 = vld [vmem:[#allocation5 + $0x4a0] sm:$0xff]
    %v292 = vld [vmem:[#allocation5 + $0x4a8] sm:$0xff]
    %v293 = vld [vmem:[#allocation5 + $0x4b0] sm:$0xff]
    %v294 = vld [vmem:[#allocation5 + $0x4b8] sm:$0xff]
    %v295 = vld [vmem:[#allocation5 + $0x4c0] sm:$0xff]
    %v296 = vld [vmem:[#allocation5 + $0x4c8] sm:$0xff]
    %v297 = vld [vmem:[#allocation5 + $0x4d0] sm:$0xff]
    %v298 = vld [vmem:[#allocation5 + $0x4d8] sm:$0xff]
    %v299 = vld [vmem:[#allocation5 + $0x4e0] sm:$0xff]
    %v300 = vld [vmem:[#allocation5 + $0x4e8] sm:$0xff]
    %v301 = vld [vmem:[#allocation5 + $0x4f0] sm:$0xff]
    %v302 = vld [vmem:[#allocation5 + $0x4f8] sm:$0xff]
    %v303 = vld [vmem:[#allocation5 + $0x500] sm:$0xff]
    %v304 = vld [vmem:[#allocation5 + $0x508] sm:$0xff]
    %v305 = vld [vmem:[#allocation5 + $0x510] sm:$0xff]
    %v306 = vld [vmem:[#allocation5 + $0x518] sm:$0xff]
    %v307 = vld [vmem:[#allocation5 + $0x520] sm:$0xff]
    %v308 = vld [vmem:[#allocation5 + $0x528] sm:$0xff]
    %v309 = vld [vmem:[#allocation5 + $0x530] sm:$0xff]
    %v310 = vld [vmem:[#allocation5 + $0x538] sm:$0xff]
    %v311 = vld [vmem:[#allocation5 + $0x540] sm:$0xff]
    %v312 = vld [vmem:[#allocation5 + $0x548] sm:$0xff]
    %v313 = vld [vmem:[#allocation5 + $0x550] sm:$0xff]
    %v314 = vld [vmem:[#allocation5 + $0x558] sm:$0xff]
    %v315 = vld [vmem:[#allocation5 + $0x560] sm:$0xff]
    %v316 = vld [vmem:[#allocation5 + $0x568] sm:$0xff]
    %v317 = vld [vmem:[#allocation5 + $0x570] sm:$0xff]
    %v318 = vld [vmem:[#allocation5 + $0x578] sm:$0xff]
    %v319 = vld [vmem:[#allocation5 + $0x580] sm:$0xff]
    %v320 = vld [vmem:[#allocation5 + $0x588] sm:$0xff]
    %v321 = vld [vmem:[#allocation5 + $0x590] sm:$0xff]
    %v322 = vld [vmem:[#allocation5 + $0x598] sm:$0xff]
    %v323 = vld [vmem:[#allocation5 + $0x5a0] sm:$0xff]
    %v324 = vld [vmem:[#allocation5 + $0x5a8] sm:$0xff]
    %v325 = vld [vmem:[#allocation5 + $0x5b0] sm:$0xff]
    %v326 = vld [vmem:[#allocation5 + $0x5b8] sm:$0xff]
    %v327 = vld [vmem:[#allocation5 + $0x5c0] sm:$0xff]
    %v328 = vld [vmem:[#allocation5 + $0x5c8] sm:$0xff]
    %v329 = vld [vmem:[#allocation5 + $0x5d0] sm:$0xff]
    %v330 = vld [vmem:[#allocation5 + $0x5d8] sm:$0xff]
    %v331 = vld [vmem:[#allocation5 + $0x5e0] sm:$0xff]
    %v332 = vld [vmem:[#allocation5 + $0x5e8] sm:$0xff]
    %v333 = vld [vmem:[#allocation5 + $0x5f0] sm:$0xff]
    %v334 = vld [vmem:[#allocation5 + $0x5f8] sm:$0xff]
    %v335 = vld [vmem:[#allocation5 + $0x600] sm:$0xff]
    %v336 = vld [vmem:[#allocation5 + $0x608] sm:$0xff]
    %v337 = vld [vmem:[#allocation5 + $0x610] sm:$0xff]
    %v338 = vld [vmem:[#allocation5 + $0x618] sm:$0xff]
    %v339 = vld [vmem:[#allocation5 + $0x620] sm:$0xff]
    %v340 = vld [vmem:[#allocation5 + $0x628] sm:$0xff]
    %v341 = vld [vmem:[#allocation5 + $0x630] sm:$0xff]
    %v342 = vld [vmem:[#allocation5 + $0x638] sm:$0xff]
    %v343 = vld [vmem:[#allocation5 + $0x640] sm:$0xff]
    %v344 = vld [vmem:[#allocation5 + $0x648] sm:$0xff]
    %v345 = vld [vmem:[#allocation5 + $0x650] sm:$0xff]
    %v346 = vld [vmem:[#allocation5 + $0x658] sm:$0xff]
    %v347 = vld [vmem:[#allocation5 + $0x660] sm:$0xff]
    %v348 = vld [vmem:[#allocation5 + $0x668] sm:$0xff]
    %v349 = vld [vmem:[#allocation5 + $0x670] sm:$0xff]
    %v350 = vld [vmem:[#allocation5 + $0x678] sm:$0xff]
    %v351 = vld [vmem:[#allocation5 + $0x680] sm:$0xff]
    %v352 = vld [vmem:[#allocation5 + $0x688] sm:$0xff]
    %v353 = vld [vmem:[#allocation5 + $0x690] sm:$0xff]
    %v354 = vld [vmem:[#allocation5 + $0x698] sm:$0xff]
    %v355 = vld [vmem:[#allocation5 + $0x6a0] sm:$0xff]
    %v356 = vld [vmem:[#allocation5 + $0x6a8] sm:$0xff]
    %v357 = vld [vmem:[#allocation5 + $0x6b0] sm:$0xff]
    %v358 = vld [vmem:[#allocation5 + $0x6b8] sm:$0xff]
    %v359 = vld [vmem:[#allocation5 + $0x6c0] sm:$0xff]
    %v360 = vld [vmem:[#allocation5 + $0x6c8] sm:$0xff]
    %v361 = vld [vmem:[#allocation5 + $0x6d0] sm:$0xff]
    %v362 = vld [vmem:[#allocation5 + $0x6d8] sm:$0xff]
    %v363 = vld [vmem:[#allocation5 + $0x6e0] sm:$0xff]
    %v364 = vld [vmem:[#allocation5 + $0x6e8] sm:$0xff]
    %v365 = vld [vmem:[#allocation5 + $0x6f0] sm:$0xff]
    %v366 = vld [vmem:[#allocation5 + $0x6f8] sm:$0xff]
    %v367 = vld [vmem:[#allocation5 + $0x700] sm:$0xff]
    %v368 = vld [vmem:[#allocation5 + $0x708] sm:$0xff]
    %v369 = vld [vmem:[#allocation5 + $0x710] sm:$0xff]
    %v370 = vld [vmem:[#allocation5 + $0x718] sm:$0xff]
    %v371 = vld [vmem:[#allocation5 + $0x720] sm:$0xff]
    %v372 = vld [vmem:[#allocation5 + $0x728] sm:$0xff]
    %v373 = vld [vmem:[#allocation5 + $0x730] sm:$0xff]
    %v374 = vld [vmem:[#allocation5 + $0x738] sm:$0xff]
    %v375 = vld [vmem:[#allocation5 + $0x740] sm:$0xff]
    %v376 = vld [vmem:[#allocation5 + $0x748] sm:$0xff]
    %v377 = vld [vmem:[#allocation5 + $0x750] sm:$0xff]
    %v378 = vld [vmem:[#allocation5 + $0x758] sm:$0xff]
    %v379 = vld [vmem:[#allocation5 + $0x760] sm:$0xff]
    %v380 = vld [vmem:[#allocation5 + $0x768] sm:$0xff]
    %v381 = vld [vmem:[#allocation5 + $0x770] sm:$0xff]
    %v382 = vld [vmem:[#allocation5 + $0x778] sm:$0xff]
    %v383 = vld [vmem:[#allocation5 + $0x780] sm:$0xff]
    %v384 = vld [vmem:[#allocation5 + $0x788] sm:$0xff]
    %v385 = vld [vmem:[#allocation5 + $0x790] sm:$0xff]
    %v386 = vld [vmem:[#allocation5 + $0x798] sm:$0xff]
    %v387 = vld [vmem:[#allocation5 + $0x7a0] sm:$0xff]
    %v388 = vld [vmem:[#allocation5 + $0x7a8] sm:$0xff]
    %v389 = vld [vmem:[#allocation5 + $0x7b0] sm:$0xff]
    %v390 = vld [vmem:[#allocation5 + $0x7b8] sm:$0xff]
    %v391 = vld [vmem:[#allocation5 + $0x7c0] sm:$0xff]
    %v392 = vld [vmem:[#allocation5 + $0x7c8] sm:$0xff]
    %v393 = vld [vmem:[#allocation5 + $0x7d0] sm:$0xff]
    %v394 = vld [vmem:[#allocation5 + $0x7d8] sm:$0xff]
    %v395 = vld [vmem:[#allocation5 + $0x7e0] sm:$0xff]
    %v396 = vld [vmem:[#allocation5 + $0x7e8] sm:$0xff]
    %v397 = vld [vmem:[#allocation5 + $0x7f0] sm:$0xff]
    %v398 = vld [vmem:[#allocation5 + $0x7f8] sm:$0xff]
    %v399 = vld [vmem:[#allocation5 + $0x800] sm:$0xff]
    %v400 = vld [vmem:[#allocation5 + $0x808] sm:$0xff]
    %v401 = vld [vmem:[#allocation5 + $0x810] sm:$0xff]
    %v402 = vld [vmem:[#allocation5 + $0x818] sm:$0xff]
    %v403 = vld [vmem:[#allocation5 + $0x820] sm:$0xff]
    %v404 = vld [vmem:[#allocation5 + $0x828] sm:$0xff]
    %v405 = vld [vmem:[#allocation5 + $0x830] sm:$0xff]
    %v406 = vld [vmem:[#allocation5 + $0x838] sm:$0xff]
    %v407 = vld [vmem:[#allocation5 + $0x840] sm:$0xff]
    %v408 = vld [vmem:[#allocation5 + $0x848] sm:$0xff]
    %v409 = vld [vmem:[#allocation5 + $0x850] sm:$0xff]
    %v410 = vld [vmem:[#allocation5 + $0x858] sm:$0xff]
    %v411 = vld [vmem:[#allocation5 + $0x860] sm:$0xff]
    %v412 = vld [vmem:[#allocation5 + $0x868] sm:$0xff]
    %v413 = vld [vmem:[#allocation5 + $0x870] sm:$0xff]
    %v414 = vld [vmem:[#allocation5 + $0x878] sm:$0xff]
    %v415 = vld [vmem:[#allocation5 + $0x880] sm:$0xff]
    %v416 = vld [vmem:[#allocation5 + $0x888] sm:$0xff]
    %v417 = vld [vmem:[#allocation5 + $0x890] sm:$0xff]
    %v418 = vld [vmem:[#allocation5 + $0x898] sm:$0xff]
    %v419 = vld [vmem:[#allocation5 + $0x8a0] sm:$0xff]
    %v420 = vld [vmem:[#allocation5 + $0x8a8] sm:$0xff]
    %v421 = vld [vmem:[#allocation5 + $0x8b0] sm:$0xff]
    %v422 = vld [vmem:[#allocation5 + $0x8b8] sm:$0xff]
    %v423 = vld [vmem:[#allocation5 + $0x8c0] sm:$0xff]
    %v424 = vld [vmem:[#allocation5 + $0x8c8] sm:$0xff]
    %v425 = vld [vmem:[#allocation5 + $0x8d0] sm:$0xff]
    %v426 = vld [vmem:[#allocation5 + $0x8d8] sm:$0xff]
    %v427 = vld [vmem:[#allocation5 + $0x8e0] sm:$0xff]
    %v428 = vld [vmem:[#allocation5 + $0x8e8] sm:$0xff]
    %v429 = vld [vmem:[#allocation5 + $0x8f0] sm:$0xff]
    %v430 = vld [vmem:[#allocation5 + $0x8f8] sm:$0xff]
    %v431 = vld [vmem:[#allocation5 + $0x900] sm:$0xff]
    %v432 = vld [vmem:[#allocation5 + $0x908] sm:$0xff]
    %v433 = vld [vmem:[#allocation5 + $0x910] sm:$0xff]
    %v434 = vld [vmem:[#allocation5 + $0x918] sm:$0xff]
    %v435 = vld [vmem:[#allocation5 + $0x920] sm:$0xff]
    %v436 = vld [vmem:[#allocation5 + $0x928] sm:$0xff]
    %v437 = vld [vmem:[#allocation5 + $0x930] sm:$0xff]
    %v438 = vld [vmem:[#allocation5 + $0x938] sm:$0xff]
    %v439 = vld [vmem:[#allocation5 + $0x940] sm:$0xff]
    %v440 = vld [vmem:[#allocation5 + $0x948] sm:$0xff]
    %v441 = vld [vmem:[#allocation5 + $0x950] sm:$0xff]
    %v442 = vld [vmem:[#allocation5 + $0x958] sm:$0xff]
    %v443 = vld [vmem:[#allocation5 + $0x960] sm:$0xff]
    %v444 = vld [vmem:[#allocation5 + $0x968] sm:$0xff]
    %v445 = vld [vmem:[#allocation5 + $0x970] sm:$0xff]
    %v446 = vld [vmem:[#allocation5 + $0x978] sm:$0xff]
    %v447 = vld [vmem:[#allocation5 + $0x980] sm:$0xff]
    %v448 = vld [vmem:[#allocation5 + $0x988] sm:$0xff]
    %v449 = vld [vmem:[#allocation5 + $0x990] sm:$0xff]
    %v450 = vld [vmem:[#allocation5 + $0x998] sm:$0xff]
    %v451 = vld [vmem:[#allocation5 + $0x9a0] sm:$0xff]
    %v452 = vld [vmem:[#allocation5 + $0x9a8] sm:$0xff]
    %v453 = vld [vmem:[#allocation5 + $0x9b0] sm:$0xff]
    %v454 = vld [vmem:[#allocation5 + $0x9b8] sm:$0xff]
    %v455 = vld [vmem:[#allocation5 + $0x9c0] sm:$0xff]
    %v456 = vld [vmem:[#allocation5 + $0x9c8] sm:$0xff]
    %v457 = vld [vmem:[#allocation5 + $0x9d0] sm:$0xff]
    %v458 = vld [vmem:[#allocation5 + $0x9d8] sm:$0xff]
    %v459 = vld [vmem:[#allocation5 + $0x9e0] sm:$0xff]
    %v460 = vld [vmem:[#allocation5 + $0x9e8] sm:$0xff]
    %v461 = vld [vmem:[#allocation5 + $0x9f0] sm:$0xff]
    %v462 = vld [vmem:[#allocation5 + $0x9f8] sm:$0xff]
    %v463 = vld [vmem:[#allocation5 + $0xa00] sm:$0xff]
    %v464 = vld [vmem:[#allocation5 + $0xa08] sm:$0xff]
    %v465 = vld [vmem:[#allocation5 + $0xa10] sm:$0xff]
    %v466 = vld [vmem:[#allocation5 + $0xa18] sm:$0xff]
    %v467 = vld [vmem:[#allocation5 + $0xa20] sm:$0xff]
    %v468 = vld [vmem:[#allocation5 + $0xa28] sm:$0xff]
    %v469 = vld [vmem:[#allocation5 + $0xa30] sm:$0xff]
    %v470 = vld [vmem:[#allocation5 + $0xa38] sm:$0xff]
    %v471 = vld [vmem:[#allocation5 + $0xa40] sm:$0xff]
    %v472 = vld [vmem:[#allocation5 + $0xa48] sm:$0xff]
    %v473 = vld [vmem:[#allocation5 + $0xa50] sm:$0xff]
    %v474 = vld [vmem:[#allocation5 + $0xa58] sm:$0xff]
    %v475 = vld [vmem:[#allocation5 + $0xa60] sm:$0xff]
    %v476 = vld [vmem:[#allocation5 + $0xa68] sm:$0xff]
    %v477 = vld [vmem:[#allocation5 + $0xa70] sm:$0xff]
    %v478 = vld [vmem:[#allocation5 + $0xa78] sm:$0xff]
    %v479 = vld [vmem:[#allocation5 + $0xa80] sm:$0xff]
    %v480 = vld [vmem:[#allocation5 + $0xa88] sm:$0xff]
    %v481 = vld [vmem:[#allocation5 + $0xa90] sm:$0xff]
    %v482 = vld [vmem:[#allocation5 + $0xa98] sm:$0xff]
    %v483 = vld [vmem:[#allocation5 + $0xaa0] sm:$0xff]
    %v484 = vld [vmem:[#allocation5 + $0xaa8] sm:$0xff]
    %v485 = vld [vmem:[#allocation5 + $0xab0] sm:$0xff]
    %v486 = vld [vmem:[#allocation5 + $0xab8] sm:$0xff]
    %v487 = vld [vmem:[#allocation5 + $0xac0] sm:$0xff]
    %v488 = vld [vmem:[#allocation5 + $0xac8] sm:$0xff]
    %v489 = vld [vmem:[#allocation5 + $0xad0] sm:$0xff]
    %v490 = vld [vmem:[#allocation5 + $0xad8] sm:$0xff]
    %v491 = vld [vmem:[#allocation5 + $0xae0] sm:$0xff]
    %v492 = vld [vmem:[#allocation5 + $0xae8] sm:$0xff]
    %v493 = vld [vmem:[#allocation5 + $0xaf0] sm:$0xff]
    %v494 = vld [vmem:[#allocation5 + $0xaf8] sm:$0xff]
    %v495 = vld [vmem:[#allocation5 + $0xb00] sm:$0xff]
    %v496 = vld [vmem:[#allocation5 + $0xb08] sm:$0xff]
    %v497 = vld [vmem:[#allocation5 + $0xb10] sm:$0xff]
    %v498 = vld [vmem:[#allocation5 + $0xb18] sm:$0xff]
    %v499 = vld [vmem:[#allocation5 + $0xb20] sm:$0xff]
    %v500 = vld [vmem:[#allocation5 + $0xb28] sm:$0xff]
    %v501 = vld [vmem:[#allocation5 + $0xb30] sm:$0xff]
    %v502 = vld [vmem:[#allocation5 + $0xb38] sm:$0xff]
    %v503 = vld [vmem:[#allocation5 + $0xb40] sm:$0xff]
    %v504 = vld [vmem:[#allocation5 + $0xb48] sm:$0xff]
    %v505 = vld [vmem:[#allocation5 + $0xb50] sm:$0xff]
    %v506 = vld [vmem:[#allocation5 + $0xb58] sm:$0xff]
    %v507 = vld [vmem:[#allocation5 + $0xb60] sm:$0xff]
    %v508 = vld [vmem:[#allocation5 + $0xb68] sm:$0xff]
    %v509 = vld [vmem:[#allocation5 + $0xb70] sm:$0xff]
    %v510 = vld [vmem:[#allocation5 + $0xb78] sm:$0xff]
    %v511 = vld [vmem:[#allocation5 + $0xb80] sm:$0xff]
    %v512 = vld [vmem:[#allocation5 + $0xb88] sm:$0xff]
    %v513 = vld [vmem:[#allocation5 + $0xb90] sm:$0xff]
    %v514 = vld [vmem:[#allocation5 + $0xb98] sm:$0xff]
    %v515 = vld [vmem:[#allocation5 + $0xba0] sm:$0xff]
    %v516 = vld [vmem:[#allocation5 + $0xba8] sm:$0xff]
    %v517 = vld [vmem:[#allocation5 + $0xbb0] sm:$0xff]
    %v518 = vld [vmem:[#allocation5 + $0xbb8] sm:$0xff]
    %v519 = vld [vmem:[#allocation5 + $0xbc0] sm:$0xff]
    %v520 = vld [vmem:[#allocation5 + $0xbc8] sm:$0xff]
    %v521 = vld [vmem:[#allocation5 + $0xbd0] sm:$0xff]
    %v522 = vld [vmem:[#allocation5 + $0xbd8] sm:$0xff]
    %v523 = vld [vmem:[#allocation5 + $0xbe0] sm:$0xff]
    %v524 = vld [vmem:[#allocation5 + $0xbe8] sm:$0xff]
    %v525 = vld [vmem:[#allocation5 + $0xbf0] sm:$0xff]
    %v526 = vld [vmem:[#allocation5 + $0xbf8] sm:$0xff]
    %v527 = vld [vmem:[#allocation5 + $0xc00] sm:$0xff]
    %v528 = vld [vmem:[#allocation5 + $0xc08] sm:$0xff]
    %v529 = vld [vmem:[#allocation5 + $0xc10] sm:$0xff]
    %v530 = vld [vmem:[#allocation5 + $0xc18] sm:$0xff]
    %v531 = vld [vmem:[#allocation5 + $0xc20] sm:$0xff]
    %v532 = vld [vmem:[#allocation5 + $0xc28] sm:$0xff]
    %v533 = vld [vmem:[#allocation5 + $0xc30] sm:$0xff]
    %v534 = vld [vmem:[#allocation5 + $0xc38] sm:$0xff]
    %v535 = vld [vmem:[#allocation5 + $0xc40] sm:$0xff]
    %v536 = vld [vmem:[#allocation5 + $0xc48] sm:$0xff]
    %v537 = vld [vmem:[#allocation5 + $0xc50] sm:$0xff]
    %v538 = vld [vmem:[#allocation5 + $0xc58] sm:$0xff]
    %v539 = vld [vmem:[#allocation5 + $0xc60] sm:$0xff]
    %v540 = vld [vmem:[#allocation5 + $0xc68] sm:$0xff]
    %v541 = vld [vmem:[#allocation5 + $0xc70] sm:$0xff]
    %v542 = vld [vmem:[#allocation5 + $0xc78] sm:$0xff]
    %v543 = vld [vmem:[#allocation5 + $0xc80] sm:$0xff]
    %v544 = vld [vmem:[#allocation5 + $0xc88] sm:$0xff]
    %v545 = vld [vmem:[#allocation5 + $0xc90] sm:$0xff]
    %v546 = vld [vmem:[#allocation5 + $0xc98] sm:$0xff]
    %v547 = vld [vmem:[#allocation5 + $0xca0] sm:$0xff]
    %v548 = vld [vmem:[#allocation5 + $0xca8] sm:$0xff]
    %v549 = vld [vmem:[#allocation5 + $0xcb0] sm:$0xff]
    %v550 = vld [vmem:[#allocation5 + $0xcb8] sm:$0xff]
    %v551 = vld [vmem:[#allocation5 + $0xcc0] sm:$0xff]
    %v552 = vld [vmem:[#allocation5 + $0xcc8] sm:$0xff]
    %v553 = vld [vmem:[#allocation5 + $0xcd0] sm:$0xff]
    %v554 = vld [vmem:[#allocation5 + $0xcd8] sm:$0xff]
    %v555 = vld [vmem:[#allocation5 + $0xce0] sm:$0xff]
    %v556 = vld [vmem:[#allocation5 + $0xce8] sm:$0xff]
    %v557 = vld [vmem:[#allocation5 + $0xcf0] sm:$0xff]
    %v558 = vld [vmem:[#allocation5 + $0xcf8] sm:$0xff]
    %v559 = vld [vmem:[#allocation5 + $0xd00] sm:$0xff]
    %v560 = vld [vmem:[#allocation5 + $0xd08] sm:$0xff]
    %v561 = vld [vmem:[#allocation5 + $0xd10] sm:$0xff]
    %v562 = vld [vmem:[#allocation5 + $0xd18] sm:$0xff]
    %v563 = vld [vmem:[#allocation5 + $0xd20] sm:$0xff]
    %v564 = vld [vmem:[#allocation5 + $0xd28] sm:$0xff]
    %v565 = vld [vmem:[#allocation5 + $0xd30] sm:$0xff]
    %v566 = vld [vmem:[#allocation5 + $0xd38] sm:$0xff]
    %v567 = vld [vmem:[#allocation5 + $0xd40] sm:$0xff]
    %v568 = vld [vmem:[#allocation5 + $0xd48] sm:$0xff]
    %v569 = vld [vmem:[#allocation5 + $0xd50] sm:$0xff]
    %v570 = vld [vmem:[#allocation5 + $0xd58] sm:$0xff]
    %v571 = vld [vmem:[#allocation5 + $0xd60] sm:$0xff]
    %v572 = vld [vmem:[#allocation5 + $0xd68] sm:$0xff]
    %v573 = vld [vmem:[#allocation5 + $0xd70] sm:$0xff]
    %v574 = vld [vmem:[#allocation5 + $0xd78] sm:$0xff]
    %v575 = vld [vmem:[#allocation5 + $0xd80] sm:$0xff]
    %v576 = vld [vmem:[#allocation5 + $0xd88] sm:$0xff]
    %v577 = vld [vmem:[#allocation5 + $0xd90] sm:$0xff]
    %v578 = vld [vmem:[#allocation5 + $0xd98] sm:$0xff]
    %v579 = vld [vmem:[#allocation5 + $0xda0] sm:$0xff]
    %v580 = vld [vmem:[#allocation5 + $0xda8] sm:$0xff]
    %v581 = vld [vmem:[#allocation5 + $0xdb0] sm:$0xff]
    %v582 = vld [vmem:[#allocation5 + $0xdb8] sm:$0xff]
    %v583 = vld [vmem:[#allocation5 + $0xdc0] sm:$0xff]
    %v584 = vld [vmem:[#allocation5 + $0xdc8] sm:$0xff]
    %v585 = vld [vmem:[#allocation5 + $0xdd0] sm:$0xff]
    %v586 = vld [vmem:[#allocation5 + $0xdd8] sm:$0xff]
    %v587 = vld [vmem:[#allocation5 + $0xde0] sm:$0xff]
    %v588 = vld [vmem:[#allocation5 + $0xde8] sm:$0xff]
    %v589 = vld [vmem:[#allocation5 + $0xdf0] sm:$0xff]
    %v590 = vld [vmem:[#allocation5 + $0xdf8] sm:$0xff]
    %v591 = vld [vmem:[#allocation5 + $0xe00] sm:$0xff]
    %v592 = vld [vmem:[#allocation5 + $0xe08] sm:$0xff]
    %v593 = vld [vmem:[#allocation5 + $0xe10] sm:$0xff]
    %v594 = vld [vmem:[#allocation5 + $0xe18] sm:$0xff]
    %v595 = vld [vmem:[#allocation5 + $0xe20] sm:$0xff]
    %v596 = vld [vmem:[#allocation5 + $0xe28] sm:$0xff]
    %v597 = vld [vmem:[#allocation5 + $0xe30] sm:$0xff]
    %v598 = vld [vmem:[#allocation5 + $0xe38] sm:$0xff]
    %v599 = vld [vmem:[#allocation5 + $0xe40] sm:$0xff]
    %v600 = vld [vmem:[#allocation5 + $0xe48] sm:$0xff]
    %v601 = vld [vmem:[#allocation5 + $0xe50] sm:$0xff]
    %v602 = vld [vmem:[#allocation5 + $0xe58] sm:$0xff]
    %v603 = vld [vmem:[#allocation5 + $0xe60] sm:$0xff]
    %v604 = vld [vmem:[#allocation5 + $0xe68] sm:$0xff]
    %v605 = vld [vmem:[#allocation5 + $0xe70] sm:$0xff]
    %v606 = vld [vmem:[#allocation5 + $0xe78] sm:$0xff]
    %v607 = vld [vmem:[#allocation5 + $0xe80] sm:$0xff]
    %v608 = vld [vmem:[#allocation5 + $0xe88] sm:$0xff]
    %v609 = vld [vmem:[#allocation5 + $0xe90] sm:$0xff]
    %v610 = vld [vmem:[#allocation5 + $0xe98] sm:$0xff]
    %v611 = vld [vmem:[#allocation5 + $0xea0] sm:$0xff]
    %v612 = vld [vmem:[#allocation5 + $0xea8] sm:$0xff]
    %v613 = vld [vmem:[#allocation5 + $0xeb0] sm:$0xff]
    %v614 = vld [vmem:[#allocation5 + $0xeb8] sm:$0xff]
    %v615 = vld [vmem:[#allocation5 + $0xec0] sm:$0xff]
    %v616 = vld [vmem:[#allocation5 + $0xec8] sm:$0xff]
    %v617 = vld [vmem:[#allocation5 + $0xed0] sm:$0xff]
    %v618 = vld [vmem:[#allocation5 + $0xed8] sm:$0xff]
    %v619 = vld [vmem:[#allocation5 + $0xee0] sm:$0xff]
    %v620 = vld [vmem:[#allocation5 + $0xee8] sm:$0xff]
    %v621 = vld [vmem:[#allocation5 + $0xef0] sm:$0xff]
    %v622 = vld [vmem:[#allocation5 + $0xef8] sm:$0xff]
    %v623 = vld [vmem:[#allocation5 + $0xf00] sm:$0xff]
    %v624 = vld [vmem:[#allocation5 + $0xf08] sm:$0xff]
    %v625 = vld [vmem:[#allocation5 + $0xf10] sm:$0xff]
    %v626 = vld [vmem:[#allocation5 + $0xf18] sm:$0xff]
    %v627 = vld [vmem:[#allocation5 + $0xf20] sm:$0xff]
    %v628 = vld [vmem:[#allocation5 + $0xf28] sm:$0xff]
    %v629 = vld [vmem:[#allocation5 + $0xf30] sm:$0xff]
    %v630 = vld [vmem:[#allocation5 + $0xf38] sm:$0xff]
    %v631 = vld [vmem:[#allocation5 + $0xf40] sm:$0xff]
    %v632 = vld [vmem:[#allocation5 + $0xf48] sm:$0xff]
    %v633 = vld [vmem:[#allocation5 + $0xf50] sm:$0xff]
    %v634 = vld [vmem:[#allocation5 + $0xf58] sm:$0xff]
    %v635 = vld [vmem:[#allocation5 + $0xf60] sm:$0xff]
    %v636 = vld [vmem:[#allocation5 + $0xf68] sm:$0xff]
    %v637 = vld [vmem:[#allocation5 + $0xf70] sm:$0xff]
    %v638 = vld [vmem:[#allocation5 + $0xf78] sm:$0xff]
    %v639 = vld [vmem:[#allocation5 + $0xf80] sm:$0xff]
    %v640 = vld [vmem:[#allocation5 + $0xf88] sm:$0xff]
    %v641 = vld [vmem:[#allocation5 + $0xf90] sm:$0xff]
    %v642 = vld [vmem:[#allocation5 + $0xf98] sm:$0xff]
    %v643 = vld [vmem:[#allocation5 + $0xfa0] sm:$0xff]
    %v644 = vld [vmem:[#allocation5 + $0xfa8] sm:$0xff]
    %v645 = vld [vmem:[#allocation5 + $0xfb0] sm:$0xff]
    %v646 = vld [vmem:[#allocation5 + $0xfb8] sm:$0xff]
    %v647 = vld [vmem:[#allocation5 + $0xfc0] sm:$0xff]
    %v648 = vld [vmem:[#allocation5 + $0xfc8] sm:$0xff]
    %v649 = vld [vmem:[#allocation5 + $0xfd0] sm:$0xff]
    %v650 = vld [vmem:[#allocation5 + $0xfd8] sm:$0xff]
    %v651 = vld [vmem:[#allocation5 + $0xfe0] sm:$0xff]
    %v652 = vld [vmem:[#allocation5 + $0xfe8] sm:$0xff]
    %v653 = vld [vmem:[#allocation5 + $0xff0] sm:$0xff]
    %v654 = vld [vmem:[#allocation5 + $0xff8] sm:$0xff]
    %v655 = vld [vmem:[#allocation11] ss:$8 sm:$0xf]
    %v656 = vld [vmem:[#allocation11] ss:$8 sm:$0xf0]
    %v657 = vor.u32 %v655, %v656
    %v659 = vlaneseq
    %v660 = vshrl.u32 %v659, 7
    %v661 = vsub.s32 0, %v660
    %v662 = vrot.slane %v657, %v661
    %v663 = vlaneseq
    %v664 = vshrl.u32 %v663, 7
    %v665 = vsub.s32 1, %v664
    %v666 = vrot.slane %v657, %v665
    %v667 = vlaneseq
    %v668 = vshrl.u32 %v667, 7
    %v669 = vsub.s32 2, %v668
    %v670 = vrot.slane %v657, %v669
    %v671 = vlaneseq
    %v672 = vshrl.u32 %v671, 7
    %v673 = vsub.s32 3, %v672
    %v674 = vrot.slane %v657, %v673
    %v675 = vlaneseq
    %v676 = vshrl.u32 %v675, 7
    %v677 = vsub.s32 4, %v676
    %v678 = vrot.slane %v657, %v677
    %v679 = vlaneseq
    %v680 = vshrl.u32 %v679, 7
    %v681 = vsub.s32 5, %v680
    %v682 = vrot.slane %v657, %v681
    %v683 = vlaneseq
    %v684 = vshrl.u32 %v683, 7
    %v685 = vsub.s32 6, %v684
    %v686 = vrot.slane %v657, %v685
    %v687 = vlaneseq
    %v688 = vshrl.u32 %v687, 7
    %v689 = vsub.s32 7, %v688
    %v690 = vrot.slane %v657, %v689
    %v1211 = vunpack.c.l.b16 %v143
    %v1212 = vunpack.c.h.b16 %v143
    %v1213 = vunpack.c.l.b16 %v144
    %v1214 = vunpack.c.h.b16 %v144
    %v1215 = vunpack.c.l.b16 %v145
    %v1216 = vunpack.c.h.b16 %v145
    %v1217 = vunpack.c.l.b16 %v146
    %v1218 = vunpack.c.h.b16 %v146
    %v1219 = vunpack.c.l.b16 %v147
    %v1220 = vunpack.c.h.b16 %v147
    %v1221 = vunpack.c.l.b16 %v148
    %v1222 = vunpack.c.h.b16 %v148
    %v1223 = vunpack.c.l.b16 %v149
    %v1224 = vunpack.c.h.b16 %v149
    %v1225 = vunpack.c.l.b16 %v150
    %v1226 = vunpack.c.h.b16 %v150
    %v1227 = vunpack.c.l.b16 %v151
    %v1228 = vunpack.c.h.b16 %v151
    %v1229 = vunpack.c.l.b16 %v152
    %v1230 = vunpack.c.h.b16 %v152
    %v1231 = vunpack.c.l.b16 %v153
    %v1232 = vunpack.c.h.b16 %v153
    %v1233 = vunpack.c.l.b16 %v154
    %v1234 = vunpack.c.h.b16 %v154
    %v1235 = vunpack.c.l.b16 %v155
    %v1236 = vunpack.c.h.b16 %v155
    %v1237 = vunpack.c.l.b16 %v156
    %v1238 = vunpack.c.h.b16 %v156
    %v1239 = vunpack.c.l.b16 %v157
    %v1240 = vunpack.c.h.b16 %v157
    %v1241 = vunpack.c.l.b16 %v158
    %v1242 = vunpack.c.h.b16 %v158
    %v1243 = vunpack.c.l.b16 %v159
    %v1244 = vunpack.c.h.b16 %v159
    %v1245 = vunpack.c.l.b16 %v160
    %v1246 = vunpack.c.h.b16 %v160
    %v1247 = vunpack.c.l.b16 %v161
    %v1248 = vunpack.c.h.b16 %v161
    %v1249 = vunpack.c.l.b16 %v162
    %v1250 = vunpack.c.h.b16 %v162
    %v1251 = vunpack.c.l.b16 %v163
    %v1252 = vunpack.c.h.b16 %v163
    %v1253 = vunpack.c.l.b16 %v164
    %v1254 = vunpack.c.h.b16 %v164
    %v1255 = vunpack.c.l.b16 %v165
    %v1256 = vunpack.c.h.b16 %v165
    %v1257 = vunpack.c.l.b16 %v166
    %v1258 = vunpack.c.h.b16 %v166
    %v1259 = vunpack.c.l.b16 %v167
    %v1260 = vunpack.c.h.b16 %v167
    %v1261 = vunpack.c.l.b16 %v168
    %v1262 = vunpack.c.h.b16 %v168
    %v1263 = vunpack.c.l.b16 %v169
    %v1264 = vunpack.c.h.b16 %v169
    %v1265 = vunpack.c.l.b16 %v170
    %v1266 = vunpack.c.h.b16 %v170
    %v1267 = vunpack.c.l.b16 %v171
    %v1268 = vunpack.c.h.b16 %v171
    %v1269 = vunpack.c.l.b16 %v172
    %v1270 = vunpack.c.h.b16 %v172
    %v1271 = vunpack.c.l.b16 %v173
    %v1272 = vunpack.c.h.b16 %v173
    %v1273 = vunpack.c.l.b16 %v174
    %v1274 = vunpack.c.h.b16 %v174
    %v1275 = vunpack.c.l.b16 %v175
    %v1276 = vunpack.c.h.b16 %v175
    %v1277 = vunpack.c.l.b16 %v176
    %v1278 = vunpack.c.h.b16 %v176
    %v1279 = vunpack.c.l.b16 %v177
    %v1280 = vunpack.c.h.b16 %v177
    %v1281 = vunpack.c.l.b16 %v178
    %v1282 = vunpack.c.h.b16 %v178
    %v1283 = vunpack.c.l.b16 %v179
    %v1284 = vunpack.c.h.b16 %v179
    %v1285 = vunpack.c.l.b16 %v180
    %v1286 = vunpack.c.h.b16 %v180
    %v1287 = vunpack.c.l.b16 %v181
    %v1288 = vunpack.c.h.b16 %v181
    %v1289 = vunpack.c.l.b16 %v182
    %v1290 = vunpack.c.h.b16 %v182
    %v1291 = vunpack.c.l.b16 %v183
    %v1292 = vunpack.c.h.b16 %v183
    %v1293 = vunpack.c.l.b16 %v184
    %v1294 = vunpack.c.h.b16 %v184
    %v1295 = vunpack.c.l.b16 %v185
    %v1296 = vunpack.c.h.b16 %v185
    %v1297 = vunpack.c.l.b16 %v186
    %v1298 = vunpack.c.h.b16 %v186
    %v1299 = vunpack.c.l.b16 %v187
    %v1300 = vunpack.c.h.b16 %v187
    %v1301 = vunpack.c.l.b16 %v188
    %v1302 = vunpack.c.h.b16 %v188
    %v1303 = vunpack.c.l.b16 %v189
    %v1304 = vunpack.c.h.b16 %v189
    %v1305 = vunpack.c.l.b16 %v190
    %v1306 = vunpack.c.h.b16 %v190
    %v1307 = vunpack.c.l.b16 %v191
    %v1308 = vunpack.c.h.b16 %v191
    %v1309 = vunpack.c.l.b16 %v192
    %v1310 = vunpack.c.h.b16 %v192
    %v1311 = vunpack.c.l.b16 %v193
    %v1312 = vunpack.c.h.b16 %v193
    %v1313 = vunpack.c.l.b16 %v194
    %v1314 = vunpack.c.h.b16 %v194
    %v1315 = vunpack.c.l.b16 %v195
    %v1316 = vunpack.c.h.b16 %v195
    %v1317 = vunpack.c.l.b16 %v196
    %v1318 = vunpack.c.h.b16 %v196
    %v1319 = vunpack.c.l.b16 %v197
    %v1320 = vunpack.c.h.b16 %v197
    %v1321 = vunpack.c.l.b16 %v198
    %v1322 = vunpack.c.h.b16 %v198
    %v1323 = vunpack.c.l.b16 %v199
    %v1324 = vunpack.c.h.b16 %v199
    %v1325 = vunpack.c.l.b16 %v200
    %v1326 = vunpack.c.h.b16 %v200
    %v1327 = vunpack.c.l.b16 %v201
    %v1328 = vunpack.c.h.b16 %v201
    %v1329 = vunpack.c.l.b16 %v202
    %v1330 = vunpack.c.h.b16 %v202
    %v1331 = vunpack.c.l.b16 %v203
    %v1332 = vunpack.c.h.b16 %v203
    %v1333 = vunpack.c.l.b16 %v204
    %v1334 = vunpack.c.h.b16 %v204
    %v1335 = vunpack.c.l.b16 %v205
    %v1336 = vunpack.c.h.b16 %v205
    %v1337 = vunpack.c.l.b16 %v206
    %v1338 = vunpack.c.h.b16 %v206
    %v1339 = vunpack.c.l.b16 %v207
    %v1340 = vunpack.c.h.b16 %v207
    %v1341 = vunpack.c.l.b16 %v208
    %v1342 = vunpack.c.h.b16 %v208
    %v1343 = vunpack.c.l.b16 %v209
    %v1344 = vunpack.c.h.b16 %v209
    %v1345 = vunpack.c.l.b16 %v210
    %v1346 = vunpack.c.h.b16 %v210
    %v1347 = vunpack.c.l.b16 %v211
    %v1348 = vunpack.c.h.b16 %v211
    %v1349 = vunpack.c.l.b16 %v212
    %v1350 = vunpack.c.h.b16 %v212
    %v1351 = vunpack.c.l.b16 %v213
    %v1352 = vunpack.c.h.b16 %v213
    %v1353 = vunpack.c.l.b16 %v214
    %v1354 = vunpack.c.h.b16 %v214
    %v1355 = vunpack.c.l.b16 %v215
    %v1356 = vunpack.c.h.b16 %v215
    %v1357 = vunpack.c.l.b16 %v216
    %v1358 = vunpack.c.h.b16 %v216
    %v1359 = vunpack.c.l.b16 %v217
    %v1360 = vunpack.c.h.b16 %v217
    %v1361 = vunpack.c.l.b16 %v218
    %v1362 = vunpack.c.h.b16 %v218
    %v1363 = vunpack.c.l.b16 %v219
    %v1364 = vunpack.c.h.b16 %v219
    %v1365 = vunpack.c.l.b16 %v220
    %v1366 = vunpack.c.h.b16 %v220
    %v1367 = vunpack.c.l.b16 %v221
    %v1368 = vunpack.c.h.b16 %v221
    %v1369 = vunpack.c.l.b16 %v222
    %v1370 = vunpack.c.h.b16 %v222
    %v1371 = vunpack.c.l.b16 %v223
    %v1372 = vunpack.c.h.b16 %v223
    %v1373 = vunpack.c.l.b16 %v224
    %v1374 = vunpack.c.h.b16 %v224
    %v1375 = vunpack.c.l.b16 %v225
    %v1376 = vunpack.c.h.b16 %v225
    %v1377 = vunpack.c.l.b16 %v226
    %v1378 = vunpack.c.h.b16 %v226
    %v1379 = vunpack.c.l.b16 %v227
    %v1380 = vunpack.c.h.b16 %v227
    %v1381 = vunpack.c.l.b16 %v228
    %v1382 = vunpack.c.h.b16 %v228
    %v1383 = vunpack.c.l.b16 %v229
    %v1384 = vunpack.c.h.b16 %v229
    %v1385 = vunpack.c.l.b16 %v230
    %v1386 = vunpack.c.h.b16 %v230
    %v1387 = vunpack.c.l.b16 %v231
    %v1388 = vunpack.c.h.b16 %v231
    %v1389 = vunpack.c.l.b16 %v232
    %v1390 = vunpack.c.h.b16 %v232
    %v1391 = vunpack.c.l.b16 %v233
    %v1392 = vunpack.c.h.b16 %v233
    %v1393 = vunpack.c.l.b16 %v234
    %v1394 = vunpack.c.h.b16 %v234
    %v1395 = vunpack.c.l.b16 %v235
    %v1396 = vunpack.c.h.b16 %v235
    %v1397 = vunpack.c.l.b16 %v236
    %v1398 = vunpack.c.h.b16 %v236
    %v1399 = vunpack.c.l.b16 %v237
    %v1400 = vunpack.c.h.b16 %v237
    %v1401 = vunpack.c.l.b16 %v238
    %v1402 = vunpack.c.h.b16 %v238
    %v1403 = vunpack.c.l.b16 %v239
    %v1404 = vunpack.c.h.b16 %v239
    %v1405 = vunpack.c.l.b16 %v240
    %v1406 = vunpack.c.h.b16 %v240
    %v1407 = vunpack.c.l.b16 %v241
    %v1408 = vunpack.c.h.b16 %v241
    %v1409 = vunpack.c.l.b16 %v242
    %v1410 = vunpack.c.h.b16 %v242
    %v1411 = vunpack.c.l.b16 %v243
    %v1412 = vunpack.c.h.b16 %v243
    %v1413 = vunpack.c.l.b16 %v244
    %v1414 = vunpack.c.h.b16 %v244
    %v1415 = vunpack.c.l.b16 %v245
    %v1416 = vunpack.c.h.b16 %v245
    %v1417 = vunpack.c.l.b16 %v246
    %v1418 = vunpack.c.h.b16 %v246
    %v1419 = vunpack.c.l.b16 %v247
    %v1420 = vunpack.c.h.b16 %v247
    %v1421 = vunpack.c.l.b16 %v248
    %v1422 = vunpack.c.h.b16 %v248
    %v1423 = vunpack.c.l.b16 %v249
    %v1424 = vunpack.c.h.b16 %v249
    %v1425 = vunpack.c.l.b16 %v250
    %v1426 = vunpack.c.h.b16 %v250
    %v1427 = vunpack.c.l.b16 %v251
    %v1428 = vunpack.c.h.b16 %v251
    %v1429 = vunpack.c.l.b16 %v252
    %v1430 = vunpack.c.h.b16 %v252
    %v1431 = vunpack.c.l.b16 %v253
    %v1432 = vunpack.c.h.b16 %v253
    %v1433 = vunpack.c.l.b16 %v254
    %v1434 = vunpack.c.h.b16 %v254
    %v1435 = vunpack.c.l.b16 %v255
    %v1436 = vunpack.c.h.b16 %v255
    %v1437 = vunpack.c.l.b16 %v256
    %v1438 = vunpack.c.h.b16 %v256
    %v1439 = vunpack.c.l.b16 %v257
    %v1440 = vunpack.c.h.b16 %v257
    %v1441 = vunpack.c.l.b16 %v258
    %v1442 = vunpack.c.h.b16 %v258
    %v1443 = vunpack.c.l.b16 %v259
    %v1444 = vunpack.c.h.b16 %v259
    %v1445 = vunpack.c.l.b16 %v260
    %v1446 = vunpack.c.h.b16 %v260
    %v1447 = vunpack.c.l.b16 %v261
    %v1448 = vunpack.c.h.b16 %v261
    %v1449 = vunpack.c.l.b16 %v262
    %v1450 = vunpack.c.h.b16 %v262
    %v1451 = vunpack.c.l.b16 %v263
    %v1452 = vunpack.c.h.b16 %v263
    %v1453 = vunpack.c.l.b16 %v264
    %v1454 = vunpack.c.h.b16 %v264
    %v1455 = vunpack.c.l.b16 %v265
    %v1456 = vunpack.c.h.b16 %v265
    %v1457 = vunpack.c.l.b16 %v266
    %v1458 = vunpack.c.h.b16 %v266
    %v1459 = vunpack.c.l.b16 %v267
    %v1460 = vunpack.c.h.b16 %v267
    %v1461 = vunpack.c.l.b16 %v268
    %v1462 = vunpack.c.h.b16 %v268
    %v1463 = vunpack.c.l.b16 %v269
    %v1464 = vunpack.c.h.b16 %v269
    %v1465 = vunpack.c.l.b16 %v270
    %v1466 = vunpack.c.h.b16 %v270
    %v1467 = vunpack.c.l.b16 %v271
    %v1468 = vunpack.c.h.b16 %v271
    %v1469 = vunpack.c.l.b16 %v272
    %v1470 = vunpack.c.h.b16 %v272
    %v1471 = vunpack.c.l.b16 %v273
    %v1472 = vunpack.c.h.b16 %v273
    %v1473 = vunpack.c.l.b16 %v274
    %v1474 = vunpack.c.h.b16 %v274
    %v1475 = vunpack.c.l.b16 %v275
    %v1476 = vunpack.c.h.b16 %v275
    %v1477 = vunpack.c.l.b16 %v276
    %v1478 = vunpack.c.h.b16 %v276
    %v1479 = vunpack.c.l.b16 %v277
    %v1480 = vunpack.c.h.b16 %v277
    %v1481 = vunpack.c.l.b16 %v278
    %v1482 = vunpack.c.h.b16 %v278
    %v1483 = vunpack.c.l.b16 %v279
    %v1484 = vunpack.c.h.b16 %v279
    %v1485 = vunpack.c.l.b16 %v280
    %v1486 = vunpack.c.h.b16 %v280
    %v1487 = vunpack.c.l.b16 %v281
    %v1488 = vunpack.c.h.b16 %v281
    %v1489 = vunpack.c.l.b16 %v282
    %v1490 = vunpack.c.h.b16 %v282
    %v1491 = vunpack.c.l.b16 %v283
    %v1492 = vunpack.c.h.b16 %v283
    %v1493 = vunpack.c.l.b16 %v284
    %v1494 = vunpack.c.h.b16 %v284
    %v1495 = vunpack.c.l.b16 %v285
    %v1496 = vunpack.c.h.b16 %v285
    %v1497 = vunpack.c.l.b16 %v286
    %v1498 = vunpack.c.h.b16 %v286
    %v1499 = vunpack.c.l.b16 %v287
    %v1500 = vunpack.c.h.b16 %v287
    %v1501 = vunpack.c.l.b16 %v288
    %v1502 = vunpack.c.h.b16 %v288
    %v1503 = vunpack.c.l.b16 %v289
    %v1504 = vunpack.c.h.b16 %v289
    %v1505 = vunpack.c.l.b16 %v290
    %v1506 = vunpack.c.h.b16 %v290
    %v1507 = vunpack.c.l.b16 %v291
    %v1508 = vunpack.c.h.b16 %v291
    %v1509 = vunpack.c.l.b16 %v292
    %v1510 = vunpack.c.h.b16 %v292
    %v1511 = vunpack.c.l.b16 %v293
    %v1512 = vunpack.c.h.b16 %v293
    %v1513 = vunpack.c.l.b16 %v294
    %v1514 = vunpack.c.h.b16 %v294
    %v1515 = vunpack.c.l.b16 %v295
    %v1516 = vunpack.c.h.b16 %v295
    %v1517 = vunpack.c.l.b16 %v296
    %v1518 = vunpack.c.h.b16 %v296
    %v1519 = vunpack.c.l.b16 %v297
    %v1520 = vunpack.c.h.b16 %v297
    %v1521 = vunpack.c.l.b16 %v298
    %v1522 = vunpack.c.h.b16 %v298
    %v1523 = vunpack.c.l.b16 %v299
    %v1524 = vunpack.c.h.b16 %v299
    %v1525 = vunpack.c.l.b16 %v300
    %v1526 = vunpack.c.h.b16 %v300
    %v1527 = vunpack.c.l.b16 %v301
    %v1528 = vunpack.c.h.b16 %v301
    %v1529 = vunpack.c.l.b16 %v302
    %v1530 = vunpack.c.h.b16 %v302
    %v1531 = vunpack.c.l.b16 %v303
    %v1532 = vunpack.c.h.b16 %v303
    %v1533 = vunpack.c.l.b16 %v304
    %v1534 = vunpack.c.h.b16 %v304
    %v1535 = vunpack.c.l.b16 %v305
    %v1536 = vunpack.c.h.b16 %v305
    %v1537 = vunpack.c.l.b16 %v306
    %v1538 = vunpack.c.h.b16 %v306
    %v1539 = vunpack.c.l.b16 %v307
    %v1540 = vunpack.c.h.b16 %v307
    %v1541 = vunpack.c.l.b16 %v308
    %v1542 = vunpack.c.h.b16 %v308
    %v1543 = vunpack.c.l.b16 %v309
    %v1544 = vunpack.c.h.b16 %v309
    %v1545 = vunpack.c.l.b16 %v310
    %v1546 = vunpack.c.h.b16 %v310
    %v1547 = vunpack.c.l.b16 %v311
    %v1548 = vunpack.c.h.b16 %v311
    %v1549 = vunpack.c.l.b16 %v312
    %v1550 = vunpack.c.h.b16 %v312
    %v1551 = vunpack.c.l.b16 %v313
    %v1552 = vunpack.c.h.b16 %v313
    %v1553 = vunpack.c.l.b16 %v314
    %v1554 = vunpack.c.h.b16 %v314
    %v1555 = vunpack.c.l.b16 %v315
    %v1556 = vunpack.c.h.b16 %v315
    %v1557 = vunpack.c.l.b16 %v316
    %v1558 = vunpack.c.h.b16 %v316
    %v1559 = vunpack.c.l.b16 %v317
    %v1560 = vunpack.c.h.b16 %v317
    %v1561 = vunpack.c.l.b16 %v318
    %v1562 = vunpack.c.h.b16 %v318
    %v1563 = vunpack.c.l.b16 %v319
    %v1564 = vunpack.c.h.b16 %v319
    %v1565 = vunpack.c.l.b16 %v320
    %v1566 = vunpack.c.h.b16 %v320
    %v1567 = vunpack.c.l.b16 %v321
    %v1568 = vunpack.c.h.b16 %v321
    %v1569 = vunpack.c.l.b16 %v322
    %v1570 = vunpack.c.h.b16 %v322
    %v1571 = vunpack.c.l.b16 %v323
    %v1572 = vunpack.c.h.b16 %v323
    %v1573 = vunpack.c.l.b16 %v324
    %v1574 = vunpack.c.h.b16 %v324
    %v1575 = vunpack.c.l.b16 %v325
    %v1576 = vunpack.c.h.b16 %v325
    %v1577 = vunpack.c.l.b16 %v326
    %v1578 = vunpack.c.h.b16 %v326
    %v1579 = vunpack.c.l.b16 %v327
    %v1580 = vunpack.c.h.b16 %v327
    %v1581 = vunpack.c.l.b16 %v328
    %v1582 = vunpack.c.h.b16 %v328
    %v1583 = vunpack.c.l.b16 %v329
    %v1584 = vunpack.c.h.b16 %v329
    %v1585 = vunpack.c.l.b16 %v330
    %v1586 = vunpack.c.h.b16 %v330
    %v1587 = vunpack.c.l.b16 %v331
    %v1588 = vunpack.c.h.b16 %v331
    %v1589 = vunpack.c.l.b16 %v332
    %v1590 = vunpack.c.h.b16 %v332
    %v1591 = vunpack.c.l.b16 %v333
    %v1592 = vunpack.c.h.b16 %v333
    %v1593 = vunpack.c.l.b16 %v334
    %v1594 = vunpack.c.h.b16 %v334
    %v1595 = vunpack.c.l.b16 %v335
    %v1596 = vunpack.c.h.b16 %v335
    %v1597 = vunpack.c.l.b16 %v336
    %v1598 = vunpack.c.h.b16 %v336
    %v1599 = vunpack.c.l.b16 %v337
    %v1600 = vunpack.c.h.b16 %v337
    %v1601 = vunpack.c.l.b16 %v338
    %v1602 = vunpack.c.h.b16 %v338
    %v1603 = vunpack.c.l.b16 %v339
    %v1604 = vunpack.c.h.b16 %v339
    %v1605 = vunpack.c.l.b16 %v340
    %v1606 = vunpack.c.h.b16 %v340
    %v1607 = vunpack.c.l.b16 %v341
    %v1608 = vunpack.c.h.b16 %v341
    %v1609 = vunpack.c.l.b16 %v342
    %v1610 = vunpack.c.h.b16 %v342
    %v1611 = vunpack.c.l.b16 %v343
    %v1612 = vunpack.c.h.b16 %v343
    %v1613 = vunpack.c.l.b16 %v344
    %v1614 = vunpack.c.h.b16 %v344
    %v1615 = vunpack.c.l.b16 %v345
    %v1616 = vunpack.c.h.b16 %v345
    %v1617 = vunpack.c.l.b16 %v346
    %v1618 = vunpack.c.h.b16 %v346
    %v1619 = vunpack.c.l.b16 %v347
    %v1620 = vunpack.c.h.b16 %v347
    %v1621 = vunpack.c.l.b16 %v348
    %v1622 = vunpack.c.h.b16 %v348
    %v1623 = vunpack.c.l.b16 %v349
    %v1624 = vunpack.c.h.b16 %v349
    %v1625 = vunpack.c.l.b16 %v350
    %v1626 = vunpack.c.h.b16 %v350
    %v1627 = vunpack.c.l.b16 %v351
    %v1628 = vunpack.c.h.b16 %v351
    %v1629 = vunpack.c.l.b16 %v352
    %v1630 = vunpack.c.h.b16 %v352
    %v1631 = vunpack.c.l.b16 %v353
    %v1632 = vunpack.c.h.b16 %v353
    %v1633 = vunpack.c.l.b16 %v354
    %v1634 = vunpack.c.h.b16 %v354
    %v1635 = vunpack.c.l.b16 %v355
    %v1636 = vunpack.c.h.b16 %v355
    %v1637 = vunpack.c.l.b16 %v356
    %v1638 = vunpack.c.h.b16 %v356
    %v1639 = vunpack.c.l.b16 %v357
    %v1640 = vunpack.c.h.b16 %v357
    %v1641 = vunpack.c.l.b16 %v358
    %v1642 = vunpack.c.h.b16 %v358
    %v1643 = vunpack.c.l.b16 %v359
    %v1644 = vunpack.c.h.b16 %v359
    %v1645 = vunpack.c.l.b16 %v360
    %v1646 = vunpack.c.h.b16 %v360
    %v1647 = vunpack.c.l.b16 %v361
    %v1648 = vunpack.c.h.b16 %v361
    %v1649 = vunpack.c.l.b16 %v362
    %v1650 = vunpack.c.h.b16 %v362
    %v1651 = vunpack.c.l.b16 %v363
    %v1652 = vunpack.c.h.b16 %v363
    %v1653 = vunpack.c.l.b16 %v364
    %v1654 = vunpack.c.h.b16 %v364
    %v1655 = vunpack.c.l.b16 %v365
    %v1656 = vunpack.c.h.b16 %v365
    %v1657 = vunpack.c.l.b16 %v366
    %v1658 = vunpack.c.h.b16 %v366
    %v1659 = vunpack.c.l.b16 %v367
    %v1660 = vunpack.c.h.b16 %v367
    %v1661 = vunpack.c.l.b16 %v368
    %v1662 = vunpack.c.h.b16 %v368
    %v1663 = vunpack.c.l.b16 %v369
    %v1664 = vunpack.c.h.b16 %v369
    %v1665 = vunpack.c.l.b16 %v370
    %v1666 = vunpack.c.h.b16 %v370
    %v1667 = vunpack.c.l.b16 %v371
    %v1668 = vunpack.c.h.b16 %v371
    %v1669 = vunpack.c.l.b16 %v372
    %v1670 = vunpack.c.h.b16 %v372
    %v1671 = vunpack.c.l.b16 %v373
    %v1672 = vunpack.c.h.b16 %v373
    %v1673 = vunpack.c.l.b16 %v374
    %v1674 = vunpack.c.h.b16 %v374
    %v1675 = vunpack.c.l.b16 %v375
    %v1676 = vunpack.c.h.b16 %v375
    %v1677 = vunpack.c.l.b16 %v376
    %v1678 = vunpack.c.h.b16 %v376
    %v1679 = vunpack.c.l.b16 %v377
    %v1680 = vunpack.c.h.b16 %v377
    %v1681 = vunpack.c.l.b16 %v378
    %v1682 = vunpack.c.h.b16 %v378
    %v1683 = vunpack.c.l.b16 %v379
    %v1684 = vunpack.c.h.b16 %v379
    %v1685 = vunpack.c.l.b16 %v380
    %v1686 = vunpack.c.h.b16 %v380
    %v1687 = vunpack.c.l.b16 %v381
    %v1688 = vunpack.c.h.b16 %v381
    %v1689 = vunpack.c.l.b16 %v382
    %v1690 = vunpack.c.h.b16 %v382
    %v1691 = vunpack.c.l.b16 %v383
    %v1692 = vunpack.c.h.b16 %v383
    %v1693 = vunpack.c.l.b16 %v384
    %v1694 = vunpack.c.h.b16 %v384
    %v1695 = vunpack.c.l.b16 %v385
    %v1696 = vunpack.c.h.b16 %v385
    %v1697 = vunpack.c.l.b16 %v386
    %v1698 = vunpack.c.h.b16 %v386
    %v1699 = vunpack.c.l.b16 %v387
    %v1700 = vunpack.c.h.b16 %v387
    %v1701 = vunpack.c.l.b16 %v388
    %v1702 = vunpack.c.h.b16 %v388
    %v1703 = vunpack.c.l.b16 %v389
    %v1704 = vunpack.c.h.b16 %v389
    %v1705 = vunpack.c.l.b16 %v390
    %v1706 = vunpack.c.h.b16 %v390
    %v1707 = vunpack.c.l.b16 %v391
    %v1708 = vunpack.c.h.b16 %v391
    %v1709 = vunpack.c.l.b16 %v392
    %v1710 = vunpack.c.h.b16 %v392
    %v1711 = vunpack.c.l.b16 %v393
    %v1712 = vunpack.c.h.b16 %v393
    %v1713 = vunpack.c.l.b16 %v394
    %v1714 = vunpack.c.h.b16 %v394
    %v1715 = vunpack.c.l.b16 %v395
    %v1716 = vunpack.c.h.b16 %v395
    %v1717 = vunpack.c.l.b16 %v396
    %v1718 = vunpack.c.h.b16 %v396
    %v1719 = vunpack.c.l.b16 %v397
    %v1720 = vunpack.c.h.b16 %v397
    %v1721 = vunpack.c.l.b16 %v398
    %v1722 = vunpack.c.h.b16 %v398
    %v1723 = vunpack.c.l.b16 %v399
    %v1724 = vunpack.c.h.b16 %v399
    %v1725 = vunpack.c.l.b16 %v400
    %v1726 = vunpack.c.h.b16 %v400
    %v1727 = vunpack.c.l.b16 %v401
    %v1728 = vunpack.c.h.b16 %v401
    %v1729 = vunpack.c.l.b16 %v402
    %v1730 = vunpack.c.h.b16 %v402
    %v1731 = vunpack.c.l.b16 %v403
    %v1732 = vunpack.c.h.b16 %v403
    %v1733 = vunpack.c.l.b16 %v404
    %v1734 = vunpack.c.h.b16 %v404
    %v1735 = vunpack.c.l.b16 %v405
    %v1736 = vunpack.c.h.b16 %v405
    %v1737 = vunpack.c.l.b16 %v406
    %v1738 = vunpack.c.h.b16 %v406
    %v1739 = vunpack.c.l.b16 %v407
    %v1740 = vunpack.c.h.b16 %v407
    %v1741 = vunpack.c.l.b16 %v408
    %v1742 = vunpack.c.h.b16 %v408
    %v1743 = vunpack.c.l.b16 %v409
    %v1744 = vunpack.c.h.b16 %v409
    %v1745 = vunpack.c.l.b16 %v410
    %v1746 = vunpack.c.h.b16 %v410
    %v1747 = vunpack.c.l.b16 %v411
    %v1748 = vunpack.c.h.b16 %v411
    %v1749 = vunpack.c.l.b16 %v412
    %v1750 = vunpack.c.h.b16 %v412
    %v1751 = vunpack.c.l.b16 %v413
    %v1752 = vunpack.c.h.b16 %v413
    %v1753 = vunpack.c.l.b16 %v414
    %v1754 = vunpack.c.h.b16 %v414
    %v1755 = vunpack.c.l.b16 %v415
    %v1756 = vunpack.c.h.b16 %v415
    %v1757 = vunpack.c.l.b16 %v416
    %v1758 = vunpack.c.h.b16 %v416
    %v1759 = vunpack.c.l.b16 %v417
    %v1760 = vunpack.c.h.b16 %v417
    %v1761 = vunpack.c.l.b16 %v418
    %v1762 = vunpack.c.h.b16 %v418
    %v1763 = vunpack.c.l.b16 %v419
    %v1764 = vunpack.c.h.b16 %v419
    %v1765 = vunpack.c.l.b16 %v420
    %v1766 = vunpack.c.h.b16 %v420
    %v1767 = vunpack.c.l.b16 %v421
    %v1768 = vunpack.c.h.b16 %v421
    %v1769 = vunpack.c.l.b16 %v422
    %v1770 = vunpack.c.h.b16 %v422
    %v1771 = vunpack.c.l.b16 %v423
    %v1772 = vunpack.c.h.b16 %v423
    %v1773 = vunpack.c.l.b16 %v424
    %v1774 = vunpack.c.h.b16 %v424
    %v1775 = vunpack.c.l.b16 %v425
    %v1776 = vunpack.c.h.b16 %v425
    %v1777 = vunpack.c.l.b16 %v426
    %v1778 = vunpack.c.h.b16 %v426
    %v1779 = vunpack.c.l.b16 %v427
    %v1780 = vunpack.c.h.b16 %v427
    %v1781 = vunpack.c.l.b16 %v428
    %v1782 = vunpack.c.h.b16 %v428
    %v1783 = vunpack.c.l.b16 %v429
    %v1784 = vunpack.c.h.b16 %v429
    %v1785 = vunpack.c.l.b16 %v430
    %v1786 = vunpack.c.h.b16 %v430
    %v1787 = vunpack.c.l.b16 %v431
    %v1788 = vunpack.c.h.b16 %v431
    %v1789 = vunpack.c.l.b16 %v432
    %v1790 = vunpack.c.h.b16 %v432
    %v1791 = vunpack.c.l.b16 %v433
    %v1792 = vunpack.c.h.b16 %v433
    %v1793 = vunpack.c.l.b16 %v434
    %v1794 = vunpack.c.h.b16 %v434
    %v1795 = vunpack.c.l.b16 %v435
    %v1796 = vunpack.c.h.b16 %v435
    %v1797 = vunpack.c.l.b16 %v436
    %v1798 = vunpack.c.h.b16 %v436
    %v1799 = vunpack.c.l.b16 %v437
    %v1800 = vunpack.c.h.b16 %v437
    %v1801 = vunpack.c.l.b16 %v438
    %v1802 = vunpack.c.h.b16 %v438
    %v1803 = vunpack.c.l.b16 %v439
    %v1804 = vunpack.c.h.b16 %v439
    %v1805 = vunpack.c.l.b16 %v440
    %v1806 = vunpack.c.h.b16 %v440
    %v1807 = vunpack.c.l.b16 %v441
    %v1808 = vunpack.c.h.b16 %v441
    %v1809 = vunpack.c.l.b16 %v442
    %v1810 = vunpack.c.h.b16 %v442
    %v1811 = vunpack.c.l.b16 %v443
    %v1812 = vunpack.c.h.b16 %v443
    %v1813 = vunpack.c.l.b16 %v444
    %v1814 = vunpack.c.h.b16 %v444
    %v1815 = vunpack.c.l.b16 %v445
    %v1816 = vunpack.c.h.b16 %v445
    %v1817 = vunpack.c.l.b16 %v446
    %v1818 = vunpack.c.h.b16 %v446
    %v1819 = vunpack.c.l.b16 %v447
    %v1820 = vunpack.c.h.b16 %v447
    %v1821 = vunpack.c.l.b16 %v448
    %v1822 = vunpack.c.h.b16 %v448
    %v1823 = vunpack.c.l.b16 %v449
    %v1824 = vunpack.c.h.b16 %v449
    %v1825 = vunpack.c.l.b16 %v450
    %v1826 = vunpack.c.h.b16 %v450
    %v1827 = vunpack.c.l.b16 %v451
    %v1828 = vunpack.c.h.b16 %v451
    %v1829 = vunpack.c.l.b16 %v452
    %v1830 = vunpack.c.h.b16 %v452
    %v1831 = vunpack.c.l.b16 %v453
    %v1832 = vunpack.c.h.b16 %v453
    %v1833 = vunpack.c.l.b16 %v454
    %v1834 = vunpack.c.h.b16 %v454
    %v1835 = vunpack.c.l.b16 %v455
    %v1836 = vunpack.c.h.b16 %v455
    %v1837 = vunpack.c.l.b16 %v456
    %v1838 = vunpack.c.h.b16 %v456
    %v1839 = vunpack.c.l.b16 %v457
    %v1840 = vunpack.c.h.b16 %v457
    %v1841 = vunpack.c.l.b16 %v458
    %v1842 = vunpack.c.h.b16 %v458
    %v1843 = vunpack.c.l.b16 %v459
    %v1844 = vunpack.c.h.b16 %v459
    %v1845 = vunpack.c.l.b16 %v460
    %v1846 = vunpack.c.h.b16 %v460
    %v1847 = vunpack.c.l.b16 %v461
    %v1848 = vunpack.c.h.b16 %v461
    %v1849 = vunpack.c.l.b16 %v462
    %v1850 = vunpack.c.h.b16 %v462
    %v1851 = vunpack.c.l.b16 %v463
    %v1852 = vunpack.c.h.b16 %v463
    %v1853 = vunpack.c.l.b16 %v464
    %v1854 = vunpack.c.h.b16 %v464
    %v1855 = vunpack.c.l.b16 %v465
    %v1856 = vunpack.c.h.b16 %v465
    %v1857 = vunpack.c.l.b16 %v466
    %v1858 = vunpack.c.h.b16 %v466
    %v1859 = vunpack.c.l.b16 %v467
    %v1860 = vunpack.c.h.b16 %v467
    %v1861 = vunpack.c.l.b16 %v468
    %v1862 = vunpack.c.h.b16 %v468
    %v1863 = vunpack.c.l.b16 %v469
    %v1864 = vunpack.c.h.b16 %v469
    %v1865 = vunpack.c.l.b16 %v470
    %v1866 = vunpack.c.h.b16 %v470
    %v1867 = vunpack.c.l.b16 %v471
    %v1868 = vunpack.c.h.b16 %v471
    %v1869 = vunpack.c.l.b16 %v472
    %v1870 = vunpack.c.h.b16 %v472
    %v1871 = vunpack.c.l.b16 %v473
    %v1872 = vunpack.c.h.b16 %v473
    %v1873 = vunpack.c.l.b16 %v474
    %v1874 = vunpack.c.h.b16 %v474
    %v1875 = vunpack.c.l.b16 %v475
    %v1876 = vunpack.c.h.b16 %v475
    %v1877 = vunpack.c.l.b16 %v476
    %v1878 = vunpack.c.h.b16 %v476
    %v1879 = vunpack.c.l.b16 %v477
    %v1880 = vunpack.c.h.b16 %v477
    %v1881 = vunpack.c.l.b16 %v478
    %v1882 = vunpack.c.h.b16 %v478
    %v1883 = vunpack.c.l.b16 %v479
    %v1884 = vunpack.c.h.b16 %v479
    %v1885 = vunpack.c.l.b16 %v480
    %v1886 = vunpack.c.h.b16 %v480
    %v1887 = vunpack.c.l.b16 %v481
    %v1888 = vunpack.c.h.b16 %v481
    %v1889 = vunpack.c.l.b16 %v482
    %v1890 = vunpack.c.h.b16 %v482
    %v1891 = vunpack.c.l.b16 %v483
    %v1892 = vunpack.c.h.b16 %v483
    %v1893 = vunpack.c.l.b16 %v484
    %v1894 = vunpack.c.h.b16 %v484
    %v1895 = vunpack.c.l.b16 %v485
    %v1896 = vunpack.c.h.b16 %v485
    %v1897 = vunpack.c.l.b16 %v486
    %v1898 = vunpack.c.h.b16 %v486
    %v1899 = vunpack.c.l.b16 %v487
    %v1900 = vunpack.c.h.b16 %v487
    %v1901 = vunpack.c.l.b16 %v488
    %v1902 = vunpack.c.h.b16 %v488
    %v1903 = vunpack.c.l.b16 %v489
    %v1904 = vunpack.c.h.b16 %v489
    %v1905 = vunpack.c.l.b16 %v490
    %v1906 = vunpack.c.h.b16 %v490
    %v1907 = vunpack.c.l.b16 %v491
    %v1908 = vunpack.c.h.b16 %v491
    %v1909 = vunpack.c.l.b16 %v492
    %v1910 = vunpack.c.h.b16 %v492
    %v1911 = vunpack.c.l.b16 %v493
    %v1912 = vunpack.c.h.b16 %v493
    %v1913 = vunpack.c.l.b16 %v494
    %v1914 = vunpack.c.h.b16 %v494
    %v1915 = vunpack.c.l.b16 %v495
    %v1916 = vunpack.c.h.b16 %v495
    %v1917 = vunpack.c.l.b16 %v496
    %v1918 = vunpack.c.h.b16 %v496
    %v1919 = vunpack.c.l.b16 %v497
    %v1920 = vunpack.c.h.b16 %v497
    %v1921 = vunpack.c.l.b16 %v498
    %v1922 = vunpack.c.h.b16 %v498
    %v1923 = vunpack.c.l.b16 %v499
    %v1924 = vunpack.c.h.b16 %v499
    %v1925 = vunpack.c.l.b16 %v500
    %v1926 = vunpack.c.h.b16 %v500
    %v1927 = vunpack.c.l.b16 %v501
    %v1928 = vunpack.c.h.b16 %v501
    %v1929 = vunpack.c.l.b16 %v502
    %v1930 = vunpack.c.h.b16 %v502
    %v1931 = vunpack.c.l.b16 %v503
    %v1932 = vunpack.c.h.b16 %v503
    %v1933 = vunpack.c.l.b16 %v504
    %v1934 = vunpack.c.h.b16 %v504
    %v1935 = vunpack.c.l.b16 %v505
    %v1936 = vunpack.c.h.b16 %v505
    %v1937 = vunpack.c.l.b16 %v506
    %v1938 = vunpack.c.h.b16 %v506
    %v1939 = vunpack.c.l.b16 %v507
    %v1940 = vunpack.c.h.b16 %v507
    %v1941 = vunpack.c.l.b16 %v508
    %v1942 = vunpack.c.h.b16 %v508
    %v1943 = vunpack.c.l.b16 %v509
    %v1944 = vunpack.c.h.b16 %v509
    %v1945 = vunpack.c.l.b16 %v510
    %v1946 = vunpack.c.h.b16 %v510
    %v1947 = vunpack.c.l.b16 %v511
    %v1948 = vunpack.c.h.b16 %v511
    %v1949 = vunpack.c.l.b16 %v512
    %v1950 = vunpack.c.h.b16 %v512
    %v1951 = vunpack.c.l.b16 %v513
    %v1952 = vunpack.c.h.b16 %v513
    %v1953 = vunpack.c.l.b16 %v514
    %v1954 = vunpack.c.h.b16 %v514
    %v1955 = vunpack.c.l.b16 %v515
    %v1956 = vunpack.c.h.b16 %v515
    %v1957 = vunpack.c.l.b16 %v516
    %v1958 = vunpack.c.h.b16 %v516
    %v1959 = vunpack.c.l.b16 %v517
    %v1960 = vunpack.c.h.b16 %v517
    %v1961 = vunpack.c.l.b16 %v518
    %v1962 = vunpack.c.h.b16 %v518
    %v1963 = vunpack.c.l.b16 %v519
    %v1964 = vunpack.c.h.b16 %v519
    %v1965 = vunpack.c.l.b16 %v520
    %v1966 = vunpack.c.h.b16 %v520
    %v1967 = vunpack.c.l.b16 %v521
    %v1968 = vunpack.c.h.b16 %v521
    %v1969 = vunpack.c.l.b16 %v522
    %v1970 = vunpack.c.h.b16 %v522
    %v1971 = vunpack.c.l.b16 %v523
    %v1972 = vunpack.c.h.b16 %v523
    %v1973 = vunpack.c.l.b16 %v524
    %v1974 = vunpack.c.h.b16 %v524
    %v1975 = vunpack.c.l.b16 %v525
    %v1976 = vunpack.c.h.b16 %v525
    %v1977 = vunpack.c.l.b16 %v526
    %v1978 = vunpack.c.h.b16 %v526
    %v1979 = vunpack.c.l.b16 %v527
    %v1980 = vunpack.c.h.b16 %v527
    %v1981 = vunpack.c.l.b16 %v528
    %v1982 = vunpack.c.h.b16 %v528
    %v1983 = vunpack.c.l.b16 %v529
    %v1984 = vunpack.c.h.b16 %v529
    %v1985 = vunpack.c.l.b16 %v530
    %v1986 = vunpack.c.h.b16 %v530
    %v1987 = vunpack.c.l.b16 %v531
    %v1988 = vunpack.c.h.b16 %v531
    %v1989 = vunpack.c.l.b16 %v532
    %v1990 = vunpack.c.h.b16 %v532
    %v1991 = vunpack.c.l.b16 %v533
    %v1992 = vunpack.c.h.b16 %v533
    %v1993 = vunpack.c.l.b16 %v534
    %v1994 = vunpack.c.h.b16 %v534
    %v1995 = vunpack.c.l.b16 %v535
    %v1996 = vunpack.c.h.b16 %v535
    %v1997 = vunpack.c.l.b16 %v536
    %v1998 = vunpack.c.h.b16 %v536
    %v1999 = vunpack.c.l.b16 %v537
    %v2000 = vunpack.c.h.b16 %v537
    %v2001 = vunpack.c.l.b16 %v538
    %v2002 = vunpack.c.h.b16 %v538
    %v2003 = vunpack.c.l.b16 %v539
    %v2004 = vunpack.c.h.b16 %v539
    %v2005 = vunpack.c.l.b16 %v540
    %v2006 = vunpack.c.h.b16 %v540
    %v2007 = vunpack.c.l.b16 %v541
    %v2008 = vunpack.c.h.b16 %v541
    %v2009 = vunpack.c.l.b16 %v542
    %v2010 = vunpack.c.h.b16 %v542
    %v2011 = vunpack.c.l.b16 %v543
    %v2012 = vunpack.c.h.b16 %v543
    %v2013 = vunpack.c.l.b16 %v544
    %v2014 = vunpack.c.h.b16 %v544
    %v2015 = vunpack.c.l.b16 %v545
    %v2016 = vunpack.c.h.b16 %v545
    %v2017 = vunpack.c.l.b16 %v546
    %v2018 = vunpack.c.h.b16 %v546
    %v2019 = vunpack.c.l.b16 %v547
    %v2020 = vunpack.c.h.b16 %v547
    %v2021 = vunpack.c.l.b16 %v548
    %v2022 = vunpack.c.h.b16 %v548
    %v2023 = vunpack.c.l.b16 %v549
    %v2024 = vunpack.c.h.b16 %v549
    %v2025 = vunpack.c.l.b16 %v550
    %v2026 = vunpack.c.h.b16 %v550
    %v2027 = vunpack.c.l.b16 %v551
    %v2028 = vunpack.c.h.b16 %v551
    %v2029 = vunpack.c.l.b16 %v552
    %v2030 = vunpack.c.h.b16 %v552
    %v2031 = vunpack.c.l.b16 %v553
    %v2032 = vunpack.c.h.b16 %v553
    %v2033 = vunpack.c.l.b16 %v554
    %v2034 = vunpack.c.h.b16 %v554
    %v2035 = vunpack.c.l.b16 %v555
    %v2036 = vunpack.c.h.b16 %v555
    %v2037 = vunpack.c.l.b16 %v556
    %v2038 = vunpack.c.h.b16 %v556
    %v2039 = vunpack.c.l.b16 %v557
    %v2040 = vunpack.c.h.b16 %v557
    %v2041 = vunpack.c.l.b16 %v558
    %v2042 = vunpack.c.h.b16 %v558
    %v2043 = vunpack.c.l.b16 %v559
    %v2044 = vunpack.c.h.b16 %v559
    %v2045 = vunpack.c.l.b16 %v560
    %v2046 = vunpack.c.h.b16 %v560
    %v2047 = vunpack.c.l.b16 %v561
    %v2048 = vunpack.c.h.b16 %v561
    %v2049 = vunpack.c.l.b16 %v562
    %v2050 = vunpack.c.h.b16 %v562
    %v2051 = vunpack.c.l.b16 %v563
    %v2052 = vunpack.c.h.b16 %v563
    %v2053 = vunpack.c.l.b16 %v564
    %v2054 = vunpack.c.h.b16 %v564
    %v2055 = vunpack.c.l.b16 %v565
    %v2056 = vunpack.c.h.b16 %v565
    %v2057 = vunpack.c.l.b16 %v566
    %v2058 = vunpack.c.h.b16 %v566
    %v2059 = vunpack.c.l.b16 %v567
    %v2060 = vunpack.c.h.b16 %v567
    %v2061 = vunpack.c.l.b16 %v568
    %v2062 = vunpack.c.h.b16 %v568
    %v2063 = vunpack.c.l.b16 %v569
    %v2064 = vunpack.c.h.b16 %v569
    %v2065 = vunpack.c.l.b16 %v570
    %v2066 = vunpack.c.h.b16 %v570
    %v2067 = vunpack.c.l.b16 %v571
    %v2068 = vunpack.c.h.b16 %v571
    %v2069 = vunpack.c.l.b16 %v572
    %v2070 = vunpack.c.h.b16 %v572
    %v2071 = vunpack.c.l.b16 %v573
    %v2072 = vunpack.c.h.b16 %v573
    %v2073 = vunpack.c.l.b16 %v574
    %v2074 = vunpack.c.h.b16 %v574
    %v2075 = vunpack.c.l.b16 %v575
    %v2076 = vunpack.c.h.b16 %v575
    %v2077 = vunpack.c.l.b16 %v576
    %v2078 = vunpack.c.h.b16 %v576
    %v2079 = vunpack.c.l.b16 %v577
    %v2080 = vunpack.c.h.b16 %v577
    %v2081 = vunpack.c.l.b16 %v578
    %v2082 = vunpack.c.h.b16 %v578
    %v2083 = vunpack.c.l.b16 %v579
    %v2084 = vunpack.c.h.b16 %v579
    %v2085 = vunpack.c.l.b16 %v580
    %v2086 = vunpack.c.h.b16 %v580
    %v2087 = vunpack.c.l.b16 %v581
    %v2088 = vunpack.c.h.b16 %v581
    %v2089 = vunpack.c.l.b16 %v582
    %v2090 = vunpack.c.h.b16 %v582
    %v2091 = vunpack.c.l.b16 %v583
    %v2092 = vunpack.c.h.b16 %v583
    %v2093 = vunpack.c.l.b16 %v584
    %v2094 = vunpack.c.h.b16 %v584
    %v2095 = vunpack.c.l.b16 %v585
    %v2096 = vunpack.c.h.b16 %v585
    %v2097 = vunpack.c.l.b16 %v586
    %v2098 = vunpack.c.h.b16 %v586
    %v2099 = vunpack.c.l.b16 %v587
    %v2100 = vunpack.c.h.b16 %v587
    %v2101 = vunpack.c.l.b16 %v588
    %v2102 = vunpack.c.h.b16 %v588
    %v2103 = vunpack.c.l.b16 %v589
    %v2104 = vunpack.c.h.b16 %v589
    %v2105 = vunpack.c.l.b16 %v590
    %v2106 = vunpack.c.h.b16 %v590
    %v2107 = vunpack.c.l.b16 %v591
    %v2108 = vunpack.c.h.b16 %v591
    %v2109 = vunpack.c.l.b16 %v592
    %v2110 = vunpack.c.h.b16 %v592
    %v2111 = vunpack.c.l.b16 %v593
    %v2112 = vunpack.c.h.b16 %v593
    %v2113 = vunpack.c.l.b16 %v594
    %v2114 = vunpack.c.h.b16 %v594
    %v2115 = vunpack.c.l.b16 %v595
    %v2116 = vunpack.c.h.b16 %v595
    %v2117 = vunpack.c.l.b16 %v596
    %v2118 = vunpack.c.h.b16 %v596
    %v2119 = vunpack.c.l.b16 %v597
    %v2120 = vunpack.c.h.b16 %v597
    %v2121 = vunpack.c.l.b16 %v598
    %v2122 = vunpack.c.h.b16 %v598
    %v2123 = vunpack.c.l.b16 %v599
    %v2124 = vunpack.c.h.b16 %v599
    %v2125 = vunpack.c.l.b16 %v600
    %v2126 = vunpack.c.h.b16 %v600
    %v2127 = vunpack.c.l.b16 %v601
    %v2128 = vunpack.c.h.b16 %v601
    %v2129 = vunpack.c.l.b16 %v602
    %v2130 = vunpack.c.h.b16 %v602
    %v2131 = vunpack.c.l.b16 %v603
    %v2132 = vunpack.c.h.b16 %v603
    %v2133 = vunpack.c.l.b16 %v604
    %v2134 = vunpack.c.h.b16 %v604
    %v2135 = vunpack.c.l.b16 %v605
    %v2136 = vunpack.c.h.b16 %v605
    %v2137 = vunpack.c.l.b16 %v606
    %v2138 = vunpack.c.h.b16 %v606
    %v2139 = vunpack.c.l.b16 %v607
    %v2140 = vunpack.c.h.b16 %v607
    %v2141 = vunpack.c.l.b16 %v608
    %v2142 = vunpack.c.h.b16 %v608
    %v2143 = vunpack.c.l.b16 %v609
    %v2144 = vunpack.c.h.b16 %v609
    %v2145 = vunpack.c.l.b16 %v610
    %v2146 = vunpack.c.h.b16 %v610
    %v2147 = vunpack.c.l.b16 %v611
    %v2148 = vunpack.c.h.b16 %v611
    %v2149 = vunpack.c.l.b16 %v612
    %v2150 = vunpack.c.h.b16 %v612
    %v2151 = vunpack.c.l.b16 %v613
    %v2152 = vunpack.c.h.b16 %v613
    %v2153 = vunpack.c.l.b16 %v614
    %v2154 = vunpack.c.h.b16 %v614
    %v2155 = vunpack.c.l.b16 %v615
    %v2156 = vunpack.c.h.b16 %v615
    %v2157 = vunpack.c.l.b16 %v616
    %v2158 = vunpack.c.h.b16 %v616
    %v2159 = vunpack.c.l.b16 %v617
    %v2160 = vunpack.c.h.b16 %v617
    %v2161 = vunpack.c.l.b16 %v618
    %v2162 = vunpack.c.h.b16 %v618
    %v2163 = vunpack.c.l.b16 %v619
    %v2164 = vunpack.c.h.b16 %v619
    %v2165 = vunpack.c.l.b16 %v620
    %v2166 = vunpack.c.h.b16 %v620
    %v2167 = vunpack.c.l.b16 %v621
    %v2168 = vunpack.c.h.b16 %v621
    %v2169 = vunpack.c.l.b16 %v622
    %v2170 = vunpack.c.h.b16 %v622
    %v2171 = vunpack.c.l.b16 %v623
    %v2172 = vunpack.c.h.b16 %v623
    %v2173 = vunpack.c.l.b16 %v624
    %v2174 = vunpack.c.h.b16 %v624
    %v2175 = vunpack.c.l.b16 %v625
    %v2176 = vunpack.c.h.b16 %v625
    %v2177 = vunpack.c.l.b16 %v626
    %v2178 = vunpack.c.h.b16 %v626
    %v2179 = vunpack.c.l.b16 %v627
    %v2180 = vunpack.c.h.b16 %v627
    %v2181 = vunpack.c.l.b16 %v628
    %v2182 = vunpack.c.h.b16 %v628
    %v2183 = vunpack.c.l.b16 %v629
    %v2184 = vunpack.c.h.b16 %v629
    %v2185 = vunpack.c.l.b16 %v630
    %v2186 = vunpack.c.h.b16 %v630
    %v2187 = vunpack.c.l.b16 %v631
    %v2188 = vunpack.c.h.b16 %v631
    %v2189 = vunpack.c.l.b16 %v632
    %v2190 = vunpack.c.h.b16 %v632
    %v2191 = vunpack.c.l.b16 %v633
    %v2192 = vunpack.c.h.b16 %v633
    %v2193 = vunpack.c.l.b16 %v634
    %v2194 = vunpack.c.h.b16 %v634
    %v2195 = vunpack.c.l.b16 %v635
    %v2196 = vunpack.c.h.b16 %v635
    %v2197 = vunpack.c.l.b16 %v636
    %v2198 = vunpack.c.h.b16 %v636
    %v2199 = vunpack.c.l.b16 %v637
    %v2200 = vunpack.c.h.b16 %v637
    %v2201 = vunpack.c.l.b16 %v638
    %v2202 = vunpack.c.h.b16 %v638
    %v2203 = vunpack.c.l.b16 %v639
    %v2204 = vunpack.c.h.b16 %v639
    %v2205 = vunpack.c.l.b16 %v640
    %v2206 = vunpack.c.h.b16 %v640
    %v2207 = vunpack.c.l.b16 %v641
    %v2208 = vunpack.c.h.b16 %v641
    %v2209 = vunpack.c.l.b16 %v642
    %v2210 = vunpack.c.h.b16 %v642
    %v2211 = vunpack.c.l.b16 %v643
    %v2212 = vunpack.c.h.b16 %v643
    %v2213 = vunpack.c.l.b16 %v644
    %v2214 = vunpack.c.h.b16 %v644
    %v2215 = vunpack.c.l.b16 %v645
    %v2216 = vunpack.c.h.b16 %v645
    %v2217 = vunpack.c.l.b16 %v646
    %v2218 = vunpack.c.h.b16 %v646
    %v2219 = vunpack.c.l.b16 %v647
    %v2220 = vunpack.c.h.b16 %v647
    %v2221 = vunpack.c.l.b16 %v648
    %v2222 = vunpack.c.h.b16 %v648
    %v2223 = vunpack.c.l.b16 %v649
    %v2224 = vunpack.c.h.b16 %v649
    %v2225 = vunpack.c.l.b16 %v650
    %v2226 = vunpack.c.h.b16 %v650
    %v2227 = vunpack.c.l.b16 %v651
    %v2228 = vunpack.c.h.b16 %v651
    %v2229 = vunpack.c.l.b16 %v652
    %v2230 = vunpack.c.h.b16 %v652
    %v2231 = vunpack.c.l.b16 %v653
    %v2232 = vunpack.c.h.b16 %v653
    %v2233 = vunpack.c.l.b16 %v654
    %v2234 = vunpack.c.h.b16 %v654
    %v2235 = vpack.c.b16 %v1219, %v1211
    %v2236 = vpack.c.b16 %v1220, %v1212
    %v2237 = vpack.c.b16 %v1221, %v1213
    %v2238 = vpack.c.b16 %v1222, %v1214
    %v2239 = vpack.c.b16 %v1223, %v1215
    %v2240 = vpack.c.b16 %v1224, %v1216
    %v2241 = vpack.c.b16 %v1225, %v1217
    %v2242 = vpack.c.b16 %v1226, %v1218
    %v2243 = vpack.c.b16 %v1235, %v1227
    %v2244 = vpack.c.b16 %v1236, %v1228
    %v2245 = vpack.c.b16 %v1237, %v1229
    %v2246 = vpack.c.b16 %v1238, %v1230
    %v2247 = vpack.c.b16 %v1239, %v1231
    %v2248 = vpack.c.b16 %v1240, %v1232
    %v2249 = vpack.c.b16 %v1241, %v1233
    %v2250 = vpack.c.b16 %v1242, %v1234
    %v2251 = vpack.c.b16 %v1251, %v1243
    %v2252 = vpack.c.b16 %v1252, %v1244
    %v2253 = vpack.c.b16 %v1253, %v1245
    %v2254 = vpack.c.b16 %v1254, %v1246
    %v2255 = vpack.c.b16 %v1255, %v1247
    %v2256 = vpack.c.b16 %v1256, %v1248
    %v2257 = vpack.c.b16 %v1257, %v1249
    %v2258 = vpack.c.b16 %v1258, %v1250
    %v2259 = vpack.c.b16 %v1267, %v1259
    %v2260 = vpack.c.b16 %v1268, %v1260
    %v2261 = vpack.c.b16 %v1269, %v1261
    %v2262 = vpack.c.b16 %v1270, %v1262
    %v2263 = vpack.c.b16 %v1271, %v1263
    %v2264 = vpack.c.b16 %v1272, %v1264
    %v2265 = vpack.c.b16 %v1273, %v1265
    %v2266 = vpack.c.b16 %v1274, %v1266
    %v2267 = vpack.c.b16 %v1283, %v1275
    %v2268 = vpack.c.b16 %v1284, %v1276
    %v2269 = vpack.c.b16 %v1285, %v1277
    %v2270 = vpack.c.b16 %v1286, %v1278
    %v2271 = vpack.c.b16 %v1287, %v1279
    %v2272 = vpack.c.b16 %v1288, %v1280
    %v2273 = vpack.c.b16 %v1289, %v1281
    %v2274 = vpack.c.b16 %v1290, %v1282
    %v2275 = vpack.c.b16 %v1299, %v1291
    %v2276 = vpack.c.b16 %v1300, %v1292
    %v2277 = vpack.c.b16 %v1301, %v1293
    %v2278 = vpack.c.b16 %v1302, %v1294
    %v2279 = vpack.c.b16 %v1303, %v1295
    %v2280 = vpack.c.b16 %v1304, %v1296
    %v2281 = vpack.c.b16 %v1305, %v1297
    %v2282 = vpack.c.b16 %v1306, %v1298
    %v2283 = vpack.c.b16 %v1315, %v1307
    %v2284 = vpack.c.b16 %v1316, %v1308
    %v2285 = vpack.c.b16 %v1317, %v1309
    %v2286 = vpack.c.b16 %v1318, %v1310
    %v2287 = vpack.c.b16 %v1319, %v1311
    %v2288 = vpack.c.b16 %v1320, %v1312
    %v2289 = vpack.c.b16 %v1321, %v1313
    %v2290 = vpack.c.b16 %v1322, %v1314
    %v2291 = vpack.c.b16 %v1331, %v1323
    %v2292 = vpack.c.b16 %v1332, %v1324
    %v2293 = vpack.c.b16 %v1333, %v1325
    %v2294 = vpack.c.b16 %v1334, %v1326
    %v2295 = vpack.c.b16 %v1335, %v1327
    %v2296 = vpack.c.b16 %v1336, %v1328
    %v2297 = vpack.c.b16 %v1337, %v1329
    %v2298 = vpack.c.b16 %v1338, %v1330
    %v2299 = vpack.c.b16 %v1347, %v1339
    %v2300 = vpack.c.b16 %v1348, %v1340
    %v2301 = vpack.c.b16 %v1349, %v1341
    %v2302 = vpack.c.b16 %v1350, %v1342
    %v2303 = vpack.c.b16 %v1351, %v1343
    %v2304 = vpack.c.b16 %v1352, %v1344
    %v2305 = vpack.c.b16 %v1353, %v1345
    %v2306 = vpack.c.b16 %v1354, %v1346
    %v2307 = vpack.c.b16 %v1363, %v1355
    %v2308 = vpack.c.b16 %v1364, %v1356
    %v2309 = vpack.c.b16 %v1365, %v1357
    %v2310 = vpack.c.b16 %v1366, %v1358
    %v2311 = vpack.c.b16 %v1367, %v1359
    %v2312 = vpack.c.b16 %v1368, %v1360
    %v2313 = vpack.c.b16 %v1369, %v1361
    %v2314 = vpack.c.b16 %v1370, %v1362
    %v2315 = vpack.c.b16 %v1379, %v1371
    %v2316 = vpack.c.b16 %v1380, %v1372
    %v2317 = vpack.c.b16 %v1381, %v1373
    %v2318 = vpack.c.b16 %v1382, %v1374
    %v2319 = vpack.c.b16 %v1383, %v1375
    %v2320 = vpack.c.b16 %v1384, %v1376
    %v2321 = vpack.c.b16 %v1385, %v1377
    %v2322 = vpack.c.b16 %v1386, %v1378
    %v2323 = vpack.c.b16 %v1395, %v1387
    %v2324 = vpack.c.b16 %v1396, %v1388
    %v2325 = vpack.c.b16 %v1397, %v1389
    %v2326 = vpack.c.b16 %v1398, %v1390
    %v2327 = vpack.c.b16 %v1399, %v1391
    %v2328 = vpack.c.b16 %v1400, %v1392
    %v2329 = vpack.c.b16 %v1401, %v1393
    %v2330 = vpack.c.b16 %v1402, %v1394
    %v2331 = vpack.c.b16 %v1411, %v1403
    %v2332 = vpack.c.b16 %v1412, %v1404
    %v2333 = vpack.c.b16 %v1413, %v1405
    %v2334 = vpack.c.b16 %v1414, %v1406
    %v2335 = vpack.c.b16 %v1415, %v1407
    %v2336 = vpack.c.b16 %v1416, %v1408
    %v2337 = vpack.c.b16 %v1417, %v1409
    %v2338 = vpack.c.b16 %v1418, %v1410
    %v2339 = vpack.c.b16 %v1427, %v1419
    %v2340 = vpack.c.b16 %v1428, %v1420
    %v2341 = vpack.c.b16 %v1429, %v1421
    %v2342 = vpack.c.b16 %v1430, %v1422
    %v2343 = vpack.c.b16 %v1431, %v1423
    %v2344 = vpack.c.b16 %v1432, %v1424
    %v2345 = vpack.c.b16 %v1433, %v1425
    %v2346 = vpack.c.b16 %v1434, %v1426
    %v2347 = vpack.c.b16 %v1443, %v1435
    %v2348 = vpack.c.b16 %v1444, %v1436
    %v2349 = vpack.c.b16 %v1445, %v1437
    %v2350 = vpack.c.b16 %v1446, %v1438
    %v2351 = vpack.c.b16 %v1447, %v1439
    %v2352 = vpack.c.b16 %v1448, %v1440
    %v2353 = vpack.c.b16 %v1449, %v1441
    %v2354 = vpack.c.b16 %v1450, %v1442
    %v2355 = vpack.c.b16 %v1459, %v1451
    %v2356 = vpack.c.b16 %v1460, %v1452
    %v2357 = vpack.c.b16 %v1461, %v1453
    %v2358 = vpack.c.b16 %v1462, %v1454
    %v2359 = vpack.c.b16 %v1463, %v1455
    %v2360 = vpack.c.b16 %v1464, %v1456
    %v2361 = vpack.c.b16 %v1465, %v1457
    %v2362 = vpack.c.b16 %v1466, %v1458
    %v2363 = vpack.c.b16 %v1475, %v1467
    %v2364 = vpack.c.b16 %v1476, %v1468
    %v2365 = vpack.c.b16 %v1477, %v1469
    %v2366 = vpack.c.b16 %v1478, %v1470
    %v2367 = vpack.c.b16 %v1479, %v1471
    %v2368 = vpack.c.b16 %v1480, %v1472
    %v2369 = vpack.c.b16 %v1481, %v1473
    %v2370 = vpack.c.b16 %v1482, %v1474
    %v2371 = vpack.c.b16 %v1491, %v1483
    %v2372 = vpack.c.b16 %v1492, %v1484
    %v2373 = vpack.c.b16 %v1493, %v1485
    %v2374 = vpack.c.b16 %v1494, %v1486
    %v2375 = vpack.c.b16 %v1495, %v1487
    %v2376 = vpack.c.b16 %v1496, %v1488
    %v2377 = vpack.c.b16 %v1497, %v1489
    %v2378 = vpack.c.b16 %v1498, %v1490
    %v2379 = vpack.c.b16 %v1507, %v1499
    %v2380 = vpack.c.b16 %v1508, %v1500
    %v2381 = vpack.c.b16 %v1509, %v1501
    %v2382 = vpack.c.b16 %v1510, %v1502
    %v2383 = vpack.c.b16 %v1511, %v1503
    %v2384 = vpack.c.b16 %v1512, %v1504
    %v2385 = vpack.c.b16 %v1513, %v1505
    %v2386 = vpack.c.b16 %v1514, %v1506
    %v2387 = vpack.c.b16 %v1523, %v1515
    %v2388 = vpack.c.b16 %v1524, %v1516
    %v2389 = vpack.c.b16 %v1525, %v1517
    %v2390 = vpack.c.b16 %v1526, %v1518
    %v2391 = vpack.c.b16 %v1527, %v1519
    %v2392 = vpack.c.b16 %v1528, %v1520
    %v2393 = vpack.c.b16 %v1529, %v1521
    %v2394 = vpack.c.b16 %v1530, %v1522
    %v2395 = vpack.c.b16 %v1539, %v1531
    %v2396 = vpack.c.b16 %v1540, %v1532
    %v2397 = vpack.c.b16 %v1541, %v1533
    %v2398 = vpack.c.b16 %v1542, %v1534
    %v2399 = vpack.c.b16 %v1543, %v1535
    %v2400 = vpack.c.b16 %v1544, %v1536
    %v2401 = vpack.c.b16 %v1545, %v1537
    %v2402 = vpack.c.b16 %v1546, %v1538
    %v2403 = vpack.c.b16 %v1555, %v1547
    %v2404 = vpack.c.b16 %v1556, %v1548
    %v2405 = vpack.c.b16 %v1557, %v1549
    %v2406 = vpack.c.b16 %v1558, %v1550
    %v2407 = vpack.c.b16 %v1559, %v1551
    %v2408 = vpack.c.b16 %v1560, %v1552
    %v2409 = vpack.c.b16 %v1561, %v1553
    %v2410 = vpack.c.b16 %v1562, %v1554
    %v2411 = vpack.c.b16 %v1571, %v1563
    %v2412 = vpack.c.b16 %v1572, %v1564
    %v2413 = vpack.c.b16 %v1573, %v1565
    %v2414 = vpack.c.b16 %v1574, %v1566
    %v2415 = vpack.c.b16 %v1575, %v1567
    %v2416 = vpack.c.b16 %v1576, %v1568
    %v2417 = vpack.c.b16 %v1577, %v1569
    %v2418 = vpack.c.b16 %v1578, %v1570
    %v2419 = vpack.c.b16 %v1587, %v1579
    %v2420 = vpack.c.b16 %v1588, %v1580
    %v2421 = vpack.c.b16 %v1589, %v1581
    %v2422 = vpack.c.b16 %v1590, %v1582
    %v2423 = vpack.c.b16 %v1591, %v1583
    %v2424 = vpack.c.b16 %v1592, %v1584
    %v2425 = vpack.c.b16 %v1593, %v1585
    %v2426 = vpack.c.b16 %v1594, %v1586
    %v2427 = vpack.c.b16 %v1603, %v1595
    %v2428 = vpack.c.b16 %v1604, %v1596
    %v2429 = vpack.c.b16 %v1605, %v1597
    %v2430 = vpack.c.b16 %v1606, %v1598
    %v2431 = vpack.c.b16 %v1607, %v1599
    %v2432 = vpack.c.b16 %v1608, %v1600
    %v2433 = vpack.c.b16 %v1609, %v1601
    %v2434 = vpack.c.b16 %v1610, %v1602
    %v2435 = vpack.c.b16 %v1619, %v1611
    %v2436 = vpack.c.b16 %v1620, %v1612
    %v2437 = vpack.c.b16 %v1621, %v1613
    %v2438 = vpack.c.b16 %v1622, %v1614
    %v2439 = vpack.c.b16 %v1623, %v1615
    %v2440 = vpack.c.b16 %v1624, %v1616
    %v2441 = vpack.c.b16 %v1625, %v1617
    %v2442 = vpack.c.b16 %v1626, %v1618
    %v2443 = vpack.c.b16 %v1635, %v1627
    %v2444 = vpack.c.b16 %v1636, %v1628
    %v2445 = vpack.c.b16 %v1637, %v1629
    %v2446 = vpack.c.b16 %v1638, %v1630
    %v2447 = vpack.c.b16 %v1639, %v1631
    %v2448 = vpack.c.b16 %v1640, %v1632
    %v2449 = vpack.c.b16 %v1641, %v1633
    %v2450 = vpack.c.b16 %v1642, %v1634
    %v2451 = vpack.c.b16 %v1651, %v1643
    %v2452 = vpack.c.b16 %v1652, %v1644
    %v2453 = vpack.c.b16 %v1653, %v1645
    %v2454 = vpack.c.b16 %v1654, %v1646
    %v2455 = vpack.c.b16 %v1655, %v1647
    %v2456 = vpack.c.b16 %v1656, %v1648
    %v2457 = vpack.c.b16 %v1657, %v1649
    %v2458 = vpack.c.b16 %v1658, %v1650
    %v2459 = vpack.c.b16 %v1667, %v1659
    %v2460 = vpack.c.b16 %v1668, %v1660
    %v2461 = vpack.c.b16 %v1669, %v1661
    %v2462 = vpack.c.b16 %v1670, %v1662
    %v2463 = vpack.c.b16 %v1671, %v1663
    %v2464 = vpack.c.b16 %v1672, %v1664
    %v2465 = vpack.c.b16 %v1673, %v1665
    %v2466 = vpack.c.b16 %v1674, %v1666
    %v2467 = vpack.c.b16 %v1683, %v1675
    %v2468 = vpack.c.b16 %v1684, %v1676
    %v2469 = vpack.c.b16 %v1685, %v1677
    %v2470 = vpack.c.b16 %v1686, %v1678
    %v2471 = vpack.c.b16 %v1687, %v1679
    %v2472 = vpack.c.b16 %v1688, %v1680
    %v2473 = vpack.c.b16 %v1689, %v1681
    %v2474 = vpack.c.b16 %v1690, %v1682
    %v2475 = vpack.c.b16 %v1699, %v1691
    %v2476 = vpack.c.b16 %v1700, %v1692
    %v2477 = vpack.c.b16 %v1701, %v1693
    %v2478 = vpack.c.b16 %v1702, %v1694
    %v2479 = vpack.c.b16 %v1703, %v1695
    %v2480 = vpack.c.b16 %v1704, %v1696
    %v2481 = vpack.c.b16 %v1705, %v1697
    %v2482 = vpack.c.b16 %v1706, %v1698
    %v2483 = vpack.c.b16 %v1715, %v1707
    %v2484 = vpack.c.b16 %v1716, %v1708
    %v2485 = vpack.c.b16 %v1717, %v1709
    %v2486 = vpack.c.b16 %v1718, %v1710
    %v2487 = vpack.c.b16 %v1719, %v1711
    %v2488 = vpack.c.b16 %v1720, %v1712
    %v2489 = vpack.c.b16 %v1721, %v1713
    %v2490 = vpack.c.b16 %v1722, %v1714
    %v2491 = vpack.c.b16 %v1731, %v1723
    %v2492 = vpack.c.b16 %v1732, %v1724
    %v2493 = vpack.c.b16 %v1733, %v1725
    %v2494 = vpack.c.b16 %v1734, %v1726
    %v2495 = vpack.c.b16 %v1735, %v1727
    %v2496 = vpack.c.b16 %v1736, %v1728
    %v2497 = vpack.c.b16 %v1737, %v1729
    %v2498 = vpack.c.b16 %v1738, %v1730
    %v2499 = vpack.c.b16 %v1747, %v1739
    %v2500 = vpack.c.b16 %v1748, %v1740
    %v2501 = vpack.c.b16 %v1749, %v1741
    %v2502 = vpack.c.b16 %v1750, %v1742
    %v2503 = vpack.c.b16 %v1751, %v1743
    %v2504 = vpack.c.b16 %v1752, %v1744
    %v2505 = vpack.c.b16 %v1753, %v1745
    %v2506 = vpack.c.b16 %v1754, %v1746
    %v2507 = vpack.c.b16 %v1763, %v1755
    %v2508 = vpack.c.b16 %v1764, %v1756
    %v2509 = vpack.c.b16 %v1765, %v1757
    %v2510 = vpack.c.b16 %v1766, %v1758
    %v2511 = vpack.c.b16 %v1767, %v1759
    %v2512 = vpack.c.b16 %v1768, %v1760
    %v2513 = vpack.c.b16 %v1769, %v1761
    %v2514 = vpack.c.b16 %v1770, %v1762
    %v2515 = vpack.c.b16 %v1779, %v1771
    %v2516 = vpack.c.b16 %v1780, %v1772
    %v2517 = vpack.c.b16 %v1781, %v1773
    %v2518 = vpack.c.b16 %v1782, %v1774
    %v2519 = vpack.c.b16 %v1783, %v1775
    %v2520 = vpack.c.b16 %v1784, %v1776
    %v2521 = vpack.c.b16 %v1785, %v1777
    %v2522 = vpack.c.b16 %v1786, %v1778
    %v2523 = vpack.c.b16 %v1795, %v1787
    %v2524 = vpack.c.b16 %v1796, %v1788
    %v2525 = vpack.c.b16 %v1797, %v1789
    %v2526 = vpack.c.b16 %v1798, %v1790
    %v2527 = vpack.c.b16 %v1799, %v1791
    %v2528 = vpack.c.b16 %v1800, %v1792
    %v2529 = vpack.c.b16 %v1801, %v1793
    %v2530 = vpack.c.b16 %v1802, %v1794
    %v2531 = vpack.c.b16 %v1811, %v1803
    %v2532 = vpack.c.b16 %v1812, %v1804
    %v2533 = vpack.c.b16 %v1813, %v1805
    %v2534 = vpack.c.b16 %v1814, %v1806
    %v2535 = vpack.c.b16 %v1815, %v1807
    %v2536 = vpack.c.b16 %v1816, %v1808
    %v2537 = vpack.c.b16 %v1817, %v1809
    %v2538 = vpack.c.b16 %v1818, %v1810
    %v2539 = vpack.c.b16 %v1827, %v1819
    %v2540 = vpack.c.b16 %v1828, %v1820
    %v2541 = vpack.c.b16 %v1829, %v1821
    %v2542 = vpack.c.b16 %v1830, %v1822
    %v2543 = vpack.c.b16 %v1831, %v1823
    %v2544 = vpack.c.b16 %v1832, %v1824
    %v2545 = vpack.c.b16 %v1833, %v1825
    %v2546 = vpack.c.b16 %v1834, %v1826
    %v2547 = vpack.c.b16 %v1843, %v1835
    %v2548 = vpack.c.b16 %v1844, %v1836
    %v2549 = vpack.c.b16 %v1845, %v1837
    %v2550 = vpack.c.b16 %v1846, %v1838
    %v2551 = vpack.c.b16 %v1847, %v1839
    %v2552 = vpack.c.b16 %v1848, %v1840
    %v2553 = vpack.c.b16 %v1849, %v1841
    %v2554 = vpack.c.b16 %v1850, %v1842
    %v2555 = vpack.c.b16 %v1859, %v1851
    %v2556 = vpack.c.b16 %v1860, %v1852
    %v2557 = vpack.c.b16 %v1861, %v1853
    %v2558 = vpack.c.b16 %v1862, %v1854
    %v2559 = vpack.c.b16 %v1863, %v1855
    %v2560 = vpack.c.b16 %v1864, %v1856
    %v2561 = vpack.c.b16 %v1865, %v1857
    %v2562 = vpack.c.b16 %v1866, %v1858
    %v2563 = vpack.c.b16 %v1875, %v1867
    %v2564 = vpack.c.b16 %v1876, %v1868
    %v2565 = vpack.c.b16 %v1877, %v1869
    %v2566 = vpack.c.b16 %v1878, %v1870
    %v2567 = vpack.c.b16 %v1879, %v1871
    %v2568 = vpack.c.b16 %v1880, %v1872
    %v2569 = vpack.c.b16 %v1881, %v1873
    %v2570 = vpack.c.b16 %v1882, %v1874
    %v2571 = vpack.c.b16 %v1891, %v1883
    %v2572 = vpack.c.b16 %v1892, %v1884
    %v2573 = vpack.c.b16 %v1893, %v1885
    %v2574 = vpack.c.b16 %v1894, %v1886
    %v2575 = vpack.c.b16 %v1895, %v1887
    %v2576 = vpack.c.b16 %v1896, %v1888
    %v2577 = vpack.c.b16 %v1897, %v1889
    %v2578 = vpack.c.b16 %v1898, %v1890
    %v2579 = vpack.c.b16 %v1907, %v1899
    %v2580 = vpack.c.b16 %v1908, %v1900
    %v2581 = vpack.c.b16 %v1909, %v1901
    %v2582 = vpack.c.b16 %v1910, %v1902
    %v2583 = vpack.c.b16 %v1911, %v1903
    %v2584 = vpack.c.b16 %v1912, %v1904
    %v2585 = vpack.c.b16 %v1913, %v1905
    %v2586 = vpack.c.b16 %v1914, %v1906
    %v2587 = vpack.c.b16 %v1923, %v1915
    %v2588 = vpack.c.b16 %v1924, %v1916
    %v2589 = vpack.c.b16 %v1925, %v1917
    %v2590 = vpack.c.b16 %v1926, %v1918
    %v2591 = vpack.c.b16 %v1927, %v1919
    %v2592 = vpack.c.b16 %v1928, %v1920
    %v2593 = vpack.c.b16 %v1929, %v1921
    %v2594 = vpack.c.b16 %v1930, %v1922
    %v2595 = vpack.c.b16 %v1939, %v1931
    %v2596 = vpack.c.b16 %v1940, %v1932
    %v2597 = vpack.c.b16 %v1941, %v1933
    %v2598 = vpack.c.b16 %v1942, %v1934
    %v2599 = vpack.c.b16 %v1943, %v1935
    %v2600 = vpack.c.b16 %v1944, %v1936
    %v2601 = vpack.c.b16 %v1945, %v1937
    %v2602 = vpack.c.b16 %v1946, %v1938
    %v2603 = vpack.c.b16 %v1955, %v1947
    %v2604 = vpack.c.b16 %v1956, %v1948
    %v2605 = vpack.c.b16 %v1957, %v1949
    %v2606 = vpack.c.b16 %v1958, %v1950
    %v2607 = vpack.c.b16 %v1959, %v1951
    %v2608 = vpack.c.b16 %v1960, %v1952
    %v2609 = vpack.c.b16 %v1961, %v1953
    %v2610 = vpack.c.b16 %v1962, %v1954
    %v2611 = vpack.c.b16 %v1971, %v1963
    %v2612 = vpack.c.b16 %v1972, %v1964
    %v2613 = vpack.c.b16 %v1973, %v1965
    %v2614 = vpack.c.b16 %v1974, %v1966
    %v2615 = vpack.c.b16 %v1975, %v1967
    %v2616 = vpack.c.b16 %v1976, %v1968
    %v2617 = vpack.c.b16 %v1977, %v1969
    %v2618 = vpack.c.b16 %v1978, %v1970
    %v2619 = vpack.c.b16 %v1987, %v1979
    %v2620 = vpack.c.b16 %v1988, %v1980
    %v2621 = vpack.c.b16 %v1989, %v1981
    %v2622 = vpack.c.b16 %v1990, %v1982
    %v2623 = vpack.c.b16 %v1991, %v1983
    %v2624 = vpack.c.b16 %v1992, %v1984
    %v2625 = vpack.c.b16 %v1993, %v1985
    %v2626 = vpack.c.b16 %v1994, %v1986
    %v2627 = vpack.c.b16 %v2003, %v1995
    %v2628 = vpack.c.b16 %v2004, %v1996
    %v2629 = vpack.c.b16 %v2005, %v1997
    %v2630 = vpack.c.b16 %v2006, %v1998
    %v2631 = vpack.c.b16 %v2007, %v1999
    %v2632 = vpack.c.b16 %v2008, %v2000
    %v2633 = vpack.c.b16 %v2009, %v2001
    %v2634 = vpack.c.b16 %v2010, %v2002
    %v2635 = vpack.c.b16 %v2019, %v2011
    %v2636 = vpack.c.b16 %v2020, %v2012
    %v2637 = vpack.c.b16 %v2021, %v2013
    %v2638 = vpack.c.b16 %v2022, %v2014
    %v2639 = vpack.c.b16 %v2023, %v2015
    %v2640 = vpack.c.b16 %v2024, %v2016
    %v2641 = vpack.c.b16 %v2025, %v2017
    %v2642 = vpack.c.b16 %v2026, %v2018
    %v2643 = vpack.c.b16 %v2035, %v2027
    %v2644 = vpack.c.b16 %v2036, %v2028
    %v2645 = vpack.c.b16 %v2037, %v2029
    %v2646 = vpack.c.b16 %v2038, %v2030
    %v2647 = vpack.c.b16 %v2039, %v2031
    %v2648 = vpack.c.b16 %v2040, %v2032
    %v2649 = vpack.c.b16 %v2041, %v2033
    %v2650 = vpack.c.b16 %v2042, %v2034
    %v2651 = vpack.c.b16 %v2051, %v2043
    %v2652 = vpack.c.b16 %v2052, %v2044
    %v2653 = vpack.c.b16 %v2053, %v2045
    %v2654 = vpack.c.b16 %v2054, %v2046
    %v2655 = vpack.c.b16 %v2055, %v2047
    %v2656 = vpack.c.b16 %v2056, %v2048
    %v2657 = vpack.c.b16 %v2057, %v2049
    %v2658 = vpack.c.b16 %v2058, %v2050
    %v2659 = vpack.c.b16 %v2067, %v2059
    %v2660 = vpack.c.b16 %v2068, %v2060
    %v2661 = vpack.c.b16 %v2069, %v2061
    %v2662 = vpack.c.b16 %v2070, %v2062
    %v2663 = vpack.c.b16 %v2071, %v2063
    %v2664 = vpack.c.b16 %v2072, %v2064
    %v2665 = vpack.c.b16 %v2073, %v2065
    %v2666 = vpack.c.b16 %v2074, %v2066
    %v2667 = vpack.c.b16 %v2083, %v2075
    %v2668 = vpack.c.b16 %v2084, %v2076
    %v2669 = vpack.c.b16 %v2085, %v2077
    %v2670 = vpack.c.b16 %v2086, %v2078
    %v2671 = vpack.c.b16 %v2087, %v2079
    %v2672 = vpack.c.b16 %v2088, %v2080
    %v2673 = vpack.c.b16 %v2089, %v2081
    %v2674 = vpack.c.b16 %v2090, %v2082
    %v2675 = vpack.c.b16 %v2099, %v2091
    %v2676 = vpack.c.b16 %v2100, %v2092
    %v2677 = vpack.c.b16 %v2101, %v2093
    %v2678 = vpack.c.b16 %v2102, %v2094
    %v2679 = vpack.c.b16 %v2103, %v2095
    %v2680 = vpack.c.b16 %v2104, %v2096
    %v2681 = vpack.c.b16 %v2105, %v2097
    %v2682 = vpack.c.b16 %v2106, %v2098
    %v2683 = vpack.c.b16 %v2115, %v2107
    %v2684 = vpack.c.b16 %v2116, %v2108
    %v2685 = vpack.c.b16 %v2117, %v2109
    %v2686 = vpack.c.b16 %v2118, %v2110
    %v2687 = vpack.c.b16 %v2119, %v2111
    %v2688 = vpack.c.b16 %v2120, %v2112
    %v2689 = vpack.c.b16 %v2121, %v2113
    %v2690 = vpack.c.b16 %v2122, %v2114
    %v2691 = vpack.c.b16 %v2131, %v2123
    %v2692 = vpack.c.b16 %v2132, %v2124
    %v2693 = vpack.c.b16 %v2133, %v2125
    %v2694 = vpack.c.b16 %v2134, %v2126
    %v2695 = vpack.c.b16 %v2135, %v2127
    %v2696 = vpack.c.b16 %v2136, %v2128
    %v2697 = vpack.c.b16 %v2137, %v2129
    %v2698 = vpack.c.b16 %v2138, %v2130
    %v2699 = vpack.c.b16 %v2147, %v2139
    %v2700 = vpack.c.b16 %v2148, %v2140
    %v2701 = vpack.c.b16 %v2149, %v2141
    %v2702 = vpack.c.b16 %v2150, %v2142
    %v2703 = vpack.c.b16 %v2151, %v2143
    %v2704 = vpack.c.b16 %v2152, %v2144
    %v2705 = vpack.c.b16 %v2153, %v2145
    %v2706 = vpack.c.b16 %v2154, %v2146
    %v2707 = vpack.c.b16 %v2163, %v2155
    %v2708 = vpack.c.b16 %v2164, %v2156
    %v2709 = vpack.c.b16 %v2165, %v2157
    %v2710 = vpack.c.b16 %v2166, %v2158
    %v2711 = vpack.c.b16 %v2167, %v2159
    %v2712 = vpack.c.b16 %v2168, %v2160
    %v2713 = vpack.c.b16 %v2169, %v2161
    %v2714 = vpack.c.b16 %v2170, %v2162
    %v2715 = vpack.c.b16 %v2179, %v2171
    %v2716 = vpack.c.b16 %v2180, %v2172
    %v2717 = vpack.c.b16 %v2181, %v2173
    %v2718 = vpack.c.b16 %v2182, %v2174
    %v2719 = vpack.c.b16 %v2183, %v2175
    %v2720 = vpack.c.b16 %v2184, %v2176
    %v2721 = vpack.c.b16 %v2185, %v2177
    %v2722 = vpack.c.b16 %v2186, %v2178
    %v2723 = vpack.c.b16 %v2195, %v2187
    %v2724 = vpack.c.b16 %v2196, %v2188
    %v2725 = vpack.c.b16 %v2197, %v2189
    %v2726 = vpack.c.b16 %v2198, %v2190
    %v2727 = vpack.c.b16 %v2199, %v2191
    %v2728 = vpack.c.b16 %v2200, %v2192
    %v2729 = vpack.c.b16 %v2201, %v2193
    %v2730 = vpack.c.b16 %v2202, %v2194
    %v2731 = vpack.c.b16 %v2211, %v2203
    %v2732 = vpack.c.b16 %v2212, %v2204
    %v2733 = vpack.c.b16 %v2213, %v2205
    %v2734 = vpack.c.b16 %v2214, %v2206
    %v2735 = vpack.c.b16 %v2215, %v2207
    %v2736 = vpack.c.b16 %v2216, %v2208
    %v2737 = vpack.c.b16 %v2217, %v2209
    %v2738 = vpack.c.b16 %v2218, %v2210
    %v2739 = vpack.c.b16 %v2227, %v2219
    %v2740 = vpack.c.b16 %v2228, %v2220
    %v2741 = vpack.c.b16 %v2229, %v2221
    %v2742 = vpack.c.b16 %v2230, %v2222
    %v2743 = vpack.c.b16 %v2231, %v2223
    %v2744 = vpack.c.b16 %v2232, %v2224
    %v2745 = vpack.c.b16 %v2233, %v2225
    %v2746 = vpack.c.b16 %v2234, %v2226
    %3259 = vmatprep.subr.bf16.mxu0 %v2236
    %3260 = vmatpush1.bf16.msra.mxu0 %v2235
    %3261 = vmatprep.subr.bf16.mxu0 %v2244
    %3262 = vmatpush1.bf16.msra.mxu0 %v2243
    %3263 = vmatprep.subr.bf16.mxu0 %v2252
    %3264 = vmatpush1.bf16.msra.mxu0 %v2251
    %3265 = vmatprep.subr.bf16.mxu0 %v2260
    %3266 = vmatpush1.bf16.msra.mxu0 %v2259
    %3267 = vmatprep.subr.bf16.mxu0 %v2268
    %3268 = vmatpush1.bf16.msra.mxu0 %v2267
    %3269 = vmatprep.subr.bf16.mxu0 %v2276
    %3270 = vmatpush1.bf16.msra.mxu0 %v2275
    %3271 = vmatprep.subr.bf16.mxu0 %v2284
    %3272 = vmatpush1.bf16.msra.mxu0 %v2283
    %3273 = vmatprep.subr.bf16.mxu0 %v2292
    %3274 = vmatpush1.bf16.msra.mxu0 %v2291
    %3275 = vmatprep.subr.bf16.mxu0 %v2300
    %3276 = vmatpush1.bf16.msra.mxu0 %v2299
    %3277 = vmatprep.subr.bf16.mxu0 %v2308
    %3278 = vmatpush1.bf16.msra.mxu0 %v2307
    %3279 = vmatprep.subr.bf16.mxu0 %v2316
    %3280 = vmatpush1.bf16.msra.mxu0 %v2315
    %3281 = vmatprep.subr.bf16.mxu0 %v2324
    %3282 = vmatpush1.bf16.msra.mxu0 %v2323
    %3283 = vmatprep.subr.bf16.mxu0 %v2332
    %3284 = vmatpush1.bf16.msra.mxu0 %v2331
    %3285 = vmatprep.subr.bf16.mxu0 %v2340
    %3286 = vmatpush1.bf16.msra.mxu0 %v2339
    %3287 = vmatprep.subr.bf16.mxu0 %v2348
    %3288 = vmatpush1.bf16.msra.mxu0 %v2347
    %3289 = vmatprep.subr.bf16.mxu0 %v2356
    %3290 = vmatpush1.bf16.msra.mxu0 %v2355
    %3291 = vmatprep.mubr.bf16.mxu0 %v136
    %3292 = vmatmul.mubr.bf16.gmra.mrb[0].mxu0 %v135
    %v3293 = vpop.f32.mrb[0].mxu0
    %v3294 = vadd.f32 %v662, %v3293
    %v3295 = vpop.f32.mrb[0].mxu0
    %v3296 = vadd.f32 %v666, %v3295
    %v3297 = vpop.f32.mrb[0].mxu0
    %v3298 = vadd.f32 %v662, %v3297
    %v3299 = vpop.f32.mrb[0].mxu0
    %v3300 = vadd.f32 %v666, %v3299
    %3301 = vdwg.mxu0
    %3302 = vmatprep.subr.bf16.mxu0 %v2364
    %3303 = vmatpush1.bf16.msra.mxu0 %v2363
    %3304 = vmatprep.subr.bf16.mxu0 %v2372
    %3305 = vmatpush1.bf16.msra.mxu0 %v2371
    %3306 = vmatprep.subr.bf16.mxu0 %v2380
    %3307 = vmatpush1.bf16.msra.mxu0 %v2379
    %3308 = vmatprep.subr.bf16.mxu0 %v2388
    %3309 = vmatpush1.bf16.msra.mxu0 %v2387
    %3310 = vmatprep.subr.bf16.mxu0 %v2396
    %3311 = vmatpush1.bf16.msra.mxu0 %v2395
    %3312 = vmatprep.subr.bf16.mxu0 %v2404
    %3313 = vmatpush1.bf16.msra.mxu0 %v2403
    %3314 = vmatprep.subr.bf16.mxu0 %v2412
    %3315 = vmatpush1.bf16.msra.mxu0 %v2411
    %3316 = vmatprep.subr.bf16.mxu0 %v2420
    %3317 = vmatpush1.bf16.msra.mxu0 %v2419
    %3318 = vmatprep.subr.bf16.mxu0 %v2428
    %3319 = vmatpush1.bf16.msra.mxu0 %v2427
    %3320 = vmatprep.subr.bf16.mxu0 %v2436
    %3321 = vmatpush1.bf16.msra.mxu0 %v2435
    %3322 = vmatprep.subr.bf16.mxu0 %v2444
    %3323 = vmatpush1.bf16.msra.mxu0 %v2443
    %3324 = vmatprep.subr.bf16.mxu0 %v2452
    %3325 = vmatpush1.bf16.msra.mxu0 %v2451
    %3326 = vmatprep.subr.bf16.mxu0 %v2460
    %3327 = vmatpush1.bf16.msra.mxu0 %v2459
    %3328 = vmatprep.subr.bf16.mxu0 %v2468
    %3329 = vmatpush1.bf16.msra.mxu0 %v2467
    %3330 = vmatprep.subr.bf16.mxu0 %v2476
    %3331 = vmatpush1.bf16.msra.mxu0 %v2475
    %3332 = vmatprep.subr.bf16.mxu0 %v2484
    %3333 = vmatpush1.bf16.msra.mxu0 %v2483
    %3334 = vmatprep.mubr.bf16.mxu0 %v138
    %3335 = vmatmul.mubr.bf16.gmra.mrb[0].mxu0 %v137
    %v3336 = vpop.f32.mrb[0].mxu0
    %v3337 = vadd.f32 %v3294, %v3336
    %v3338 = vpop.f32.mrb[0].mxu0
    %v3339 = vadd.f32 %v3296, %v3338
    %v3340 = vpop.f32.mrb[0].mxu0
    %v3341 = vadd.f32 %v3298, %v3340
    %v3342 = vpop.f32.mrb[0].mxu0
    %v3343 = vadd.f32 %v3300, %v3342
    %3344 = vdwg.mxu0
    %3345 = vmatprep.subr.bf16.mxu0 %v2492
    %3346 = vmatpush1.bf16.msra.mxu0 %v2491
    %3347 = vmatprep.subr.bf16.mxu0 %v2500
    %3348 = vmatpush1.bf16.msra.mxu0 %v2499
    %3349 = vmatprep.subr.bf16.mxu0 %v2508
    %3350 = vmatpush1.bf16.msra.mxu0 %v2507
    %3351 = vmatprep.subr.bf16.mxu0 %v2516
    %3352 = vmatpush1.bf16.msra.mxu0 %v2515
    %3353 = vmatprep.subr.bf16.mxu0 %v2524
    %3354 = vmatpush1.bf16.msra.mxu0 %v2523
    %3355 = vmatprep.subr.bf16.mxu0 %v2532
    %3356 = vmatpush1.bf16.msra.mxu0 %v2531
    %3357 = vmatprep.subr.bf16.mxu0 %v2540
    %3358 = vmatpush1.bf16.msra.mxu0 %v2539
    %3359 = vmatprep.subr.bf16.mxu0 %v2548
    %3360 = vmatpush1.bf16.msra.mxu0 %v2547
    %3361 = vmatprep.subr.bf16.mxu0 %v2556
    %3362 = vmatpush1.bf16.msra.mxu0 %v2555
    %3363 = vmatprep.subr.bf16.mxu0 %v2564
    %3364 = vmatpush1.bf16.msra.mxu0 %v2563
    %3365 = vmatprep.subr.bf16.mxu0 %v2572
    %3366 = vmatpush1.bf16.msra.mxu0 %v2571
    %3367 = vmatprep.subr.bf16.mxu0 %v2580
    %3368 = vmatpush1.bf16.msra.mxu0 %v2579
    %3369 = vmatprep.subr.bf16.mxu0 %v2588
    %3370 = vmatpush1.bf16.msra.mxu0 %v2587
    %3371 = vmatprep.subr.bf16.mxu0 %v2596
    %3372 = vmatpush1.bf16.msra.mxu0 %v2595
    %3373 = vmatprep.subr.bf16.mxu0 %v2604
    %3374 = vmatpush1.bf16.msra.mxu0 %v2603
    %3375 = vmatprep.subr.bf16.mxu0 %v2612
    %3376 = vmatpush1.bf16.msra.mxu0 %v2611
    %3377 = vmatprep.mubr.bf16.mxu0 %v140
    %3378 = vmatmul.mubr.bf16.gmra.mrb[0].mxu0 %v139
    %v3379 = vpop.f32.mrb[0].mxu0
    %v3380 = vadd.f32 %v3337, %v3379
    %v3381 = vpop.f32.mrb[0].mxu0
    %v3382 = vadd.f32 %v3339, %v3381
    %v3383 = vpop.f32.mrb[0].mxu0
    %v3384 = vadd.f32 %v3341, %v3383
    %v3385 = vpop.f32.mrb[0].mxu0
    %v3386 = vadd.f32 %v3343, %v3385
    %3387 = vdwg.mxu0
    %3388 = vmatprep.subr.bf16.mxu0 %v2620
    %3389 = vmatpush1.bf16.msra.mxu0 %v2619
    %3390 = vmatprep.subr.bf16.mxu0 %v2628
    %3391 = vmatpush1.bf16.msra.mxu0 %v2627
    %3392 = vmatprep.subr.bf16.mxu0 %v2636
    %3393 = vmatpush1.bf16.msra.mxu0 %v2635
    %3394 = vmatprep.subr.bf16.mxu0 %v2644
    %3395 = vmatpush1.bf16.msra.mxu0 %v2643
    %3396 = vmatprep.subr.bf16.mxu0 %v2652
    %3397 = vmatpush1.bf16.msra.mxu0 %v2651
    %3398 = vmatprep.subr.bf16.mxu0 %v2660
    %3399 = vmatpush1.bf16.msra.mxu0 %v2659
    %3400 = vmatprep.subr.bf16.mxu0 %v2668
    %3401 = vmatpush1.bf16.msra.mxu0 %v2667
    %3402 = vmatprep.subr.bf16.mxu0 %v2676
    %3403 = vmatpush1.bf16.msra.mxu0 %v2675
    %3404 = vmatprep.subr.bf16.mxu0 %v2684
    %3405 = vmatpush1.bf16.msra.mxu0 %v2683
    %3406 = vmatprep.subr.bf16.mxu0 %v2692
    %3407 = vmatpush1.bf16.msra.mxu0 %v2691
    %3408 = vmatprep.subr.bf16.mxu0 %v2700
    %3409 = vmatpush1.bf16.msra.mxu0 %v2699
    %3410 = vmatprep.subr.bf16.mxu0 %v2708
    %3411 = vmatpush1.bf16.msra.mxu0 %v2707
    %3412 = vmatprep.subr.bf16.mxu0 %v2716
    %3413 = vmatpush1.bf16.msra.mxu0 %v2715
    %3414 = vmatprep.subr.bf16.mxu0 %v2724
    %3415 = vmatpush1.bf16.msra.mxu0 %v2723
    %3416 = vmatprep.subr.bf16.mxu0 %v2732
    %3417 = vmatpush1.bf16.msra.mxu0 %v2731
    %3418 = vmatprep.subr.bf16.mxu0 %v2740
    %3419 = vmatpush1.bf16.msra.mxu0 %v2739
    %3420 = vmatprep.mubr.bf16.mxu0 %v142
    %3421 = vmatmul.mubr.bf16.gmra.mrb[0].mxu0 %v141
    %v3422 = vpop.f32.mrb[0].mxu0
    %v3423 = vadd.f32 %v3380, %v3422
    %v3424 = vpop.f32.mrb[0].mxu0
    %v3425 = vadd.f32 %v3382, %v3424
    %v3426 = vpop.f32.mrb[0].mxu0
    %v3427 = vadd.f32 %v3384, %v3426
    %v3428 = vpop.f32.mrb[0].mxu0
    %v3429 = vadd.f32 %v3386, %v3428
    %3430 = vdwg.mxu0
    %3431 = vmatprep.subr.bf16.mxu0 %v2238
    %3432 = vmatpush1.bf16.msra.mxu0 %v2237
    %3433 = vmatprep.subr.bf16.mxu0 %v2246
    %3434 = vmatpush1.bf16.msra.mxu0 %v2245
    %3435 = vmatprep.subr.bf16.mxu0 %v2254
    %3436 = vmatpush1.bf16.msra.mxu0 %v2253
    %3437 = vmatprep.subr.bf16.mxu0 %v2262
    %3438 = vmatpush1.bf16.msra.mxu0 %v2261
    %3439 = vmatprep.subr.bf16.mxu0 %v2270
    %3440 = vmatpush1.bf16.msra.mxu0 %v2269
    %3441 = vmatprep.subr.bf16.mxu0 %v2278
    %3442 = vmatpush1.bf16.msra.mxu0 %v2277
    %3443 = vmatprep.subr.bf16.mxu0 %v2286
    %3444 = vmatpush1.bf16.msra.mxu0 %v2285
    %3445 = vmatprep.subr.bf16.mxu0 %v2294
    %3446 = vmatpush1.bf16.msra.mxu0 %v2293
    %3447 = vmatprep.subr.bf16.mxu0 %v2302
    %3448 = vmatpush1.bf16.msra.mxu0 %v2301
    %3449 = vmatprep.subr.bf16.mxu0 %v2310
    %3450 = vmatpush1.bf16.msra.mxu0 %v2309
    %3451 = vmatprep.subr.bf16.mxu0 %v2318
    %3452 = vmatpush1.bf16.msra.mxu0 %v2317
    %3453 = vmatprep.subr.bf16.mxu0 %v2326
    %3454 = vmatpush1.bf16.msra.mxu0 %v2325
    %3455 = vmatprep.subr.bf16.mxu0 %v2334
    %3456 = vmatpush1.bf16.msra.mxu0 %v2333
    %3457 = vmatprep.subr.bf16.mxu0 %v2342
    %3458 = vmatpush1.bf16.msra.mxu0 %v2341
    %3459 = vmatprep.subr.bf16.mxu0 %v2350
    %3460 = vmatpush1.bf16.msra.mxu0 %v2349
    %3461 = vmatprep.subr.bf16.mxu0 %v2358
    %3462 = vmatpush1.bf16.msra.mxu0 %v2357
    %3463 = vmatprep.mubr.bf16.mxu0 %v136
    %3464 = vmatmul.mubr.bf16.gmra.mrb[0].mxu0 %v135
    %v3465 = vpop.f32.mrb[0].mxu0
    %v3466 = vadd.f32 %v670, %v3465
    %v3467 = vpop.f32.mrb[0].mxu0
    %v3468 = vadd.f32 %v674, %v3467
    %v3469 = vpop.f32.mrb[0].mxu0
    %v3470 = vadd.f32 %v670, %v3469
    %v3471 = vpop.f32.mrb[0].mxu0
    %v3472 = vadd.f32 %v674, %v3471
    %3473 = vdwg.mxu0
    %3474 = vmatprep.subr.bf16.mxu0 %v2366
    %3475 = vmatpush1.bf16.msra.mxu0 %v2365
    %3476 = vmatprep.subr.bf16.mxu0 %v2374
    %3477 = vmatpush1.bf16.msra.mxu0 %v2373
    %3478 = vmatprep.subr.bf16.mxu0 %v2382
    %3479 = vmatpush1.bf16.msra.mxu0 %v2381
    %3480 = vmatprep.subr.bf16.mxu0 %v2390
    %3481 = vmatpush1.bf16.msra.mxu0 %v2389
    %3482 = vmatprep.subr.bf16.mxu0 %v2398
    %3483 = vmatpush1.bf16.msra.mxu0 %v2397
    %3484 = vmatprep.subr.bf16.mxu0 %v2406
    %3485 = vmatpush1.bf16.msra.mxu0 %v2405
    %3486 = vmatprep.subr.bf16.mxu0 %v2414
    %3487 = vmatpush1.bf16.msra.mxu0 %v2413
    %3488 = vmatprep.subr.bf16.mxu0 %v2422
    %3489 = vmatpush1.bf16.msra.mxu0 %v2421
    %3490 = vmatprep.subr.bf16.mxu0 %v2430
    %3491 = vmatpush1.bf16.msra.mxu0 %v2429
    %3492 = vmatprep.subr.bf16.mxu0 %v2438
    %3493 = vmatpush1.bf16.msra.mxu0 %v2437
    %3494 = vmatprep.subr.bf16.mxu0 %v2446
    %3495 = vmatpush1.bf16.msra.mxu0 %v2445
    %3496 = vmatprep.subr.bf16.mxu0 %v2454
    %3497 = vmatpush1.bf16.msra.mxu0 %v2453
    %3498 = vmatprep.subr.bf16.mxu0 %v2462
    %3499 = vmatpush1.bf16.msra.mxu0 %v2461
    %3500 = vmatprep.subr.bf16.mxu0 %v2470
    %3501 = vmatpush1.bf16.msra.mxu0 %v2469
    %3502 = vmatprep.subr.bf16.mxu0 %v2478
    %3503 = vmatpush1.bf16.msra.mxu0 %v2477
    %3504 = vmatprep.subr.bf16.mxu0 %v2486
    %3505 = vmatpush1.bf16.msra.mxu0 %v2485
    %3506 = vmatprep.mubr.bf16.mxu0 %v138
    %3507 = vmatmul.mubr.bf16.gmra.mrb[0].mxu0 %v137
    %v3508 = vpop.f32.mrb[0].mxu0
    %v3509 = vadd.f32 %v3466, %v3508
    %v3510 = vpop.f32.mrb[0].mxu0
    %v3511 = vadd.f32 %v3468, %v3510
    %v3512 = vpop.f32.mrb[0].mxu0
    %v3513 = vadd.f32 %v3470, %v3512
    %v3514 = vpop.f32.mrb[0].mxu0
    %v3515 = vadd.f32 %v3472, %v3514
    %3516 = vdwg.mxu0
    %3517 = vmatprep.subr.bf16.mxu0 %v2494
    %3518 = vmatpush1.bf16.msra.mxu0 %v2493
    %3519 = vmatprep.subr.bf16.mxu0 %v2502
    %3520 = vmatpush1.bf16.msra.mxu0 %v2501
    %3521 = vmatprep.subr.bf16.mxu0 %v2510
    %3522 = vmatpush1.bf16.msra.mxu0 %v2509
    %3523 = vmatprep.subr.bf16.mxu0 %v2518
    %3524 = vmatpush1.bf16.msra.mxu0 %v2517
    %3525 = vmatprep.subr.bf16.mxu0 %v2526
    %3526 = vmatpush1.bf16.msra.mxu0 %v2525
    %3527 = vmatprep.subr.bf16.mxu0 %v2534
    %3528 = vmatpush1.bf16.msra.mxu0 %v2533
    %3529 = vmatprep.subr.bf16.mxu0 %v2542
    %3530 = vmatpush1.bf16.msra.mxu0 %v2541
    %3531 = vmatprep.subr.bf16.mxu0 %v2550
    %3532 = vmatpush1.bf16.msra.mxu0 %v2549
    %3533 = vmatprep.subr.bf16.mxu0 %v2558
    %3534 = vmatpush1.bf16.msra.mxu0 %v2557
    %3535 = vmatprep.subr.bf16.mxu0 %v2566
    %3536 = vmatpush1.bf16.msra.mxu0 %v2565
    %3537 = vmatprep.subr.bf16.mxu0 %v2574
    %3538 = vmatpush1.bf16.msra.mxu0 %v2573
    %3539 = vmatprep.subr.bf16.mxu0 %v2582
    %3540 = vmatpush1.bf16.msra.mxu0 %v2581
    %3541 = vmatprep.subr.bf16.mxu0 %v2590
    %3542 = vmatpush1.bf16.msra.mxu0 %v2589
    %3543 = vmatprep.subr.bf16.mxu0 %v2598
    %3544 = vmatpush1.bf16.msra.mxu0 %v2597
    %3545 = vmatprep.subr.bf16.mxu0 %v2606
    %3546 = vmatpush1.bf16.msra.mxu0 %v2605
    %3547 = vmatprep.subr.bf16.mxu0 %v2614
    %3548 = vmatpush1.bf16.msra.mxu0 %v2613
    %3549 = vmatprep.mubr.bf16.mxu0 %v140
    %3550 = vmatmul.mubr.bf16.gmra.mrb[0].mxu0 %v139
    %v3551 = vpop.f32.mrb[0].mxu0
    %v3552 = vadd.f32 %v3509, %v3551
    %v3553 = vpop.f32.mrb[0].mxu0
    %v3554 = vadd.f32 %v3511, %v3553
    %v3555 = vpop.f32.mrb[0].mxu0
    %v3556 = vadd.f32 %v3513, %v3555
    %v3557 = vpop.f32.mrb[0].mxu0
    %v3558 = vadd.f32 %v3515, %v3557
    %3559 = vdwg.mxu0
    %3560 = vmatprep.subr.bf16.mxu0 %v2622
    %3561 = vmatpush1.bf16.msra.mxu0 %v2621
    %3562 = vmatprep.subr.bf16.mxu0 %v2630
    %3563 = vmatpush1.bf16.msra.mxu0 %v2629
    %3564 = vmatprep.subr.bf16.mxu0 %v2638
    %3565 = vmatpush1.bf16.msra.mxu0 %v2637
    %3566 = vmatprep.subr.bf16.mxu0 %v2646
    %3567 = vmatpush1.bf16.msra.mxu0 %v2645
    %3568 = vmatprep.subr.bf16.mxu0 %v2654
    %3569 = vmatpush1.bf16.msra.mxu0 %v2653
    %3570 = vmatprep.subr.bf16.mxu0 %v2662
    %3571 = vmatpush1.bf16.msra.mxu0 %v2661
    %3572 = vmatprep.subr.bf16.mxu0 %v2670
    %3573 = vmatpush1.bf16.msra.mxu0 %v2669
    %3574 = vmatprep.subr.bf16.mxu0 %v2678
    %3575 = vmatpush1.bf16.msra.mxu0 %v2677
    %3576 = vmatprep.subr.bf16.mxu0 %v2686
    %3577 = vmatpush1.bf16.msra.mxu0 %v2685
    %3578 = vmatprep.subr.bf16.mxu0 %v2694
    %3579 = vmatpush1.bf16.msra.mxu0 %v2693
    %3580 = vmatprep.subr.bf16.mxu0 %v2702
    %3581 = vmatpush1.bf16.msra.mxu0 %v2701
    %3582 = vmatprep.subr.bf16.mxu0 %v2710
    %3583 = vmatpush1.bf16.msra.mxu0 %v2709
    %3584 = vmatprep.subr.bf16.mxu0 %v2718
    %3585 = vmatpush1.bf16.msra.mxu0 %v2717
    %3586 = vmatprep.subr.bf16.mxu0 %v2726
    %3587 = vmatpush1.bf16.msra.mxu0 %v2725
    %3588 = vmatprep.subr.bf16.mxu0 %v2734
    %3589 = vmatpush1.bf16.msra.mxu0 %v2733
    %3590 = vmatprep.subr.bf16.mxu0 %v2742
    %3591 = vmatpush1.bf16.msra.mxu0 %v2741
    %3592 = vmatprep.mubr.bf16.mxu0 %v142
    %3593 = vmatmul.mubr.bf16.gmra.mrb[0].mxu0 %v141
    %v3594 = vpop.f32.mrb[0].mxu0
    %v3595 = vadd.f32 %v3552, %v3594
    %v3596 = vpop.f32.mrb[0].mxu0
    %v3597 = vadd.f32 %v3554, %v3596
    %v3598 = vpop.f32.mrb[0].mxu0
    %v3599 = vadd.f32 %v3556, %v3598
    %v3600 = vpop.f32.mrb[0].mxu0
    %v3601 = vadd.f32 %v3558, %v3600
    %3602 = vdwg.mxu0
    %3603 = vmatprep.subr.bf16.mxu0 %v2240
    %3604 = vmatpush1.bf16.msra.mxu0 %v2239
    %3605 = vmatprep.subr.bf16.mxu0 %v2248
    %3606 = vmatpush1.bf16.msra.mxu0 %v2247
    %3607 = vmatprep.subr.bf16.mxu0 %v2256
    %3608 = vmatpush1.bf16.msra.mxu0 %v2255
    %3609 = vmatprep.subr.bf16.mxu0 %v2264
    %3610 = vmatpush1.bf16.msra.mxu0 %v2263
    %3611 = vmatprep.subr.bf16.mxu0 %v2272
    %3612 = vmatpush1.bf16.msra.mxu0 %v2271
    %3613 = vmatprep.subr.bf16.mxu0 %v2280
    %3614 = vmatpush1.bf16.msra.mxu0 %v2279
    %3615 = vmatprep.subr.bf16.mxu0 %v2288
    %3616 = vmatpush1.bf16.msra.mxu0 %v2287
    %3617 = vmatprep.subr.bf16.mxu0 %v2296
    %3618 = vmatpush1.bf16.msra.mxu0 %v2295
    %3619 = vmatprep.subr.bf16.mxu0 %v2304
    %3620 = vmatpush1.bf16.msra.mxu0 %v2303
    %3621 = vmatprep.subr.bf16.mxu0 %v2312
    %3622 = vmatpush1.bf16.msra.mxu0 %v2311
    %3623 = vmatprep.subr.bf16.mxu0 %v2320
    %3624 = vmatpush1.bf16.msra.mxu0 %v2319
    %3625 = vmatprep.subr.bf16.mxu0 %v2328
    %3626 = vmatpush1.bf16.msra.mxu0 %v2327
    %3627 = vmatprep.subr.bf16.mxu0 %v2336
    %3628 = vmatpush1.bf16.msra.mxu0 %v2335
    %3629 = vmatprep.subr.bf16.mxu0 %v2344
    %3630 = vmatpush1.bf16.msra.mxu0 %v2343
    %3631 = vmatprep.subr.bf16.mxu0 %v2352
    %3632 = vmatpush1.bf16.msra.mxu0 %v2351
    %3633 = vmatprep.subr.bf16.mxu0 %v2360
    %3634 = vmatpush1.bf16.msra.mxu0 %v2359
    %3635 = vmatprep.mubr.bf16.mxu0 %v136
    %3636 = vmatmul.mubr.bf16.gmra.mrb[0].mxu0 %v135
    %v3637 = vpop.f32.mrb[0].mxu0
    %v3638 = vadd.f32 %v678, %v3637
    %v3639 = vpop.f32.mrb[0].mxu0
    %v3640 = vadd.f32 %v682, %v3639
    %v3641 = vpop.f32.mrb[0].mxu0
    %v3642 = vadd.f32 %v678, %v3641
    %v3643 = vpop.f32.mrb[0].mxu0
    %v3644 = vadd.f32 %v682, %v3643
    %3645 = vdwg.mxu0
    %3646 = vmatprep.subr.bf16.mxu0 %v2368
    %3647 = vmatpush1.bf16.msra.mxu0 %v2367
    %3648 = vmatprep.subr.bf16.mxu0 %v2376
    %3649 = vmatpush1.bf16.msra.mxu0 %v2375
    %3650 = vmatprep.subr.bf16.mxu0 %v2384
    %3651 = vmatpush1.bf16.msra.mxu0 %v2383
    %3652 = vmatprep.subr.bf16.mxu0 %v2392
    %3653 = vmatpush1.bf16.msra.mxu0 %v2391
    %3654 = vmatprep.subr.bf16.mxu0 %v2400
    %3655 = vmatpush1.bf16.msra.mxu0 %v2399
    %3656 = vmatprep.subr.bf16.mxu0 %v2408
    %3657 = vmatpush1.bf16.msra.mxu0 %v2407
    %3658 = vmatprep.subr.bf16.mxu0 %v2416
    %3659 = vmatpush1.bf16.msra.mxu0 %v2415
    %3660 = vmatprep.subr.bf16.mxu0 %v2424
    %3661 = vmatpush1.bf16.msra.mxu0 %v2423
    %3662 = vmatprep.subr.bf16.mxu0 %v2432
    %3663 = vmatpush1.bf16.msra.mxu0 %v2431
    %3664 = vmatprep.subr.bf16.mxu0 %v2440
    %3665 = vmatpush1.bf16.msra.mxu0 %v2439
    %3666 = vmatprep.subr.bf16.mxu0 %v2448
    %3667 = vmatpush1.bf16.msra.mxu0 %v2447
    %3668 = vmatprep.subr.bf16.mxu0 %v2456
    %3669 = vmatpush1.bf16.msra.mxu0 %v2455
    %3670 = vmatprep.subr.bf16.mxu0 %v2464
    %3671 = vmatpush1.bf16.msra.mxu0 %v2463
    %3672 = vmatprep.subr.bf16.mxu0 %v2472
    %3673 = vmatpush1.bf16.msra.mxu0 %v2471
    %3674 = vmatprep.subr.bf16.mxu0 %v2480
    %3675 = vmatpush1.bf16.msra.mxu0 %v2479
    %3676 = vmatprep.subr.bf16.mxu0 %v2488
    %3677 = vmatpush1.bf16.msra.mxu0 %v2487
    %3678 = vmatprep.mubr.bf16.mxu0 %v138
    %3679 = vmatmul.mubr.bf16.gmra.mrb[0].mxu0 %v137
    %v3680 = vpop.f32.mrb[0].mxu0
    %v3681 = vadd.f32 %v3638, %v3680
    %v3682 = vpop.f32.mrb[0].mxu0
    %v3683 = vadd.f32 %v3640, %v3682
    %v3684 = vpop.f32.mrb[0].mxu0
    %v3685 = vadd.f32 %v3642, %v3684
    %v3686 = vpop.f32.mrb[0].mxu0
    %v3687 = vadd.f32 %v3644, %v3686
    %3688 = vdwg.mxu0
    %3689 = vmatprep.subr.bf16.mxu0 %v2496
    %3690 = vmatpush1.bf16.msra.mxu0 %v2495
    %3691 = vmatprep.subr.bf16.mxu0 %v2504
    %3692 = vmatpush1.bf16.msra.mxu0 %v2503
    %3693 = vmatprep.subr.bf16.mxu0 %v2512
    %3694 = vmatpush1.bf16.msra.mxu0 %v2511
    %3695 = vmatprep.subr.bf16.mxu0 %v2520
    %3696 = vmatpush1.bf16.msra.mxu0 %v2519
    %3697 = vmatprep.subr.bf16.mxu0 %v2528
    %3698 = vmatpush1.bf16.msra.mxu0 %v2527
    %3699 = vmatprep.subr.bf16.mxu0 %v2536
    %3700 = vmatpush1.bf16.msra.mxu0 %v2535
    %3701 = vmatprep.subr.bf16.mxu0 %v2544
    %3702 = vmatpush1.bf16.msra.mxu0 %v2543
    %3703 = vmatprep.subr.bf16.mxu0 %v2552
    %3704 = vmatpush1.bf16.msra.mxu0 %v2551
    %3705 = vmatprep.subr.bf16.mxu0 %v2560
    %3706 = vmatpush1.bf16.msra.mxu0 %v2559
    %3707 = vmatprep.subr.bf16.mxu0 %v2568
    %3708 = vmatpush1.bf16.msra.mxu0 %v2567
    %3709 = vmatprep.subr.bf16.mxu0 %v2576
    %3710 = vmatpush1.bf16.msra.mxu0 %v2575
    %3711 = vmatprep.subr.bf16.mxu0 %v2584
    %3712 = vmatpush1.bf16.msra.mxu0 %v2583
    %3713 = vmatprep.subr.bf16.mxu0 %v2592
    %3714 = vmatpush1.bf16.msra.mxu0 %v2591
    %3715 = vmatprep.subr.bf16.mxu0 %v2600
    %3716 = vmatpush1.bf16.msra.mxu0 %v2599
    %3717 = vmatprep.subr.bf16.mxu0 %v2608
    %3718 = vmatpush1.bf16.msra.mxu0 %v2607
    %3719 = vmatprep.subr.bf16.mxu0 %v2616
    %3720 = vmatpush1.bf16.msra.mxu0 %v2615
    %3721 = vmatprep.mubr.bf16.mxu0 %v140
    %3722 = vmatmul.mubr.bf16.gmra.mrb[0].mxu0 %v139
    %v3723 = vpop.f32.mrb[0].mxu0
    %v3724 = vadd.f32 %v3681, %v3723
    %v3725 = vpop.f32.mrb[0].mxu0
    %v3726 = vadd.f32 %v3683, %v3725
    %v3727 = vpop.f32.mrb[0].mxu0
    %v3728 = vadd.f32 %v3685, %v3727
    %v3729 = vpop.f32.mrb[0].mxu0
    %v3730 = vadd.f32 %v3687, %v3729
    %3731 = vdwg.mxu0
    %3732 = vmatprep.subr.bf16.mxu0 %v2624
    %3733 = vmatpush1.bf16.msra.mxu0 %v2623
    %3734 = vmatprep.subr.bf16.mxu0 %v2632
    %3735 = vmatpush1.bf16.msra.mxu0 %v2631
    %3736 = vmatprep.subr.bf16.mxu0 %v2640
    %3737 = vmatpush1.bf16.msra.mxu0 %v2639
    %3738 = vmatprep.subr.bf16.mxu0 %v2648
    %3739 = vmatpush1.bf16.msra.mxu0 %v2647
    %3740 = vmatprep.subr.bf16.mxu0 %v2656
    %3741 = vmatpush1.bf16.msra.mxu0 %v2655
    %3742 = vmatprep.subr.bf16.mxu0 %v2664
    %3743 = vmatpush1.bf16.msra.mxu0 %v2663
    %3744 = vmatprep.subr.bf16.mxu0 %v2672
    %3745 = vmatpush1.bf16.msra.mxu0 %v2671
    %3746 = vmatprep.subr.bf16.mxu0 %v2680
    %3747 = vmatpush1.bf16.msra.mxu0 %v2679
    %3748 = vmatprep.subr.bf16.mxu0 %v2688
    %3749 = vmatpush1.bf16.msra.mxu0 %v2687
    %3750 = vmatprep.subr.bf16.mxu0 %v2696
    %3751 = vmatpush1.bf16.msra.mxu0 %v2695
    %3752 = vmatprep.subr.bf16.mxu0 %v2704
    %3753 = vmatpush1.bf16.msra.mxu0 %v2703
    %3754 = vmatprep.subr.bf16.mxu0 %v2712
    %3755 = vmatpush1.bf16.msra.mxu0 %v2711
    %3756 = vmatprep.subr.bf16.mxu0 %v2720
    %3757 = vmatpush1.bf16.msra.mxu0 %v2719
    %3758 = vmatprep.subr.bf16.mxu0 %v2728
    %3759 = vmatpush1.bf16.msra.mxu0 %v2727
    %3760 = vmatprep.subr.bf16.mxu0 %v2736
    %3761 = vmatpush1.bf16.msra.mxu0 %v2735
    %3762 = vmatprep.subr.bf16.mxu0 %v2744
    %3763 = vmatpush1.bf16.msra.mxu0 %v2743
    %3764 = vmatprep.mubr.bf16.mxu0 %v142
    %3765 = vmatmul.mubr.bf16.gmra.mrb[0].mxu0 %v141
    %v3766 = vpop.f32.mrb[0].mxu0
    %v3767 = vadd.f32 %v3724, %v3766
    %v3768 = vpop.f32.mrb[0].mxu0
    %v3769 = vadd.f32 %v3726, %v3768
    %v3770 = vpop.f32.mrb[0].mxu0
    %v3771 = vadd.f32 %v3728, %v3770
    %v3772 = vpop.f32.mrb[0].mxu0
    %v3773 = vadd.f32 %v3730, %v3772
    %3774 = vdwg.mxu0
    %3775 = vmatprep.subr.bf16.mxu0 %v2242
    %3776 = vmatpush1.bf16.msra.mxu0 %v2241
    %3777 = vmatprep.subr.bf16.mxu0 %v2250
    %3778 = vmatpush1.bf16.msra.mxu0 %v2249
    %3779 = vmatprep.subr.bf16.mxu0 %v2258
    %3780 = vmatpush1.bf16.msra.mxu0 %v2257
    %3781 = vmatprep.subr.bf16.mxu0 %v2266
    %3782 = vmatpush1.bf16.msra.mxu0 %v2265
    %3783 = vmatprep.subr.bf16.mxu0 %v2274
    %3784 = vmatpush1.bf16.msra.mxu0 %v2273
    %3785 = vmatprep.subr.bf16.mxu0 %v2282
    %3786 = vmatpush1.bf16.msra.mxu0 %v2281
    %3787 = vmatprep.subr.bf16.mxu0 %v2290
    %3788 = vmatpush1.bf16.msra.mxu0 %v2289
    %3789 = vmatprep.subr.bf16.mxu0 %v2298
    %3790 = vmatpush1.bf16.msra.mxu0 %v2297
    %3791 = vmatprep.subr.bf16.mxu0 %v2306
    %3792 = vmatpush1.bf16.msra.mxu0 %v2305
    %3793 = vmatprep.subr.bf16.mxu0 %v2314
    %3794 = vmatpush1.bf16.msra.mxu0 %v2313
    %3795 = vmatprep.subr.bf16.mxu0 %v2322
    %3796 = vmatpush1.bf16.msra.mxu0 %v2321
    %3797 = vmatprep.subr.bf16.mxu0 %v2330
    %3798 = vmatpush1.bf16.msra.mxu0 %v2329
    %3799 = vmatprep.subr.bf16.mxu0 %v2338
    %3800 = vmatpush1.bf16.msra.mxu0 %v2337
    %3801 = vmatprep.subr.bf16.mxu0 %v2346
    %3802 = vmatpush1.bf16.msra.mxu0 %v2345
    %3803 = vmatprep.subr.bf16.mxu0 %v2354
    %3804 = vmatpush1.bf16.msra.mxu0 %v2353
    %3805 = vmatprep.subr.bf16.mxu0 %v2362
    %3806 = vmatpush1.bf16.msra.mxu0 %v2361
    %3807 = vmatprep.mubr.bf16.mxu0 %v136
    %3808 = vmatmul.mubr.bf16.gmra.mrb[0].mxu0 %v135
    %v3809 = vpop.f32.mrb[0].mxu0
    %v3810 = vadd.f32 %v686, %v3809
    %v3811 = vpop.f32.mrb[0].mxu0
    %v3812 = vadd.f32 %v690, %v3811
    %v3813 = vpop.f32.mrb[0].mxu0
    %v3814 = vadd.f32 %v686, %v3813
    %v3815 = vpop.f32.mrb[0].mxu0
    %v3816 = vadd.f32 %v690, %v3815
    %3817 = vdwg.mxu0
    %3818 = vmatprep.subr.bf16.mxu0 %v2370
    %3819 = vmatpush1.bf16.msra.mxu0 %v2369
    %3820 = vmatprep.subr.bf16.mxu0 %v2378
    %3821 = vmatpush1.bf16.msra.mxu0 %v2377
    %3822 = vmatprep.subr.bf16.mxu0 %v2386
    %3823 = vmatpush1.bf16.msra.mxu0 %v2385
    %3824 = vmatprep.subr.bf16.mxu0 %v2394
    %3825 = vmatpush1.bf16.msra.mxu0 %v2393
    %3826 = vmatprep.subr.bf16.mxu0 %v2402
    %3827 = vmatpush1.bf16.msra.mxu0 %v2401
    %3828 = vmatprep.subr.bf16.mxu0 %v2410
    %3829 = vmatpush1.bf16.msra.mxu0 %v2409
    %3830 = vmatprep.subr.bf16.mxu0 %v2418
    %3831 = vmatpush1.bf16.msra.mxu0 %v2417
    %3832 = vmatprep.subr.bf16.mxu0 %v2426
    %3833 = vmatpush1.bf16.msra.mxu0 %v2425
    %3834 = vmatprep.subr.bf16.mxu0 %v2434
    %3835 = vmatpush1.bf16.msra.mxu0 %v2433
    %3836 = vmatprep.subr.bf16.mxu0 %v2442
    %3837 = vmatpush1.bf16.msra.mxu0 %v2441
    %3838 = vmatprep.subr.bf16.mxu0 %v2450
    %3839 = vmatpush1.bf16.msra.mxu0 %v2449
    %3840 = vmatprep.subr.bf16.mxu0 %v2458
    %3841 = vmatpush1.bf16.msra.mxu0 %v2457
    %3842 = vmatprep.subr.bf16.mxu0 %v2466
    %3843 = vmatpush1.bf16.msra.mxu0 %v2465
    %3844 = vmatprep.subr.bf16.mxu0 %v2474
    %3845 = vmatpush1.bf16.msra.mxu0 %v2473
    %3846 = vmatprep.subr.bf16.mxu0 %v2482
    %3847 = vmatpush1.bf16.msra.mxu0 %v2481
    %3848 = vmatprep.subr.bf16.mxu0 %v2490
    %3849 = vmatpush1.bf16.msra.mxu0 %v2489
    %3850 = vmatprep.mubr.bf16.mxu0 %v138
    %3851 = vmatmul.mubr.bf16.gmra.mrb[0].mxu0 %v137
    %v3852 = vpop.f32.mrb[0].mxu0
    %v3853 = vadd.f32 %v3810, %v3852
    %v3854 = vpop.f32.mrb[0].mxu0
    %v3855 = vadd.f32 %v3812, %v3854
    %v3856 = vpop.f32.mrb[0].mxu0
    %v3857 = vadd.f32 %v3814, %v3856
    %v3858 = vpop.f32.mrb[0].mxu0
    %v3859 = vadd.f32 %v3816, %v3858
    %3860 = vdwg.mxu0
    %3861 = vmatprep.subr.bf16.mxu0 %v2498
    %3862 = vmatpush1.bf16.msra.mxu0 %v2497
    %3863 = vmatprep.subr.bf16.mxu0 %v2506
    %3864 = vmatpush1.bf16.msra.mxu0 %v2505
    %3865 = vmatprep.subr.bf16.mxu0 %v2514
    %3866 = vmatpush1.bf16.msra.mxu0 %v2513
    %3867 = vmatprep.subr.bf16.mxu0 %v2522
    %3868 = vmatpush1.bf16.msra.mxu0 %v2521
    %3869 = vmatprep.subr.bf16.mxu0 %v2530
    %3870 = vmatpush1.bf16.msra.mxu0 %v2529
    %3871 = vmatprep.subr.bf16.mxu0 %v2538
    %3872 = vmatpush1.bf16.msra.mxu0 %v2537
    %3873 = vmatprep.subr.bf16.mxu0 %v2546
    %3874 = vmatpush1.bf16.msra.mxu0 %v2545
    %3875 = vmatprep.subr.bf16.mxu0 %v2554
    %3876 = vmatpush1.bf16.msra.mxu0 %v2553
    %3877 = vmatprep.subr.bf16.mxu0 %v2562
    %3878 = vmatpush1.bf16.msra.mxu0 %v2561
    %3879 = vmatprep.subr.bf16.mxu0 %v2570
    %3880 = vmatpush1.bf16.msra.mxu0 %v2569
    %3881 = vmatprep.subr.bf16.mxu0 %v2578
    %3882 = vmatpush1.bf16.msra.mxu0 %v2577
    %3883 = vmatprep.subr.bf16.mxu0 %v2586
    %3884 = vmatpush1.bf16.msra.mxu0 %v2585
    %3885 = vmatprep.subr.bf16.mxu0 %v2594
    %3886 = vmatpush1.bf16.msra.mxu0 %v2593
    %3887 = vmatprep.subr.bf16.mxu0 %v2602
    %3888 = vmatpush1.bf16.msra.mxu0 %v2601
    %3889 = vmatprep.subr.bf16.mxu0 %v2610
    %3890 = vmatpush1.bf16.msra.mxu0 %v2609
    %3891 = vmatprep.subr.bf16.mxu0 %v2618
    %3892 = vmatpush1.bf16.msra.mxu0 %v2617
    %3893 = vmatprep.mubr.bf16.mxu0 %v140
    %3894 = vmatmul.mubr.bf16.gmra.mrb[0].mxu0 %v139
    %v3895 = vpop.f32.mrb[0].mxu0
    %v3896 = vadd.f32 %v3853, %v3895
    %v3897 = vpop.f32.mrb[0].mxu0
    %v3898 = vadd.f32 %v3855, %v3897
    %v3899 = vpop.f32.mrb[0].mxu0
    %v3900 = vadd.f32 %v3857, %v3899
    %v3901 = vpop.f32.mrb[0].mxu0
    %v3902 = vadd.f32 %v3859, %v3901
    %3903 = vdwg.mxu0
    %3904 = vmatprep.subr.bf16.mxu0 %v2626
    %3905 = vmatpush1.bf16.msra.mxu0 %v2625
    %3906 = vmatprep.subr.bf16.mxu0 %v2634
    %3907 = vmatpush1.bf16.msra.mxu0 %v2633
    %3908 = vmatprep.subr.bf16.mxu0 %v2642
    %3909 = vmatpush1.bf16.msra.mxu0 %v2641
    %3910 = vmatprep.subr.bf16.mxu0 %v2650
    %3911 = vmatpush1.bf16.msra.mxu0 %v2649
    %3912 = vmatprep.subr.bf16.mxu0 %v2658
    %3913 = vmatpush1.bf16.msra.mxu0 %v2657
    %3914 = vmatprep.subr.bf16.mxu0 %v2666
    %3915 = vmatpush1.bf16.msra.mxu0 %v2665
    %3916 = vmatprep.subr.bf16.mxu0 %v2674
    %3917 = vmatpush1.bf16.msra.mxu0 %v2673
    %3918 = vmatprep.subr.bf16.mxu0 %v2682
    %3919 = vmatpush1.bf16.msra.mxu0 %v2681
    %3920 = vmatprep.subr.bf16.mxu0 %v2690
    %3921 = vmatpush1.bf16.msra.mxu0 %v2689
    %3922 = vmatprep.subr.bf16.mxu0 %v2698
    %3923 = vmatpush1.bf16.msra.mxu0 %v2697
    %3924 = vmatprep.subr.bf16.mxu0 %v2706
    %3925 = vmatpush1.bf16.msra.mxu0 %v2705
    %3926 = vmatprep.subr.bf16.mxu0 %v2714
    %3927 = vmatpush1.bf16.msra.mxu0 %v2713
    %3928 = vmatprep.subr.bf16.mxu0 %v2722
    %3929 = vmatpush1.bf16.msra.mxu0 %v2721
    %3930 = vmatprep.subr.bf16.mxu0 %v2730
    %3931 = vmatpush1.bf16.msra.mxu0 %v2729
    %3932 = vmatprep.subr.bf16.mxu0 %v2738
    %3933 = vmatpush1.bf16.msra.mxu0 %v2737
    %3934 = vmatprep.subr.bf16.mxu0 %v2746
    %3935 = vmatpush1.bf16.msra.mxu0 %v2745
    %3936 = vmatprep.mubr.bf16.mxu0 %v142
    %3937 = vmatmul.mubr.bf16.gmra.mrb[0].mxu0 %v141
    %v3938 = vpop.f32.mrb[0].mxu0
    %v3939 = vadd.f32 %v3896, %v3938
    %v3940 = vpop.f32.mrb[0].mxu0
    %v3941 = vadd.f32 %v3898, %v3940
    %v3942 = vpop.f32.mrb[0].mxu0
    %v3943 = vadd.f32 %v3900, %v3942
    %v3944 = vpop.f32.mrb[0].mxu0
    %v3945 = vadd.f32 %v3902, %v3944
    %3946 = vdwg.mxu0
    %v3947 = vadd.f32 %v3423, %v3427
    %v3948 = vrot.slane %v3947, 4
    %v3949 = vadd.f32 %v3947, %v3948
    %v3950 = vrot.slane %v3949, 2
    %v3951 = vadd.f32 %v3949, %v3950
    %v3952 = vrot.slane %v3951, 1
    %v3953 = vadd.f32 %v3951, %v3952
    %v3954 = vadd.f32 %v3425, %v3429
    %v3955 = vrot.slane %v3954, 4
    %v3956 = vadd.f32 %v3954, %v3955
    %v3957 = vrot.slane %v3956, 2
    %v3958 = vadd.f32 %v3956, %v3957
    %v3959 = vrot.slane %v3958, 1
    %v3960 = vadd.f32 %v3958, %v3959
    %v3961 = vadd.f32 %v3595, %v3599
    %v3962 = vrot.slane %v3961, 4
    %v3963 = vadd.f32 %v3961, %v3962
    %v3964 = vrot.slane %v3963, 2
    %v3965 = vadd.f32 %v3963, %v3964
    %v3966 = vrot.slane %v3965, 1
    %v3967 = vadd.f32 %v3965, %v3966
    %v3968 = vadd.f32 %v3597, %v3601
    %v3969 = vrot.slane %v3968, 4
    %v3970 = vadd.f32 %v3968, %v3969
    %v3971 = vrot.slane %v3970, 2
    %v3972 = vadd.f32 %v3970, %v3971
    %v3973 = vrot.slane %v3972, 1
    %v3974 = vadd.f32 %v3972, %v3973
    %v3975 = vadd.f32 %v3767, %v3771
    %v3976 = vrot.slane %v3975, 4
    %v3977 = vadd.f32 %v3975, %v3976
    %v3978 = vrot.slane %v3977, 2
    %v3979 = vadd.f32 %v3977, %v3978
    %v3980 = vrot.slane %v3979, 1
    %v3981 = vadd.f32 %v3979, %v3980
    %v3982 = vadd.f32 %v3769, %v3773
    %v3983 = vrot.slane %v3982, 4
    %v3984 = vadd.f32 %v3982, %v3983
    %v3985 = vrot.slane %v3984, 2
    %v3986 = vadd.f32 %v3984, %v3985
    %v3987 = vrot.slane %v3986, 1
    %v3988 = vadd.f32 %v3986, %v3987
    %v3989 = vadd.f32 %v3939, %v3943
    %v3990 = vrot.slane %v3989, 4
    %v3991 = vadd.f32 %v3989, %v3990
    %v3992 = vrot.slane %v3991, 2
    %v3993 = vadd.f32 %v3991, %v3992
    %v3994 = vrot.slane %v3993, 1
    %v3995 = vadd.f32 %v3993, %v3994
    %v3996 = vadd.f32 %v3941, %v3945
    %v3997 = vrot.slane %v3996, 4
    %v3998 = vadd.f32 %v3996, %v3997
    %v3999 = vrot.slane %v3998, 2
    %v4000 = vadd.f32 %v3998, %v3999
    %v4001 = vrot.slane %v4000, 1
    %v4002 = vadd.f32 %v4000, %v4001
    %v4003 = vrcp.pop 16.0
    %v4004 = vmul.f32 %v3953, %v4003
    %v4005 = vmul.f32 %v3960, %v4003
    %v4006 = vmul.f32 %v3967, %v4003
    %v4007 = vmul.f32 %v3974, %v4003
    %v4008 = vmul.f32 %v3981, %v4003
    %v4009 = vmul.f32 %v3988, %v4003
    %v4010 = vmul.f32 %v3995, %v4003
    %v4011 = vmul.f32 %v4002, %v4003
    %v4012 = vmul.f32 %v3423, %v3423
    %v4013 = vmul.f32 %v3425, %v3425
    %v4014 = vmul.f32 %v3595, %v3595
    %v4015 = vmul.f32 %v3597, %v3597
    %v4016 = vmul.f32 %v3767, %v3767
    %v4017 = vmul.f32 %v3769, %v3769
    %v4018 = vmul.f32 %v3939, %v3939
    %v4019 = vmul.f32 %v3941, %v3941
    %v4020 = vmul.f32 %v3427, %v3427
    %v4021 = vmul.f32 %v3429, %v3429
    %v4022 = vmul.f32 %v3599, %v3599
    %v4023 = vmul.f32 %v3601, %v3601
    %v4024 = vmul.f32 %v3771, %v3771
    %v4025 = vmul.f32 %v3773, %v3773
    %v4026 = vmul.f32 %v3943, %v3943
    %v4027 = vmul.f32 %v3945, %v3945
    %v4028 = vadd.f32 %v4012, %v4020
    %v4029 = vrot.slane %v4028, 4
    %v4030 = vadd.f32 %v4028, %v4029
    %v4031 = vrot.slane %v4030, 2
    %v4032 = vadd.f32 %v4030, %v4031
    %v4033 = vrot.slane %v4032, 1
    %v4034 = vadd.f32 %v4032, %v4033
    %v4035 = vadd.f32 %v4013, %v4021
    %v4036 = vrot.slane %v4035, 4
    %v4037 = vadd.f32 %v4035, %v4036
    %v4038 = vrot.slane %v4037, 2
    %v4039 = vadd.f32 %v4037, %v4038
    %v4040 = vrot.slane %v4039, 1
    %v4041 = vadd.f32 %v4039, %v4040
    %v4042 = vadd.f32 %v4014, %v4022
    %v4043 = vrot.slane %v4042, 4
    %v4044 = vadd.f32 %v4042, %v4043
    %v4045 = vrot.slane %v4044, 2
    %v4046 = vadd.f32 %v4044, %v4045
    %v4047 = vrot.slane %v4046, 1
    %v4048 = vadd.f32 %v4046, %v4047
    %v4049 = vadd.f32 %v4015, %v4023
    %v4050 = vrot.slane %v4049, 4
    %v4051 = vadd.f32 %v4049, %v4050
    %v4052 = vrot.slane %v4051, 2
    %v4053 = vadd.f32 %v4051, %v4052
    %v4054 = vrot.slane %v4053, 1
    %v4055 = vadd.f32 %v4053, %v4054
    %v4056 = vadd.f32 %v4016, %v4024
    %v4057 = vrot.slane %v4056, 4
    %v4058 = vadd.f32 %v4056, %v4057
    %v4059 = vrot.slane %v4058, 2
    %v4060 = vadd.f32 %v4058, %v4059
    %v4061 = vrot.slane %v4060, 1
    %v4062 = vadd.f32 %v4060, %v4061
    %v4063 = vadd.f32 %v4017, %v4025
    %v4064 = vrot.slane %v4063, 4
    %v4065 = vadd.f32 %v4063, %v4064
    %v4066 = vrot.slane %v4065, 2
    %v4067 = vadd.f32 %v4065, %v4066
    %v4068 = vrot.slane %v4067, 1
    %v4069 = vadd.f32 %v4067, %v4068
    %v4070 = vadd.f32 %v4018, %v4026
    %v4071 = vrot.slane %v4070, 4
    %v4072 = vadd.f32 %v4070, %v4071
    %v4073 = vrot.slane %v4072, 2
    %v4074 = vadd.f32 %v4072, %v4073
    %v4075 = vrot.slane %v4074, 1
    %v4076 = vadd.f32 %v4074, %v4075
    %v4077 = vadd.f32 %v4019, %v4027
    %v4078 = vrot.slane %v4077, 4
    %v4079 = vadd.f32 %v4077, %v4078
    %v4080 = vrot.slane %v4079, 2
    %v4081 = vadd.f32 %v4079, %v4080
    %v4082 = vrot.slane %v4081, 1
    %v4083 = vadd.f32 %v4081, %v4082
    %v4084 = vmul.f32 %v4034, %v4003
    %v4085 = vmul.f32 %v4041, %v4003
    %v4086 = vmul.f32 %v4048, %v4003
    %v4087 = vmul.f32 %v4055, %v4003
    %v4088 = vmul.f32 %v4062, %v4003
    %v4089 = vmul.f32 %v4069, %v4003
    %v4090 = vmul.f32 %v4076, %v4003
    %v4091 = vmul.f32 %v4083, %v4003
    %v4092 = vmul.f32 %v4004, %v4004
    %v4093 = vmul.f32 %v4005, %v4005
    %v4094 = vmul.f32 %v4006, %v4006
    %v4095 = vmul.f32 %v4007, %v4007
    %v4096 = vmul.f32 %v4008, %v4008
    %v4097 = vmul.f32 %v4009, %v4009
    %v4098 = vmul.f32 %v4010, %v4010
    %v4099 = vmul.f32 %v4011, %v4011
    %v4100 = vsub.f32 %v4084, %v4092
    %v4101 = vsub.f32 %v4085, %v4093
    %v4102 = vsub.f32 %v4086, %v4094
    %v4103 = vsub.f32 %v4087, %v4095
    %v4104 = vsub.f32 %v4088, %v4096
    %v4105 = vsub.f32 %v4089, %v4097
    %v4106 = vsub.f32 %v4090, %v4098
    %v4107 = vsub.f32 %v4091, %v4099
    %s4108 = scalar_lea.vmem [#allocation11], 1
    %v4109 = vld [vmem:[%s4108] ss:$8 sm:$0xf]
    %v4110 = vld [vmem:[%s4108] ss:$8 sm:$0xf0]
    %v4111 = vor.u32 %v4109, %v4110
    %v4112 = vadd.f32 %v4100, 0.001
    %v4113 = vadd.f32 %v4101, 0.001
    %v4114 = vadd.f32 %v4102, 0.001
    %v4115 = vadd.f32 %v4103, 0.001
    %v4116 = vadd.f32 %v4104, 0.001
    %v4117 = vadd.f32 %v4105, 0.001
    %v4118 = vadd.f32 %v4106, 0.001
    %v4119 = vadd.f32 %v4107, 0.001
    %v4120 = vrsqrt.pop %v4112
    %v4121 = vrsqrt.pop %v4113
    %v4122 = vrsqrt.pop %v4114
    %v4123 = vrsqrt.pop %v4115
    %v4124 = vrsqrt.pop %v4116
    %v4125 = vrsqrt.pop %v4117
    %v4126 = vrsqrt.pop %v4118
    %v4127 = vrsqrt.pop %v4119
    %v4136 = vcombine.low %v4120, %v4121
    %v4137 = vcombine.low %v4122, %v4123
    %v4138 = vcombine.low %v4124, %v4125
    %v4139 = vcombine.low %v4126, %v4127
    %v4141 = vunpack.c.l.s4 1966171168
    %v4142 = vunpack.c.0.s8 %v4141
    %v4143 = vlaneseq
    %v4144 = vshrl.u32 %v4143, 7
    %v4145 = vsub.s32 %v4142, %v4144
    %v4146 = vrot.slane %v4136, %v4145
    %v4148 = vunpack.c.l.s4 1966171168
    %v4149 = vunpack.c.0.s8 %v4148
    %v4150 = vlaneseq
    %v4151 = vshrl.u32 %v4150, 7
    %v4152 = vsub.s32 %v4149, %v4151
    %v4153 = vrot.slane %v4137, %v4152
    %v4155 = vunpack.c.l.s4 1966171168
    %v4156 = vunpack.c.0.s8 %v4155
    %v4157 = vlaneseq
    %v4158 = vshrl.u32 %v4157, 7
    %v4159 = vsub.s32 %v4156, %v4158
    %v4160 = vrot.slane %v4138, %v4159
    %v4162 = vunpack.c.l.s4 1966171168
    %v4163 = vunpack.c.0.s8 %v4162
    %v4164 = vlaneseq
    %v4165 = vshrl.u32 %v4164, 7
    %v4166 = vsub.s32 %v4163, %v4165
    %v4167 = vrot.slane %v4139, %v4166
    %v4168 = vcombine.low %v4146, %v4153
    %v4169 = vcombine.low %v4160, %v4167
    %v4171 = vunpack.c.l.s4 1966171168
    %v4172 = vunpack.c.0.s8 %v4171
    %v4173 = vlaneseq
    %v4174 = vshrl.u32 %v4173, 7
    %v4175 = vsub.s32 %v4172, %v4174
    %v4176 = vrot.slane %v4168, %v4175
    %v4178 = vunpack.c.l.s4 1966171168
    %v4179 = vunpack.c.0.s8 %v4178
    %v4180 = vlaneseq
    %v4181 = vshrl.u32 %v4180, 7
    %v4182 = vsub.s32 %v4179, %v4181
    %v4183 = vrot.slane %v4169, %v4182
    %v4184 = vcombine.low %v4176, %v4183
    %v4186 = vmul.f32 %v4111, %v4184
    %v4188 = vlaneseq
    %v4189 = vshrl.u32 %v4188, 7
    %v4190 = vsub.s32 0, %v4189
    %v4191 = vrot.slane %v4186, %v4190
    %v4192 = vlaneseq
    %v4193 = vshrl.u32 %v4192, 7
    %v4194 = vsub.s32 1, %v4193
    %v4195 = vrot.slane %v4186, %v4194
    %v4196 = vlaneseq
    %v4197 = vshrl.u32 %v4196, 7
    %v4198 = vsub.s32 2, %v4197
    %v4199 = vrot.slane %v4186, %v4198
    %v4200 = vlaneseq
    %v4201 = vshrl.u32 %v4200, 7
    %v4202 = vsub.s32 3, %v4201
    %v4203 = vrot.slane %v4186, %v4202
    %v4204 = vlaneseq
    %v4205 = vshrl.u32 %v4204, 7
    %v4206 = vsub.s32 4, %v4205
    %v4207 = vrot.slane %v4186, %v4206
    %v4208 = vlaneseq
    %v4209 = vshrl.u32 %v4208, 7
    %v4210 = vsub.s32 5, %v4209
    %v4211 = vrot.slane %v4186, %v4210
    %v4212 = vlaneseq
    %v4213 = vshrl.u32 %v4212, 7
    %v4214 = vsub.s32 6, %v4213
    %v4215 = vrot.slane %v4186, %v4214
    %v4216 = vlaneseq
    %v4217 = vshrl.u32 %v4216, 7
    %v4218 = vsub.s32 7, %v4217
    %v4219 = vrot.slane %v4186, %v4218
    %v4228 = vmul.f32 %v3423, %v4191
    %v4229 = vmul.f32 %v3425, %v4195
    %v4230 = vmul.f32 %v3595, %v4199
    %v4231 = vmul.f32 %v3597, %v4203
    %v4232 = vmul.f32 %v3767, %v4207
    %v4233 = vmul.f32 %v3769, %v4211
    %v4234 = vmul.f32 %v3939, %v4215
    %v4235 = vmul.f32 %v3941, %v4219
    %v4236 = vmul.f32 %v3427, %v4191
    %v4237 = vmul.f32 %v3429, %v4195
    %v4238 = vmul.f32 %v3599, %v4199
    %v4239 = vmul.f32 %v3601, %v4203
    %v4240 = vmul.f32 %v3771, %v4207
    %v4241 = vmul.f32 %v3773, %v4211
    %v4242 = vmul.f32 %v3943, %v4215
    %v4243 = vmul.f32 %v3945, %v4219
    %s4244 = scalar_lea.vmem [#allocation11], 2
    %v4245 = vld [vmem:[%s4244] ss:$8 sm:$0xf]
    %v4246 = vld [vmem:[%s4244] ss:$8 sm:$0xf0]
    %v4247 = vor.u32 %v4245, %v4246
    %v4248 = vmul.f32 %v4004, %v4191
    %v4249 = vmul.f32 %v4005, %v4195
    %v4250 = vmul.f32 %v4006, %v4199
    %v4251 = vmul.f32 %v4007, %v4203
    %v4252 = vmul.f32 %v4008, %v4207
    %v4253 = vmul.f32 %v4009, %v4211
    %v4254 = vmul.f32 %v4010, %v4215
    %v4255 = vmul.f32 %v4011, %v4219
    %v4264 = vcombine.low %v4248, %v4249
    %v4265 = vcombine.low %v4250, %v4251
    %v4266 = vcombine.low %v4252, %v4253
    %v4267 = vcombine.low %v4254, %v4255
    %v4269 = vunpack.c.l.s4 1966171168
    %v4270 = vunpack.c.0.s8 %v4269
    %v4271 = vlaneseq
    %v4272 = vshrl.u32 %v4271, 7
    %v4273 = vsub.s32 %v4270, %v4272
    %v4274 = vrot.slane %v4264, %v4273
    %v4276 = vunpack.c.l.s4 1966171168
    %v4277 = vunpack.c.0.s8 %v4276
    %v4278 = vlaneseq
    %v4279 = vshrl.u32 %v4278, 7
    %v4280 = vsub.s32 %v4277, %v4279
    %v4281 = vrot.slane %v4265, %v4280
    %v4283 = vunpack.c.l.s4 1966171168
    %v4284 = vunpack.c.0.s8 %v4283
    %v4285 = vlaneseq
    %v4286 = vshrl.u32 %v4285, 7
    %v4287 = vsub.s32 %v4284, %v4286
    %v4288 = vrot.slane %v4266, %v4287
    %v4290 = vunpack.c.l.s4 1966171168
    %v4291 = vunpack.c.0.s8 %v4290
    %v4292 = vlaneseq
    %v4293 = vshrl.u32 %v4292, 7
    %v4294 = vsub.s32 %v4291, %v4293
    %v4295 = vrot.slane %v4267, %v4294
    %v4296 = vcombine.low %v4274, %v4281
    %v4297 = vcombine.low %v4288, %v4295
    %v4299 = vunpack.c.l.s4 1966171168
    %v4300 = vunpack.c.0.s8 %v4299
    %v4301 = vlaneseq
    %v4302 = vshrl.u32 %v4301, 7
    %v4303 = vsub.s32 %v4300, %v4302
    %v4304 = vrot.slane %v4296, %v4303
    %v4306 = vunpack.c.l.s4 1966171168
    %v4307 = vunpack.c.0.s8 %v4306
    %v4308 = vlaneseq
    %v4309 = vshrl.u32 %v4308, 7
    %v4310 = vsub.s32 %v4307, %v4309
    %v4311 = vrot.slane %v4297, %v4310
    %v4312 = vcombine.low %v4304, %v4311
    %v4314 = vsub.f32 %v4247, %v4312
    %v4316 = vlaneseq
    %v4317 = vshrl.u32 %v4316, 7
    %v4318 = vsub.s32 0, %v4317
    %v4319 = vrot.slane %v4314, %v4318
    %v4320 = vlaneseq
    %v4321 = vshrl.u32 %v4320, 7
    %v4322 = vsub.s32 1, %v4321
    %v4323 = vrot.slane %v4314, %v4322
    %v4324 = vlaneseq
    %v4325 = vshrl.u32 %v4324, 7
    %v4326 = vsub.s32 2, %v4325
    %v4327 = vrot.slane %v4314, %v4326
    %v4328 = vlaneseq
    %v4329 = vshrl.u32 %v4328, 7
    %v4330 = vsub.s32 3, %v4329
    %v4331 = vrot.slane %v4314, %v4330
    %v4332 = vlaneseq
    %v4333 = vshrl.u32 %v4332, 7
    %v4334 = vsub.s32 4, %v4333
    %v4335 = vrot.slane %v4314, %v4334
    %v4336 = vlaneseq
    %v4337 = vshrl.u32 %v4336, 7
    %v4338 = vsub.s32 5, %v4337
    %v4339 = vrot.slane %v4314, %v4338
    %v4340 = vlaneseq
    %v4341 = vshrl.u32 %v4340, 7
    %v4342 = vsub.s32 6, %v4341
    %v4343 = vrot.slane %v4314, %v4342
    %v4344 = vlaneseq
    %v4345 = vshrl.u32 %v4344, 7
    %v4346 = vsub.s32 7, %v4345
    %v4347 = vrot.slane %v4314, %v4346
    %v4356 = vadd.f32 %v4228, %v4319
    %v4357 = vadd.f32 %v4229, %v4323
    %v4358 = vadd.f32 %v4230, %v4327
    %v4359 = vadd.f32 %v4231, %v4331
    %v4360 = vadd.f32 %v4232, %v4335
    %v4361 = vadd.f32 %v4233, %v4339
    %v4362 = vadd.f32 %v4234, %v4343
    %v4363 = vadd.f32 %v4235, %v4347
    %v4364 = vadd.f32 %v4236, %v4319
    %v4365 = vadd.f32 %v4237, %v4323
    %v4366 = vadd.f32 %v4238, %v4327
    %v4367 = vadd.f32 %v4239, %v4331
    %v4368 = vadd.f32 %v4240, %v4335
    %v4369 = vadd.f32 %v4241, %v4339
    %v4370 = vadd.f32 %v4242, %v4343
    %v4371 = vadd.f32 %v4243, %v4347
    %v4372 = vpack.c.bf16 %v4364, %v4356
    %v4373 = vpack.c.bf16 %v4365, %v4357
    %v4374 = vpack.c.bf16 %v4366, %v4358
    %v4375 = vpack.c.bf16 %v4367, %v4359
    %v4376 = vpack.c.bf16 %v4368, %v4360
    %v4377 = vpack.c.bf16 %v4369, %v4361
    %v4378 = vpack.c.bf16 %v4370, %v4362
    %v4379 = vpack.c.bf16 %v4371, %v4363
    %v4380 = vld [vmem:[#allocation7] sm:$0xff]
    %v4381 = vld [vmem:[#allocation7 + $0x8] sm:$0xff]
    %v4382 = vld [vmem:[#allocation7 + $0x10] sm:$0xff]
    %v4383 = vld [vmem:[#allocation7 + $0x18] sm:$0xff]
    %v4384 = vld [vmem:[#allocation7 + $0x20] sm:$0xff]
    %v4385 = vld [vmem:[#allocation7 + $0x28] sm:$0xff]
    %v4386 = vld [vmem:[#allocation7 + $0x30] sm:$0xff]
    %v4387 = vld [vmem:[#allocation7 + $0x38] sm:$0xff]
    %v4388 = vld [vmem:[#allocation7 + $0x40] sm:$0xff]
    %v4389 = vld [vmem:[#allocation7 + $0x48] sm:$0xff]
    %v4390 = vld [vmem:[#allocation7 + $0x50] sm:$0xff]
    %v4391 = vld [vmem:[#allocation7 + $0x58] sm:$0xff]
    %v4392 = vld [vmem:[#allocation7 + $0x60] sm:$0xff]
    %v4393 = vld [vmem:[#allocation7 + $0x68] sm:$0xff]
    %v4394 = vld [vmem:[#allocation7 + $0x70] sm:$0xff]
    %v4395 = vld [vmem:[#allocation7 + $0x78] sm:$0xff]
    %v4396 = vld [vmem:[#allocation7 + $0x80] sm:$0xff]
    %v4397 = vld [vmem:[#allocation7 + $0x88] sm:$0xff]
    %v4398 = vld [vmem:[#allocation7 + $0x90] sm:$0xff]
    %v4399 = vld [vmem:[#allocation7 + $0x98] sm:$0xff]
    %v4400 = vld [vmem:[#allocation7 + $0xa0] sm:$0xff]
    %v4401 = vld [vmem:[#allocation7 + $0xa8] sm:$0xff]
    %v4402 = vld [vmem:[#allocation7 + $0xb0] sm:$0xff]
    %v4403 = vld [vmem:[#allocation7 + $0xb8] sm:$0xff]
    %v4404 = vld [vmem:[#allocation7 + $0xc0] sm:$0xff]
    %v4405 = vld [vmem:[#allocation7 + $0xc8] sm:$0xff]
    %v4406 = vld [vmem:[#allocation7 + $0xd0] sm:$0xff]
    %v4407 = vld [vmem:[#allocation7 + $0xd8] sm:$0xff]
    %v4408 = vld [vmem:[#allocation7 + $0xe0] sm:$0xff]
    %v4409 = vld [vmem:[#allocation7 + $0xe8] sm:$0xff]
    %v4410 = vld [vmem:[#allocation7 + $0xf0] sm:$0xff]
    %v4411 = vld [vmem:[#allocation7 + $0xf8] sm:$0xff]
    %v4412 = vld [vmem:[#allocation7 + $0x100] sm:$0xff]
    %v4413 = vld [vmem:[#allocation7 + $0x108] sm:$0xff]
    %v4414 = vld [vmem:[#allocation7 + $0x110] sm:$0xff]
    %v4415 = vld [vmem:[#allocation7 + $0x118] sm:$0xff]
    %v4416 = vld [vmem:[#allocation7 + $0x120] sm:$0xff]
    %v4417 = vld [vmem:[#allocation7 + $0x128] sm:$0xff]
    %v4418 = vld [vmem:[#allocation7 + $0x130] sm:$0xff]
    %v4419 = vld [vmem:[#allocation7 + $0x138] sm:$0xff]
    %v4420 = vld [vmem:[#allocation7 + $0x140] sm:$0xff]
    %v4421 = vld [vmem:[#allocation7 + $0x148] sm:$0xff]
    %v4422 = vld [vmem:[#allocation7 + $0x150] sm:$0xff]
    %v4423 = vld [vmem:[#allocation7 + $0x158] sm:$0xff]
    %v4424 = vld [vmem:[#allocation7 + $0x160] sm:$0xff]
    %v4425 = vld [vmem:[#allocation7 + $0x168] sm:$0xff]
    %v4426 = vld [vmem:[#allocation7 + $0x170] sm:$0xff]
    %v4427 = vld [vmem:[#allocation7 + $0x178] sm:$0xff]
    %v4428 = vld [vmem:[#allocation7 + $0x180] sm:$0xff]
    %v4429 = vld [vmem:[#allocation7 + $0x188] sm:$0xff]
    %v4430 = vld [vmem:[#allocation7 + $0x190] sm:$0xff]
    %v4431 = vld [vmem:[#allocation7 + $0x198] sm:$0xff]
    %v4432 = vld [vmem:[#allocation7 + $0x1a0] sm:$0xff]
    %v4433 = vld [vmem:[#allocation7 + $0x1a8] sm:$0xff]
    %v4434 = vld [vmem:[#allocation7 + $0x1b0] sm:$0xff]
    %v4435 = vld [vmem:[#allocation7 + $0x1b8] sm:$0xff]
    %v4436 = vld [vmem:[#allocation7 + $0x1c0] sm:$0xff]
    %v4437 = vld [vmem:[#allocation7 + $0x1c8] sm:$0xff]
    %v4438 = vld [vmem:[#allocation7 + $0x1d0] sm:$0xff]
    %v4439 = vld [vmem:[#allocation7 + $0x1d8] sm:$0xff]
    %v4440 = vld [vmem:[#allocation7 + $0x1e0] sm:$0xff]
    %v4441 = vld [vmem:[#allocation7 + $0x1e8] sm:$0xff]
    %v4442 = vld [vmem:[#allocation7 + $0x1f0] sm:$0xff]
    %v4443 = vld [vmem:[#allocation7 + $0x1f8] sm:$0xff]
    %v4444 = vld [vmem:[#allocation7 + $0x200] sm:$0xff]
    %v4445 = vld [vmem:[#allocation7 + $0x208] sm:$0xff]
    %v4446 = vld [vmem:[#allocation7 + $0x210] sm:$0xff]
    %v4447 = vld [vmem:[#allocation7 + $0x218] sm:$0xff]
    %v4448 = vld [vmem:[#allocation7 + $0x220] sm:$0xff]
    %v4449 = vld [vmem:[#allocation7 + $0x228] sm:$0xff]
    %v4450 = vld [vmem:[#allocation7 + $0x230] sm:$0xff]
    %v4451 = vld [vmem:[#allocation7 + $0x238] sm:$0xff]
    %v4452 = vld [vmem:[#allocation7 + $0x240] sm:$0xff]
    %v4453 = vld [vmem:[#allocation7 + $0x248] sm:$0xff]
    %v4454 = vld [vmem:[#allocation7 + $0x250] sm:$0xff]
    %v4455 = vld [vmem:[#allocation7 + $0x258] sm:$0xff]
    %v4456 = vld [vmem:[#allocation7 + $0x260] sm:$0xff]
    %v4457 = vld [vmem:[#allocation7 + $0x268] sm:$0xff]
    %v4458 = vld [vmem:[#allocation7 + $0x270] sm:$0xff]
    %v4459 = vld [vmem:[#allocation7 + $0x278] sm:$0xff]
    %v4460 = vld [vmem:[#allocation7 + $0x280] sm:$0xff]
    %v4461 = vld [vmem:[#allocation7 + $0x288] sm:$0xff]
    %v4462 = vld [vmem:[#allocation7 + $0x290] sm:$0xff]
    %v4463 = vld [vmem:[#allocation7 + $0x298] sm:$0xff]
    %v4464 = vld [vmem:[#allocation7 + $0x2a0] sm:$0xff]
    %v4465 = vld [vmem:[#allocation7 + $0x2a8] sm:$0xff]
    %v4466 = vld [vmem:[#allocation7 + $0x2b0] sm:$0xff]
    %v4467 = vld [vmem:[#allocation7 + $0x2b8] sm:$0xff]
    %v4468 = vld [vmem:[#allocation7 + $0x2c0] sm:$0xff]
    %v4469 = vld [vmem:[#allocation7 + $0x2c8] sm:$0xff]
    %v4470 = vld [vmem:[#allocation7 + $0x2d0] sm:$0xff]
    %v4471 = vld [vmem:[#allocation7 + $0x2d8] sm:$0xff]
    %v4472 = vld [vmem:[#allocation7 + $0x2e0] sm:$0xff]
    %v4473 = vld [vmem:[#allocation7 + $0x2e8] sm:$0xff]
    %v4474 = vld [vmem:[#allocation7 + $0x2f0] sm:$0xff]
    %v4475 = vld [vmem:[#allocation7 + $0x2f8] sm:$0xff]
    %v4476 = vld [vmem:[#allocation7 + $0x300] sm:$0xff]
    %v4477 = vld [vmem:[#allocation7 + $0x308] sm:$0xff]
    %v4478 = vld [vmem:[#allocation7 + $0x310] sm:$0xff]
    %v4479 = vld [vmem:[#allocation7 + $0x318] sm:$0xff]
    %v4480 = vld [vmem:[#allocation7 + $0x320] sm:$0xff]
    %v4481 = vld [vmem:[#allocation7 + $0x328] sm:$0xff]
    %v4482 = vld [vmem:[#allocation7 + $0x330] sm:$0xff]
    %v4483 = vld [vmem:[#allocation7 + $0x338] sm:$0xff]
    %v4484 = vld [vmem:[#allocation7 + $0x340] sm:$0xff]
    %v4485 = vld [vmem:[#allocation7 + $0x348] sm:$0xff]
    %v4486 = vld [vmem:[#allocation7 + $0x350] sm:$0xff]
    %v4487 = vld [vmem:[#allocation7 + $0x358] sm:$0xff]
    %v4488 = vld [vmem:[#allocation7 + $0x360] sm:$0xff]
    %v4489 = vld [vmem:[#allocation7 + $0x368] sm:$0xff]
    %v4490 = vld [vmem:[#allocation7 + $0x370] sm:$0xff]
    %v4491 = vld [vmem:[#allocation7 + $0x378] sm:$0xff]
    %v4492 = vld [vmem:[#allocation7 + $0x380] sm:$0xff]
    %v4493 = vld [vmem:[#allocation7 + $0x388] sm:$0xff]
    %v4494 = vld [vmem:[#allocation7 + $0x390] sm:$0xff]
    %v4495 = vld [vmem:[#allocation7 + $0x398] sm:$0xff]
    %v4496 = vld [vmem:[#allocation7 + $0x3a0] sm:$0xff]
    %v4497 = vld [vmem:[#allocation7 + $0x3a8] sm:$0xff]
    %v4498 = vld [vmem:[#allocation7 + $0x3b0] sm:$0xff]
    %v4499 = vld [vmem:[#allocation7 + $0x3b8] sm:$0xff]
    %v4500 = vld [vmem:[#allocation7 + $0x3c0] sm:$0xff]
    %v4501 = vld [vmem:[#allocation7 + $0x3c8] sm:$0xff]
    %v4502 = vld [vmem:[#allocation7 + $0x3d0] sm:$0xff]
    %v4503 = vld [vmem:[#allocation7 + $0x3d8] sm:$0xff]
    %v4504 = vld [vmem:[#allocation7 + $0x3e0] sm:$0xff]
    %v4505 = vld [vmem:[#allocation7 + $0x3e8] sm:$0xff]
    %v4506 = vld [vmem:[#allocation7 + $0x3f0] sm:$0xff]
    %v4507 = vld [vmem:[#allocation7 + $0x3f8] sm:$0xff]
    %v4508 = vld [vmem:[#allocation7 + $0x400] sm:$0xff]
    %v4509 = vld [vmem:[#allocation7 + $0x408] sm:$0xff]
    %v4510 = vld [vmem:[#allocation7 + $0x410] sm:$0xff]
    %v4511 = vld [vmem:[#allocation7 + $0x418] sm:$0xff]
    %v4512 = vld [vmem:[#allocation7 + $0x420] sm:$0xff]
    %v4513 = vld [vmem:[#allocation7 + $0x428] sm:$0xff]
    %v4514 = vld [vmem:[#allocation7 + $0x430] sm:$0xff]
    %v4515 = vld [vmem:[#allocation7 + $0x438] sm:$0xff]
    %v4516 = vld [vmem:[#allocation7 + $0x440] sm:$0xff]
    %v4517 = vld [vmem:[#allocation7 + $0x448] sm:$0xff]
    %v4518 = vld [vmem:[#allocation7 + $0x450] sm:$0xff]
    %v4519 = vld [vmem:[#allocation7 + $0x458] sm:$0xff]
    %v4520 = vld [vmem:[#allocation7 + $0x460] sm:$0xff]
    %v4521 = vld [vmem:[#allocation7 + $0x468] sm:$0xff]
    %v4522 = vld [vmem:[#allocation7 + $0x470] sm:$0xff]
    %v4523 = vld [vmem:[#allocation7 + $0x478] sm:$0xff]
    %v4524 = vld [vmem:[#allocation7 + $0x480] sm:$0xff]
    %v4525 = vld [vmem:[#allocation7 + $0x488] sm:$0xff]
    %v4526 = vld [vmem:[#allocation7 + $0x490] sm:$0xff]
    %v4527 = vld [vmem:[#allocation7 + $0x498] sm:$0xff]
    %v4528 = vld [vmem:[#allocation7 + $0x4a0] sm:$0xff]
    %v4529 = vld [vmem:[#allocation7 + $0x4a8] sm:$0xff]
    %v4530 = vld [vmem:[#allocation7 + $0x4b0] sm:$0xff]
    %v4531 = vld [vmem:[#allocation7 + $0x4b8] sm:$0xff]
    %v4532 = vld [vmem:[#allocation7 + $0x4c0] sm:$0xff]
    %v4533 = vld [vmem:[#allocation7 + $0x4c8] sm:$0xff]
    %v4534 = vld [vmem:[#allocation7 + $0x4d0] sm:$0xff]
    %v4535 = vld [vmem:[#allocation7 + $0x4d8] sm:$0xff]
    %v4536 = vld [vmem:[#allocation7 + $0x4e0] sm:$0xff]
    %v4537 = vld [vmem:[#allocation7 + $0x4e8] sm:$0xff]
    %v4538 = vld [vmem:[#allocation7 + $0x4f0] sm:$0xff]
    %v4539 = vld [vmem:[#allocation7 + $0x4f8] sm:$0xff]
    %v4540 = vld [vmem:[#allocation7 + $0x500] sm:$0xff]
    %v4541 = vld [vmem:[#allocation7 + $0x508] sm:$0xff]
    %v4542 = vld [vmem:[#allocation7 + $0x510] sm:$0xff]
    %v4543 = vld [vmem:[#allocation7 + $0x518] sm:$0xff]
    %v4544 = vld [vmem:[#allocation7 + $0x520] sm:$0xff]
    %v4545 = vld [vmem:[#allocation7 + $0x528] sm:$0xff]
    %v4546 = vld [vmem:[#allocation7 + $0x530] sm:$0xff]
    %v4547 = vld [vmem:[#allocation7 + $0x538] sm:$0xff]
    %v4548 = vld [vmem:[#allocation7 + $0x540] sm:$0xff]
    %v4549 = vld [vmem:[#allocation7 + $0x548] sm:$0xff]
    %v4550 = vld [vmem:[#allocation7 + $0x550] sm:$0xff]
    %v4551 = vld [vmem:[#allocation7 + $0x558] sm:$0xff]
    %v4552 = vld [vmem:[#allocation7 + $0x560] sm:$0xff]
    %v4553 = vld [vmem:[#allocation7 + $0x568] sm:$0xff]
    %v4554 = vld [vmem:[#allocation7 + $0x570] sm:$0xff]
    %v4555 = vld [vmem:[#allocation7 + $0x578] sm:$0xff]
    %v4556 = vld [vmem:[#allocation7 + $0x580] sm:$0xff]
    %v4557 = vld [vmem:[#allocation7 + $0x588] sm:$0xff]
    %v4558 = vld [vmem:[#allocation7 + $0x590] sm:$0xff]
    %v4559 = vld [vmem:[#allocation7 + $0x598] sm:$0xff]
    %v4560 = vld [vmem:[#allocation7 + $0x5a0] sm:$0xff]
    %v4561 = vld [vmem:[#allocation7 + $0x5a8] sm:$0xff]
    %v4562 = vld [vmem:[#allocation7 + $0x5b0] sm:$0xff]
    %v4563 = vld [vmem:[#allocation7 + $0x5b8] sm:$0xff]
    %v4564 = vld [vmem:[#allocation7 + $0x5c0] sm:$0xff]
    %v4565 = vld [vmem:[#allocation7 + $0x5c8] sm:$0xff]
    %v4566 = vld [vmem:[#allocation7 + $0x5d0] sm:$0xff]
    %v4567 = vld [vmem:[#allocation7 + $0x5d8] sm:$0xff]
    %v4568 = vld [vmem:[#allocation7 + $0x5e0] sm:$0xff]
    %v4569 = vld [vmem:[#allocation7 + $0x5e8] sm:$0xff]
    %v4570 = vld [vmem:[#allocation7 + $0x5f0] sm:$0xff]
    %v4571 = vld [vmem:[#allocation7 + $0x5f8] sm:$0xff]
    %v4572 = vld [vmem:[#allocation7 + $0x600] sm:$0xff]
    %v4573 = vld [vmem:[#allocation7 + $0x608] sm:$0xff]
    %v4574 = vld [vmem:[#allocation7 + $0x610] sm:$0xff]
    %v4575 = vld [vmem:[#allocation7 + $0x618] sm:$0xff]
    %v4576 = vld [vmem:[#allocation7 + $0x620] sm:$0xff]
    %v4577 = vld [vmem:[#allocation7 + $0x628] sm:$0xff]
    %v4578 = vld [vmem:[#allocation7 + $0x630] sm:$0xff]
    %v4579 = vld [vmem:[#allocation7 + $0x638] sm:$0xff]
    %v4580 = vld [vmem:[#allocation7 + $0x640] sm:$0xff]
    %v4581 = vld [vmem:[#allocation7 + $0x648] sm:$0xff]
    %v4582 = vld [vmem:[#allocation7 + $0x650] sm:$0xff]
    %v4583 = vld [vmem:[#allocation7 + $0x658] sm:$0xff]
    %v4584 = vld [vmem:[#allocation7 + $0x660] sm:$0xff]
    %v4585 = vld [vmem:[#allocation7 + $0x668] sm:$0xff]
    %v4586 = vld [vmem:[#allocation7 + $0x670] sm:$0xff]
    %v4587 = vld [vmem:[#allocation7 + $0x678] sm:$0xff]
    %v4588 = vld [vmem:[#allocation7 + $0x680] sm:$0xff]
    %v4589 = vld [vmem:[#allocation7 + $0x688] sm:$0xff]
    %v4590 = vld [vmem:[#allocation7 + $0x690] sm:$0xff]
    %v4591 = vld [vmem:[#allocation7 + $0x698] sm:$0xff]
    %v4592 = vld [vmem:[#allocation7 + $0x6a0] sm:$0xff]
    %v4593 = vld [vmem:[#allocation7 + $0x6a8] sm:$0xff]
    %v4594 = vld [vmem:[#allocation7 + $0x6b0] sm:$0xff]
    %v4595 = vld [vmem:[#allocation7 + $0x6b8] sm:$0xff]
    %v4596 = vld [vmem:[#allocation7 + $0x6c0] sm:$0xff]
    %v4597 = vld [vmem:[#allocation7 + $0x6c8] sm:$0xff]
    %v4598 = vld [vmem:[#allocation7 + $0x6d0] sm:$0xff]
    %v4599 = vld [vmem:[#allocation7 + $0x6d8] sm:$0xff]
    %v4600 = vld [vmem:[#allocation7 + $0x6e0] sm:$0xff]
    %v4601 = vld [vmem:[#allocation7 + $0x6e8] sm:$0xff]
    %v4602 = vld [vmem:[#allocation7 + $0x6f0] sm:$0xff]
    %v4603 = vld [vmem:[#allocation7 + $0x6f8] sm:$0xff]
    %v4604 = vld [vmem:[#allocation7 + $0x700] sm:$0xff]
    %v4605 = vld [vmem:[#allocation7 + $0x708] sm:$0xff]
    %v4606 = vld [vmem:[#allocation7 + $0x710] sm:$0xff]
    %v4607 = vld [vmem:[#allocation7 + $0x718] sm:$0xff]
    %v4608 = vld [vmem:[#allocation7 + $0x720] sm:$0xff]
    %v4609 = vld [vmem:[#allocation7 + $0x728] sm:$0xff]
    %v4610 = vld [vmem:[#allocation7 + $0x730] sm:$0xff]
    %v4611 = vld [vmem:[#allocation7 + $0x738] sm:$0xff]
    %v4612 = vld [vmem:[#allocation7 + $0x740] sm:$0xff]
    %v4613 = vld [vmem:[#allocation7 + $0x748] sm:$0xff]
    %v4614 = vld [vmem:[#allocation7 + $0x750] sm:$0xff]
    %v4615 = vld [vmem:[#allocation7 + $0x758] sm:$0xff]
    %v4616 = vld [vmem:[#allocation7 + $0x760] sm:$0xff]
    %v4617 = vld [vmem:[#allocation7 + $0x768] sm:$0xff]
    %v4618 = vld [vmem:[#allocation7 + $0x770] sm:$0xff]
    %v4619 = vld [vmem:[#allocation7 + $0x778] sm:$0xff]
    %v4620 = vld [vmem:[#allocation7 + $0x780] sm:$0xff]
    %v4621 = vld [vmem:[#allocation7 + $0x788] sm:$0xff]
    %v4622 = vld [vmem:[#allocation7 + $0x790] sm:$0xff]
    %v4623 = vld [vmem:[#allocation7 + $0x798] sm:$0xff]
    %v4624 = vld [vmem:[#allocation7 + $0x7a0] sm:$0xff]
    %v4625 = vld [vmem:[#allocation7 + $0x7a8] sm:$0xff]
    %v4626 = vld [vmem:[#allocation7 + $0x7b0] sm:$0xff]
    %v4627 = vld [vmem:[#allocation7 + $0x7b8] sm:$0xff]
    %v4628 = vld [vmem:[#allocation7 + $0x7c0] sm:$0xff]
    %v4629 = vld [vmem:[#allocation7 + $0x7c8] sm:$0xff]
    %v4630 = vld [vmem:[#allocation7 + $0x7d0] sm:$0xff]
    %v4631 = vld [vmem:[#allocation7 + $0x7d8] sm:$0xff]
    %v4632 = vld [vmem:[#allocation7 + $0x7e0] sm:$0xff]
    %v4633 = vld [vmem:[#allocation7 + $0x7e8] sm:$0xff]
    %v4634 = vld [vmem:[#allocation7 + $0x7f0] sm:$0xff]
    %v4635 = vld [vmem:[#allocation7 + $0x7f8] sm:$0xff]
    %v4636 = vld [vmem:[#allocation7 + $0x800] sm:$0xff]
    %v4637 = vld [vmem:[#allocation7 + $0x808] sm:$0xff]
    %v4638 = vld [vmem:[#allocation7 + $0x810] sm:$0xff]
    %v4639 = vld [vmem:[#allocation7 + $0x818] sm:$0xff]
    %v4640 = vld [vmem:[#allocation7 + $0x820] sm:$0xff]
    %v4641 = vld [vmem:[#allocation7 + $0x828] sm:$0xff]
    %v4642 = vld [vmem:[#allocation7 + $0x830] sm:$0xff]
    %v4643 = vld [vmem:[#allocation7 + $0x838] sm:$0xff]
    %v4644 = vld [vmem:[#allocation7 + $0x840] sm:$0xff]
    %v4645 = vld [vmem:[#allocation7 + $0x848] sm:$0xff]
    %v4646 = vld [vmem:[#allocation7 + $0x850] sm:$0xff]
    %v4647 = vld [vmem:[#allocation7 + $0x858] sm:$0xff]
    %v4648 = vld [vmem:[#allocation7 + $0x860] sm:$0xff]
    %v4649 = vld [vmem:[#allocation7 + $0x868] sm:$0xff]
    %v4650 = vld [vmem:[#allocation7 + $0x870] sm:$0xff]
    %v4651 = vld [vmem:[#allocation7 + $0x878] sm:$0xff]
    %v4652 = vld [vmem:[#allocation7 + $0x880] sm:$0xff]
    %v4653 = vld [vmem:[#allocation7 + $0x888] sm:$0xff]
    %v4654 = vld [vmem:[#allocation7 + $0x890] sm:$0xff]
    %v4655 = vld [vmem:[#allocation7 + $0x898] sm:$0xff]
    %v4656 = vld [vmem:[#allocation7 + $0x8a0] sm:$0xff]
    %v4657 = vld [vmem:[#allocation7 + $0x8a8] sm:$0xff]
    %v4658 = vld [vmem:[#allocation7 + $0x8b0] sm:$0xff]
    %v4659 = vld [vmem:[#allocation7 + $0x8b8] sm:$0xff]
    %v4660 = vld [vmem:[#allocation7 + $0x8c0] sm:$0xff]
    %v4661 = vld [vmem:[#allocation7 + $0x8c8] sm:$0xff]
    %v4662 = vld [vmem:[#allocation7 + $0x8d0] sm:$0xff]
    %v4663 = vld [vmem:[#allocation7 + $0x8d8] sm:$0xff]
    %v4664 = vld [vmem:[#allocation7 + $0x8e0] sm:$0xff]
    %v4665 = vld [vmem:[#allocation7 + $0x8e8] sm:$0xff]
    %v4666 = vld [vmem:[#allocation7 + $0x8f0] sm:$0xff]
    %v4667 = vld [vmem:[#allocation7 + $0x8f8] sm:$0xff]
    %v4668 = vld [vmem:[#allocation7 + $0x900] sm:$0xff]
    %v4669 = vld [vmem:[#allocation7 + $0x908] sm:$0xff]
    %v4670 = vld [vmem:[#allocation7 + $0x910] sm:$0xff]
    %v4671 = vld [vmem:[#allocation7 + $0x918] sm:$0xff]
    %v4672 = vld [vmem:[#allocation7 + $0x920] sm:$0xff]
    %v4673 = vld [vmem:[#allocation7 + $0x928] sm:$0xff]
    %v4674 = vld [vmem:[#allocation7 + $0x930] sm:$0xff]
    %v4675 = vld [vmem:[#allocation7 + $0x938] sm:$0xff]
    %v4676 = vld [vmem:[#allocation7 + $0x940] sm:$0xff]
    %v4677 = vld [vmem:[#allocation7 + $0x948] sm:$0xff]
    %v4678 = vld [vmem:[#allocation7 + $0x950] sm:$0xff]
    %v4679 = vld [vmem:[#allocation7 + $0x958] sm:$0xff]
    %v4680 = vld [vmem:[#allocation7 + $0x960] sm:$0xff]
    %v4681 = vld [vmem:[#allocation7 + $0x968] sm:$0xff]
    %v4682 = vld [vmem:[#allocation7 + $0x970] sm:$0xff]
    %v4683 = vld [vmem:[#allocation7 + $0x978] sm:$0xff]
    %v4684 = vld [vmem:[#allocation7 + $0x980] sm:$0xff]
    %v4685 = vld [vmem:[#allocation7 + $0x988] sm:$0xff]
    %v4686 = vld [vmem:[#allocation7 + $0x990] sm:$0xff]
    %v4687 = vld [vmem:[#allocation7 + $0x998] sm:$0xff]
    %v4688 = vld [vmem:[#allocation7 + $0x9a0] sm:$0xff]
    %v4689 = vld [vmem:[#allocation7 + $0x9a8] sm:$0xff]
    %v4690 = vld [vmem:[#allocation7 + $0x9b0] sm:$0xff]
    %v4691 = vld [vmem:[#allocation7 + $0x9b8] sm:$0xff]
    %v4692 = vld [vmem:[#allocation7 + $0x9c0] sm:$0xff]
    %v4693 = vld [vmem:[#allocation7 + $0x9c8] sm:$0xff]
    %v4694 = vld [vmem:[#allocation7 + $0x9d0] sm:$0xff]
    %v4695 = vld [vmem:[#allocation7 + $0x9d8] sm:$0xff]
    %v4696 = vld [vmem:[#allocation7 + $0x9e0] sm:$0xff]
    %v4697 = vld [vmem:[#allocation7 + $0x9e8] sm:$0xff]
    %v4698 = vld [vmem:[#allocation7 + $0x9f0] sm:$0xff]
    %v4699 = vld [vmem:[#allocation7 + $0x9f8] sm:$0xff]
    %v4700 = vld [vmem:[#allocation7 + $0xa00] sm:$0xff]
    %v4701 = vld [vmem:[#allocation7 + $0xa08] sm:$0xff]
    %v4702 = vld [vmem:[#allocation7 + $0xa10] sm:$0xff]
    %v4703 = vld [vmem:[#allocation7 + $0xa18] sm:$0xff]
    %v4704 = vld [vmem:[#allocation7 + $0xa20] sm:$0xff]
    %v4705 = vld [vmem:[#allocation7 + $0xa28] sm:$0xff]
    %v4706 = vld [vmem:[#allocation7 + $0xa30] sm:$0xff]
    %v4707 = vld [vmem:[#allocation7 + $0xa38] sm:$0xff]
    %v4708 = vld [vmem:[#allocation7 + $0xa40] sm:$0xff]
    %v4709 = vld [vmem:[#allocation7 + $0xa48] sm:$0xff]
    %v4710 = vld [vmem:[#allocation7 + $0xa50] sm:$0xff]
    %v4711 = vld [vmem:[#allocation7 + $0xa58] sm:$0xff]
    %v4712 = vld [vmem:[#allocation7 + $0xa60] sm:$0xff]
    %v4713 = vld [vmem:[#allocation7 + $0xa68] sm:$0xff]
    %v4714 = vld [vmem:[#allocation7 + $0xa70] sm:$0xff]
    %v4715 = vld [vmem:[#allocation7 + $0xa78] sm:$0xff]
    %v4716 = vld [vmem:[#allocation7 + $0xa80] sm:$0xff]
    %v4717 = vld [vmem:[#allocation7 + $0xa88] sm:$0xff]
    %v4718 = vld [vmem:[#allocation7 + $0xa90] sm:$0xff]
    %v4719 = vld [vmem:[#allocation7 + $0xa98] sm:$0xff]
    %v4720 = vld [vmem:[#allocation7 + $0xaa0] sm:$0xff]
    %v4721 = vld [vmem:[#allocation7 + $0xaa8] sm:$0xff]
    %v4722 = vld [vmem:[#allocation7 + $0xab0] sm:$0xff]
    %v4723 = vld [vmem:[#allocation7 + $0xab8] sm:$0xff]
    %v4724 = vld [vmem:[#allocation7 + $0xac0] sm:$0xff]
    %v4725 = vld [vmem:[#allocation7 + $0xac8] sm:$0xff]
    %v4726 = vld [vmem:[#allocation7 + $0xad0] sm:$0xff]
    %v4727 = vld [vmem:[#allocation7 + $0xad8] sm:$0xff]
    %v4728 = vld [vmem:[#allocation7 + $0xae0] sm:$0xff]
    %v4729 = vld [vmem:[#allocation7 + $0xae8] sm:$0xff]
    %v4730 = vld [vmem:[#allocation7 + $0xaf0] sm:$0xff]
    %v4731 = vld [vmem:[#allocation7 + $0xaf8] sm:$0xff]
    %v4732 = vld [vmem:[#allocation7 + $0xb00] sm:$0xff]
    %v4733 = vld [vmem:[#allocation7 + $0xb08] sm:$0xff]
    %v4734 = vld [vmem:[#allocation7 + $0xb10] sm:$0xff]
    %v4735 = vld [vmem:[#allocation7 + $0xb18] sm:$0xff]
    %v4736 = vld [vmem:[#allocation7 + $0xb20] sm:$0xff]
    %v4737 = vld [vmem:[#allocation7 + $0xb28] sm:$0xff]
    %v4738 = vld [vmem:[#allocation7 + $0xb30] sm:$0xff]
    %v4739 = vld [vmem:[#allocation7 + $0xb38] sm:$0xff]
    %v4740 = vld [vmem:[#allocation7 + $0xb40] sm:$0xff]
    %v4741 = vld [vmem:[#allocation7 + $0xb48] sm:$0xff]
    %v4742 = vld [vmem:[#allocation7 + $0xb50] sm:$0xff]
    %v4743 = vld [vmem:[#allocation7 + $0xb58] sm:$0xff]
    %v4744 = vld [vmem:[#allocation7 + $0xb60] sm:$0xff]
    %v4745 = vld [vmem:[#allocation7 + $0xb68] sm:$0xff]
    %v4746 = vld [vmem:[#allocation7 + $0xb70] sm:$0xff]
    %v4747 = vld [vmem:[#allocation7 + $0xb78] sm:$0xff]
    %v4748 = vld [vmem:[#allocation7 + $0xb80] sm:$0xff]
    %v4749 = vld [vmem:[#allocation7 + $0xb88] sm:$0xff]
    %v4750 = vld [vmem:[#allocation7 + $0xb90] sm:$0xff]
    %v4751 = vld [vmem:[#allocation7 + $0xb98] sm:$0xff]
    %v4752 = vld [vmem:[#allocation7 + $0xba0] sm:$0xff]
    %v4753 = vld [vmem:[#allocation7 + $0xba8] sm:$0xff]
    %v4754 = vld [vmem:[#allocation7 + $0xbb0] sm:$0xff]
    %v4755 = vld [vmem:[#allocation7 + $0xbb8] sm:$0xff]
    %v4756 = vld [vmem:[#allocation7 + $0xbc0] sm:$0xff]
    %v4757 = vld [vmem:[#allocation7 + $0xbc8] sm:$0xff]
    %v4758 = vld [vmem:[#allocation7 + $0xbd0] sm:$0xff]
    %v4759 = vld [vmem:[#allocation7 + $0xbd8] sm:$0xff]
    %v4760 = vld [vmem:[#allocation7 + $0xbe0] sm:$0xff]
    %v4761 = vld [vmem:[#allocation7 + $0xbe8] sm:$0xff]
    %v4762 = vld [vmem:[#allocation7 + $0xbf0] sm:$0xff]
    %v4763 = vld [vmem:[#allocation7 + $0xbf8] sm:$0xff]
    %v4764 = vld [vmem:[#allocation7 + $0xc00] sm:$0xff]
    %v4765 = vld [vmem:[#allocation7 + $0xc08] sm:$0xff]
    %v4766 = vld [vmem:[#allocation7 + $0xc10] sm:$0xff]
    %v4767 = vld [vmem:[#allocation7 + $0xc18] sm:$0xff]
    %v4768 = vld [vmem:[#allocation7 + $0xc20] sm:$0xff]
    %v4769 = vld [vmem:[#allocation7 + $0xc28] sm:$0xff]
    %v4770 = vld [vmem:[#allocation7 + $0xc30] sm:$0xff]
    %v4771 = vld [vmem:[#allocation7 + $0xc38] sm:$0xff]
    %v4772 = vld [vmem:[#allocation7 + $0xc40] sm:$0xff]
    %v4773 = vld [vmem:[#allocation7 + $0xc48] sm:$0xff]
    %v4774 = vld [vmem:[#allocation7 + $0xc50] sm:$0xff]
    %v4775 = vld [vmem:[#allocation7 + $0xc58] sm:$0xff]
    %v4776 = vld [vmem:[#allocation7 + $0xc60] sm:$0xff]
    %v4777 = vld [vmem:[#allocation7 + $0xc68] sm:$0xff]
    %v4778 = vld [vmem:[#allocation7 + $0xc70] sm:$0xff]
    %v4779 = vld [vmem:[#allocation7 + $0xc78] sm:$0xff]
    %v4780 = vld [vmem:[#allocation7 + $0xc80] sm:$0xff]
    %v4781 = vld [vmem:[#allocation7 + $0xc88] sm:$0xff]
    %v4782 = vld [vmem:[#allocation7 + $0xc90] sm:$0xff]
    %v4783 = vld [vmem:[#allocation7 + $0xc98] sm:$0xff]
    %v4784 = vld [vmem:[#allocation7 + $0xca0] sm:$0xff]
    %v4785 = vld [vmem:[#allocation7 + $0xca8] sm:$0xff]
    %v4786 = vld [vmem:[#allocation7 + $0xcb0] sm:$0xff]
    %v4787 = vld [vmem:[#allocation7 + $0xcb8] sm:$0xff]
    %v4788 = vld [vmem:[#allocation7 + $0xcc0] sm:$0xff]
    %v4789 = vld [vmem:[#allocation7 + $0xcc8] sm:$0xff]
    %v4790 = vld [vmem:[#allocation7 + $0xcd0] sm:$0xff]
    %v4791 = vld [vmem:[#allocation7 + $0xcd8] sm:$0xff]
    %v4792 = vld [vmem:[#allocation7 + $0xce0] sm:$0xff]
    %v4793 = vld [vmem:[#allocation7 + $0xce8] sm:$0xff]
    %v4794 = vld [vmem:[#allocation7 + $0xcf0] sm:$0xff]
    %v4795 = vld [vmem:[#allocation7 + $0xcf8] sm:$0xff]
    %v4796 = vld [vmem:[#allocation7 + $0xd00] sm:$0xff]
    %v4797 = vld [vmem:[#allocation7 + $0xd08] sm:$0xff]
    %v4798 = vld [vmem:[#allocation7 + $0xd10] sm:$0xff]
    %v4799 = vld [vmem:[#allocation7 + $0xd18] sm:$0xff]
    %v4800 = vld [vmem:[#allocation7 + $0xd20] sm:$0xff]
    %v4801 = vld [vmem:[#allocation7 + $0xd28] sm:$0xff]
    %v4802 = vld [vmem:[#allocation7 + $0xd30] sm:$0xff]
    %v4803 = vld [vmem:[#allocation7 + $0xd38] sm:$0xff]
    %v4804 = vld [vmem:[#allocation7 + $0xd40] sm:$0xff]
    %v4805 = vld [vmem:[#allocation7 + $0xd48] sm:$0xff]
    %v4806 = vld [vmem:[#allocation7 + $0xd50] sm:$0xff]
    %v4807 = vld [vmem:[#allocation7 + $0xd58] sm:$0xff]
    %v4808 = vld [vmem:[#allocation7 + $0xd60] sm:$0xff]
    %v4809 = vld [vmem:[#allocation7 + $0xd68] sm:$0xff]
    %v4810 = vld [vmem:[#allocation7 + $0xd70] sm:$0xff]
    %v4811 = vld [vmem:[#allocation7 + $0xd78] sm:$0xff]
    %v4812 = vld [vmem:[#allocation7 + $0xd80] sm:$0xff]
    %v4813 = vld [vmem:[#allocation7 + $0xd88] sm:$0xff]
    %v4814 = vld [vmem:[#allocation7 + $0xd90] sm:$0xff]
    %v4815 = vld [vmem:[#allocation7 + $0xd98] sm:$0xff]
    %v4816 = vld [vmem:[#allocation7 + $0xda0] sm:$0xff]
    %v4817 = vld [vmem:[#allocation7 + $0xda8] sm:$0xff]
    %v4818 = vld [vmem:[#allocation7 + $0xdb0] sm:$0xff]
    %v4819 = vld [vmem:[#allocation7 + $0xdb8] sm:$0xff]
    %v4820 = vld [vmem:[#allocation7 + $0xdc0] sm:$0xff]
    %v4821 = vld [vmem:[#allocation7 + $0xdc8] sm:$0xff]
    %v4822 = vld [vmem:[#allocation7 + $0xdd0] sm:$0xff]
    %v4823 = vld [vmem:[#allocation7 + $0xdd8] sm:$0xff]
    %v4824 = vld [vmem:[#allocation7 + $0xde0] sm:$0xff]
    %v4825 = vld [vmem:[#allocation7 + $0xde8] sm:$0xff]
    %v4826 = vld [vmem:[#allocation7 + $0xdf0] sm:$0xff]
    %v4827 = vld [vmem:[#allocation7 + $0xdf8] sm:$0xff]
    %v4828 = vld [vmem:[#allocation7 + $0xe00] sm:$0xff]
    %v4829 = vld [vmem:[#allocation7 + $0xe08] sm:$0xff]
    %v4830 = vld [vmem:[#allocation7 + $0xe10] sm:$0xff]
    %v4831 = vld [vmem:[#allocation7 + $0xe18] sm:$0xff]
    %v4832 = vld [vmem:[#allocation7 + $0xe20] sm:$0xff]
    %v4833 = vld [vmem:[#allocation7 + $0xe28] sm:$0xff]
    %v4834 = vld [vmem:[#allocation7 + $0xe30] sm:$0xff]
    %v4835 = vld [vmem:[#allocation7 + $0xe38] sm:$0xff]
    %v4836 = vld [vmem:[#allocation7 + $0xe40] sm:$0xff]
    %v4837 = vld [vmem:[#allocation7 + $0xe48] sm:$0xff]
    %v4838 = vld [vmem:[#allocation7 + $0xe50] sm:$0xff]
    %v4839 = vld [vmem:[#allocation7 + $0xe58] sm:$0xff]
    %v4840 = vld [vmem:[#allocation7 + $0xe60] sm:$0xff]
    %v4841 = vld [vmem:[#allocation7 + $0xe68] sm:$0xff]
    %v4842 = vld [vmem:[#allocation7 + $0xe70] sm:$0xff]
    %v4843 = vld [vmem:[#allocation7 + $0xe78] sm:$0xff]
    %v4844 = vld [vmem:[#allocation7 + $0xe80] sm:$0xff]
    %v4845 = vld [vmem:[#allocation7 + $0xe88] sm:$0xff]
    %v4846 = vld [vmem:[#allocation7 + $0xe90] sm:$0xff]
    %v4847 = vld [vmem:[#allocation7 + $0xe98] sm:$0xff]
    %v4848 = vld [vmem:[#allocation7 + $0xea0] sm:$0xff]
    %v4849 = vld [vmem:[#allocation7 + $0xea8] sm:$0xff]
    %v4850 = vld [vmem:[#allocation7 + $0xeb0] sm:$0xff]
    %v4851 = vld [vmem:[#allocation7 + $0xeb8] sm:$0xff]
    %v4852 = vld [vmem:[#allocation7 + $0xec0] sm:$0xff]
    %v4853 = vld [vmem:[#allocation7 + $0xec8] sm:$0xff]
    %v4854 = vld [vmem:[#allocation7 + $0xed0] sm:$0xff]
    %v4855 = vld [vmem:[#allocation7 + $0xed8] sm:$0xff]
    %v4856 = vld [vmem:[#allocation7 + $0xee0] sm:$0xff]
    %v4857 = vld [vmem:[#allocation7 + $0xee8] sm:$0xff]
    %v4858 = vld [vmem:[#allocation7 + $0xef0] sm:$0xff]
    %v4859 = vld [vmem:[#allocation7 + $0xef8] sm:$0xff]
    %v4860 = vld [vmem:[#allocation7 + $0xf00] sm:$0xff]
    %v4861 = vld [vmem:[#allocation7 + $0xf08] sm:$0xff]
    %v4862 = vld [vmem:[#allocation7 + $0xf10] sm:$0xff]
    %v4863 = vld [vmem:[#allocation7 + $0xf18] sm:$0xff]
    %v4864 = vld [vmem:[#allocation7 + $0xf20] sm:$0xff]
    %v4865 = vld [vmem:[#allocation7 + $0xf28] sm:$0xff]
    %v4866 = vld [vmem:[#allocation7 + $0xf30] sm:$0xff]
    %v4867 = vld [vmem:[#allocation7 + $0xf38] sm:$0xff]
    %v4868 = vld [vmem:[#allocation7 + $0xf40] sm:$0xff]
    %v4869 = vld [vmem:[#allocation7 + $0xf48] sm:$0xff]
    %v4870 = vld [vmem:[#allocation7 + $0xf50] sm:$0xff]
    %v4871 = vld [vmem:[#allocation7 + $0xf58] sm:$0xff]
    %v4872 = vld [vmem:[#allocation7 + $0xf60] sm:$0xff]
    %v4873 = vld [vmem:[#allocation7 + $0xf68] sm:$0xff]
    %v4874 = vld [vmem:[#allocation7 + $0xf70] sm:$0xff]
    %v4875 = vld [vmem:[#allocation7 + $0xf78] sm:$0xff]
    %v4876 = vld [vmem:[#allocation7 + $0xf80] sm:$0xff]
    %v4877 = vld [vmem:[#allocation7 + $0xf88] sm:$0xff]
    %v4878 = vld [vmem:[#allocation7 + $0xf90] sm:$0xff]
    %v4879 = vld [vmem:[#allocation7 + $0xf98] sm:$0xff]
    %v4880 = vld [vmem:[#allocation7 + $0xfa0] sm:$0xff]
    %v4881 = vld [vmem:[#allocation7 + $0xfa8] sm:$0xff]
    %v4882 = vld [vmem:[#allocation7 + $0xfb0] sm:$0xff]
    %v4883 = vld [vmem:[#allocation7 + $0xfb8] sm:$0xff]
    %v4884 = vld [vmem:[#allocation7 + $0xfc0] sm:$0xff]
    %v4885 = vld [vmem:[#allocation7 + $0xfc8] sm:$0xff]
    %v4886 = vld [vmem:[#allocation7 + $0xfd0] sm:$0xff]
    %v4887 = vld [vmem:[#allocation7 + $0xfd8] sm:$0xff]
    %v4888 = vld [vmem:[#allocation7 + $0xfe0] sm:$0xff]
    %v4889 = vld [vmem:[#allocation7 + $0xfe8] sm:$0xff]
    %v4890 = vld [vmem:[#allocation7 + $0xff0] sm:$0xff]
    %v4891 = vld [vmem:[#allocation7 + $0xff8] sm:$0xff]
    %s4892 = scalar_lea.vmem [#allocation11], 3
    %v4893 = vld [vmem:[%s4892] ss:$8 sm:$0xf]
    %v4894 = vld [vmem:[%s4892] ss:$8 sm:$0xf0]
    %v4895 = vor.u32 %v4893, %v4894
    %v4897 = vlaneseq
    %v4898 = vshrl.u32 %v4897, 7
    %v4899 = vsub.s32 0, %v4898
    %v4900 = vrot.slane %v4895, %v4899
    %v4901 = vlaneseq
    %v4902 = vshrl.u32 %v4901, 7
    %v4903 = vsub.s32 1, %v4902
    %v4904 = vrot.slane %v4895, %v4903
    %v4905 = vlaneseq
    %v4906 = vshrl.u32 %v4905, 7
    %v4907 = vsub.s32 2, %v4906
    %v4908 = vrot.slane %v4895, %v4907
    %v4909 = vlaneseq
    %v4910 = vshrl.u32 %v4909, 7
    %v4911 = vsub.s32 3, %v4910
    %v4912 = vrot.slane %v4895, %v4911
    %v4913 = vlaneseq
    %v4914 = vshrl.u32 %v4913, 7
    %v4915 = vsub.s32 4, %v4914
    %v4916 = vrot.slane %v4895, %v4915
    %v4917 = vlaneseq
    %v4918 = vshrl.u32 %v4917, 7
    %v4919 = vsub.s32 5, %v4918
    %v4920 = vrot.slane %v4895, %v4919
    %v4921 = vlaneseq
    %v4922 = vshrl.u32 %v4921, 7
    %v4923 = vsub.s32 6, %v4922
    %v4924 = vrot.slane %v4895, %v4923
    %v4925 = vlaneseq
    %v4926 = vshrl.u32 %v4925, 7
    %v4927 = vsub.s32 7, %v4926
    %v4928 = vrot.slane %v4895, %v4927
    %v5449 = vunpack.c.l.b16 %v4380
    %v5450 = vunpack.c.h.b16 %v4380
    %v5451 = vunpack.c.l.b16 %v4381
    %v5452 = vunpack.c.h.b16 %v4381
    %v5453 = vunpack.c.l.b16 %v4382
    %v5454 = vunpack.c.h.b16 %v4382
    %v5455 = vunpack.c.l.b16 %v4383
    %v5456 = vunpack.c.h.b16 %v4383
    %v5457 = vunpack.c.l.b16 %v4384
    %v5458 = vunpack.c.h.b16 %v4384
    %v5459 = vunpack.c.l.b16 %v4385
    %v5460 = vunpack.c.h.b16 %v4385
    %v5461 = vunpack.c.l.b16 %v4386
    %v5462 = vunpack.c.h.b16 %v4386
    %v5463 = vunpack.c.l.b16 %v4387
    %v5464 = vunpack.c.h.b16 %v4387
    %v5465 = vunpack.c.l.b16 %v4388
    %v5466 = vunpack.c.h.b16 %v4388
    %v5467 = vunpack.c.l.b16 %v4389
    %v5468 = vunpack.c.h.b16 %v4389
    %v5469 = vunpack.c.l.b16 %v4390
    %v5470 = vunpack.c.h.b16 %v4390
    %v5471 = vunpack.c.l.b16 %v4391
    %v5472 = vunpack.c.h.b16 %v4391
    %v5473 = vunpack.c.l.b16 %v4392
    %v5474 = vunpack.c.h.b16 %v4392
    %v5475 = vunpack.c.l.b16 %v4393
    %v5476 = vunpack.c.h.b16 %v4393
    %v5477 = vunpack.c.l.b16 %v4394
    %v5478 = vunpack.c.h.b16 %v4394
    %v5479 = vunpack.c.l.b16 %v4395
    %v5480 = vunpack.c.h.b16 %v4395
    %v5481 = vunpack.c.l.b16 %v4396
    %v5482 = vunpack.c.h.b16 %v4396
    %v5483 = vunpack.c.l.b16 %v4397
    %v5484 = vunpack.c.h.b16 %v4397
    %v5485 = vunpack.c.l.b16 %v4398
    %v5486 = vunpack.c.h.b16 %v4398
    %v5487 = vunpack.c.l.b16 %v4399
    %v5488 = vunpack.c.h.b16 %v4399
    %v5489 = vunpack.c.l.b16 %v4400
    %v5490 = vunpack.c.h.b16 %v4400
    %v5491 = vunpack.c.l.b16 %v4401
    %v5492 = vunpack.c.h.b16 %v4401
    %v5493 = vunpack.c.l.b16 %v4402
    %v5494 = vunpack.c.h.b16 %v4402
    %v5495 = vunpack.c.l.b16 %v4403
    %v5496 = vunpack.c.h.b16 %v4403
    %v5497 = vunpack.c.l.b16 %v4404
    %v5498 = vunpack.c.h.b16 %v4404
    %v5499 = vunpack.c.l.b16 %v4405
    %v5500 = vunpack.c.h.b16 %v4405
    %v5501 = vunpack.c.l.b16 %v4406
    %v5502 = vunpack.c.h.b16 %v4406
    %v5503 = vunpack.c.l.b16 %v4407
    %v5504 = vunpack.c.h.b16 %v4407
    %v5505 = vunpack.c.l.b16 %v4408
    %v5506 = vunpack.c.h.b16 %v4408
    %v5507 = vunpack.c.l.b16 %v4409
    %v5508 = vunpack.c.h.b16 %v4409
    %v5509 = vunpack.c.l.b16 %v4410
    %v5510 = vunpack.c.h.b16 %v4410
    %v5511 = vunpack.c.l.b16 %v4411
    %v5512 = vunpack.c.h.b16 %v4411
    %v5513 = vunpack.c.l.b16 %v4412
    %v5514 = vunpack.c.h.b16 %v4412
    %v5515 = vunpack.c.l.b16 %v4413
    %v5516 = vunpack.c.h.b16 %v4413
    %v5517 = vunpack.c.l.b16 %v4414
    %v5518 = vunpack.c.h.b16 %v4414
    %v5519 = vunpack.c.l.b16 %v4415
    %v5520 = vunpack.c.h.b16 %v4415
    %v5521 = vunpack.c.l.b16 %v4416
    %v5522 = vunpack.c.h.b16 %v4416
    %v5523 = vunpack.c.l.b16 %v4417
    %v5524 = vunpack.c.h.b16 %v4417
    %v5525 = vunpack.c.l.b16 %v4418
    %v5526 = vunpack.c.h.b16 %v4418
    %v5527 = vunpack.c.l.b16 %v4419
    %v5528 = vunpack.c.h.b16 %v4419
    %v5529 = vunpack.c.l.b16 %v4420
    %v5530 = vunpack.c.h.b16 %v4420
    %v5531 = vunpack.c.l.b16 %v4421
    %v5532 = vunpack.c.h.b16 %v4421
    %v5533 = vunpack.c.l.b16 %v4422
    %v5534 = vunpack.c.h.b16 %v4422
    %v5535 = vunpack.c.l.b16 %v4423
    %v5536 = vunpack.c.h.b16 %v4423
    %v5537 = vunpack.c.l.b16 %v4424
    %v5538 = vunpack.c.h.b16 %v4424
    %v5539 = vunpack.c.l.b16 %v4425
    %v5540 = vunpack.c.h.b16 %v4425
    %v5541 = vunpack.c.l.b16 %v4426
    %v5542 = vunpack.c.h.b16 %v4426
    %v5543 = vunpack.c.l.b16 %v4427
    %v5544 = vunpack.c.h.b16 %v4427
    %v5545 = vunpack.c.l.b16 %v4428
    %v5546 = vunpack.c.h.b16 %v4428
    %v5547 = vunpack.c.l.b16 %v4429
    %v5548 = vunpack.c.h.b16 %v4429
    %v5549 = vunpack.c.l.b16 %v4430
    %v5550 = vunpack.c.h.b16 %v4430
    %v5551 = vunpack.c.l.b16 %v4431
    %v5552 = vunpack.c.h.b16 %v4431
    %v5553 = vunpack.c.l.b16 %v4432
    %v5554 = vunpack.c.h.b16 %v4432
    %v5555 = vunpack.c.l.b16 %v4433
    %v5556 = vunpack.c.h.b16 %v4433
    %v5557 = vunpack.c.l.b16 %v4434
    %v5558 = vunpack.c.h.b16 %v4434
    %v5559 = vunpack.c.l.b16 %v4435
    %v5560 = vunpack.c.h.b16 %v4435
    %v5561 = vunpack.c.l.b16 %v4436
    %v5562 = vunpack.c.h.b16 %v4436
    %v5563 = vunpack.c.l.b16 %v4437
    %v5564 = vunpack.c.h.b16 %v4437
    %v5565 = vunpack.c.l.b16 %v4438
    %v5566 = vunpack.c.h.b16 %v4438
    %v5567 = vunpack.c.l.b16 %v4439
    %v5568 = vunpack.c.h.b16 %v4439
    %v5569 = vunpack.c.l.b16 %v4440
    %v5570 = vunpack.c.h.b16 %v4440
    %v5571 = vunpack.c.l.b16 %v4441
    %v5572 = vunpack.c.h.b16 %v4441
    %v5573 = vunpack.c.l.b16 %v4442
    %v5574 = vunpack.c.h.b16 %v4442
    %v5575 = vunpack.c.l.b16 %v4443
    %v5576 = vunpack.c.h.b16 %v4443
    %v5577 = vunpack.c.l.b16 %v4444
    %v5578 = vunpack.c.h.b16 %v4444
    %v5579 = vunpack.c.l.b16 %v4445
    %v5580 = vunpack.c.h.b16 %v4445
    %v5581 = vunpack.c.l.b16 %v4446
    %v5582 = vunpack.c.h.b16 %v4446
    %v5583 = vunpack.c.l.b16 %v4447
    %v5584 = vunpack.c.h.b16 %v4447
    %v5585 = vunpack.c.l.b16 %v4448
    %v5586 = vunpack.c.h.b16 %v4448
    %v5587 = vunpack.c.l.b16 %v4449
    %v5588 = vunpack.c.h.b16 %v4449
    %v5589 = vunpack.c.l.b16 %v4450
    %v5590 = vunpack.c.h.b16 %v4450
    %v5591 = vunpack.c.l.b16 %v4451
    %v5592 = vunpack.c.h.b16 %v4451
    %v5593 = vunpack.c.l.b16 %v4452
    %v5594 = vunpack.c.h.b16 %v4452
    %v5595 = vunpack.c.l.b16 %v4453
    %v5596 = vunpack.c.h.b16 %v4453
    %v5597 = vunpack.c.l.b16 %v4454
    %v5598 = vunpack.c.h.b16 %v4454
    %v5599 = vunpack.c.l.b16 %v4455
    %v5600 = vunpack.c.h.b16 %v4455
    %v5601 = vunpack.c.l.b16 %v4456
    %v5602 = vunpack.c.h.b16 %v4456
    %v5603 = vunpack.c.l.b16 %v4457
    %v5604 = vunpack.c.h.b16 %v4457
    %v5605 = vunpack.c.l.b16 %v4458
    %v5606 = vunpack.c.h.b16 %v4458
    %v5607 = vunpack.c.l.b16 %v4459
    %v5608 = vunpack.c.h.b16 %v4459
    %v5609 = vunpack.c.l.b16 %v4460
    %v5610 = vunpack.c.h.b16 %v4460
    %v5611 = vunpack.c.l.b16 %v4461
    %v5612 = vunpack.c.h.b16 %v4461
    %v5613 = vunpack.c.l.b16 %v4462
    %v5614 = vunpack.c.h.b16 %v4462
    %v5615 = vunpack.c.l.b16 %v4463
    %v5616 = vunpack.c.h.b16 %v4463
    %v5617 = vunpack.c.l.b16 %v4464
    %v5618 = vunpack.c.h.b16 %v4464
    %v5619 = vunpack.c.l.b16 %v4465
    %v5620 = vunpack.c.h.b16 %v4465
    %v5621 = vunpack.c.l.b16 %v4466
    %v5622 = vunpack.c.h.b16 %v4466
    %v5623 = vunpack.c.l.b16 %v4467
    %v5624 = vunpack.c.h.b16 %v4467
    %v5625 = vunpack.c.l.b16 %v4468
    %v5626 = vunpack.c.h.b16 %v4468
    %v5627 = vunpack.c.l.b16 %v4469
    %v5628 = vunpack.c.h.b16 %v4469
    %v5629 = vunpack.c.l.b16 %v4470
    %v5630 = vunpack.c.h.b16 %v4470
    %v5631 = vunpack.c.l.b16 %v4471
    %v5632 = vunpack.c.h.b16 %v4471
    %v5633 = vunpack.c.l.b16 %v4472
    %v5634 = vunpack.c.h.b16 %v4472
    %v5635 = vunpack.c.l.b16 %v4473
    %v5636 = vunpack.c.h.b16 %v4473
    %v5637 = vunpack.c.l.b16 %v4474
    %v5638 = vunpack.c.h.b16 %v4474
    %v5639 = vunpack.c.l.b16 %v4475
    %v5640 = vunpack.c.h.b16 %v4475
    %v5641 = vunpack.c.l.b16 %v4476
    %v5642 = vunpack.c.h.b16 %v4476
    %v5643 = vunpack.c.l.b16 %v4477
    %v5644 = vunpack.c.h.b16 %v4477
    %v5645 = vunpack.c.l.b16 %v4478
    %v5646 = vunpack.c.h.b16 %v4478
    %v5647 = vunpack.c.l.b16 %v4479
    %v5648 = vunpack.c.h.b16 %v4479
    %v5649 = vunpack.c.l.b16 %v4480
    %v5650 = vunpack.c.h.b16 %v4480
    %v5651 = vunpack.c.l.b16 %v4481
    %v5652 = vunpack.c.h.b16 %v4481
    %v5653 = vunpack.c.l.b16 %v4482
    %v5654 = vunpack.c.h.b16 %v4482
    %v5655 = vunpack.c.l.b16 %v4483
    %v5656 = vunpack.c.h.b16 %v4483
    %v5657 = vunpack.c.l.b16 %v4484
    %v5658 = vunpack.c.h.b16 %v4484
    %v5659 = vunpack.c.l.b16 %v4485
    %v5660 = vunpack.c.h.b16 %v4485
    %v5661 = vunpack.c.l.b16 %v4486
    %v5662 = vunpack.c.h.b16 %v4486
    %v5663 = vunpack.c.l.b16 %v4487
    %v5664 = vunpack.c.h.b16 %v4487
    %v5665 = vunpack.c.l.b16 %v4488
    %v5666 = vunpack.c.h.b16 %v4488
    %v5667 = vunpack.c.l.b16 %v4489
    %v5668 = vunpack.c.h.b16 %v4489
    %v5669 = vunpack.c.l.b16 %v4490
    %v5670 = vunpack.c.h.b16 %v4490
    %v5671 = vunpack.c.l.b16 %v4491
    %v5672 = vunpack.c.h.b16 %v4491
    %v5673 = vunpack.c.l.b16 %v4492
    %v5674 = vunpack.c.h.b16 %v4492
    %v5675 = vunpack.c.l.b16 %v4493
    %v5676 = vunpack.c.h.b16 %v4493
    %v5677 = vunpack.c.l.b16 %v4494
    %v5678 = vunpack.c.h.b16 %v4494
    %v5679 = vunpack.c.l.b16 %v4495
    %v5680 = vunpack.c.h.b16 %v4495
    %v5681 = vunpack.c.l.b16 %v4496
    %v5682 = vunpack.c.h.b16 %v4496
    %v5683 = vunpack.c.l.b16 %v4497
    %v5684 = vunpack.c.h.b16 %v4497
    %v5685 = vunpack.c.l.b16 %v4498
    %v5686 = vunpack.c.h.b16 %v4498
    %v5687 = vunpack.c.l.b16 %v4499
    %v5688 = vunpack.c.h.b16 %v4499
    %v5689 = vunpack.c.l.b16 %v4500
    %v5690 = vunpack.c.h.b16 %v4500
    %v5691 = vunpack.c.l.b16 %v4501
    %v5692 = vunpack.c.h.b16 %v4501
    %v5693 = vunpack.c.l.b16 %v4502
    %v5694 = vunpack.c.h.b16 %v4502
    %v5695 = vunpack.c.l.b16 %v4503
    %v5696 = vunpack.c.h.b16 %v4503
    %v5697 = vunpack.c.l.b16 %v4504
    %v5698 = vunpack.c.h.b16 %v4504
    %v5699 = vunpack.c.l.b16 %v4505
    %v5700 = vunpack.c.h.b16 %v4505
    %v5701 = vunpack.c.l.b16 %v4506
    %v5702 = vunpack.c.h.b16 %v4506
    %v5703 = vunpack.c.l.b16 %v4507
    %v5704 = vunpack.c.h.b16 %v4507
    %v5705 = vunpack.c.l.b16 %v4508
    %v5706 = vunpack.c.h.b16 %v4508
    %v5707 = vunpack.c.l.b16 %v4509
    %v5708 = vunpack.c.h.b16 %v4509
    %v5709 = vunpack.c.l.b16 %v4510
    %v5710 = vunpack.c.h.b16 %v4510
    %v5711 = vunpack.c.l.b16 %v4511
    %v5712 = vunpack.c.h.b16 %v4511
    %v5713 = vunpack.c.l.b16 %v4512
    %v5714 = vunpack.c.h.b16 %v4512
    %v5715 = vunpack.c.l.b16 %v4513
    %v5716 = vunpack.c.h.b16 %v4513
    %v5717 = vunpack.c.l.b16 %v4514
    %v5718 = vunpack.c.h.b16 %v4514
    %v5719 = vunpack.c.l.b16 %v4515
    %v5720 = vunpack.c.h.b16 %v4515
    %v5721 = vunpack.c.l.b16 %v4516
    %v5722 = vunpack.c.h.b16 %v4516
    %v5723 = vunpack.c.l.b16 %v4517
    %v5724 = vunpack.c.h.b16 %v4517
    %v5725 = vunpack.c.l.b16 %v4518
    %v5726 = vunpack.c.h.b16 %v4518
    %v5727 = vunpack.c.l.b16 %v4519
    %v5728 = vunpack.c.h.b16 %v4519
    %v5729 = vunpack.c.l.b16 %v4520
    %v5730 = vunpack.c.h.b16 %v4520
    %v5731 = vunpack.c.l.b16 %v4521
    %v5732 = vunpack.c.h.b16 %v4521
    %v5733 = vunpack.c.l.b16 %v4522
    %v5734 = vunpack.c.h.b16 %v4522
    %v5735 = vunpack.c.l.b16 %v4523
    %v5736 = vunpack.c.h.b16 %v4523
    %v5737 = vunpack.c.l.b16 %v4524
    %v5738 = vunpack.c.h.b16 %v4524
    %v5739 = vunpack.c.l.b16 %v4525
    %v5740 = vunpack.c.h.b16 %v4525
    %v5741 = vunpack.c.l.b16 %v4526
    %v5742 = vunpack.c.h.b16 %v4526
    %v5743 = vunpack.c.l.b16 %v4527
    %v5744 = vunpack.c.h.b16 %v4527
    %v5745 = vunpack.c.l.b16 %v4528
    %v5746 = vunpack.c.h.b16 %v4528
    %v5747 = vunpack.c.l.b16 %v4529
    %v5748 = vunpack.c.h.b16 %v4529
    %v5749 = vunpack.c.l.b16 %v4530
    %v5750 = vunpack.c.h.b16 %v4530
    %v5751 = vunpack.c.l.b16 %v4531
    %v5752 = vunpack.c.h.b16 %v4531
    %v5753 = vunpack.c.l.b16 %v4532
    %v5754 = vunpack.c.h.b16 %v4532
    %v5755 = vunpack.c.l.b16 %v4533
    %v5756 = vunpack.c.h.b16 %v4533
    %v5757 = vunpack.c.l.b16 %v4534
    %v5758 = vunpack.c.h.b16 %v4534
    %v5759 = vunpack.c.l.b16 %v4535
    %v5760 = vunpack.c.h.b16 %v4535
    %v5761 = vunpack.c.l.b16 %v4536
    %v5762 = vunpack.c.h.b16 %v4536
    %v5763 = vunpack.c.l.b16 %v4537
    %v5764 = vunpack.c.h.b16 %v4537
    %v5765 = vunpack.c.l.b16 %v4538
    %v5766 = vunpack.c.h.b16 %v4538
    %v5767 = vunpack.c.l.b16 %v4539
    %v5768 = vunpack.c.h.b16 %v4539
    %v5769 = vunpack.c.l.b16 %v4540
    %v5770 = vunpack.c.h.b16 %v4540
    %v5771 = vunpack.c.l.b16 %v4541
    %v5772 = vunpack.c.h.b16 %v4541
    %v5773 = vunpack.c.l.b16 %v4542
    %v5774 = vunpack.c.h.b16 %v4542
    %v5775 = vunpack.c.l.b16 %v4543
    %v5776 = vunpack.c.h.b16 %v4543
    %v5777 = vunpack.c.l.b16 %v4544
    %v5778 = vunpack.c.h.b16 %v4544
    %v5779 = vunpack.c.l.b16 %v4545
    %v5780 = vunpack.c.h.b16 %v4545
    %v5781 = vunpack.c.l.b16 %v4546
    %v5782 = vunpack.c.h.b16 %v4546
    %v5783 = vunpack.c.l.b16 %v4547
    %v5784 = vunpack.c.h.b16 %v4547
    %v5785 = vunpack.c.l.b16 %v4548
    %v5786 = vunpack.c.h.b16 %v4548
    %v5787 = vunpack.c.l.b16 %v4549
    %v5788 = vunpack.c.h.b16 %v4549
    %v5789 = vunpack.c.l.b16 %v4550
    %v5790 = vunpack.c.h.b16 %v4550
    %v5791 = vunpack.c.l.b16 %v4551
    %v5792 = vunpack.c.h.b16 %v4551
    %v5793 = vunpack.c.l.b16 %v4552
    %v5794 = vunpack.c.h.b16 %v4552
    %v5795 = vunpack.c.l.b16 %v4553
    %v5796 = vunpack.c.h.b16 %v4553
    %v5797 = vunpack.c.l.b16 %v4554
    %v5798 = vunpack.c.h.b16 %v4554
    %v5799 = vunpack.c.l.b16 %v4555
    %v5800 = vunpack.c.h.b16 %v4555
    %v5801 = vunpack.c.l.b16 %v4556
    %v5802 = vunpack.c.h.b16 %v4556
    %v5803 = vunpack.c.l.b16 %v4557
    %v5804 = vunpack.c.h.b16 %v4557
    %v5805 = vunpack.c.l.b16 %v4558
    %v5806 = vunpack.c.h.b16 %v4558
    %v5807 = vunpack.c.l.b16 %v4559
    %v5808 = vunpack.c.h.b16 %v4559
    %v5809 = vunpack.c.l.b16 %v4560
    %v5810 = vunpack.c.h.b16 %v4560
    %v5811 = vunpack.c.l.b16 %v4561
    %v5812 = vunpack.c.h.b16 %v4561
    %v5813 = vunpack.c.l.b16 %v4562
    %v5814 = vunpack.c.h.b16 %v4562
    %v5815 = vunpack.c.l.b16 %v4563
    %v5816 = vunpack.c.h.b16 %v4563
    %v5817 = vunpack.c.l.b16 %v4564
    %v5818 = vunpack.c.h.b16 %v4564
    %v5819 = vunpack.c.l.b16 %v4565
    %v5820 = vunpack.c.h.b16 %v4565
    %v5821 = vunpack.c.l.b16 %v4566
    %v5822 = vunpack.c.h.b16 %v4566
    %v5823 = vunpack.c.l.b16 %v4567
    %v5824 = vunpack.c.h.b16 %v4567
    %v5825 = vunpack.c.l.b16 %v4568
    %v5826 = vunpack.c.h.b16 %v4568
    %v5827 = vunpack.c.l.b16 %v4569
    %v5828 = vunpack.c.h.b16 %v4569
    %v5829 = vunpack.c.l.b16 %v4570
    %v5830 = vunpack.c.h.b16 %v4570
    %v5831 = vunpack.c.l.b16 %v4571
    %v5832 = vunpack.c.h.b16 %v4571
    %v5833 = vunpack.c.l.b16 %v4572
    %v5834 = vunpack.c.h.b16 %v4572
    %v5835 = vunpack.c.l.b16 %v4573
    %v5836 = vunpack.c.h.b16 %v4573
    %v5837 = vunpack.c.l.b16 %v4574
    %v5838 = vunpack.c.h.b16 %v4574
    %v5839 = vunpack.c.l.b16 %v4575
    %v5840 = vunpack.c.h.b16 %v4575
    %v5841 = vunpack.c.l.b16 %v4576
    %v5842 = vunpack.c.h.b16 %v4576
    %v5843 = vunpack.c.l.b16 %v4577
    %v5844 = vunpack.c.h.b16 %v4577
    %v5845 = vunpack.c.l.b16 %v4578
    %v5846 = vunpack.c.h.b16 %v4578
    %v5847 = vunpack.c.l.b16 %v4579
    %v5848 = vunpack.c.h.b16 %v4579
    %v5849 = vunpack.c.l.b16 %v4580
    %v5850 = vunpack.c.h.b16 %v4580
    %v5851 = vunpack.c.l.b16 %v4581
    %v5852 = vunpack.c.h.b16 %v4581
    %v5853 = vunpack.c.l.b16 %v4582
    %v5854 = vunpack.c.h.b16 %v4582
    %v5855 = vunpack.c.l.b16 %v4583
    %v5856 = vunpack.c.h.b16 %v4583
    %v5857 = vunpack.c.l.b16 %v4584
    %v5858 = vunpack.c.h.b16 %v4584
    %v5859 = vunpack.c.l.b16 %v4585
    %v5860 = vunpack.c.h.b16 %v4585
    %v5861 = vunpack.c.l.b16 %v4586
    %v5862 = vunpack.c.h.b16 %v4586
    %v5863 = vunpack.c.l.b16 %v4587
    %v5864 = vunpack.c.h.b16 %v4587
    %v5865 = vunpack.c.l.b16 %v4588
    %v5866 = vunpack.c.h.b16 %v4588
    %v5867 = vunpack.c.l.b16 %v4589
    %v5868 = vunpack.c.h.b16 %v4589
    %v5869 = vunpack.c.l.b16 %v4590
    %v5870 = vunpack.c.h.b16 %v4590
    %v5871 = vunpack.c.l.b16 %v4591
    %v5872 = vunpack.c.h.b16 %v4591
    %v5873 = vunpack.c.l.b16 %v4592
    %v5874 = vunpack.c.h.b16 %v4592
    %v5875 = vunpack.c.l.b16 %v4593
    %v5876 = vunpack.c.h.b16 %v4593
    %v5877 = vunpack.c.l.b16 %v4594
    %v5878 = vunpack.c.h.b16 %v4594
    %v5879 = vunpack.c.l.b16 %v4595
    %v5880 = vunpack.c.h.b16 %v4595
    %v5881 = vunpack.c.l.b16 %v4596
    %v5882 = vunpack.c.h.b16 %v4596
    %v5883 = vunpack.c.l.b16 %v4597
    %v5884 = vunpack.c.h.b16 %v4597
    %v5885 = vunpack.c.l.b16 %v4598
    %v5886 = vunpack.c.h.b16 %v4598
    %v5887 = vunpack.c.l.b16 %v4599
    %v5888 = vunpack.c.h.b16 %v4599
    %v5889 = vunpack.c.l.b16 %v4600
    %v5890 = vunpack.c.h.b16 %v4600
    %v5891 = vunpack.c.l.b16 %v4601
    %v5892 = vunpack.c.h.b16 %v4601
    %v5893 = vunpack.c.l.b16 %v4602
    %v5894 = vunpack.c.h.b16 %v4602
    %v5895 = vunpack.c.l.b16 %v4603
    %v5896 = vunpack.c.h.b16 %v4603
    %v5897 = vunpack.c.l.b16 %v4604
    %v5898 = vunpack.c.h.b16 %v4604
    %v5899 = vunpack.c.l.b16 %v4605
    %v5900 = vunpack.c.h.b16 %v4605
    %v5901 = vunpack.c.l.b16 %v4606
    %v5902 = vunpack.c.h.b16 %v4606
    %v5903 = vunpack.c.l.b16 %v4607
    %v5904 = vunpack.c.h.b16 %v4607
    %v5905 = vunpack.c.l.b16 %v4608
    %v5906 = vunpack.c.h.b16 %v4608
    %v5907 = vunpack.c.l.b16 %v4609
    %v5908 = vunpack.c.h.b16 %v4609
    %v5909 = vunpack.c.l.b16 %v4610
    %v5910 = vunpack.c.h.b16 %v4610
    %v5911 = vunpack.c.l.b16 %v4611
    %v5912 = vunpack.c.h.b16 %v4611
    %v5913 = vunpack.c.l.b16 %v4612
    %v5914 = vunpack.c.h.b16 %v4612
    %v5915 = vunpack.c.l.b16 %v4613
    %v5916 = vunpack.c.h.b16 %v4613
    %v5917 = vunpack.c.l.b16 %v4614
    %v5918 = vunpack.c.h.b16 %v4614
    %v5919 = vunpack.c.l.b16 %v4615
    %v5920 = vunpack.c.h.b16 %v4615
    %v5921 = vunpack.c.l.b16 %v4616
    %v5922 = vunpack.c.h.b16 %v4616
    %v5923 = vunpack.c.l.b16 %v4617
    %v5924 = vunpack.c.h.b16 %v4617
    %v5925 = vunpack.c.l.b16 %v4618
    %v5926 = vunpack.c.h.b16 %v4618
    %v5927 = vunpack.c.l.b16 %v4619
    %v5928 = vunpack.c.h.b16 %v4619
    %v5929 = vunpack.c.l.b16 %v4620
    %v5930 = vunpack.c.h.b16 %v4620
    %v5931 = vunpack.c.l.b16 %v4621
    %v5932 = vunpack.c.h.b16 %v4621
    %v5933 = vunpack.c.l.b16 %v4622
    %v5934 = vunpack.c.h.b16 %v4622
    %v5935 = vunpack.c.l.b16 %v4623
    %v5936 = vunpack.c.h.b16 %v4623
    %v5937 = vunpack.c.l.b16 %v4624
    %v5938 = vunpack.c.h.b16 %v4624
    %v5939 = vunpack.c.l.b16 %v4625
    %v5940 = vunpack.c.h.b16 %v4625
    %v5941 = vunpack.c.l.b16 %v4626
    %v5942 = vunpack.c.h.b16 %v4626
    %v5943 = vunpack.c.l.b16 %v4627
    %v5944 = vunpack.c.h.b16 %v4627
    %v5945 = vunpack.c.l.b16 %v4628
    %v5946 = vunpack.c.h.b16 %v4628
    %v5947 = vunpack.c.l.b16 %v4629
    %v5948 = vunpack.c.h.b16 %v4629
    %v5949 = vunpack.c.l.b16 %v4630
    %v5950 = vunpack.c.h.b16 %v4630
    %v5951 = vunpack.c.l.b16 %v4631
    %v5952 = vunpack.c.h.b16 %v4631
    %v5953 = vunpack.c.l.b16 %v4632
    %v5954 = vunpack.c.h.b16 %v4632
    %v5955 = vunpack.c.l.b16 %v4633
    %v5956 = vunpack.c.h.b16 %v4633
    %v5957 = vunpack.c.l.b16 %v4634
    %v5958 = vunpack.c.h.b16 %v4634
    %v5959 = vunpack.c.l.b16 %v4635
    %v5960 = vunpack.c.h.b16 %v4635
    %v5961 = vunpack.c.l.b16 %v4636
    %v5962 = vunpack.c.h.b16 %v4636
    %v5963 = vunpack.c.l.b16 %v4637
    %v5964 = vunpack.c.h.b16 %v4637
    %v5965 = vunpack.c.l.b16 %v4638
    %v5966 = vunpack.c.h.b16 %v4638
    %v5967 = vunpack.c.l.b16 %v4639
    %v5968 = vunpack.c.h.b16 %v4639
    %v5969 = vunpack.c.l.b16 %v4640
    %v5970 = vunpack.c.h.b16 %v4640
    %v5971 = vunpack.c.l.b16 %v4641
    %v5972 = vunpack.c.h.b16 %v4641
    %v5973 = vunpack.c.l.b16 %v4642
    %v5974 = vunpack.c.h.b16 %v4642
    %v5975 = vunpack.c.l.b16 %v4643
    %v5976 = vunpack.c.h.b16 %v4643
    %v5977 = vunpack.c.l.b16 %v4644
    %v5978 = vunpack.c.h.b16 %v4644
    %v5979 = vunpack.c.l.b16 %v4645
    %v5980 = vunpack.c.h.b16 %v4645
    %v5981 = vunpack.c.l.b16 %v4646
    %v5982 = vunpack.c.h.b16 %v4646
    %v5983 = vunpack.c.l.b16 %v4647
    %v5984 = vunpack.c.h.b16 %v4647
    %v5985 = vunpack.c.l.b16 %v4648
    %v5986 = vunpack.c.h.b16 %v4648
    %v5987 = vunpack.c.l.b16 %v4649
    %v5988 = vunpack.c.h.b16 %v4649
    %v5989 = vunpack.c.l.b16 %v4650
    %v5990 = vunpack.c.h.b16 %v4650
    %v5991 = vunpack.c.l.b16 %v4651
    %v5992 = vunpack.c.h.b16 %v4651
    %v5993 = vunpack.c.l.b16 %v4652
    %v5994 = vunpack.c.h.b16 %v4652
    %v5995 = vunpack.c.l.b16 %v4653
    %v5996 = vunpack.c.h.b16 %v4653
    %v5997 = vunpack.c.l.b16 %v4654
    %v5998 = vunpack.c.h.b16 %v4654
    %v5999 = vunpack.c.l.b16 %v4655
    %v6000 = vunpack.c.h.b16 %v4655
    %v6001 = vunpack.c.l.b16 %v4656
    %v6002 = vunpack.c.h.b16 %v4656
    %v6003 = vunpack.c.l.b16 %v4657
    %v6004 = vunpack.c.h.b16 %v4657
    %v6005 = vunpack.c.l.b16 %v4658
    %v6006 = vunpack.c.h.b16 %v4658
    %v6007 = vunpack.c.l.b16 %v4659
    %v6008 = vunpack.c.h.b16 %v4659
    %v6009 = vunpack.c.l.b16 %v4660
    %v6010 = vunpack.c.h.b16 %v4660
    %v6011 = vunpack.c.l.b16 %v4661
    %v6012 = vunpack.c.h.b16 %v4661
    %v6013 = vunpack.c.l.b16 %v4662
    %v6014 = vunpack.c.h.b16 %v4662
    %v6015 = vunpack.c.l.b16 %v4663
    %v6016 = vunpack.c.h.b16 %v4663
    %v6017 = vunpack.c.l.b16 %v4664
    %v6018 = vunpack.c.h.b16 %v4664
    %v6019 = vunpack.c.l.b16 %v4665
    %v6020 = vunpack.c.h.b16 %v4665
    %v6021 = vunpack.c.l.b16 %v4666
    %v6022 = vunpack.c.h.b16 %v4666
    %v6023 = vunpack.c.l.b16 %v4667
    %v6024 = vunpack.c.h.b16 %v4667
    %v6025 = vunpack.c.l.b16 %v4668
    %v6026 = vunpack.c.h.b16 %v4668
    %v6027 = vunpack.c.l.b16 %v4669
    %v6028 = vunpack.c.h.b16 %v4669
    %v6029 = vunpack.c.l.b16 %v4670
    %v6030 = vunpack.c.h.b16 %v4670
    %v6031 = vunpack.c.l.b16 %v4671
    %v6032 = vunpack.c.h.b16 %v4671
    %v6033 = vunpack.c.l.b16 %v4672
    %v6034 = vunpack.c.h.b16 %v4672
    %v6035 = vunpack.c.l.b16 %v4673
    %v6036 = vunpack.c.h.b16 %v4673
    %v6037 = vunpack.c.l.b16 %v4674
    %v6038 = vunpack.c.h.b16 %v4674
    %v6039 = vunpack.c.l.b16 %v4675
    %v6040 = vunpack.c.h.b16 %v4675
    %v6041 = vunpack.c.l.b16 %v4676
    %v6042 = vunpack.c.h.b16 %v4676
    %v6043 = vunpack.c.l.b16 %v4677
    %v6044 = vunpack.c.h.b16 %v4677
    %v6045 = vunpack.c.l.b16 %v4678
    %v6046 = vunpack.c.h.b16 %v4678
    %v6047 = vunpack.c.l.b16 %v4679
    %v6048 = vunpack.c.h.b16 %v4679
    %v6049 = vunpack.c.l.b16 %v4680
    %v6050 = vunpack.c.h.b16 %v4680
    %v6051 = vunpack.c.l.b16 %v4681
    %v6052 = vunpack.c.h.b16 %v4681
    %v6053 = vunpack.c.l.b16 %v4682
    %v6054 = vunpack.c.h.b16 %v4682
    %v6055 = vunpack.c.l.b16 %v4683
    %v6056 = vunpack.c.h.b16 %v4683
    %v6057 = vunpack.c.l.b16 %v4684
    %v6058 = vunpack.c.h.b16 %v4684
    %v6059 = vunpack.c.l.b16 %v4685
    %v6060 = vunpack.c.h.b16 %v4685
    %v6061 = vunpack.c.l.b16 %v4686
    %v6062 = vunpack.c.h.b16 %v4686
    %v6063 = vunpack.c.l.b16 %v4687
    %v6064 = vunpack.c.h.b16 %v4687
    %v6065 = vunpack.c.l.b16 %v4688
    %v6066 = vunpack.c.h.b16 %v4688
    %v6067 = vunpack.c.l.b16 %v4689
    %v6068 = vunpack.c.h.b16 %v4689
    %v6069 = vunpack.c.l.b16 %v4690
    %v6070 = vunpack.c.h.b16 %v4690
    %v6071 = vunpack.c.l.b16 %v4691
    %v6072 = vunpack.c.h.b16 %v4691
    %v6073 = vunpack.c.l.b16 %v4692
    %v6074 = vunpack.c.h.b16 %v4692
    %v6075 = vunpack.c.l.b16 %v4693
    %v6076 = vunpack.c.h.b16 %v4693
    %v6077 = vunpack.c.l.b16 %v4694
    %v6078 = vunpack.c.h.b16 %v4694
    %v6079 = vunpack.c.l.b16 %v4695
    %v6080 = vunpack.c.h.b16 %v4695
    %v6081 = vunpack.c.l.b16 %v4696
    %v6082 = vunpack.c.h.b16 %v4696
    %v6083 = vunpack.c.l.b16 %v4697
    %v6084 = vunpack.c.h.b16 %v4697
    %v6085 = vunpack.c.l.b16 %v4698
    %v6086 = vunpack.c.h.b16 %v4698
    %v6087 = vunpack.c.l.b16 %v4699
    %v6088 = vunpack.c.h.b16 %v4699
    %v6089 = vunpack.c.l.b16 %v4700
    %v6090 = vunpack.c.h.b16 %v4700
    %v6091 = vunpack.c.l.b16 %v4701
    %v6092 = vunpack.c.h.b16 %v4701
    %v6093 = vunpack.c.l.b16 %v4702
    %v6094 = vunpack.c.h.b16 %v4702
    %v6095 = vunpack.c.l.b16 %v4703
    %v6096 = vunpack.c.h.b16 %v4703
    %v6097 = vunpack.c.l.b16 %v4704
    %v6098 = vunpack.c.h.b16 %v4704
    %v6099 = vunpack.c.l.b16 %v4705
    %v6100 = vunpack.c.h.b16 %v4705
    %v6101 = vunpack.c.l.b16 %v4706
    %v6102 = vunpack.c.h.b16 %v4706
    %v6103 = vunpack.c.l.b16 %v4707
    %v6104 = vunpack.c.h.b16 %v4707
    %v6105 = vunpack.c.l.b16 %v4708
    %v6106 = vunpack.c.h.b16 %v4708
    %v6107 = vunpack.c.l.b16 %v4709
    %v6108 = vunpack.c.h.b16 %v4709
    %v6109 = vunpack.c.l.b16 %v4710
    %v6110 = vunpack.c.h.b16 %v4710
    %v6111 = vunpack.c.l.b16 %v4711
    %v6112 = vunpack.c.h.b16 %v4711
    %v6113 = vunpack.c.l.b16 %v4712
    %v6114 = vunpack.c.h.b16 %v4712
    %v6115 = vunpack.c.l.b16 %v4713
    %v6116 = vunpack.c.h.b16 %v4713
    %v6117 = vunpack.c.l.b16 %v4714
    %v6118 = vunpack.c.h.b16 %v4714
    %v6119 = vunpack.c.l.b16 %v4715
    %v6120 = vunpack.c.h.b16 %v4715
    %v6121 = vunpack.c.l.b16 %v4716
    %v6122 = vunpack.c.h.b16 %v4716
    %v6123 = vunpack.c.l.b16 %v4717
    %v6124 = vunpack.c.h.b16 %v4717
    %v6125 = vunpack.c.l.b16 %v4718
    %v6126 = vunpack.c.h.b16 %v4718
    %v6127 = vunpack.c.l.b16 %v4719
    %v6128 = vunpack.c.h.b16 %v4719
    %v6129 = vunpack.c.l.b16 %v4720
    %v6130 = vunpack.c.h.b16 %v4720
    %v6131 = vunpack.c.l.b16 %v4721
    %v6132 = vunpack.c.h.b16 %v4721
    %v6133 = vunpack.c.l.b16 %v4722
    %v6134 = vunpack.c.h.b16 %v4722
    %v6135 = vunpack.c.l.b16 %v4723
    %v6136 = vunpack.c.h.b16 %v4723
    %v6137 = vunpack.c.l.b16 %v4724
    %v6138 = vunpack.c.h.b16 %v4724
    %v6139 = vunpack.c.l.b16 %v4725
    %v6140 = vunpack.c.h.b16 %v4725
    %v6141 = vunpack.c.l.b16 %v4726
    %v6142 = vunpack.c.h.b16 %v4726
    %v6143 = vunpack.c.l.b16 %v4727
    %v6144 = vunpack.c.h.b16 %v4727
    %v6145 = vunpack.c.l.b16 %v4728
    %v6146 = vunpack.c.h.b16 %v4728
    %v6147 = vunpack.c.l.b16 %v4729
    %v6148 = vunpack.c.h.b16 %v4729
    %v6149 = vunpack.c.l.b16 %v4730
    %v6150 = vunpack.c.h.b16 %v4730
    %v6151 = vunpack.c.l.b16 %v4731
    %v6152 = vunpack.c.h.b16 %v4731
    %v6153 = vunpack.c.l.b16 %v4732
    %v6154 = vunpack.c.h.b16 %v4732
    %v6155 = vunpack.c.l.b16 %v4733
    %v6156 = vunpack.c.h.b16 %v4733
    %v6157 = vunpack.c.l.b16 %v4734
    %v6158 = vunpack.c.h.b16 %v4734
    %v6159 = vunpack.c.l.b16 %v4735
    %v6160 = vunpack.c.h.b16 %v4735
    %v6161 = vunpack.c.l.b16 %v4736
    %v6162 = vunpack.c.h.b16 %v4736
    %v6163 = vunpack.c.l.b16 %v4737
    %v6164 = vunpack.c.h.b16 %v4737
    %v6165 = vunpack.c.l.b16 %v4738
    %v6166 = vunpack.c.h.b16 %v4738
    %v6167 = vunpack.c.l.b16 %v4739
    %v6168 = vunpack.c.h.b16 %v4739
    %v6169 = vunpack.c.l.b16 %v4740
    %v6170 = vunpack.c.h.b16 %v4740
    %v6171 = vunpack.c.l.b16 %v4741
    %v6172 = vunpack.c.h.b16 %v4741
    %v6173 = vunpack.c.l.b16 %v4742
    %v6174 = vunpack.c.h.b16 %v4742
    %v6175 = vunpack.c.l.b16 %v4743
    %v6176 = vunpack.c.h.b16 %v4743
    %v6177 = vunpack.c.l.b16 %v4744
    %v6178 = vunpack.c.h.b16 %v4744
    %v6179 = vunpack.c.l.b16 %v4745
    %v6180 = vunpack.c.h.b16 %v4745
    %v6181 = vunpack.c.l.b16 %v4746
    %v6182 = vunpack.c.h.b16 %v4746
    %v6183 = vunpack.c.l.b16 %v4747
    %v6184 = vunpack.c.h.b16 %v4747
    %v6185 = vunpack.c.l.b16 %v4748
    %v6186 = vunpack.c.h.b16 %v4748
    %v6187 = vunpack.c.l.b16 %v4749
    %v6188 = vunpack.c.h.b16 %v4749
    %v6189 = vunpack.c.l.b16 %v4750
    %v6190 = vunpack.c.h.b16 %v4750
    %v6191 = vunpack.c.l.b16 %v4751
    %v6192 = vunpack.c.h.b16 %v4751
    %v6193 = vunpack.c.l.b16 %v4752
    %v6194 = vunpack.c.h.b16 %v4752
    %v6195 = vunpack.c.l.b16 %v4753
    %v6196 = vunpack.c.h.b16 %v4753
    %v6197 = vunpack.c.l.b16 %v4754
    %v6198 = vunpack.c.h.b16 %v4754
    %v6199 = vunpack.c.l.b16 %v4755
    %v6200 = vunpack.c.h.b16 %v4755
    %v6201 = vunpack.c.l.b16 %v4756
    %v6202 = vunpack.c.h.b16 %v4756
    %v6203 = vunpack.c.l.b16 %v4757
    %v6204 = vunpack.c.h.b16 %v4757
    %v6205 = vunpack.c.l.b16 %v4758
    %v6206 = vunpack.c.h.b16 %v4758
    %v6207 = vunpack.c.l.b16 %v4759
    %v6208 = vunpack.c.h.b16 %v4759
    %v6209 = vunpack.c.l.b16 %v4760
    %v6210 = vunpack.c.h.b16 %v4760
    %v6211 = vunpack.c.l.b16 %v4761
    %v6212 = vunpack.c.h.b16 %v4761
    %v6213 = vunpack.c.l.b16 %v4762
    %v6214 = vunpack.c.h.b16 %v4762
    %v6215 = vunpack.c.l.b16 %v4763
    %v6216 = vunpack.c.h.b16 %v4763
    %v6217 = vunpack.c.l.b16 %v4764
    %v6218 = vunpack.c.h.b16 %v4764
    %v6219 = vunpack.c.l.b16 %v4765
    %v6220 = vunpack.c.h.b16 %v4765
    %v6221 = vunpack.c.l.b16 %v4766
    %v6222 = vunpack.c.h.b16 %v4766
    %v6223 = vunpack.c.l.b16 %v4767
    %v6224 = vunpack.c.h.b16 %v4767
    %v6225 = vunpack.c.l.b16 %v4768
    %v6226 = vunpack.c.h.b16 %v4768
    %v6227 = vunpack.c.l.b16 %v4769
    %v6228 = vunpack.c.h.b16 %v4769
    %v6229 = vunpack.c.l.b16 %v4770
    %v6230 = vunpack.c.h.b16 %v4770
    %v6231 = vunpack.c.l.b16 %v4771
    %v6232 = vunpack.c.h.b16 %v4771
    %v6233 = vunpack.c.l.b16 %v4772
    %v6234 = vunpack.c.h.b16 %v4772
    %v6235 = vunpack.c.l.b16 %v4773
    %v6236 = vunpack.c.h.b16 %v4773
    %v6237 = vunpack.c.l.b16 %v4774
    %v6238 = vunpack.c.h.b16 %v4774
    %v6239 = vunpack.c.l.b16 %v4775
    %v6240 = vunpack.c.h.b16 %v4775
    %v6241 = vunpack.c.l.b16 %v4776
    %v6242 = vunpack.c.h.b16 %v4776
    %v6243 = vunpack.c.l.b16 %v4777
    %v6244 = vunpack.c.h.b16 %v4777
    %v6245 = vunpack.c.l.b16 %v4778
    %v6246 = vunpack.c.h.b16 %v4778
    %v6247 = vunpack.c.l.b16 %v4779
    %v6248 = vunpack.c.h.b16 %v4779
    %v6249 = vunpack.c.l.b16 %v4780
    %v6250 = vunpack.c.h.b16 %v4780
    %v6251 = vunpack.c.l.b16 %v4781
    %v6252 = vunpack.c.h.b16 %v4781
    %v6253 = vunpack.c.l.b16 %v4782
    %v6254 = vunpack.c.h.b16 %v4782
    %v6255 = vunpack.c.l.b16 %v4783
    %v6256 = vunpack.c.h.b16 %v4783
    %v6257 = vunpack.c.l.b16 %v4784
    %v6258 = vunpack.c.h.b16 %v4784
    %v6259 = vunpack.c.l.b16 %v4785
    %v6260 = vunpack.c.h.b16 %v4785
    %v6261 = vunpack.c.l.b16 %v4786
    %v6262 = vunpack.c.h.b16 %v4786
    %v6263 = vunpack.c.l.b16 %v4787
    %v6264 = vunpack.c.h.b16 %v4787
    %v6265 = vunpack.c.l.b16 %v4788
    %v6266 = vunpack.c.h.b16 %v4788
    %v6267 = vunpack.c.l.b16 %v4789
    %v6268 = vunpack.c.h.b16 %v4789
    %v6269 = vunpack.c.l.b16 %v4790
    %v6270 = vunpack.c.h.b16 %v4790
    %v6271 = vunpack.c.l.b16 %v4791
    %v6272 = vunpack.c.h.b16 %v4791
    %v6273 = vunpack.c.l.b16 %v4792
    %v6274 = vunpack.c.h.b16 %v4792
    %v6275 = vunpack.c.l.b16 %v4793
    %v6276 = vunpack.c.h.b16 %v4793
    %v6277 = vunpack.c.l.b16 %v4794
    %v6278 = vunpack.c.h.b16 %v4794
    %v6279 = vunpack.c.l.b16 %v4795
    %v6280 = vunpack.c.h.b16 %v4795
    %v6281 = vunpack.c.l.b16 %v4796
    %v6282 = vunpack.c.h.b16 %v4796
    %v6283 = vunpack.c.l.b16 %v4797
    %v6284 = vunpack.c.h.b16 %v4797
    %v6285 = vunpack.c.l.b16 %v4798
    %v6286 = vunpack.c.h.b16 %v4798
    %v6287 = vunpack.c.l.b16 %v4799
    %v6288 = vunpack.c.h.b16 %v4799
    %v6289 = vunpack.c.l.b16 %v4800
    %v6290 = vunpack.c.h.b16 %v4800
    %v6291 = vunpack.c.l.b16 %v4801
    %v6292 = vunpack.c.h.b16 %v4801
    %v6293 = vunpack.c.l.b16 %v4802
    %v6294 = vunpack.c.h.b16 %v4802
    %v6295 = vunpack.c.l.b16 %v4803
    %v6296 = vunpack.c.h.b16 %v4803
    %v6297 = vunpack.c.l.b16 %v4804
    %v6298 = vunpack.c.h.b16 %v4804
    %v6299 = vunpack.c.l.b16 %v4805
    %v6300 = vunpack.c.h.b16 %v4805
    %v6301 = vunpack.c.l.b16 %v4806
    %v6302 = vunpack.c.h.b16 %v4806
    %v6303 = vunpack.c.l.b16 %v4807
    %v6304 = vunpack.c.h.b16 %v4807
    %v6305 = vunpack.c.l.b16 %v4808
    %v6306 = vunpack.c.h.b16 %v4808
    %v6307 = vunpack.c.l.b16 %v4809
    %v6308 = vunpack.c.h.b16 %v4809
    %v6309 = vunpack.c.l.b16 %v4810
    %v6310 = vunpack.c.h.b16 %v4810
    %v6311 = vunpack.c.l.b16 %v4811
    %v6312 = vunpack.c.h.b16 %v4811
    %v6313 = vunpack.c.l.b16 %v4812
    %v6314 = vunpack.c.h.b16 %v4812
    %v6315 = vunpack.c.l.b16 %v4813
    %v6316 = vunpack.c.h.b16 %v4813
    %v6317 = vunpack.c.l.b16 %v4814
    %v6318 = vunpack.c.h.b16 %v4814
    %v6319 = vunpack.c.l.b16 %v4815
    %v6320 = vunpack.c.h.b16 %v4815
    %v6321 = vunpack.c.l.b16 %v4816
    %v6322 = vunpack.c.h.b16 %v4816
    %v6323 = vunpack.c.l.b16 %v4817
    %v6324 = vunpack.c.h.b16 %v4817
    %v6325 = vunpack.c.l.b16 %v4818
    %v6326 = vunpack.c.h.b16 %v4818
    %v6327 = vunpack.c.l.b16 %v4819
    %v6328 = vunpack.c.h.b16 %v4819
    %v6329 = vunpack.c.l.b16 %v4820
    %v6330 = vunpack.c.h.b16 %v4820
    %v6331 = vunpack.c.l.b16 %v4821
    %v6332 = vunpack.c.h.b16 %v4821
    %v6333 = vunpack.c.l.b16 %v4822
    %v6334 = vunpack.c.h.b16 %v4822
    %v6335 = vunpack.c.l.b16 %v4823
    %v6336 = vunpack.c.h.b16 %v4823
    %v6337 = vunpack.c.l.b16 %v4824
    %v6338 = vunpack.c.h.b16 %v4824
    %v6339 = vunpack.c.l.b16 %v4825
    %v6340 = vunpack.c.h.b16 %v4825
    %v6341 = vunpack.c.l.b16 %v4826
    %v6342 = vunpack.c.h.b16 %v4826
    %v6343 = vunpack.c.l.b16 %v4827
    %v6344 = vunpack.c.h.b16 %v4827
    %v6345 = vunpack.c.l.b16 %v4828
    %v6346 = vunpack.c.h.b16 %v4828
    %v6347 = vunpack.c.l.b16 %v4829
    %v6348 = vunpack.c.h.b16 %v4829
    %v6349 = vunpack.c.l.b16 %v4830
    %v6350 = vunpack.c.h.b16 %v4830
    %v6351 = vunpack.c.l.b16 %v4831
    %v6352 = vunpack.c.h.b16 %v4831
    %v6353 = vunpack.c.l.b16 %v4832
    %v6354 = vunpack.c.h.b16 %v4832
    %v6355 = vunpack.c.l.b16 %v4833
    %v6356 = vunpack.c.h.b16 %v4833
    %v6357 = vunpack.c.l.b16 %v4834
    %v6358 = vunpack.c.h.b16 %v4834
    %v6359 = vunpack.c.l.b16 %v4835
    %v6360 = vunpack.c.h.b16 %v4835
    %v6361 = vunpack.c.l.b16 %v4836
    %v6362 = vunpack.c.h.b16 %v4836
    %v6363 = vunpack.c.l.b16 %v4837
    %v6364 = vunpack.c.h.b16 %v4837
    %v6365 = vunpack.c.l.b16 %v4838
    %v6366 = vunpack.c.h.b16 %v4838
    %v6367 = vunpack.c.l.b16 %v4839
    %v6368 = vunpack.c.h.b16 %v4839
    %v6369 = vunpack.c.l.b16 %v4840
    %v6370 = vunpack.c.h.b16 %v4840
    %v6371 = vunpack.c.l.b16 %v4841
    %v6372 = vunpack.c.h.b16 %v4841
    %v6373 = vunpack.c.l.b16 %v4842
    %v6374 = vunpack.c.h.b16 %v4842
    %v6375 = vunpack.c.l.b16 %v4843
    %v6376 = vunpack.c.h.b16 %v4843
    %v6377 = vunpack.c.l.b16 %v4844
    %v6378 = vunpack.c.h.b16 %v4844
    %v6379 = vunpack.c.l.b16 %v4845
    %v6380 = vunpack.c.h.b16 %v4845
    %v6381 = vunpack.c.l.b16 %v4846
    %v6382 = vunpack.c.h.b16 %v4846
    %v6383 = vunpack.c.l.b16 %v4847
    %v6384 = vunpack.c.h.b16 %v4847
    %v6385 = vunpack.c.l.b16 %v4848
    %v6386 = vunpack.c.h.b16 %v4848
    %v6387 = vunpack.c.l.b16 %v4849
    %v6388 = vunpack.c.h.b16 %v4849
    %v6389 = vunpack.c.l.b16 %v4850
    %v6390 = vunpack.c.h.b16 %v4850
    %v6391 = vunpack.c.l.b16 %v4851
    %v6392 = vunpack.c.h.b16 %v4851
    %v6393 = vunpack.c.l.b16 %v4852
    %v6394 = vunpack.c.h.b16 %v4852
    %v6395 = vunpack.c.l.b16 %v4853
    %v6396 = vunpack.c.h.b16 %v4853
    %v6397 = vunpack.c.l.b16 %v4854
    %v6398 = vunpack.c.h.b16 %v4854
    %v6399 = vunpack.c.l.b16 %v4855
    %v6400 = vunpack.c.h.b16 %v4855
    %v6401 = vunpack.c.l.b16 %v4856
    %v6402 = vunpack.c.h.b16 %v4856
    %v6403 = vunpack.c.l.b16 %v4857
    %v6404 = vunpack.c.h.b16 %v4857
    %v6405 = vunpack.c.l.b16 %v4858
    %v6406 = vunpack.c.h.b16 %v4858
    %v6407 = vunpack.c.l.b16 %v4859
    %v6408 = vunpack.c.h.b16 %v4859
    %v6409 = vunpack.c.l.b16 %v4860
    %v6410 = vunpack.c.h.b16 %v4860
    %v6411 = vunpack.c.l.b16 %v4861
    %v6412 = vunpack.c.h.b16 %v4861
    %v6413 = vunpack.c.l.b16 %v4862
    %v6414 = vunpack.c.h.b16 %v4862
    %v6415 = vunpack.c.l.b16 %v4863
    %v6416 = vunpack.c.h.b16 %v4863
    %v6417 = vunpack.c.l.b16 %v4864
    %v6418 = vunpack.c.h.b16 %v4864
    %v6419 = vunpack.c.l.b16 %v4865
    %v6420 = vunpack.c.h.b16 %v4865
    %v6421 = vunpack.c.l.b16 %v4866
    %v6422 = vunpack.c.h.b16 %v4866
    %v6423 = vunpack.c.l.b16 %v4867
    %v6424 = vunpack.c.h.b16 %v4867
    %v6425 = vunpack.c.l.b16 %v4868
    %v6426 = vunpack.c.h.b16 %v4868
    %v6427 = vunpack.c.l.b16 %v4869
    %v6428 = vunpack.c.h.b16 %v4869
    %v6429 = vunpack.c.l.b16 %v4870
    %v6430 = vunpack.c.h.b16 %v4870
    %v6431 = vunpack.c.l.b16 %v4871
    %v6432 = vunpack.c.h.b16 %v4871
    %v6433 = vunpack.c.l.b16 %v4872
    %v6434 = vunpack.c.h.b16 %v4872
    %v6435 = vunpack.c.l.b16 %v4873
    %v6436 = vunpack.c.h.b16 %v4873
    %v6437 = vunpack.c.l.b16 %v4874
    %v6438 = vunpack.c.h.b16 %v4874
    %v6439 = vunpack.c.l.b16 %v4875
    %v6440 = vunpack.c.h.b16 %v4875
    %v6441 = vunpack.c.l.b16 %v4876
    %v6442 = vunpack.c.h.b16 %v4876
    %v6443 = vunpack.c.l.b16 %v4877
    %v6444 = vunpack.c.h.b16 %v4877
    %v6445 = vunpack.c.l.b16 %v4878
    %v6446 = vunpack.c.h.b16 %v4878
    %v6447 = vunpack.c.l.b16 %v4879
    %v6448 = vunpack.c.h.b16 %v4879
    %v6449 = vunpack.c.l.b16 %v4880
    %v6450 = vunpack.c.h.b16 %v4880
    %v6451 = vunpack.c.l.b16 %v4881
    %v6452 = vunpack.c.h.b16 %v4881
    %v6453 = vunpack.c.l.b16 %v4882
    %v6454 = vunpack.c.h.b16 %v4882
    %v6455 = vunpack.c.l.b16 %v4883
    %v6456 = vunpack.c.h.b16 %v4883
    %v6457 = vunpack.c.l.b16 %v4884
    %v6458 = vunpack.c.h.b16 %v4884
    %v6459 = vunpack.c.l.b16 %v4885
    %v6460 = vunpack.c.h.b16 %v4885
    %v6461 = vunpack.c.l.b16 %v4886
    %v6462 = vunpack.c.h.b16 %v4886
    %v6463 = vunpack.c.l.b16 %v4887
    %v6464 = vunpack.c.h.b16 %v4887
    %v6465 = vunpack.c.l.b16 %v4888
    %v6466 = vunpack.c.h.b16 %v4888
    %v6467 = vunpack.c.l.b16 %v4889
    %v6468 = vunpack.c.h.b16 %v4889
    %v6469 = vunpack.c.l.b16 %v4890
    %v6470 = vunpack.c.h.b16 %v4890
    %v6471 = vunpack.c.l.b16 %v4891
    %v6472 = vunpack.c.h.b16 %v4891
    %v6473 = vpack.c.b16 %v5457, %v5449
    %v6474 = vpack.c.b16 %v5458, %v5450
    %v6475 = vpack.c.b16 %v5459, %v5451
    %v6476 = vpack.c.b16 %v5460, %v5452
    %v6477 = vpack.c.b16 %v5461, %v5453
    %v6478 = vpack.c.b16 %v5462, %v5454
    %v6479 = vpack.c.b16 %v5463, %v5455
    %v6480 = vpack.c.b16 %v5464, %v5456
    %v6481 = vpack.c.b16 %v5473, %v5465
    %v6482 = vpack.c.b16 %v5474, %v5466
    %v6483 = vpack.c.b16 %v5475, %v5467
    %v6484 = vpack.c.b16 %v5476, %v5468
    %v6485 = vpack.c.b16 %v5477, %v5469
    %v6486 = vpack.c.b16 %v5478, %v5470
    %v6487 = vpack.c.b16 %v5479, %v5471
    %v6488 = vpack.c.b16 %v5480, %v5472
    %v6489 = vpack.c.b16 %v5489, %v5481
    %v6490 = vpack.c.b16 %v5490, %v5482
    %v6491 = vpack.c.b16 %v5491, %v5483
    %v6492 = vpack.c.b16 %v5492, %v5484
    %v6493 = vpack.c.b16 %v5493, %v5485
    %v6494 = vpack.c.b16 %v5494, %v5486
    %v6495 = vpack.c.b16 %v5495, %v5487
    %v6496 = vpack.c.b16 %v5496, %v5488
    %v6497 = vpack.c.b16 %v5505, %v5497
    %v6498 = vpack.c.b16 %v5506, %v5498
    %v6499 = vpack.c.b16 %v5507, %v5499
    %v6500 = vpack.c.b16 %v5508, %v5500
    %v6501 = vpack.c.b16 %v5509, %v5501
    %v6502 = vpack.c.b16 %v5510, %v5502
    %v6503 = vpack.c.b16 %v5511, %v5503
    %v6504 = vpack.c.b16 %v5512, %v5504
    %v6505 = vpack.c.b16 %v5521, %v5513
    %v6506 = vpack.c.b16 %v5522, %v5514
    %v6507 = vpack.c.b16 %v5523, %v5515
    %v6508 = vpack.c.b16 %v5524, %v5516
    %v6509 = vpack.c.b16 %v5525, %v5517
    %v6510 = vpack.c.b16 %v5526, %v5518
    %v6511 = vpack.c.b16 %v5527, %v5519
    %v6512 = vpack.c.b16 %v5528, %v5520
    %v6513 = vpack.c.b16 %v5537, %v5529
    %v6514 = vpack.c.b16 %v5538, %v5530
    %v6515 = vpack.c.b16 %v5539, %v5531
    %v6516 = vpack.c.b16 %v5540, %v5532
    %v6517 = vpack.c.b16 %v5541, %v5533
    %v6518 = vpack.c.b16 %v5542, %v5534
    %v6519 = vpack.c.b16 %v5543, %v5535
    %v6520 = vpack.c.b16 %v5544, %v5536
    %v6521 = vpack.c.b16 %v5553, %v5545
    %v6522 = vpack.c.b16 %v5554, %v5546
    %v6523 = vpack.c.b16 %v5555, %v5547
    %v6524 = vpack.c.b16 %v5556, %v5548
    %v6525 = vpack.c.b16 %v5557, %v5549
    %v6526 = vpack.c.b16 %v5558, %v5550
    %v6527 = vpack.c.b16 %v5559, %v5551
    %v6528 = vpack.c.b16 %v5560, %v5552
    %v6529 = vpack.c.b16 %v5569, %v5561
    %v6530 = vpack.c.b16 %v5570, %v5562
    %v6531 = vpack.c.b16 %v5571, %v5563
    %v6532 = vpack.c.b16 %v5572, %v5564
    %v6533 = vpack.c.b16 %v5573, %v5565
    %v6534 = vpack.c.b16 %v5574, %v5566
    %v6535 = vpack.c.b16 %v5575, %v5567
    %v6536 = vpack.c.b16 %v5576, %v5568
    %v6537 = vpack.c.b16 %v5585, %v5577
    %v6538 = vpack.c.b16 %v5586, %v5578
    %v6539 = vpack.c.b16 %v5587, %v5579
    %v6540 = vpack.c.b16 %v5588, %v5580
    %v6541 = vpack.c.b16 %v5589, %v5581
    %v6542 = vpack.c.b16 %v5590, %v5582
    %v6543 = vpack.c.b16 %v5591, %v5583
    %v6544 = vpack.c.b16 %v5592, %v5584
    %v6545 = vpack.c.b16 %v5601, %v5593
    %v6546 = vpack.c.b16 %v5602, %v5594
    %v6547 = vpack.c.b16 %v5603, %v5595
    %v6548 = vpack.c.b16 %v5604, %v5596
    %v6549 = vpack.c.b16 %v5605, %v5597
    %v6550 = vpack.c.b16 %v5606, %v5598
    %v6551 = vpack.c.b16 %v5607, %v5599
    %v6552 = vpack.c.b16 %v5608, %v5600
    %v6553 = vpack.c.b16 %v5617, %v5609
    %v6554 = vpack.c.b16 %v5618, %v5610
    %v6555 = vpack.c.b16 %v5619, %v5611
    %v6556 = vpack.c.b16 %v5620, %v5612
    %v6557 = vpack.c.b16 %v5621, %v5613
    %v6558 = vpack.c.b16 %v5622, %v5614
    %v6559 = vpack.c.b16 %v5623, %v5615
    %v6560 = vpack.c.b16 %v5624, %v5616
    %v6561 = vpack.c.b16 %v5633, %v5625
    %v6562 = vpack.c.b16 %v5634, %v5626
    %v6563 = vpack.c.b16 %v5635, %v5627
    %v6564 = vpack.c.b16 %v5636, %v5628
    %v6565 = vpack.c.b16 %v5637, %v5629
    %v6566 = vpack.c.b16 %v5638, %v5630
    %v6567 = vpack.c.b16 %v5639, %v5631
    %v6568 = vpack.c.b16 %v5640, %v5632
    %v6569 = vpack.c.b16 %v5649, %v5641
    %v6570 = vpack.c.b16 %v5650, %v5642
    %v6571 = vpack.c.b16 %v5651, %v5643
    %v6572 = vpack.c.b16 %v5652, %v5644
    %v6573 = vpack.c.b16 %v5653, %v5645
    %v6574 = vpack.c.b16 %v5654, %v5646
    %v6575 = vpack.c.b16 %v5655, %v5647
    %v6576 = vpack.c.b16 %v5656, %v5648
    %v6577 = vpack.c.b16 %v5665, %v5657
    %v6578 = vpack.c.b16 %v5666, %v5658
    %v6579 = vpack.c.b16 %v5667, %v5659
    %v6580 = vpack.c.b16 %v5668, %v5660
    %v6581 = vpack.c.b16 %v5669, %v5661
    %v6582 = vpack.c.b16 %v5670, %v5662
    %v6583 = vpack.c.b16 %v5671, %v5663
    %v6584 = vpack.c.b16 %v5672, %v5664
    %v6585 = vpack.c.b16 %v5681, %v5673
    %v6586 = vpack.c.b16 %v5682, %v5674
    %v6587 = vpack.c.b16 %v5683, %v5675
    %v6588 = vpack.c.b16 %v5684, %v5676
    %v6589 = vpack.c.b16 %v5685, %v5677
    %v6590 = vpack.c.b16 %v5686, %v5678
    %v6591 = vpack.c.b16 %v5687, %v5679
    %v6592 = vpack.c.b16 %v5688, %v5680
    %v6593 = vpack.c.b16 %v5697, %v5689
    %v6594 = vpack.c.b16 %v5698, %v5690
    %v6595 = vpack.c.b16 %v5699, %v5691
    %v6596 = vpack.c.b16 %v5700, %v5692
    %v6597 = vpack.c.b16 %v5701, %v5693
    %v6598 = vpack.c.b16 %v5702, %v5694
    %v6599 = vpack.c.b16 %v5703, %v5695
    %v6600 = vpack.c.b16 %v5704, %v5696
    %v6601 = vpack.c.b16 %v5713, %v5705
    %v6602 = vpack.c.b16 %v5714, %v5706
    %v6603 = vpack.c.b16 %v5715, %v5707
    %v6604 = vpack.c.b16 %v5716, %v5708
    %v6605 = vpack.c.b16 %v5717, %v5709
    %v6606 = vpack.c.b16 %v5718, %v5710
    %v6607 = vpack.c.b16 %v5719, %v5711
    %v6608 = vpack.c.b16 %v5720, %v5712
    %v6609 = vpack.c.b16 %v5729, %v5721
    %v6610 = vpack.c.b16 %v5730, %v5722
    %v6611 = vpack.c.b16 %v5731, %v5723
    %v6612 = vpack.c.b16 %v5732, %v5724
    %v6613 = vpack.c.b16 %v5733, %v5725
    %v6614 = vpack.c.b16 %v5734, %v5726
    %v6615 = vpack.c.b16 %v5735, %v5727
    %v6616 = vpack.c.b16 %v5736, %v5728
    %v6617 = vpack.c.b16 %v5745, %v5737
    %v6618 = vpack.c.b16 %v5746, %v5738
    %v6619 = vpack.c.b16 %v5747, %v5739
    %v6620 = vpack.c.b16 %v5748, %v5740
    %v6621 = vpack.c.b16 %v5749, %v5741
    %v6622 = vpack.c.b16 %v5750, %v5742
    %v6623 = vpack.c.b16 %v5751, %v5743
    %v6624 = vpack.c.b16 %v5752, %v5744
    %v6625 = vpack.c.b16 %v5761, %v5753
    %v6626 = vpack.c.b16 %v5762, %v5754
    %v6627 = vpack.c.b16 %v5763, %v5755
    %v6628 = vpack.c.b16 %v5764, %v5756
    %v6629 = vpack.c.b16 %v5765, %v5757
    %v6630 = vpack.c.b16 %v5766, %v5758
    %v6631 = vpack.c.b16 %v5767, %v5759
    %v6632 = vpack.c.b16 %v5768, %v5760
    %v6633 = vpack.c.b16 %v5777, %v5769
    %v6634 = vpack.c.b16 %v5778, %v5770
    %v6635 = vpack.c.b16 %v5779, %v5771
    %v6636 = vpack.c.b16 %v5780, %v5772
    %v6637 = vpack.c.b16 %v5781, %v5773
    %v6638 = vpack.c.b16 %v5782, %v5774
    %v6639 = vpack.c.b16 %v5783, %v5775
    %v6640 = vpack.c.b16 %v5784, %v5776
    %v6641 = vpack.c.b16 %v5793, %v5785
    %v6642 = vpack.c.b16 %v5794, %v5786
    %v6643 = vpack.c.b16 %v5795, %v5787
    %v6644 = vpack.c.b16 %v5796, %v5788
    %v6645 = vpack.c.b16 %v5797, %v5789
    %v6646 = vpack.c.b16 %v5798, %v5790
    %v6647 = vpack.c.b16 %v5799, %v5791
    %v6648 = vpack.c.b16 %v5800, %v5792
    %v6649 = vpack.c.b16 %v5809, %v5801
    %v6650 = vpack.c.b16 %v5810, %v5802
    %v6651 = vpack.c.b16 %v5811, %v5803
    %v6652 = vpack.c.b16 %v5812, %v5804
    %v6653 = vpack.c.b16 %v5813, %v5805
    %v6654 = vpack.c.b16 %v5814, %v5806
    %v6655 = vpack.c.b16 %v5815, %v5807
    %v6656 = vpack.c.b16 %v5816, %v5808
    %v6657 = vpack.c.b16 %v5825, %v5817
    %v6658 = vpack.c.b16 %v5826, %v5818
    %v6659 = vpack.c.b16 %v5827, %v5819
    %v6660 = vpack.c.b16 %v5828, %v5820
    %v6661 = vpack.c.b16 %v5829, %v5821
    %v6662 = vpack.c.b16 %v5830, %v5822
    %v6663 = vpack.c.b16 %v5831, %v5823
    %v6664 = vpack.c.b16 %v5832, %v5824
    %v6665 = vpack.c.b16 %v5841, %v5833
    %v6666 = vpack.c.b16 %v5842, %v5834
    %v6667 = vpack.c.b16 %v5843, %v5835
    %v6668 = vpack.c.b16 %v5844, %v5836
    %v6669 = vpack.c.b16 %v5845, %v5837
    %v6670 = vpack.c.b16 %v5846, %v5838
    %v6671 = vpack.c.b16 %v5847, %v5839
    %v6672 = vpack.c.b16 %v5848, %v5840
    %v6673 = vpack.c.b16 %v5857, %v5849
    %v6674 = vpack.c.b16 %v5858, %v5850
    %v6675 = vpack.c.b16 %v5859, %v5851
    %v6676 = vpack.c.b16 %v5860, %v5852
    %v6677 = vpack.c.b16 %v5861, %v5853
    %v6678 = vpack.c.b16 %v5862, %v5854
    %v6679 = vpack.c.b16 %v5863, %v5855
    %v6680 = vpack.c.b16 %v5864, %v5856
    %v6681 = vpack.c.b16 %v5873, %v5865
    %v6682 = vpack.c.b16 %v5874, %v5866
    %v6683 = vpack.c.b16 %v5875, %v5867
    %v6684 = vpack.c.b16 %v5876, %v5868
    %v6685 = vpack.c.b16 %v5877, %v5869
    %v6686 = vpack.c.b16 %v5878, %v5870
    %v6687 = vpack.c.b16 %v5879, %v5871
    %v6688 = vpack.c.b16 %v5880, %v5872
    %v6689 = vpack.c.b16 %v5889, %v5881
    %v6690 = vpack.c.b16 %v5890, %v5882
    %v6691 = vpack.c.b16 %v5891, %v5883
    %v6692 = vpack.c.b16 %v5892, %v5884
    %v6693 = vpack.c.b16 %v5893, %v5885
    %v6694 = vpack.c.b16 %v5894, %v5886
    %v6695 = vpack.c.b16 %v5895, %v5887
    %v6696 = vpack.c.b16 %v5896, %v5888
    %v6697 = vpack.c.b16 %v5905, %v5897
    %v6698 = vpack.c.b16 %v5906, %v5898
    %v6699 = vpack.c.b16 %v5907, %v5899
    %v6700 = vpack.c.b16 %v5908, %v5900
    %v6701 = vpack.c.b16 %v5909, %v5901
    %v6702 = vpack.c.b16 %v5910, %v5902
    %v6703 = vpack.c.b16 %v5911, %v5903
    %v6704 = vpack.c.b16 %v5912, %v5904
    %v6705 = vpack.c.b16 %v5921, %v5913
    %v6706 = vpack.c.b16 %v5922, %v5914
    %v6707 = vpack.c.b16 %v5923, %v5915
    %v6708 = vpack.c.b16 %v5924, %v5916
    %v6709 = vpack.c.b16 %v5925, %v5917
    %v6710 = vpack.c.b16 %v5926, %v5918
    %v6711 = vpack.c.b16 %v5927, %v5919
    %v6712 = vpack.c.b16 %v5928, %v5920
    %v6713 = vpack.c.b16 %v5937, %v5929
    %v6714 = vpack.c.b16 %v5938, %v5930
    %v6715 = vpack.c.b16 %v5939, %v5931
    %v6716 = vpack.c.b16 %v5940, %v5932
    %v6717 = vpack.c.b16 %v5941, %v5933
    %v6718 = vpack.c.b16 %v5942, %v5934
    %v6719 = vpack.c.b16 %v5943, %v5935
    %v6720 = vpack.c.b16 %v5944, %v5936
    %v6721 = vpack.c.b16 %v5953, %v5945
    %v6722 = vpack.c.b16 %v5954, %v5946
    %v6723 = vpack.c.b16 %v5955, %v5947
    %v6724 = vpack.c.b16 %v5956, %v5948
    %v6725 = vpack.c.b16 %v5957, %v5949
    %v6726 = vpack.c.b16 %v5958, %v5950
    %v6727 = vpack.c.b16 %v5959, %v5951
    %v6728 = vpack.c.b16 %v5960, %v5952
    %v6729 = vpack.c.b16 %v5969, %v5961
    %v6730 = vpack.c.b16 %v5970, %v5962
    %v6731 = vpack.c.b16 %v5971, %v5963
    %v6732 = vpack.c.b16 %v5972, %v5964
    %v6733 = vpack.c.b16 %v5973, %v5965
    %v6734 = vpack.c.b16 %v5974, %v5966
    %v6735 = vpack.c.b16 %v5975, %v5967
    %v6736 = vpack.c.b16 %v5976, %v5968
    %v6737 = vpack.c.b16 %v5985, %v5977
    %v6738 = vpack.c.b16 %v5986, %v5978
    %v6739 = vpack.c.b16 %v5987, %v5979
    %v6740 = vpack.c.b16 %v5988, %v5980
    %v6741 = vpack.c.b16 %v5989, %v5981
    %v6742 = vpack.c.b16 %v5990, %v5982
    %v6743 = vpack.c.b16 %v5991, %v5983
    %v6744 = vpack.c.b16 %v5992, %v5984
    %v6745 = vpack.c.b16 %v6001, %v5993
    %v6746 = vpack.c.b16 %v6002, %v5994
    %v6747 = vpack.c.b16 %v6003, %v5995
    %v6748 = vpack.c.b16 %v6004, %v5996
    %v6749 = vpack.c.b16 %v6005, %v5997
    %v6750 = vpack.c.b16 %v6006, %v5998
    %v6751 = vpack.c.b16 %v6007, %v5999
    %v6752 = vpack.c.b16 %v6008, %v6000
    %v6753 = vpack.c.b16 %v6017, %v6009
    %v6754 = vpack.c.b16 %v6018, %v6010
    %v6755 = vpack.c.b16 %v6019, %v6011
    %v6756 = vpack.c.b16 %v6020, %v6012
    %v6757 = vpack.c.b16 %v6021, %v6013
    %v6758 = vpack.c.b16 %v6022, %v6014
    %v6759 = vpack.c.b16 %v6023, %v6015
    %v6760 = vpack.c.b16 %v6024, %v6016
    %v6761 = vpack.c.b16 %v6033, %v6025
    %v6762 = vpack.c.b16 %v6034, %v6026
    %v6763 = vpack.c.b16 %v6035, %v6027
    %v6764 = vpack.c.b16 %v6036, %v6028
    %v6765 = vpack.c.b16 %v6037, %v6029
    %v6766 = vpack.c.b16 %v6038, %v6030
    %v6767 = vpack.c.b16 %v6039, %v6031
    %v6768 = vpack.c.b16 %v6040, %v6032
    %v6769 = vpack.c.b16 %v6049, %v6041
    %v6770 = vpack.c.b16 %v6050, %v6042
    %v6771 = vpack.c.b16 %v6051, %v6043
    %v6772 = vpack.c.b16 %v6052, %v6044
    %v6773 = vpack.c.b16 %v6053, %v6045
    %v6774 = vpack.c.b16 %v6054, %v6046
    %v6775 = vpack.c.b16 %v6055, %v6047
    %v6776 = vpack.c.b16 %v6056, %v6048
    %v6777 = vpack.c.b16 %v6065, %v6057
    %v6778 = vpack.c.b16 %v6066, %v6058
    %v6779 = vpack.c.b16 %v6067, %v6059
    %v6780 = vpack.c.b16 %v6068, %v6060
    %v6781 = vpack.c.b16 %v6069, %v6061
    %v6782 = vpack.c.b16 %v6070, %v6062
    %v6783 = vpack.c.b16 %v6071, %v6063
    %v6784 = vpack.c.b16 %v6072, %v6064
    %v6785 = vpack.c.b16 %v6081, %v6073
    %v6786 = vpack.c.b16 %v6082, %v6074
    %v6787 = vpack.c.b16 %v6083, %v6075
    %v6788 = vpack.c.b16 %v6084, %v6076
    %v6789 = vpack.c.b16 %v6085, %v6077
    %v6790 = vpack.c.b16 %v6086, %v6078
    %v6791 = vpack.c.b16 %v6087, %v6079
    %v6792 = vpack.c.b16 %v6088, %v6080
    %v6793 = vpack.c.b16 %v6097, %v6089
    %v6794 = vpack.c.b16 %v6098, %v6090
    %v6795 = vpack.c.b16 %v6099, %v6091
    %v6796 = vpack.c.b16 %v6100, %v6092
    %v6797 = vpack.c.b16 %v6101, %v6093
    %v6798 = vpack.c.b16 %v6102, %v6094
    %v6799 = vpack.c.b16 %v6103, %v6095
    %v6800 = vpack.c.b16 %v6104, %v6096
    %v6801 = vpack.c.b16 %v6113, %v6105
    %v6802 = vpack.c.b16 %v6114, %v6106
    %v6803 = vpack.c.b16 %v6115, %v6107
    %v6804 = vpack.c.b16 %v6116, %v6108
    %v6805 = vpack.c.b16 %v6117, %v6109
    %v6806 = vpack.c.b16 %v6118, %v6110
    %v6807 = vpack.c.b16 %v6119, %v6111
    %v6808 = vpack.c.b16 %v6120, %v6112
    %v6809 = vpack.c.b16 %v6129, %v6121
    %v6810 = vpack.c.b16 %v6130, %v6122
    %v6811 = vpack.c.b16 %v6131, %v6123
    %v6812 = vpack.c.b16 %v6132, %v6124
    %v6813 = vpack.c.b16 %v6133, %v6125
    %v6814 = vpack.c.b16 %v6134, %v6126
    %v6815 = vpack.c.b16 %v6135, %v6127
    %v6816 = vpack.c.b16 %v6136, %v6128
    %v6817 = vpack.c.b16 %v6145, %v6137
    %v6818 = vpack.c.b16 %v6146, %v6138
    %v6819 = vpack.c.b16 %v6147, %v6139
    %v6820 = vpack.c.b16 %v6148, %v6140
    %v6821 = vpack.c.b16 %v6149, %v6141
    %v6822 = vpack.c.b16 %v6150, %v6142
    %v6823 = vpack.c.b16 %v6151, %v6143
    %v6824 = vpack.c.b16 %v6152, %v6144
    %v6825 = vpack.c.b16 %v6161, %v6153
    %v6826 = vpack.c.b16 %v6162, %v6154
    %v6827 = vpack.c.b16 %v6163, %v6155
    %v6828 = vpack.c.b16 %v6164, %v6156
    %v6829 = vpack.c.b16 %v6165, %v6157
    %v6830 = vpack.c.b16 %v6166, %v6158
    %v6831 = vpack.c.b16 %v6167, %v6159
    %v6832 = vpack.c.b16 %v6168, %v6160
    %v6833 = vpack.c.b16 %v6177, %v6169
    %v6834 = vpack.c.b16 %v6178, %v6170
    %v6835 = vpack.c.b16 %v6179, %v6171
    %v6836 = vpack.c.b16 %v6180, %v6172
    %v6837 = vpack.c.b16 %v6181, %v6173
    %v6838 = vpack.c.b16 %v6182, %v6174
    %v6839 = vpack.c.b16 %v6183, %v6175
    %v6840 = vpack.c.b16 %v6184, %v6176
    %v6841 = vpack.c.b16 %v6193, %v6185
    %v6842 = vpack.c.b16 %v6194, %v6186
    %v6843 = vpack.c.b16 %v6195, %v6187
    %v6844 = vpack.c.b16 %v6196, %v6188
    %v6845 = vpack.c.b16 %v6197, %v6189
    %v6846 = vpack.c.b16 %v6198, %v6190
    %v6847 = vpack.c.b16 %v6199, %v6191
    %v6848 = vpack.c.b16 %v6200, %v6192
    %v6849 = vpack.c.b16 %v6209, %v6201
    %v6850 = vpack.c.b16 %v6210, %v6202
    %v6851 = vpack.c.b16 %v6211, %v6203
    %v6852 = vpack.c.b16 %v6212, %v6204
    %v6853 = vpack.c.b16 %v6213, %v6205
    %v6854 = vpack.c.b16 %v6214, %v6206
    %v6855 = vpack.c.b16 %v6215, %v6207
    %v6856 = vpack.c.b16 %v6216, %v6208
    %v6857 = vpack.c.b16 %v6225, %v6217
    %v6858 = vpack.c.b16 %v6226, %v6218
    %v6859 = vpack.c.b16 %v6227, %v6219
    %v6860 = vpack.c.b16 %v6228, %v6220
    %v6861 = vpack.c.b16 %v6229, %v6221
    %v6862 = vpack.c.b16 %v6230, %v6222
    %v6863 = vpack.c.b16 %v6231, %v6223
    %v6864 = vpack.c.b16 %v6232, %v6224
    %v6865 = vpack.c.b16 %v6241, %v6233
    %v6866 = vpack.c.b16 %v6242, %v6234
    %v6867 = vpack.c.b16 %v6243, %v6235
    %v6868 = vpack.c.b16 %v6244, %v6236
    %v6869 = vpack.c.b16 %v6245, %v6237
    %v6870 = vpack.c.b16 %v6246, %v6238
    %v6871 = vpack.c.b16 %v6247, %v6239
    %v6872 = vpack.c.b16 %v6248, %v6240
    %v6873 = vpack.c.b16 %v6257, %v6249
    %v6874 = vpack.c.b16 %v6258, %v6250
    %v6875 = vpack.c.b16 %v6259, %v6251
    %v6876 = vpack.c.b16 %v6260, %v6252
    %v6877 = vpack.c.b16 %v6261, %v6253
    %v6878 = vpack.c.b16 %v6262, %v6254
    %v6879 = vpack.c.b16 %v6263, %v6255
    %v6880 = vpack.c.b16 %v6264, %v6256
    %v6881 = vpack.c.b16 %v6273, %v6265
    %v6882 = vpack.c.b16 %v6274, %v6266
    %v6883 = vpack.c.b16 %v6275, %v6267
    %v6884 = vpack.c.b16 %v6276, %v6268
    %v6885 = vpack.c.b16 %v6277, %v6269
    %v6886 = vpack.c.b16 %v6278, %v6270
    %v6887 = vpack.c.b16 %v6279, %v6271
    %v6888 = vpack.c.b16 %v6280, %v6272
    %v6889 = vpack.c.b16 %v6289, %v6281
    %v6890 = vpack.c.b16 %v6290, %v6282
    %v6891 = vpack.c.b16 %v6291, %v6283
    %v6892 = vpack.c.b16 %v6292, %v6284
    %v6893 = vpack.c.b16 %v6293, %v6285
    %v6894 = vpack.c.b16 %v6294, %v6286
    %v6895 = vpack.c.b16 %v6295, %v6287
    %v6896 = vpack.c.b16 %v6296, %v6288
    %v6897 = vpack.c.b16 %v6305, %v6297
    %v6898 = vpack.c.b16 %v6306, %v6298
    %v6899 = vpack.c.b16 %v6307, %v6299
    %v6900 = vpack.c.b16 %v6308, %v6300
    %v6901 = vpack.c.b16 %v6309, %v6301
    %v6902 = vpack.c.b16 %v6310, %v6302
    %v6903 = vpack.c.b16 %v6311, %v6303
    %v6904 = vpack.c.b16 %v6312, %v6304
    %v6905 = vpack.c.b16 %v6321, %v6313
    %v6906 = vpack.c.b16 %v6322, %v6314
    %v6907 = vpack.c.b16 %v6323, %v6315
    %v6908 = vpack.c.b16 %v6324, %v6316
    %v6909 = vpack.c.b16 %v6325, %v6317
    %v6910 = vpack.c.b16 %v6326, %v6318
    %v6911 = vpack.c.b16 %v6327, %v6319
    %v6912 = vpack.c.b16 %v6328, %v6320
    %v6913 = vpack.c.b16 %v6337, %v6329
    %v6914 = vpack.c.b16 %v6338, %v6330
    %v6915 = vpack.c.b16 %v6339, %v6331
    %v6916 = vpack.c.b16 %v6340, %v6332
    %v6917 = vpack.c.b16 %v6341, %v6333
    %v6918 = vpack.c.b16 %v6342, %v6334
    %v6919 = vpack.c.b16 %v6343, %v6335
    %v6920 = vpack.c.b16 %v6344, %v6336
    %v6921 = vpack.c.b16 %v6353, %v6345
    %v6922 = vpack.c.b16 %v6354, %v6346
    %v6923 = vpack.c.b16 %v6355, %v6347
    %v6924 = vpack.c.b16 %v6356, %v6348
    %v6925 = vpack.c.b16 %v6357, %v6349
    %v6926 = vpack.c.b16 %v6358, %v6350
    %v6927 = vpack.c.b16 %v6359, %v6351
    %v6928 = vpack.c.b16 %v6360, %v6352
    %v6929 = vpack.c.b16 %v6369, %v6361
    %v6930 = vpack.c.b16 %v6370, %v6362
    %v6931 = vpack.c.b16 %v6371, %v6363
    %v6932 = vpack.c.b16 %v6372, %v6364
    %v6933 = vpack.c.b16 %v6373, %v6365
    %v6934 = vpack.c.b16 %v6374, %v6366
    %v6935 = vpack.c.b16 %v6375, %v6367
    %v6936 = vpack.c.b16 %v6376, %v6368
    %v6937 = vpack.c.b16 %v6385, %v6377
    %v6938 = vpack.c.b16 %v6386, %v6378
    %v6939 = vpack.c.b16 %v6387, %v6379
    %v6940 = vpack.c.b16 %v6388, %v6380
    %v6941 = vpack.c.b16 %v6389, %v6381
    %v6942 = vpack.c.b16 %v6390, %v6382
    %v6943 = vpack.c.b16 %v6391, %v6383
    %v6944 = vpack.c.b16 %v6392, %v6384
    %v6945 = vpack.c.b16 %v6401, %v6393
    %v6946 = vpack.c.b16 %v6402, %v6394
    %v6947 = vpack.c.b16 %v6403, %v6395
    %v6948 = vpack.c.b16 %v6404, %v6396
    %v6949 = vpack.c.b16 %v6405, %v6397
    %v6950 = vpack.c.b16 %v6406, %v6398
    %v6951 = vpack.c.b16 %v6407, %v6399
    %v6952 = vpack.c.b16 %v6408, %v6400
    %v6953 = vpack.c.b16 %v6417, %v6409
    %v6954 = vpack.c.b16 %v6418, %v6410
    %v6955 = vpack.c.b16 %v6419, %v6411
    %v6956 = vpack.c.b16 %v6420, %v6412
    %v6957 = vpack.c.b16 %v6421, %v6413
    %v6958 = vpack.c.b16 %v6422, %v6414
    %v6959 = vpack.c.b16 %v6423, %v6415
    %v6960 = vpack.c.b16 %v6424, %v6416
    %v6961 = vpack.c.b16 %v6433, %v6425
    %v6962 = vpack.c.b16 %v6434, %v6426
    %v6963 = vpack.c.b16 %v6435, %v6427
    %v6964 = vpack.c.b16 %v6436, %v6428
    %v6965 = vpack.c.b16 %v6437, %v6429
    %v6966 = vpack.c.b16 %v6438, %v6430
    %v6967 = vpack.c.b16 %v6439, %v6431
    %v6968 = vpack.c.b16 %v6440, %v6432
    %v6969 = vpack.c.b16 %v6449, %v6441
    %v6970 = vpack.c.b16 %v6450, %v6442
    %v6971 = vpack.c.b16 %v6451, %v6443
    %v6972 = vpack.c.b16 %v6452, %v6444
    %v6973 = vpack.c.b16 %v6453, %v6445
    %v6974 = vpack.c.b16 %v6454, %v6446
    %v6975 = vpack.c.b16 %v6455, %v6447
    %v6976 = vpack.c.b16 %v6456, %v6448
    %v6977 = vpack.c.b16 %v6465, %v6457
    %v6978 = vpack.c.b16 %v6466, %v6458
    %v6979 = vpack.c.b16 %v6467, %v6459
    %v6980 = vpack.c.b16 %v6468, %v6460
    %v6981 = vpack.c.b16 %v6469, %v6461
    %v6982 = vpack.c.b16 %v6470, %v6462
    %v6983 = vpack.c.b16 %v6471, %v6463
    %v6984 = vpack.c.b16 %v6472, %v6464
    %7497 = vmatprep.subr.bf16.mxu0 %v6474
    %7498 = vmatpush1.bf16.msra.mxu0 %v6473
    %7499 = vmatprep.subr.bf16.mxu0 %v6482
    %7500 = vmatpush1.bf16.msra.mxu0 %v6481
    %7501 = vmatprep.subr.bf16.mxu0 %v6490
    %7502 = vmatpush1.bf16.msra.mxu0 %v6489
    %7503 = vmatprep.subr.bf16.mxu0 %v6498
    %7504 = vmatpush1.bf16.msra.mxu0 %v6497
    %7505 = vmatprep.subr.bf16.mxu0 %v6506
    %7506 = vmatpush1.bf16.msra.mxu0 %v6505
    %7507 = vmatprep.subr.bf16.mxu0 %v6514
    %7508 = vmatpush1.bf16.msra.mxu0 %v6513
    %7509 = vmatprep.subr.bf16.mxu0 %v6522
    %7510 = vmatpush1.bf16.msra.mxu0 %v6521
    %7511 = vmatprep.subr.bf16.mxu0 %v6530
    %7512 = vmatpush1.bf16.msra.mxu0 %v6529
    %7513 = vmatprep.subr.bf16.mxu0 %v6538
    %7514 = vmatpush1.bf16.msra.mxu0 %v6537
    %7515 = vmatprep.subr.bf16.mxu0 %v6546
    %7516 = vmatpush1.bf16.msra.mxu0 %v6545
    %7517 = vmatprep.subr.bf16.mxu0 %v6554
    %7518 = vmatpush1.bf16.msra.mxu0 %v6553
    %7519 = vmatprep.subr.bf16.mxu0 %v6562
    %7520 = vmatpush1.bf16.msra.mxu0 %v6561
    %7521 = vmatprep.subr.bf16.mxu0 %v6570
    %7522 = vmatpush1.bf16.msra.mxu0 %v6569
    %7523 = vmatprep.subr.bf16.mxu0 %v6578
    %7524 = vmatpush1.bf16.msra.mxu0 %v6577
    %7525 = vmatprep.subr.bf16.mxu0 %v6586
    %7526 = vmatpush1.bf16.msra.mxu0 %v6585
    %7527 = vmatprep.subr.bf16.mxu0 %v6594
    %7528 = vmatpush1.bf16.msra.mxu0 %v6593
    %7529 = vmatprep.mubr.bf16.mxu0 %v4373
    %7530 = vmatmul.mubr.bf16.gmra.mrb[0].mxu0 %v4372
    %v7531 = vpop.f32.mrb[0].mxu0
    %v7532 = vadd.f32 %v4900, %v7531
    %v7533 = vpop.f32.mrb[0].mxu0
    %v7534 = vadd.f32 %v4904, %v7533
    %v7535 = vpop.f32.mrb[0].mxu0
    %v7536 = vadd.f32 %v4900, %v7535
    %v7537 = vpop.f32.mrb[0].mxu0
    %v7538 = vadd.f32 %v4904, %v7537
    %7539 = vdwg.mxu0
    %7540 = vmatprep.subr.bf16.mxu0 %v6602
    %7541 = vmatpush1.bf16.msra.mxu0 %v6601
    %7542 = vmatprep.subr.bf16.mxu0 %v6610
    %7543 = vmatpush1.bf16.msra.mxu0 %v6609
    %7544 = vmatprep.subr.bf16.mxu0 %v6618
    %7545 = vmatpush1.bf16.msra.mxu0 %v6617
    %7546 = vmatprep.subr.bf16.mxu0 %v6626
    %7547 = vmatpush1.bf16.msra.mxu0 %v6625
    %7548 = vmatprep.subr.bf16.mxu0 %v6634
    %7549 = vmatpush1.bf16.msra.mxu0 %v6633
    %7550 = vmatprep.subr.bf16.mxu0 %v6642
    %7551 = vmatpush1.bf16.msra.mxu0 %v6641
    %7552 = vmatprep.subr.bf16.mxu0 %v6650
    %7553 = vmatpush1.bf16.msra.mxu0 %v6649
    %7554 = vmatprep.subr.bf16.mxu0 %v6658
    %7555 = vmatpush1.bf16.msra.mxu0 %v6657
    %7556 = vmatprep.subr.bf16.mxu0 %v6666
    %7557 = vmatpush1.bf16.msra.mxu0 %v6665
    %7558 = vmatprep.subr.bf16.mxu0 %v6674
    %7559 = vmatpush1.bf16.msra.mxu0 %v6673
    %7560 = vmatprep.subr.bf16.mxu0 %v6682
    %7561 = vmatpush1.bf16.msra.mxu0 %v6681
    %7562 = vmatprep.subr.bf16.mxu0 %v6690
    %7563 = vmatpush1.bf16.msra.mxu0 %v6689
    %7564 = vmatprep.subr.bf16.mxu0 %v6698
    %7565 = vmatpush1.bf16.msra.mxu0 %v6697
    %7566 = vmatprep.subr.bf16.mxu0 %v6706
    %7567 = vmatpush1.bf16.msra.mxu0 %v6705
    %7568 = vmatprep.subr.bf16.mxu0 %v6714
    %7569 = vmatpush1.bf16.msra.mxu0 %v6713
    %7570 = vmatprep.subr.bf16.mxu0 %v6722
    %7571 = vmatpush1.bf16.msra.mxu0 %v6721
    %7572 = vmatprep.mubr.bf16.mxu0 %v4375
    %7573 = vmatmul.mubr.bf16.gmra.mrb[0].mxu0 %v4374
    %v7574 = vpop.f32.mrb[0].mxu0
    %v7575 = vadd.f32 %v7532, %v7574
    %v7576 = vpop.f32.mrb[0].mxu0
    %v7577 = vadd.f32 %v7534, %v7576
    %v7578 = vpop.f32.mrb[0].mxu0
    %v7579 = vadd.f32 %v7536, %v7578
    %v7580 = vpop.f32.mrb[0].mxu0
    %v7581 = vadd.f32 %v7538, %v7580
    %7582 = vdwg.mxu0
    %7583 = vmatprep.subr.bf16.mxu0 %v6730
    %7584 = vmatpush1.bf16.msra.mxu0 %v6729
    %7585 = vmatprep.subr.bf16.mxu0 %v6738
    %7586 = vmatpush1.bf16.msra.mxu0 %v6737
    %7587 = vmatprep.subr.bf16.mxu0 %v6746
    %7588 = vmatpush1.bf16.msra.mxu0 %v6745
    %7589 = vmatprep.subr.bf16.mxu0 %v6754
    %7590 = vmatpush1.bf16.msra.mxu0 %v6753
    %7591 = vmatprep.subr.bf16.mxu0 %v6762
    %7592 = vmatpush1.bf16.msra.mxu0 %v6761
    %7593 = vmatprep.subr.bf16.mxu0 %v6770
    %7594 = vmatpush1.bf16.msra.mxu0 %v6769
    %7595 = vmatprep.subr.bf16.mxu0 %v6778
    %7596 = vmatpush1.bf16.msra.mxu0 %v6777
    %7597 = vmatprep.subr.bf16.mxu0 %v6786
    %7598 = vmatpush1.bf16.msra.mxu0 %v6785
    %7599 = vmatprep.subr.bf16.mxu0 %v6794
    %7600 = vmatpush1.bf16.msra.mxu0 %v6793
    %7601 = vmatprep.subr.bf16.mxu0 %v6802
    %7602 = vmatpush1.bf16.msra.mxu0 %v6801
    %7603 = vmatprep.subr.bf16.mxu0 %v6810
    %7604 = vmatpush1.bf16.msra.mxu0 %v6809
    %7605 = vmatprep.subr.bf16.mxu0 %v6818
    %7606 = vmatpush1.bf16.msra.mxu0 %v6817
    %7607 = vmatprep.subr.bf16.mxu0 %v6826
    %7608 = vmatpush1.bf16.msra.mxu0 %v6825
    %7609 = vmatprep.subr.bf16.mxu0 %v6834
    %7610 = vmatpush1.bf16.msra.mxu0 %v6833
    %7611 = vmatprep.subr.bf16.mxu0 %v6842
    %7612 = vmatpush1.bf16.msra.mxu0 %v6841
    %7613 = vmatprep.subr.bf16.mxu0 %v6850
    %7614 = vmatpush1.bf16.msra.mxu0 %v6849
    %7615 = vmatprep.mubr.bf16.mxu0 %v4377
    %7616 = vmatmul.mubr.bf16.gmra.mrb[0].mxu0 %v4376
    %v7617 = vpop.f32.mrb[0].mxu0
    %v7618 = vadd.f32 %v7575, %v7617
    %v7619 = vpop.f32.mrb[0].mxu0
    %v7620 = vadd.f32 %v7577, %v7619
    %v7621 = vpop.f32.mrb[0].mxu0
    %v7622 = vadd.f32 %v7579, %v7621
    %v7623 = vpop.f32.mrb[0].mxu0
    %v7624 = vadd.f32 %v7581, %v7623
    %7625 = vdwg.mxu0
    %7626 = vmatprep.subr.bf16.mxu0 %v6858
    %7627 = vmatpush1.bf16.msra.mxu0 %v6857
    %7628 = vmatprep.subr.bf16.mxu0 %v6866
    %7629 = vmatpush1.bf16.msra.mxu0 %v6865
    %7630 = vmatprep.subr.bf16.mxu0 %v6874
    %7631 = vmatpush1.bf16.msra.mxu0 %v6873
    %7632 = vmatprep.subr.bf16.mxu0 %v6882
    %7633 = vmatpush1.bf16.msra.mxu0 %v6881
    %7634 = vmatprep.subr.bf16.mxu0 %v6890
    %7635 = vmatpush1.bf16.msra.mxu0 %v6889
    %7636 = vmatprep.subr.bf16.mxu0 %v6898
    %7637 = vmatpush1.bf16.msra.mxu0 %v6897
    %7638 = vmatprep.subr.bf16.mxu0 %v6906
    %7639 = vmatpush1.bf16.msra.mxu0 %v6905
    %7640 = vmatprep.subr.bf16.mxu0 %v6914
    %7641 = vmatpush1.bf16.msra.mxu0 %v6913
    %7642 = vmatprep.subr.bf16.mxu0 %v6922
    %7643 = vmatpush1.bf16.msra.mxu0 %v6921
    %7644 = vmatprep.subr.bf16.mxu0 %v6930
    %7645 = vmatpush1.bf16.msra.mxu0 %v6929
    %7646 = vmatprep.subr.bf16.mxu0 %v6938
    %7647 = vmatpush1.bf16.msra.mxu0 %v6937
    %7648 = vmatprep.subr.bf16.mxu0 %v6946
    %7649 = vmatpush1.bf16.msra.mxu0 %v6945
    %7650 = vmatprep.subr.bf16.mxu0 %v6954
    %7651 = vmatpush1.bf16.msra.mxu0 %v6953
    %7652 = vmatprep.subr.bf16.mxu0 %v6962
    %7653 = vmatpush1.bf16.msra.mxu0 %v6961
    %7654 = vmatprep.subr.bf16.mxu0 %v6970
    %7655 = vmatpush1.bf16.msra.mxu0 %v6969
    %7656 = vmatprep.subr.bf16.mxu0 %v6978
    %7657 = vmatpush1.bf16.msra.mxu0 %v6977
    %7658 = vmatprep.mubr.bf16.mxu0 %v4379
    %7659 = vmatmul.mubr.bf16.gmra.mrb[0].mxu0 %v4378
    %v7660 = vpop.f32.mrb[0].mxu0
    %v7661 = vadd.f32 %v7618, %v7660
    %v7662 = vpop.f32.mrb[0].mxu0
    %v7663 = vadd.f32 %v7620, %v7662
    %v7664 = vpop.f32.mrb[0].mxu0
    %v7665 = vadd.f32 %v7622, %v7664
    %v7666 = vpop.f32.mrb[0].mxu0
    %v7667 = vadd.f32 %v7624, %v7666
    %7668 = vdwg.mxu0
    %7669 = vmatprep.subr.bf16.mxu0 %v6476
    %7670 = vmatpush1.bf16.msra.mxu0 %v6475
    %7671 = vmatprep.subr.bf16.mxu0 %v6484
    %7672 = vmatpush1.bf16.msra.mxu0 %v6483
    %7673 = vmatprep.subr.bf16.mxu0 %v6492
    %7674 = vmatpush1.bf16.msra.mxu0 %v6491
    %7675 = vmatprep.subr.bf16.mxu0 %v6500
    %7676 = vmatpush1.bf16.msra.mxu0 %v6499
    %7677 = vmatprep.subr.bf16.mxu0 %v6508
    %7678 = vmatpush1.bf16.msra.mxu0 %v6507
    %7679 = vmatprep.subr.bf16.mxu0 %v6516
    %7680 = vmatpush1.bf16.msra.mxu0 %v6515
    %7681 = vmatprep.subr.bf16.mxu0 %v6524
    %7682 = vmatpush1.bf16.msra.mxu0 %v6523
    %7683 = vmatprep.subr.bf16.mxu0 %v6532
    %7684 = vmatpush1.bf16.msra.mxu0 %v6531
    %7685 = vmatprep.subr.bf16.mxu0 %v6540
    %7686 = vmatpush1.bf16.msra.mxu0 %v6539
    %7687 = vmatprep.subr.bf16.mxu0 %v6548
    %7688 = vmatpush1.bf16.msra.mxu0 %v6547
    %7689 = vmatprep.subr.bf16.mxu0 %v6556
    %7690 = vmatpush1.bf16.msra.mxu0 %v6555
    %7691 = vmatprep.subr.bf16.mxu0 %v6564
    %7692 = vmatpush1.bf16.msra.mxu0 %v6563
    %7693 = vmatprep.subr.bf16.mxu0 %v6572
    %7694 = vmatpush1.bf16.msra.mxu0 %v6571
    %7695 = vmatprep.subr.bf16.mxu0 %v6580
    %7696 = vmatpush1.bf16.msra.mxu0 %v6579
    %7697 = vmatprep.subr.bf16.mxu0 %v6588
    %7698 = vmatpush1.bf16.msra.mxu0 %v6587
    %7699 = vmatprep.subr.bf16.mxu0 %v6596
    %7700 = vmatpush1.bf16.msra.mxu0 %v6595
    %7701 = vmatprep.mubr.bf16.mxu0 %v4373
    %7702 = vmatmul.mubr.bf16.gmra.mrb[0].mxu0 %v4372
    %v7703 = vpop.f32.mrb[0].mxu0
    %v7704 = vadd.f32 %v4908, %v7703
    %v7705 = vpop.f32.mrb[0].mxu0
    %v7706 = vadd.f32 %v4912, %v7705
    %v7707 = vpop.f32.mrb[0].mxu0
    %v7708 = vadd.f32 %v4908, %v7707
    %v7709 = vpop.f32.mrb[0].mxu0
    %v7710 = vadd.f32 %v4912, %v7709
    %7711 = vdwg.mxu0
    %7712 = vmatprep.subr.bf16.mxu0 %v6604
    %7713 = vmatpush1.bf16.msra.mxu0 %v6603
    %7714 = vmatprep.subr.bf16.mxu0 %v6612
    %7715 = vmatpush1.bf16.msra.mxu0 %v6611
    %7716 = vmatprep.subr.bf16.mxu0 %v6620
    %7717 = vmatpush1.bf16.msra.mxu0 %v6619
    %7718 = vmatprep.subr.bf16.mxu0 %v6628
    %7719 = vmatpush1.bf16.msra.mxu0 %v6627
    %7720 = vmatprep.subr.bf16.mxu0 %v6636
    %7721 = vmatpush1.bf16.msra.mxu0 %v6635
    %7722 = vmatprep.subr.bf16.mxu0 %v6644
    %7723 = vmatpush1.bf16.msra.mxu0 %v6643
    %7724 = vmatprep.subr.bf16.mxu0 %v6652
    %7725 = vmatpush1.bf16.msra.mxu0 %v6651
    %7726 = vmatprep.subr.bf16.mxu0 %v6660
    %7727 = vmatpush1.bf16.msra.mxu0 %v6659
    %7728 = vmatprep.subr.bf16.mxu0 %v6668
    %7729 = vmatpush1.bf16.msra.mxu0 %v6667
    %7730 = vmatprep.subr.bf16.mxu0 %v6676
    %7731 = vmatpush1.bf16.msra.mxu0 %v6675
    %7732 = vmatprep.subr.bf16.mxu0 %v6684
    %7733 = vmatpush1.bf16.msra.mxu0 %v6683
    %7734 = vmatprep.subr.bf16.mxu0 %v6692
    %7735 = vmatpush1.bf16.msra.mxu0 %v6691
    %7736 = vmatprep.subr.bf16.mxu0 %v6700
    %7737 = vmatpush1.bf16.msra.mxu0 %v6699
    %7738 = vmatprep.subr.bf16.mxu0 %v6708
    %7739 = vmatpush1.bf16.msra.mxu0 %v6707
    %7740 = vmatprep.subr.bf16.mxu0 %v6716
    %7741 = vmatpush1.bf16.msra.mxu0 %v6715
    %7742 = vmatprep.subr.bf16.mxu0 %v6724
    %7743 = vmatpush1.bf16.msra.mxu0 %v6723
    %7744 = vmatprep.mubr.bf16.mxu0 %v4375
    %7745 = vmatmul.mubr.bf16.gmra.mrb[0].mxu0 %v4374
    %v7746 = vpop.f32.mrb[0].mxu0
    %v7747 = vadd.f32 %v7704, %v7746
    %v7748 = vpop.f32.mrb[0].mxu0
    %v7749 = vadd.f32 %v7706, %v7748
    %v7750 = vpop.f32.mrb[0].mxu0
    %v7751 = vadd.f32 %v7708, %v7750
    %v7752 = vpop.f32.mrb[0].mxu0
    %v7753 = vadd.f32 %v7710, %v7752
    %7754 = vdwg.mxu0
    %7755 = vmatprep.subr.bf16.mxu0 %v6732
    %7756 = vmatpush1.bf16.msra.mxu0 %v6731
    %7757 = vmatprep.subr.bf16.mxu0 %v6740
    %7758 = vmatpush1.bf16.msra.mxu0 %v6739
    %7759 = vmatprep.subr.bf16.mxu0 %v6748
    %7760 = vmatpush1.bf16.msra.mxu0 %v6747
    %7761 = vmatprep.subr.bf16.mxu0 %v6756
    %7762 = vmatpush1.bf16.msra.mxu0 %v6755
    %7763 = vmatprep.subr.bf16.mxu0 %v6764
    %7764 = vmatpush1.bf16.msra.mxu0 %v6763
    %7765 = vmatprep.subr.bf16.mxu0 %v6772
    %7766 = vmatpush1.bf16.msra.mxu0 %v6771
    %7767 = vmatprep.subr.bf16.mxu0 %v6780
    %7768 = vmatpush1.bf16.msra.mxu0 %v6779
    %7769 = vmatprep.subr.bf16.mxu0 %v6788
    %7770 = vmatpush1.bf16.msra.mxu0 %v6787
    %7771 = vmatprep.subr.bf16.mxu0 %v6796
    %7772 = vmatpush1.bf16.msra.mxu0 %v6795
    %7773 = vmatprep.subr.bf16.mxu0 %v6804
    %7774 = vmatpush1.bf16.msra.mxu0 %v6803
    %7775 = vmatprep.subr.bf16.mxu0 %v6812
    %7776 = vmatpush1.bf16.msra.mxu0 %v6811
    %7777 = vmatprep.subr.bf16.mxu0 %v6820
    %7778 = vmatpush1.bf16.msra.mxu0 %v6819
    %7779 = vmatprep.subr.bf16.mxu0 %v6828
    %7780 = vmatpush1.bf16.msra.mxu0 %v6827
    %7781 = vmatprep.subr.bf16.mxu0 %v6836
    %7782 = vmatpush1.bf16.msra.mxu0 %v6835
    %7783 = vmatprep.subr.bf16.mxu0 %v6844
    %7784 = vmatpush1.bf16.msra.mxu0 %v6843
    %7785 = vmatprep.subr.bf16.mxu0 %v6852
    %7786 = vmatpush1.bf16.msra.mxu0 %v6851
    %7787 = vmatprep.mubr.bf16.mxu0 %v4377
    %7788 = vmatmul.mubr.bf16.gmra.mrb[0].mxu0 %v4376
    %v7789 = vpop.f32.mrb[0].mxu0
    %v7790 = vadd.f32 %v7747, %v7789
    %v7791 = vpop.f32.mrb[0].mxu0
    %v7792 = vadd.f32 %v7749, %v7791
    %v7793 = vpop.f32.mrb[0].mxu0
    %v7794 = vadd.f32 %v7751, %v7793
    %v7795 = vpop.f32.mrb[0].mxu0
    %v7796 = vadd.f32 %v7753, %v7795
    %7797 = vdwg.mxu0
    %7798 = vmatprep.subr.bf16.mxu0 %v6860
    %7799 = vmatpush1.bf16.msra.mxu0 %v6859
    %7800 = vmatprep.subr.bf16.mxu0 %v6868
    %7801 = vmatpush1.bf16.msra.mxu0 %v6867
    %7802 = vmatprep.subr.bf16.mxu0 %v6876
    %7803 = vmatpush1.bf16.msra.mxu0 %v6875
    %7804 = vmatprep.subr.bf16.mxu0 %v6884
    %7805 = vmatpush1.bf16.msra.mxu0 %v6883
    %7806 = vmatprep.subr.bf16.mxu0 %v6892
    %7807 = vmatpush1.bf16.msra.mxu0 %v6891
    %7808 = vmatprep.subr.bf16.mxu0 %v6900
    %7809 = vmatpush1.bf16.msra.mxu0 %v6899
    %7810 = vmatprep.subr.bf16.mxu0 %v6908
    %7811 = vmatpush1.bf16.msra.mxu0 %v6907
    %7812 = vmatprep.subr.bf16.mxu0 %v6916
    %7813 = vmatpush1.bf16.msra.mxu0 %v6915
    %7814 = vmatprep.subr.bf16.mxu0 %v6924
    %7815 = vmatpush1.bf16.msra.mxu0 %v6923
    %7816 = vmatprep.subr.bf16.mxu0 %v6932
    %7817 = vmatpush1.bf16.msra.mxu0 %v6931
    %7818 = vmatprep.subr.bf16.mxu0 %v6940
    %7819 = vmatpush1.bf16.msra.mxu0 %v6939
    %7820 = vmatprep.subr.bf16.mxu0 %v6948
    %7821 = vmatpush1.bf16.msra.mxu0 %v6947
    %7822 = vmatprep.subr.bf16.mxu0 %v6956
    %7823 = vmatpush1.bf16.msra.mxu0 %v6955
    %7824 = vmatprep.subr.bf16.mxu0 %v6964
    %7825 = vmatpush1.bf16.msra.mxu0 %v6963
    %7826 = vmatprep.subr.bf16.mxu0 %v6972
    %7827 = vmatpush1.bf16.msra.mxu0 %v6971
    %7828 = vmatprep.subr.bf16.mxu0 %v6980
    %7829 = vmatpush1.bf16.msra.mxu0 %v6979
    %7830 = vmatprep.mubr.bf16.mxu0 %v4379
    %7831 = vmatmul.mubr.bf16.gmra.mrb[0].mxu0 %v4378
    %v7832 = vpop.f32.mrb[0].mxu0
    %v7833 = vadd.f32 %v7790, %v7832
    %v7834 = vpop.f32.mrb[0].mxu0
    %v7835 = vadd.f32 %v7792, %v7834
    %v7836 = vpop.f32.mrb[0].mxu0
    %v7837 = vadd.f32 %v7794, %v7836
    %v7838 = vpop.f32.mrb[0].mxu0
    %v7839 = vadd.f32 %v7796, %v7838
    %7840 = vdwg.mxu0
    %7841 = vmatprep.subr.bf16.mxu0 %v6478
    %7842 = vmatpush1.bf16.msra.mxu0 %v6477
    %7843 = vmatprep.subr.bf16.mxu0 %v6486
    %7844 = vmatpush1.bf16.msra.mxu0 %v6485
    %7845 = vmatprep.subr.bf16.mxu0 %v6494
    %7846 = vmatpush1.bf16.msra.mxu0 %v6493
    %7847 = vmatprep.subr.bf16.mxu0 %v6502
    %7848 = vmatpush1.bf16.msra.mxu0 %v6501
    %7849 = vmatprep.subr.bf16.mxu0 %v6510
    %7850 = vmatpush1.bf16.msra.mxu0 %v6509
    %7851 = vmatprep.subr.bf16.mxu0 %v6518
    %7852 = vmatpush1.bf16.msra.mxu0 %v6517
    %7853 = vmatprep.subr.bf16.mxu0 %v6526
    %7854 = vmatpush1.bf16.msra.mxu0 %v6525
    %7855 = vmatprep.subr.bf16.mxu0 %v6534
    %7856 = vmatpush1.bf16.msra.mxu0 %v6533
    %7857 = vmatprep.subr.bf16.mxu0 %v6542
    %7858 = vmatpush1.bf16.msra.mxu0 %v6541
    %7859 = vmatprep.subr.bf16.mxu0 %v6550
    %7860 = vmatpush1.bf16.msra.mxu0 %v6549
    %7861 = vmatprep.subr.bf16.mxu0 %v6558
    %7862 = vmatpush1.bf16.msra.mxu0 %v6557
    %7863 = vmatprep.subr.bf16.mxu0 %v6566
    %7864 = vmatpush1.bf16.msra.mxu0 %v6565
    %7865 = vmatprep.subr.bf16.mxu0 %v6574
    %7866 = vmatpush1.bf16.msra.mxu0 %v6573
    %7867 = vmatprep.subr.bf16.mxu0 %v6582
    %7868 = vmatpush1.bf16.msra.mxu0 %v6581
    %7869 = vmatprep.subr.bf16.mxu0 %v6590
    %7870 = vmatpush1.bf16.msra.mxu0 %v6589
    %7871 = vmatprep.subr.bf16.mxu0 %v6598
    %7872 = vmatpush1.bf16.msra.mxu0 %v6597
    %7873 = vmatprep.mubr.bf16.mxu0 %v4373
    %7874 = vmatmul.mubr.bf16.gmra.mrb[0].mxu0 %v4372
    %v7875 = vpop.f32.mrb[0].mxu0
    %v7876 = vadd.f32 %v4916, %v7875
    %v7877 = vpop.f32.mrb[0].mxu0
    %v7878 = vadd.f32 %v4920, %v7877
    %v7879 = vpop.f32.mrb[0].mxu0
    %v7880 = vadd.f32 %v4916, %v7879
    %v7881 = vpop.f32.mrb[0].mxu0
    %v7882 = vadd.f32 %v4920, %v7881
    %7883 = vdwg.mxu0
    %7884 = vmatprep.subr.bf16.mxu0 %v6606
    %7885 = vmatpush1.bf16.msra.mxu0 %v6605
    %7886 = vmatprep.subr.bf16.mxu0 %v6614
    %7887 = vmatpush1.bf16.msra.mxu0 %v6613
    %7888 = vmatprep.subr.bf16.mxu0 %v6622
    %7889 = vmatpush1.bf16.msra.mxu0 %v6621
    %7890 = vmatprep.subr.bf16.mxu0 %v6630
    %7891 = vmatpush1.bf16.msra.mxu0 %v6629
    %7892 = vmatprep.subr.bf16.mxu0 %v6638
    %7893 = vmatpush1.bf16.msra.mxu0 %v6637
    %7894 = vmatprep.subr.bf16.mxu0 %v6646
    %7895 = vmatpush1.bf16.msra.mxu0 %v6645
    %7896 = vmatprep.subr.bf16.mxu0 %v6654
    %7897 = vmatpush1.bf16.msra.mxu0 %v6653
    %7898 = vmatprep.subr.bf16.mxu0 %v6662
    %7899 = vmatpush1.bf16.msra.mxu0 %v6661
    %7900 = vmatprep.subr.bf16.mxu0 %v6670
    %7901 = vmatpush1.bf16.msra.mxu0 %v6669
    %7902 = vmatprep.subr.bf16.mxu0 %v6678
    %7903 = vmatpush1.bf16.msra.mxu0 %v6677
    %7904 = vmatprep.subr.bf16.mxu0 %v6686
    %7905 = vmatpush1.bf16.msra.mxu0 %v6685
    %7906 = vmatprep.subr.bf16.mxu0 %v6694
    %7907 = vmatpush1.bf16.msra.mxu0 %v6693
    %7908 = vmatprep.subr.bf16.mxu0 %v6702
    %7909 = vmatpush1.bf16.msra.mxu0 %v6701
    %7910 = vmatprep.subr.bf16.mxu0 %v6710
    %7911 = vmatpush1.bf16.msra.mxu0 %v6709
    %7912 = vmatprep.subr.bf16.mxu0 %v6718
    %7913 = vmatpush1.bf16.msra.mxu0 %v6717
    %7914 = vmatprep.subr.bf16.mxu0 %v6726
    %7915 = vmatpush1.bf16.msra.mxu0 %v6725
    %7916 = vmatprep.mubr.bf16.mxu0 %v4375
    %7917 = vmatmul.mubr.bf16.gmra.mrb[0].mxu0 %v4374
    %v7918 = vpop.f32.mrb[0].mxu0
    %v7919 = vadd.f32 %v7876, %v7918
    %v7920 = vpop.f32.mrb[0].mxu0
    %v7921 = vadd.f32 %v7878, %v7920
    %v7922 = vpop.f32.mrb[0].mxu0
    %v7923 = vadd.f32 %v7880, %v7922
    %v7924 = vpop.f32.mrb[0].mxu0
    %v7925 = vadd.f32 %v7882, %v7924
    %7926 = vdwg.mxu0
    %7927 = vmatprep.subr.bf16.mxu0 %v6734
    %7928 = vmatpush1.bf16.msra.mxu0 %v6733
    %7929 = vmatprep.subr.bf16.mxu0 %v6742
    %7930 = vmatpush1.bf16.msra.mxu0 %v6741
    %7931 = vmatprep.subr.bf16.mxu0 %v6750
    %7932 = vmatpush1.bf16.msra.mxu0 %v6749
    %7933 = vmatprep.subr.bf16.mxu0 %v6758
    %7934 = vmatpush1.bf16.msra.mxu0 %v6757
    %7935 = vmatprep.subr.bf16.mxu0 %v6766
    %7936 = vmatpush1.bf16.msra.mxu0 %v6765
    %7937 = vmatprep.subr.bf16.mxu0 %v6774
    %7938 = vmatpush1.bf16.msra.mxu0 %v6773
    %7939 = vmatprep.subr.bf16.mxu0 %v6782
    %7940 = vmatpush1.bf16.msra.mxu0 %v6781
    %7941 = vmatprep.subr.bf16.mxu0 %v6790
    %7942 = vmatpush1.bf16.msra.mxu0 %v6789
    %7943 = vmatprep.subr.bf16.mxu0 %v6798
    %7944 = vmatpush1.bf16.msra.mxu0 %v6797
    %7945 = vmatprep.subr.bf16.mxu0 %v6806
    %7946 = vmatpush1.bf16.msra.mxu0 %v6805
    %7947 = vmatprep.subr.bf16.mxu0 %v6814
    %7948 = vmatpush1.bf16.msra.mxu0 %v6813
    %7949 = vmatprep.subr.bf16.mxu0 %v6822
    %7950 = vmatpush1.bf16.msra.mxu0 %v6821
    %7951 = vmatprep.subr.bf16.mxu0 %v6830
    %7952 = vmatpush1.bf16.msra.mxu0 %v6829
    %7953 = vmatprep.subr.bf16.mxu0 %v6838
    %7954 = vmatpush1.bf16.msra.mxu0 %v6837
    %7955 = vmatprep.subr.bf16.mxu0 %v6846
    %7956 = vmatpush1.bf16.msra.mxu0 %v6845
    %7957 = vmatprep.subr.bf16.mxu0 %v6854
    %7958 = vmatpush1.bf16.msra.mxu0 %v6853
    %7959 = vmatprep.mubr.bf16.mxu0 %v4377
    %7960 = vmatmul.mubr.bf16.gmra.mrb[0].mxu0 %v4376
    %v7961 = vpop.f32.mrb[0].mxu0
    %v7962 = vadd.f32 %v7919, %v7961
    %v7963 = vpop.f32.mrb[0].mxu0
    %v7964 = vadd.f32 %v7921, %v7963
    %v7965 = vpop.f32.mrb[0].mxu0
    %v7966 = vadd.f32 %v7923, %v7965
    %v7967 = vpop.f32.mrb[0].mxu0
    %v7968 = vadd.f32 %v7925, %v7967
    %7969 = vdwg.mxu0
    %7970 = vmatprep.subr.bf16.mxu0 %v6862
    %7971 = vmatpush1.bf16.msra.mxu0 %v6861
    %7972 = vmatprep.subr.bf16.mxu0 %v6870
    %7973 = vmatpush1.bf16.msra.mxu0 %v6869
    %7974 = vmatprep.subr.bf16.mxu0 %v6878
    %7975 = vmatpush1.bf16.msra.mxu0 %v6877
    %7976 = vmatprep.subr.bf16.mxu0 %v6886
    %7977 = vmatpush1.bf16.msra.mxu0 %v6885
    %7978 = vmatprep.subr.bf16.mxu0 %v6894
    %7979 = vmatpush1.bf16.msra.mxu0 %v6893
    %7980 = vmatprep.subr.bf16.mxu0 %v6902
    %7981 = vmatpush1.bf16.msra.mxu0 %v6901
    %7982 = vmatprep.subr.bf16.mxu0 %v6910
    %7983 = vmatpush1.bf16.msra.mxu0 %v6909
    %7984 = vmatprep.subr.bf16.mxu0 %v6918
    %7985 = vmatpush1.bf16.msra.mxu0 %v6917
    %7986 = vmatprep.subr.bf16.mxu0 %v6926
    %7987 = vmatpush1.bf16.msra.mxu0 %v6925
    %7988 = vmatprep.subr.bf16.mxu0 %v6934
    %7989 = vmatpush1.bf16.msra.mxu0 %v6933
    %7990 = vmatprep.subr.bf16.mxu0 %v6942
    %7991 = vmatpush1.bf16.msra.mxu0 %v6941
    %7992 = vmatprep.subr.bf16.mxu0 %v6950
    %7993 = vmatpush1.bf16.msra.mxu0 %v6949
    %7994 = vmatprep.subr.bf16.mxu0 %v6958
    %7995 = vmatpush1.bf16.msra.mxu0 %v6957
    %7996 = vmatprep.subr.bf16.mxu0 %v6966
    %7997 = vmatpush1.bf16.msra.mxu0 %v6965
    %7998 = vmatprep.subr.bf16.mxu0 %v6974
    %7999 = vmatpush1.bf16.msra.mxu0 %v6973
    %8000 = vmatprep.subr.bf16.mxu0 %v6982
    %8001 = vmatpush1.bf16.msra.mxu0 %v6981
    %8002 = vmatprep.mubr.bf16.mxu0 %v4379
    %8003 = vmatmul.mubr.bf16.gmra.mrb[0].mxu0 %v4378
    %v8004 = vpop.f32.mrb[0].mxu0
    %v8005 = vadd.f32 %v7962, %v8004
    %v8006 = vpop.f32.mrb[0].mxu0
    %v8007 = vadd.f32 %v7964, %v8006
    %v8008 = vpop.f32.mrb[0].mxu0
    %v8009 = vadd.f32 %v7966, %v8008
    %v8010 = vpop.f32.mrb[0].mxu0
    %v8011 = vadd.f32 %v7968, %v8010
    %8012 = vdwg.mxu0
    %8013 = vmatprep.subr.bf16.mxu0 %v6480
    %8014 = vmatpush1.bf16.msra.mxu0 %v6479
    %8015 = vmatprep.subr.bf16.mxu0 %v6488
    %8016 = vmatpush1.bf16.msra.mxu0 %v6487
    %8017 = vmatprep.subr.bf16.mxu0 %v6496
    %8018 = vmatpush1.bf16.msra.mxu0 %v6495
    %8019 = vmatprep.subr.bf16.mxu0 %v6504
    %8020 = vmatpush1.bf16.msra.mxu0 %v6503
    %8021 = vmatprep.subr.bf16.mxu0 %v6512
    %8022 = vmatpush1.bf16.msra.mxu0 %v6511
    %8023 = vmatprep.subr.bf16.mxu0 %v6520
    %8024 = vmatpush1.bf16.msra.mxu0 %v6519
    %8025 = vmatprep.subr.bf16.mxu0 %v6528
    %8026 = vmatpush1.bf16.msra.mxu0 %v6527
    %8027 = vmatprep.subr.bf16.mxu0 %v6536
    %8028 = vmatpush1.bf16.msra.mxu0 %v6535
    %8029 = vmatprep.subr.bf16.mxu0 %v6544
    %8030 = vmatpush1.bf16.msra.mxu0 %v6543
    %8031 = vmatprep.subr.bf16.mxu0 %v6552
    %8032 = vmatpush1.bf16.msra.mxu0 %v6551
    %8033 = vmatprep.subr.bf16.mxu0 %v6560
    %8034 = vmatpush1.bf16.msra.mxu0 %v6559
    %8035 = vmatprep.subr.bf16.mxu0 %v6568
    %8036 = vmatpush1.bf16.msra.mxu0 %v6567
    %8037 = vmatprep.subr.bf16.mxu0 %v6576
    %8038 = vmatpush1.bf16.msra.mxu0 %v6575
    %8039 = vmatprep.subr.bf16.mxu0 %v6584
    %8040 = vmatpush1.bf16.msra.mxu0 %v6583
    %8041 = vmatprep.subr.bf16.mxu0 %v6592
    %8042 = vmatpush1.bf16.msra.mxu0 %v6591
    %8043 = vmatprep.subr.bf16.mxu0 %v6600
    %8044 = vmatpush1.bf16.msra.mxu0 %v6599
    %8045 = vmatprep.mubr.bf16.mxu0 %v4373
    %8046 = vmatmul.mubr.bf16.gmra.mrb[0].mxu0 %v4372
    %v8047 = vpop.f32.mrb[0].mxu0
    %v8048 = vadd.f32 %v4924, %v8047
    %v8049 = vpop.f32.mrb[0].mxu0
    %v8050 = vadd.f32 %v4928, %v8049
    %v8051 = vpop.f32.mrb[0].mxu0
    %v8052 = vadd.f32 %v4924, %v8051
    %v8053 = vpop.f32.mrb[0].mxu0
    %v8054 = vadd.f32 %v4928, %v8053
    %8055 = vdwg.mxu0
    %8056 = vmatprep.subr.bf16.mxu0 %v6608
    %8057 = vmatpush1.bf16.msra.mxu0 %v6607
    %8058 = vmatprep.subr.bf16.mxu0 %v6616
    %8059 = vmatpush1.bf16.msra.mxu0 %v6615
    %8060 = vmatprep.subr.bf16.mxu0 %v6624
    %8061 = vmatpush1.bf16.msra.mxu0 %v6623
    %8062 = vmatprep.subr.bf16.mxu0 %v6632
    %8063 = vmatpush1.bf16.msra.mxu0 %v6631
    %8064 = vmatprep.subr.bf16.mxu0 %v6640
    %8065 = vmatpush1.bf16.msra.mxu0 %v6639
    %8066 = vmatprep.subr.bf16.mxu0 %v6648
    %8067 = vmatpush1.bf16.msra.mxu0 %v6647
    %8068 = vmatprep.subr.bf16.mxu0 %v6656
    %8069 = vmatpush1.bf16.msra.mxu0 %v6655
    %8070 = vmatprep.subr.bf16.mxu0 %v6664
    %8071 = vmatpush1.bf16.msra.mxu0 %v6663
    %8072 = vmatprep.subr.bf16.mxu0 %v6672
    %8073 = vmatpush1.bf16.msra.mxu0 %v6671
    %8074 = vmatprep.subr.bf16.mxu0 %v6680
    %8075 = vmatpush1.bf16.msra.mxu0 %v6679
    %8076 = vmatprep.subr.bf16.mxu0 %v6688
    %8077 = vmatpush1.bf16.msra.mxu0 %v6687
    %8078 = vmatprep.subr.bf16.mxu0 %v6696
    %8079 = vmatpush1.bf16.msra.mxu0 %v6695
    %8080 = vmatprep.subr.bf16.mxu0 %v6704
    %8081 = vmatpush1.bf16.msra.mxu0 %v6703
    %8082 = vmatprep.subr.bf16.mxu0 %v6712
    %8083 = vmatpush1.bf16.msra.mxu0 %v6711
    %8084 = vmatprep.subr.bf16.mxu0 %v6720
    %8085 = vmatpush1.bf16.msra.mxu0 %v6719
    %8086 = vmatprep.subr.bf16.mxu0 %v6728
    %8087 = vmatpush1.bf16.msra.mxu0 %v6727
    %8088 = vmatprep.mubr.bf16.mxu0 %v4375
    %8089 = vmatmul.mubr.bf16.gmra.mrb[0].mxu0 %v4374
    %v8090 = vpop.f32.mrb[0].mxu0
    %v8091 = vadd.f32 %v8048, %v8090
    %v8092 = vpop.f32.mrb[0].mxu0
    %v8093 = vadd.f32 %v8050, %v8092
    %v8094 = vpop.f32.mrb[0].mxu0
    %v8095 = vadd.f32 %v8052, %v8094
    %v8096 = vpop.f32.mrb[0].mxu0
    %v8097 = vadd.f32 %v8054, %v8096
    %8098 = vdwg.mxu0
    %8099 = vmatprep.subr.bf16.mxu0 %v6736
    %8100 = vmatpush1.bf16.msra.mxu0 %v6735
    %8101 = vmatprep.subr.bf16.mxu0 %v6744
    %8102 = vmatpush1.bf16.msra.mxu0 %v6743
    %8103 = vmatprep.subr.bf16.mxu0 %v6752
    %8104 = vmatpush1.bf16.msra.mxu0 %v6751
    %8105 = vmatprep.subr.bf16.mxu0 %v6760
    %8106 = vmatpush1.bf16.msra.mxu0 %v6759
    %8107 = vmatprep.subr.bf16.mxu0 %v6768
    %8108 = vmatpush1.bf16.msra.mxu0 %v6767
    %8109 = vmatprep.subr.bf16.mxu0 %v6776
    %8110 = vmatpush1.bf16.msra.mxu0 %v6775
    %8111 = vmatprep.subr.bf16.mxu0 %v6784
    %8112 = vmatpush1.bf16.msra.mxu0 %v6783
    %8113 = vmatprep.subr.bf16.mxu0 %v6792
    %8114 = vmatpush1.bf16.msra.mxu0 %v6791
    %8115 = vmatprep.subr.bf16.mxu0 %v6800
    %8116 = vmatpush1.bf16.msra.mxu0 %v6799
    %8117 = vmatprep.subr.bf16.mxu0 %v6808
    %8118 = vmatpush1.bf16.msra.mxu0 %v6807
    %8119 = vmatprep.subr.bf16.mxu0 %v6816
    %8120 = vmatpush1.bf16.msra.mxu0 %v6815
    %8121 = vmatprep.subr.bf16.mxu0 %v6824
    %8122 = vmatpush1.bf16.msra.mxu0 %v6823
    %8123 = vmatprep.subr.bf16.mxu0 %v6832
    %8124 = vmatpush1.bf16.msra.mxu0 %v6831
    %8125 = vmatprep.subr.bf16.mxu0 %v6840
    %8126 = vmatpush1.bf16.msra.mxu0 %v6839
    %8127 = vmatprep.subr.bf16.mxu0 %v6848
    %8128 = vmatpush1.bf16.msra.mxu0 %v6847
    %8129 = vmatprep.subr.bf16.mxu0 %v6856
    %8130 = vmatpush1.bf16.msra.mxu0 %v6855
    %8131 = vmatprep.mubr.bf16.mxu0 %v4377
    %8132 = vmatmul.mubr.bf16.gmra.mrb[0].mxu0 %v4376
    %v8133 = vpop.f32.mrb[0].mxu0
    %v8134 = vadd.f32 %v8091, %v8133
    %v8135 = vpop.f32.mrb[0].mxu0
    %v8136 = vadd.f32 %v8093, %v8135
    %v8137 = vpop.f32.mrb[0].mxu0
    %v8138 = vadd.f32 %v8095, %v8137
    %v8139 = vpop.f32.mrb[0].mxu0
    %v8140 = vadd.f32 %v8097, %v8139
    %8141 = vdwg.mxu0
    %8142 = vmatprep.subr.bf16.mxu0 %v6864
    %8143 = vmatpush1.bf16.msra.mxu0 %v6863
    %8144 = vmatprep.subr.bf16.mxu0 %v6872
    %8145 = vmatpush1.bf16.msra.mxu0 %v6871
    %8146 = vmatprep.subr.bf16.mxu0 %v6880
    %8147 = vmatpush1.bf16.msra.mxu0 %v6879
    %8148 = vmatprep.subr.bf16.mxu0 %v6888
    %8149 = vmatpush1.bf16.msra.mxu0 %v6887
    %8150 = vmatprep.subr.bf16.mxu0 %v6896
    %8151 = vmatpush1.bf16.msra.mxu0 %v6895
    %8152 = vmatprep.subr.bf16.mxu0 %v6904
    %8153 = vmatpush1.bf16.msra.mxu0 %v6903
    %8154 = vmatprep.subr.bf16.mxu0 %v6912
    %8155 = vmatpush1.bf16.msra.mxu0 %v6911
    %8156 = vmatprep.subr.bf16.mxu0 %v6920
    %8157 = vmatpush1.bf16.msra.mxu0 %v6919
    %8158 = vmatprep.subr.bf16.mxu0 %v6928
    %8159 = vmatpush1.bf16.msra.mxu0 %v6927
    %8160 = vmatprep.subr.bf16.mxu0 %v6936
    %8161 = vmatpush1.bf16.msra.mxu0 %v6935
    %8162 = vmatprep.subr.bf16.mxu0 %v6944
    %8163 = vmatpush1.bf16.msra.mxu0 %v6943
    %8164 = vmatprep.subr.bf16.mxu0 %v6952
    %8165 = vmatpush1.bf16.msra.mxu0 %v6951
    %8166 = vmatprep.subr.bf16.mxu0 %v6960
    %8167 = vmatpush1.bf16.msra.mxu0 %v6959
    %8168 = vmatprep.subr.bf16.mxu0 %v6968
    %8169 = vmatpush1.bf16.msra.mxu0 %v6967
    %8170 = vmatprep.subr.bf16.mxu0 %v6976
    %8171 = vmatpush1.bf16.msra.mxu0 %v6975
    %8172 = vmatprep.subr.bf16.mxu0 %v6984
    %8173 = vmatpush1.bf16.msra.mxu0 %v6983
    %8174 = vmatprep.mubr.bf16.mxu0 %v4379
    %8175 = vmatmul.mubr.bf16.gmra.mrb[0].mxu0 %v4378
    %v8176 = vpop.f32.mrb[0].mxu0
    %v8177 = vadd.f32 %v8134, %v8176
    %v8178 = vpop.f32.mrb[0].mxu0
    %v8179 = vadd.f32 %v8136, %v8178
    %v8180 = vpop.f32.mrb[0].mxu0
    %v8181 = vadd.f32 %v8138, %v8180
    %v8182 = vpop.f32.mrb[0].mxu0
    %v8183 = vadd.f32 %v8140, %v8182
    %8184 = vdwg.mxu0
    %v8185 = vmax.f32 %v7661, 0.0
    %v8186 = vmax.f32 %v7663, 0.0
    %v8187 = vmax.f32 %v7833, 0.0
    %v8188 = vmax.f32 %v7835, 0.0
    %v8189 = vmax.f32 %v8005, 0.0
    %v8190 = vmax.f32 %v8007, 0.0
    %v8191 = vmax.f32 %v8177, 0.0
    %v8192 = vmax.f32 %v8179, 0.0
    %v8193 = vmax.f32 %v7665, 0.0
    %v8194 = vmax.f32 %v7667, 0.0
    %v8195 = vmax.f32 %v7837, 0.0
    %v8196 = vmax.f32 %v7839, 0.0
    %v8197 = vmax.f32 %v8009, 0.0
    %v8198 = vmax.f32 %v8011, 0.0
    %v8199 = vmax.f32 %v8181, 0.0
    %v8200 = vmax.f32 %v8183, 0.0
    %v8201 = vpack.c.bf16 %v8193, %v8185
    %v8202 = vpack.c.bf16 %v8194, %v8186
    %v8203 = vpack.c.bf16 %v8195, %v8187
    %v8204 = vpack.c.bf16 %v8196, %v8188
    %v8205 = vpack.c.bf16 %v8197, %v8189
    %v8206 = vpack.c.bf16 %v8198, %v8190
    %v8207 = vpack.c.bf16 %v8199, %v8191
    %v8208 = vpack.c.bf16 %v8200, %v8192
    %v8209 = vld [vmem:[#allocation8] sm:$0xff]
    %v8210 = vld [vmem:[#allocation8 + $0x8] sm:$0xff]
    %v8211 = vld [vmem:[#allocation8 + $0x10] sm:$0xff]
    %v8212 = vld [vmem:[#allocation8 + $0x18] sm:$0xff]
    %v8213 = vld [vmem:[#allocation8 + $0x20] sm:$0xff]
    %v8214 = vld [vmem:[#allocation8 + $0x28] sm:$0xff]
    %v8215 = vld [vmem:[#allocation8 + $0x30] sm:$0xff]
    %v8216 = vld [vmem:[#allocation8 + $0x38] sm:$0xff]
    %v8217 = vld [vmem:[#allocation8 + $0x40] sm:$0xff]
    %v8218 = vld [vmem:[#allocation8 + $0x48] sm:$0xff]
    %v8219 = vld [vmem:[#allocation8 + $0x50] sm:$0xff]
    %v8220 = vld [vmem:[#allocation8 + $0x58] sm:$0xff]
    %v8221 = vld [vmem:[#allocation8 + $0x60] sm:$0xff]
    %v8222 = vld [vmem:[#allocation8 + $0x68] sm:$0xff]
    %v8223 = vld [vmem:[#allocation8 + $0x70] sm:$0xff]
    %v8224 = vld [vmem:[#allocation8 + $0x78] sm:$0xff]
    %v8225 = vld [vmem:[#allocation8 + $0x80] sm:$0xff]
    %v8226 = vld [vmem:[#allocation8 + $0x88] sm:$0xff]
    %v8227 = vld [vmem:[#allocation8 + $0x90] sm:$0xff]
    %v8228 = vld [vmem:[#allocation8 + $0x98] sm:$0xff]
    %v8229 = vld [vmem:[#allocation8 + $0xa0] sm:$0xff]
    %v8230 = vld [vmem:[#allocation8 + $0xa8] sm:$0xff]
    %v8231 = vld [vmem:[#allocation8 + $0xb0] sm:$0xff]
    %v8232 = vld [vmem:[#allocation8 + $0xb8] sm:$0xff]
    %v8233 = vld [vmem:[#allocation8 + $0xc0] sm:$0xff]
    %v8234 = vld [vmem:[#allocation8 + $0xc8] sm:$0xff]
    %v8235 = vld [vmem:[#allocation8 + $0xd0] sm:$0xff]
    %v8236 = vld [vmem:[#allocation8 + $0xd8] sm:$0xff]
    %v8237 = vld [vmem:[#allocation8 + $0xe0] sm:$0xff]
    %v8238 = vld [vmem:[#allocation8 + $0xe8] sm:$0xff]
    %v8239 = vld [vmem:[#allocation8 + $0xf0] sm:$0xff]
    %v8240 = vld [vmem:[#allocation8 + $0xf8] sm:$0xff]
    %v8241 = vld [vmem:[#allocation8 + $0x100] sm:$0xff]
    %v8242 = vld [vmem:[#allocation8 + $0x108] sm:$0xff]
    %v8243 = vld [vmem:[#allocation8 + $0x110] sm:$0xff]
    %v8244 = vld [vmem:[#allocation8 + $0x118] sm:$0xff]
    %v8245 = vld [vmem:[#allocation8 + $0x120] sm:$0xff]
    %v8246 = vld [vmem:[#allocation8 + $0x128] sm:$0xff]
    %v8247 = vld [vmem:[#allocation8 + $0x130] sm:$0xff]
    %v8248 = vld [vmem:[#allocation8 + $0x138] sm:$0xff]
    %v8249 = vld [vmem:[#allocation8 + $0x140] sm:$0xff]
    %v8250 = vld [vmem:[#allocation8 + $0x148] sm:$0xff]
    %v8251 = vld [vmem:[#allocation8 + $0x150] sm:$0xff]
    %v8252 = vld [vmem:[#allocation8 + $0x158] sm:$0xff]
    %v8253 = vld [vmem:[#allocation8 + $0x160] sm:$0xff]
    %v8254 = vld [vmem:[#allocation8 + $0x168] sm:$0xff]
    %v8255 = vld [vmem:[#allocation8 + $0x170] sm:$0xff]
    %v8256 = vld [vmem:[#allocation8 + $0x178] sm:$0xff]
    %v8257 = vld [vmem:[#allocation8 + $0x180] sm:$0xff]
    %v8258 = vld [vmem:[#allocation8 + $0x188] sm:$0xff]
    %v8259 = vld [vmem:[#allocation8 + $0x190] sm:$0xff]
    %v8260 = vld [vmem:[#allocation8 + $0x198] sm:$0xff]
    %v8261 = vld [vmem:[#allocation8 + $0x1a0] sm:$0xff]
    %v8262 = vld [vmem:[#allocation8 + $0x1a8] sm:$0xff]
    %v8263 = vld [vmem:[#allocation8 + $0x1b0] sm:$0xff]
    %v8264 = vld [vmem:[#allocation8 + $0x1b8] sm:$0xff]
    %v8265 = vld [vmem:[#allocation8 + $0x1c0] sm:$0xff]
    %v8266 = vld [vmem:[#allocation8 + $0x1c8] sm:$0xff]
    %v8267 = vld [vmem:[#allocation8 + $0x1d0] sm:$0xff]
    %v8268 = vld [vmem:[#allocation8 + $0x1d8] sm:$0xff]
    %v8269 = vld [vmem:[#allocation8 + $0x1e0] sm:$0xff]
    %v8270 = vld [vmem:[#allocation8 + $0x1e8] sm:$0xff]
    %v8271 = vld [vmem:[#allocation8 + $0x1f0] sm:$0xff]
    %v8272 = vld [vmem:[#allocation8 + $0x1f8] sm:$0xff]
    %v8273 = vld [vmem:[#allocation8 + $0x200] sm:$0xff]
    %v8274 = vld [vmem:[#allocation8 + $0x208] sm:$0xff]
    %v8275 = vld [vmem:[#allocation8 + $0x210] sm:$0xff]
    %v8276 = vld [vmem:[#allocation8 + $0x218] sm:$0xff]
    %v8277 = vld [vmem:[#allocation8 + $0x220] sm:$0xff]
    %v8278 = vld [vmem:[#allocation8 + $0x228] sm:$0xff]
    %v8279 = vld [vmem:[#allocation8 + $0x230] sm:$0xff]
    %v8280 = vld [vmem:[#allocation8 + $0x238] sm:$0xff]
    %v8281 = vld [vmem:[#allocation8 + $0x240] sm:$0xff]
    %v8282 = vld [vmem:[#allocation8 + $0x248] sm:$0xff]
    %v8283 = vld [vmem:[#allocation8 + $0x250] sm:$0xff]
    %v8284 = vld [vmem:[#allocation8 + $0x258] sm:$0xff]
    %v8285 = vld [vmem:[#allocation8 + $0x260] sm:$0xff]
    %v8286 = vld [vmem:[#allocation8 + $0x268] sm:$0xff]
    %v8287 = vld [vmem:[#allocation8 + $0x270] sm:$0xff]
    %v8288 = vld [vmem:[#allocation8 + $0x278] sm:$0xff]
    %v8289 = vld [vmem:[#allocation8 + $0x280] sm:$0xff]
    %v8290 = vld [vmem:[#allocation8 + $0x288] sm:$0xff]
    %v8291 = vld [vmem:[#allocation8 + $0x290] sm:$0xff]
    %v8292 = vld [vmem:[#allocation8 + $0x298] sm:$0xff]
    %v8293 = vld [vmem:[#allocation8 + $0x2a0] sm:$0xff]
    %v8294 = vld [vmem:[#allocation8 + $0x2a8] sm:$0xff]
    %v8295 = vld [vmem:[#allocation8 + $0x2b0] sm:$0xff]
    %v8296 = vld [vmem:[#allocation8 + $0x2b8] sm:$0xff]
    %v8297 = vld [vmem:[#allocation8 + $0x2c0] sm:$0xff]
    %v8298 = vld [vmem:[#allocation8 + $0x2c8] sm:$0xff]
    %v8299 = vld [vmem:[#allocation8 + $0x2d0] sm:$0xff]
    %v8300 = vld [vmem:[#allocation8 + $0x2d8] sm:$0xff]
    %v8301 = vld [vmem:[#allocation8 + $0x2e0] sm:$0xff]
    %v8302 = vld [vmem:[#allocation8 + $0x2e8] sm:$0xff]
    %v8303 = vld [vmem:[#allocation8 + $0x2f0] sm:$0xff]
    %v8304 = vld [vmem:[#allocation8 + $0x2f8] sm:$0xff]
    %v8305 = vld [vmem:[#allocation8 + $0x300] sm:$0xff]
    %v8306 = vld [vmem:[#allocation8 + $0x308] sm:$0xff]
    %v8307 = vld [vmem:[#allocation8 + $0x310] sm:$0xff]
    %v8308 = vld [vmem:[#allocation8 + $0x318] sm:$0xff]
    %v8309 = vld [vmem:[#allocation8 + $0x320] sm:$0xff]
    %v8310 = vld [vmem:[#allocation8 + $0x328] sm:$0xff]
    %v8311 = vld [vmem:[#allocation8 + $0x330] sm:$0xff]
    %v8312 = vld [vmem:[#allocation8 + $0x338] sm:$0xff]
    %v8313 = vld [vmem:[#allocation8 + $0x340] sm:$0xff]
    %v8314 = vld [vmem:[#allocation8 + $0x348] sm:$0xff]
    %v8315 = vld [vmem:[#allocation8 + $0x350] sm:$0xff]
    %v8316 = vld [vmem:[#allocation8 + $0x358] sm:$0xff]
    %v8317 = vld [vmem:[#allocation8 + $0x360] sm:$0xff]
    %v8318 = vld [vmem:[#allocation8 + $0x368] sm:$0xff]
    %v8319 = vld [vmem:[#allocation8 + $0x370] sm:$0xff]
    %v8320 = vld [vmem:[#allocation8 + $0x378] sm:$0xff]
    %v8321 = vld [vmem:[#allocation8 + $0x380] sm:$0xff]
    %v8322 = vld [vmem:[#allocation8 + $0x388] sm:$0xff]
    %v8323 = vld [vmem:[#allocation8 + $0x390] sm:$0xff]
    %v8324 = vld [vmem:[#allocation8 + $0x398] sm:$0xff]
    %v8325 = vld [vmem:[#allocation8 + $0x3a0] sm:$0xff]
    %v8326 = vld [vmem:[#allocation8 + $0x3a8] sm:$0xff]
    %v8327 = vld [vmem:[#allocation8 + $0x3b0] sm:$0xff]
    %v8328 = vld [vmem:[#allocation8 + $0x3b8] sm:$0xff]
    %v8329 = vld [vmem:[#allocation8 + $0x3c0] sm:$0xff]
    %v8330 = vld [vmem:[#allocation8 + $0x3c8] sm:$0xff]
    %v8331 = vld [vmem:[#allocation8 + $0x3d0] sm:$0xff]
    %v8332 = vld [vmem:[#allocation8 + $0x3d8] sm:$0xff]
    %v8333 = vld [vmem:[#allocation8 + $0x3e0] sm:$0xff]
    %v8334 = vld [vmem:[#allocation8 + $0x3e8] sm:$0xff]
    %v8335 = vld [vmem:[#allocation8 + $0x3f0] sm:$0xff]
    %v8336 = vld [vmem:[#allocation8 + $0x3f8] sm:$0xff]
    %v8337 = vld [vmem:[#allocation8 + $0x400] sm:$0xff]
    %v8338 = vld [vmem:[#allocation8 + $0x408] sm:$0xff]
    %v8339 = vld [vmem:[#allocation8 + $0x410] sm:$0xff]
    %v8340 = vld [vmem:[#allocation8 + $0x418] sm:$0xff]
    %v8341 = vld [vmem:[#allocation8 + $0x420] sm:$0xff]
    %v8342 = vld [vmem:[#allocation8 + $0x428] sm:$0xff]
    %v8343 = vld [vmem:[#allocation8 + $0x430] sm:$0xff]
    %v8344 = vld [vmem:[#allocation8 + $0x438] sm:$0xff]
    %v8345 = vld [vmem:[#allocation8 + $0x440] sm:$0xff]
    %v8346 = vld [vmem:[#allocation8 + $0x448] sm:$0xff]
    %v8347 = vld [vmem:[#allocation8 + $0x450] sm:$0xff]
    %v8348 = vld [vmem:[#allocation8 + $0x458] sm:$0xff]
    %v8349 = vld [vmem:[#allocation8 + $0x460] sm:$0xff]
    %v8350 = vld [vmem:[#allocation8 + $0x468] sm:$0xff]
    %v8351 = vld [vmem:[#allocation8 + $0x470] sm:$0xff]
    %v8352 = vld [vmem:[#allocation8 + $0x478] sm:$0xff]
    %v8353 = vld [vmem:[#allocation8 + $0x480] sm:$0xff]
    %v8354 = vld [vmem:[#allocation8 + $0x488] sm:$0xff]
    %v8355 = vld [vmem:[#allocation8 + $0x490] sm:$0xff]
    %v8356 = vld [vmem:[#allocation8 + $0x498] sm:$0xff]
    %v8357 = vld [vmem:[#allocation8 + $0x4a0] sm:$0xff]
    %v8358 = vld [vmem:[#allocation8 + $0x4a8] sm:$0xff]
    %v8359 = vld [vmem:[#allocation8 + $0x4b0] sm:$0xff]
    %v8360 = vld [vmem:[#allocation8 + $0x4b8] sm:$0xff]
    %v8361 = vld [vmem:[#allocation8 + $0x4c0] sm:$0xff]
    %v8362 = vld [vmem:[#allocation8 + $0x4c8] sm:$0xff]
    %v8363 = vld [vmem:[#allocation8 + $0x4d0] sm:$0xff]
    %v8364 = vld [vmem:[#allocation8 + $0x4d8] sm:$0xff]
    %v8365 = vld [vmem:[#allocation8 + $0x4e0] sm:$0xff]
    %v8366 = vld [vmem:[#allocation8 + $0x4e8] sm:$0xff]
    %v8367 = vld [vmem:[#allocation8 + $0x4f0] sm:$0xff]
    %v8368 = vld [vmem:[#allocation8 + $0x4f8] sm:$0xff]
    %v8369 = vld [vmem:[#allocation8 + $0x500] sm:$0xff]
    %v8370 = vld [vmem:[#allocation8 + $0x508] sm:$0xff]
    %v8371 = vld [vmem:[#allocation8 + $0x510] sm:$0xff]
    %v8372 = vld [vmem:[#allocation8 + $0x518] sm:$0xff]
    %v8373 = vld [vmem:[#allocation8 + $0x520] sm:$0xff]
    %v8374 = vld [vmem:[#allocation8 + $0x528] sm:$0xff]
    %v8375 = vld [vmem:[#allocation8 + $0x530] sm:$0xff]
    %v8376 = vld [vmem:[#allocation8 + $0x538] sm:$0xff]
    %v8377 = vld [vmem:[#allocation8 + $0x540] sm:$0xff]
    %v8378 = vld [vmem:[#allocation8 + $0x548] sm:$0xff]
    %v8379 = vld [vmem:[#allocation8 + $0x550] sm:$0xff]
    %v8380 = vld [vmem:[#allocation8 + $0x558] sm:$0xff]
    %v8381 = vld [vmem:[#allocation8 + $0x560] sm:$0xff]
    %v8382 = vld [vmem:[#allocation8 + $0x568] sm:$0xff]
    %v8383 = vld [vmem:[#allocation8 + $0x570] sm:$0xff]
    %v8384 = vld [vmem:[#allocation8 + $0x578] sm:$0xff]
    %v8385 = vld [vmem:[#allocation8 + $0x580] sm:$0xff]
    %v8386 = vld [vmem:[#allocation8 + $0x588] sm:$0xff]
    %v8387 = vld [vmem:[#allocation8 + $0x590] sm:$0xff]
    %v8388 = vld [vmem:[#allocation8 + $0x598] sm:$0xff]
    %v8389 = vld [vmem:[#allocation8 + $0x5a0] sm:$0xff]
    %v8390 = vld [vmem:[#allocation8 + $0x5a8] sm:$0xff]
    %v8391 = vld [vmem:[#allocation8 + $0x5b0] sm:$0xff]
    %v8392 = vld [vmem:[#allocation8 + $0x5b8] sm:$0xff]
    %v8393 = vld [vmem:[#allocation8 + $0x5c0] sm:$0xff]
    %v8394 = vld [vmem:[#allocation8 + $0x5c8] sm:$0xff]
    %v8395 = vld [vmem:[#allocation8 + $0x5d0] sm:$0xff]
    %v8396 = vld [vmem:[#allocation8 + $0x5d8] sm:$0xff]
    %v8397 = vld [vmem:[#allocation8 + $0x5e0] sm:$0xff]
    %v8398 = vld [vmem:[#allocation8 + $0x5e8] sm:$0xff]
    %v8399 = vld [vmem:[#allocation8 + $0x5f0] sm:$0xff]
    %v8400 = vld [vmem:[#allocation8 + $0x5f8] sm:$0xff]
    %v8401 = vld [vmem:[#allocation8 + $0x600] sm:$0xff]
    %v8402 = vld [vmem:[#allocation8 + $0x608] sm:$0xff]
    %v8403 = vld [vmem:[#allocation8 + $0x610] sm:$0xff]
    %v8404 = vld [vmem:[#allocation8 + $0x618] sm:$0xff]
    %v8405 = vld [vmem:[#allocation8 + $0x620] sm:$0xff]
    %v8406 = vld [vmem:[#allocation8 + $0x628] sm:$0xff]
    %v8407 = vld [vmem:[#allocation8 + $0x630] sm:$0xff]
    %v8408 = vld [vmem:[#allocation8 + $0x638] sm:$0xff]
    %v8409 = vld [vmem:[#allocation8 + $0x640] sm:$0xff]
    %v8410 = vld [vmem:[#allocation8 + $0x648] sm:$0xff]
    %v8411 = vld [vmem:[#allocation8 + $0x650] sm:$0xff]
    %v8412 = vld [vmem:[#allocation8 + $0x658] sm:$0xff]
    %v8413 = vld [vmem:[#allocation8 + $0x660] sm:$0xff]
    %v8414 = vld [vmem:[#allocation8 + $0x668] sm:$0xff]
    %v8415 = vld [vmem:[#allocation8 + $0x670] sm:$0xff]
    %v8416 = vld [vmem:[#allocation8 + $0x678] sm:$0xff]
    %v8417 = vld [vmem:[#allocation8 + $0x680] sm:$0xff]
    %v8418 = vld [vmem:[#allocation8 + $0x688] sm:$0xff]
    %v8419 = vld [vmem:[#allocation8 + $0x690] sm:$0xff]
    %v8420 = vld [vmem:[#allocation8 + $0x698] sm:$0xff]
    %v8421 = vld [vmem:[#allocation8 + $0x6a0] sm:$0xff]
    %v8422 = vld [vmem:[#allocation8 + $0x6a8] sm:$0xff]
    %v8423 = vld [vmem:[#allocation8 + $0x6b0] sm:$0xff]
    %v8424 = vld [vmem:[#allocation8 + $0x6b8] sm:$0xff]
    %v8425 = vld [vmem:[#allocation8 + $0x6c0] sm:$0xff]
    %v8426 = vld [vmem:[#allocation8 + $0x6c8] sm:$0xff]
    %v8427 = vld [vmem:[#allocation8 + $0x6d0] sm:$0xff]
    %v8428 = vld [vmem:[#allocation8 + $0x6d8] sm:$0xff]
    %v8429 = vld [vmem:[#allocation8 + $0x6e0] sm:$0xff]
    %v8430 = vld [vmem:[#allocation8 + $0x6e8] sm:$0xff]
    %v8431 = vld [vmem:[#allocation8 + $0x6f0] sm:$0xff]
    %v8432 = vld [vmem:[#allocation8 + $0x6f8] sm:$0xff]
    %v8433 = vld [vmem:[#allocation8 + $0x700] sm:$0xff]
    %v8434 = vld [vmem:[#allocation8 + $0x708] sm:$0xff]
    %v8435 = vld [vmem:[#allocation8 + $0x710] sm:$0xff]
    %v8436 = vld [vmem:[#allocation8 + $0x718] sm:$0xff]
    %v8437 = vld [vmem:[#allocation8 + $0x720] sm:$0xff]
    %v8438 = vld [vmem:[#allocation8 + $0x728] sm:$0xff]
    %v8439 = vld [vmem:[#allocation8 + $0x730] sm:$0xff]
    %v8440 = vld [vmem:[#allocation8 + $0x738] sm:$0xff]
    %v8441 = vld [vmem:[#allocation8 + $0x740] sm:$0xff]
    %v8442 = vld [vmem:[#allocation8 + $0x748] sm:$0xff]
    %v8443 = vld [vmem:[#allocation8 + $0x750] sm:$0xff]
    %v8444 = vld [vmem:[#allocation8 + $0x758] sm:$0xff]
    %v8445 = vld [vmem:[#allocation8 + $0x760] sm:$0xff]
    %v8446 = vld [vmem:[#allocation8 + $0x768] sm:$0xff]
    %v8447 = vld [vmem:[#allocation8 + $0x770] sm:$0xff]
    %v8448 = vld [vmem:[#allocation8 + $0x778] sm:$0xff]
    %v8449 = vld [vmem:[#allocation8 + $0x780] sm:$0xff]
    %v8450 = vld [vmem:[#allocation8 + $0x788] sm:$0xff]
    %v8451 = vld [vmem:[#allocation8 + $0x790] sm:$0xff]
    %v8452 = vld [vmem:[#allocation8 + $0x798] sm:$0xff]
    %v8453 = vld [vmem:[#allocation8 + $0x7a0] sm:$0xff]
    %v8454 = vld [vmem:[#allocation8 + $0x7a8] sm:$0xff]
    %v8455 = vld [vmem:[#allocation8 + $0x7b0] sm:$0xff]
    %v8456 = vld [vmem:[#allocation8 + $0x7b8] sm:$0xff]
    %v8457 = vld [vmem:[#allocation8 + $0x7c0] sm:$0xff]
    %v8458 = vld [vmem:[#allocation8 + $0x7c8] sm:$0xff]
    %v8459 = vld [vmem:[#allocation8 + $0x7d0] sm:$0xff]
    %v8460 = vld [vmem:[#allocation8 + $0x7d8] sm:$0xff]
    %v8461 = vld [vmem:[#allocation8 + $0x7e0] sm:$0xff]
    %v8462 = vld [vmem:[#allocation8 + $0x7e8] sm:$0xff]
    %v8463 = vld [vmem:[#allocation8 + $0x7f0] sm:$0xff]
    %v8464 = vld [vmem:[#allocation8 + $0x7f8] sm:$0xff]
    %v8465 = vld [vmem:[#allocation8 + $0x800] sm:$0xff]
    %v8466 = vld [vmem:[#allocation8 + $0x808] sm:$0xff]
    %v8467 = vld [vmem:[#allocation8 + $0x810] sm:$0xff]
    %v8468 = vld [vmem:[#allocation8 + $0x818] sm:$0xff]
    %v8469 = vld [vmem:[#allocation8 + $0x820] sm:$0xff]
    %v8470 = vld [vmem:[#allocation8 + $0x828] sm:$0xff]
    %v8471 = vld [vmem:[#allocation8 + $0x830] sm:$0xff]
    %v8472 = vld [vmem:[#allocation8 + $0x838] sm:$0xff]
    %v8473 = vld [vmem:[#allocation8 + $0x840] sm:$0xff]
    %v8474 = vld [vmem:[#allocation8 + $0x848] sm:$0xff]
    %v8475 = vld [vmem:[#allocation8 + $0x850] sm:$0xff]
    %v8476 = vld [vmem:[#allocation8 + $0x858] sm:$0xff]
    %v8477 = vld [vmem:[#allocation8 + $0x860] sm:$0xff]
    %v8478 = vld [vmem:[#allocation8 + $0x868] sm:$0xff]
    %v8479 = vld [vmem:[#allocation8 + $0x870] sm:$0xff]
    %v8480 = vld [vmem:[#allocation8 + $0x878] sm:$0xff]
    %v8481 = vld [vmem:[#allocation8 + $0x880] sm:$0xff]
    %v8482 = vld [vmem:[#allocation8 + $0x888] sm:$0xff]
    %v8483 = vld [vmem:[#allocation8 + $0x890] sm:$0xff]
    %v8484 = vld [vmem:[#allocation8 + $0x898] sm:$0xff]
    %v8485 = vld [vmem:[#allocation8 + $0x8a0] sm:$0xff]
    %v8486 = vld [vmem:[#allocation8 + $0x8a8] sm:$0xff]
    %v8487 = vld [vmem:[#allocation8 + $0x8b0] sm:$0xff]
    %v8488 = vld [vmem:[#allocation8 + $0x8b8] sm:$0xff]
    %v8489 = vld [vmem:[#allocation8 + $0x8c0] sm:$0xff]
    %v8490 = vld [vmem:[#allocation8 + $0x8c8] sm:$0xff]
    %v8491 = vld [vmem:[#allocation8 + $0x8d0] sm:$0xff]
    %v8492 = vld [vmem:[#allocation8 + $0x8d8] sm:$0xff]
    %v8493 = vld [vmem:[#allocation8 + $0x8e0] sm:$0xff]
    %v8494 = vld [vmem:[#allocation8 + $0x8e8] sm:$0xff]
    %v8495 = vld [vmem:[#allocation8 + $0x8f0] sm:$0xff]
    %v8496 = vld [vmem:[#allocation8 + $0x8f8] sm:$0xff]
    %v8497 = vld [vmem:[#allocation8 + $0x900] sm:$0xff]
    %v8498 = vld [vmem:[#allocation8 + $0x908] sm:$0xff]
    %v8499 = vld [vmem:[#allocation8 + $0x910] sm:$0xff]
    %v8500 = vld [vmem:[#allocation8 + $0x918] sm:$0xff]
    %v8501 = vld [vmem:[#allocation8 + $0x920] sm:$0xff]
    %v8502 = vld [vmem:[#allocation8 + $0x928] sm:$0xff]
    %v8503 = vld [vmem:[#allocation8 + $0x930] sm:$0xff]
    %v8504 = vld [vmem:[#allocation8 + $0x938] sm:$0xff]
    %v8505 = vld [vmem:[#allocation8 + $0x940] sm:$0xff]
    %v8506 = vld [vmem:[#allocation8 + $0x948] sm:$0xff]
    %v8507 = vld [vmem:[#allocation8 + $0x950] sm:$0xff]
    %v8508 = vld [vmem:[#allocation8 + $0x958] sm:$0xff]
    %v8509 = vld [vmem:[#allocation8 + $0x960] sm:$0xff]
    %v8510 = vld [vmem:[#allocation8 + $0x968] sm:$0xff]
    %v8511 = vld [vmem:[#allocation8 + $0x970] sm:$0xff]
    %v8512 = vld [vmem:[#allocation8 + $0x978] sm:$0xff]
    %v8513 = vld [vmem:[#allocation8 + $0x980] sm:$0xff]
    %v8514 = vld [vmem:[#allocation8 + $0x988] sm:$0xff]
    %v8515 = vld [vmem:[#allocation8 + $0x990] sm:$0xff]
    %v8516 = vld [vmem:[#allocation8 + $0x998] sm:$0xff]
    %v8517 = vld [vmem:[#allocation8 + $0x9a0] sm:$0xff]
    %v8518 = vld [vmem:[#allocation8 + $0x9a8] sm:$0xff]
    %v8519 = vld [vmem:[#allocation8 + $0x9b0] sm:$0xff]
    %v8520 = vld [vmem:[#allocation8 + $0x9b8] sm:$0xff]
    %v8521 = vld [vmem:[#allocation8 + $0x9c0] sm:$0xff]
    %v8522 = vld [vmem:[#allocation8 + $0x9c8] sm:$0xff]
    %v8523 = vld [vmem:[#allocation8 + $0x9d0] sm:$0xff]
    %v8524 = vld [vmem:[#allocation8 + $0x9d8] sm:$0xff]
    %v8525 = vld [vmem:[#allocation8 + $0x9e0] sm:$0xff]
    %v8526 = vld [vmem:[#allocation8 + $0x9e8] sm:$0xff]
    %v8527 = vld [vmem:[#allocation8 + $0x9f0] sm:$0xff]
    %v8528 = vld [vmem:[#allocation8 + $0x9f8] sm:$0xff]
    %v8529 = vld [vmem:[#allocation8 + $0xa00] sm:$0xff]
    %v8530 = vld [vmem:[#allocation8 + $0xa08] sm:$0xff]
    %v8531 = vld [vmem:[#allocation8 + $0xa10] sm:$0xff]
    %v8532 = vld [vmem:[#allocation8 + $0xa18] sm:$0xff]
    %v8533 = vld [vmem:[#allocation8 + $0xa20] sm:$0xff]
    %v8534 = vld [vmem:[#allocation8 + $0xa28] sm:$0xff]
    %v8535 = vld [vmem:[#allocation8 + $0xa30] sm:$0xff]
    %v8536 = vld [vmem:[#allocation8 + $0xa38] sm:$0xff]
    %v8537 = vld [vmem:[#allocation8 + $0xa40] sm:$0xff]
    %v8538 = vld [vmem:[#allocation8 + $0xa48] sm:$0xff]
    %v8539 = vld [vmem:[#allocation8 + $0xa50] sm:$0xff]
    %v8540 = vld [vmem:[#allocation8 + $0xa58] sm:$0xff]
    %v8541 = vld [vmem:[#allocation8 + $0xa60] sm:$0xff]
    %v8542 = vld [vmem:[#allocation8 + $0xa68] sm:$0xff]
    %v8543 = vld [vmem:[#allocation8 + $0xa70] sm:$0xff]
    %v8544 = vld [vmem:[#allocation8 + $0xa78] sm:$0xff]
    %v8545 = vld [vmem:[#allocation8 + $0xa80] sm:$0xff]
    %v8546 = vld [vmem:[#allocation8 + $0xa88] sm:$0xff]
    %v8547 = vld [vmem:[#allocation8 + $0xa90] sm:$0xff]
    %v8548 = vld [vmem:[#allocation8 + $0xa98] sm:$0xff]
    %v8549 = vld [vmem:[#allocation8 + $0xaa0] sm:$0xff]
    %v8550 = vld [vmem:[#allocation8 + $0xaa8] sm:$0xff]
    %v8551 = vld [vmem:[#allocation8 + $0xab0] sm:$0xff]
    %v8552 = vld [vmem:[#allocation8 + $0xab8] sm:$0xff]
    %v8553 = vld [vmem:[#allocation8 + $0xac0] sm:$0xff]
    %v8554 = vld [vmem:[#allocation8 + $0xac8] sm:$0xff]
    %v8555 = vld [vmem:[#allocation8 + $0xad0] sm:$0xff]
    %v8556 = vld [vmem:[#allocation8 + $0xad8] sm:$0xff]
    %v8557 = vld [vmem:[#allocation8 + $0xae0] sm:$0xff]
    %v8558 = vld [vmem:[#allocation8 + $0xae8] sm:$0xff]
    %v8559 = vld [vmem:[#allocation8 + $0xaf0] sm:$0xff]
    %v8560 = vld [vmem:[#allocation8 + $0xaf8] sm:$0xff]
    %v8561 = vld [vmem:[#allocation8 + $0xb00] sm:$0xff]
    %v8562 = vld [vmem:[#allocation8 + $0xb08] sm:$0xff]
    %v8563 = vld [vmem:[#allocation8 + $0xb10] sm:$0xff]
    %v8564 = vld [vmem:[#allocation8 + $0xb18] sm:$0xff]
    %v8565 = vld [vmem:[#allocation8 + $0xb20] sm:$0xff]
    %v8566 = vld [vmem:[#allocation8 + $0xb28] sm:$0xff]
    %v8567 = vld [vmem:[#allocation8 + $0xb30] sm:$0xff]
    %v8568 = vld [vmem:[#allocation8 + $0xb38] sm:$0xff]
    %v8569 = vld [vmem:[#allocation8 + $0xb40] sm:$0xff]
    %v8570 = vld [vmem:[#allocation8 + $0xb48] sm:$0xff]
    %v8571 = vld [vmem:[#allocation8 + $0xb50] sm:$0xff]
    %v8572 = vld [vmem:[#allocation8 + $0xb58] sm:$0xff]
    %v8573 = vld [vmem:[#allocation8 + $0xb60] sm:$0xff]
    %v8574 = vld [vmem:[#allocation8 + $0xb68] sm:$0xff]
    %v8575 = vld [vmem:[#allocation8 + $0xb70] sm:$0xff]
    %v8576 = vld [vmem:[#allocation8 + $0xb78] sm:$0xff]
    %v8577 = vld [vmem:[#allocation8 + $0xb80] sm:$0xff]
    %v8578 = vld [vmem:[#allocation8 + $0xb88] sm:$0xff]
    %v8579 = vld [vmem:[#allocation8 + $0xb90] sm:$0xff]
    %v8580 = vld [vmem:[#allocation8 + $0xb98] sm:$0xff]
    %v8581 = vld [vmem:[#allocation8 + $0xba0] sm:$0xff]
    %v8582 = vld [vmem:[#allocation8 + $0xba8] sm:$0xff]
    %v8583 = vld [vmem:[#allocation8 + $0xbb0] sm:$0xff]
    %v8584 = vld [vmem:[#allocation8 + $0xbb8] sm:$0xff]
    %v8585 = vld [vmem:[#allocation8 + $0xbc0] sm:$0xff]
    %v8586 = vld [vmem:[#allocation8 + $0xbc8] sm:$0xff]
    %v8587 = vld [vmem:[#allocation8 + $0xbd0] sm:$0xff]
    %v8588 = vld [vmem:[#allocation8 + $0xbd8] sm:$0xff]
    %v8589 = vld [vmem:[#allocation8 + $0xbe0] sm:$0xff]
    %v8590 = vld [vmem:[#allocation8 + $0xbe8] sm:$0xff]
    %v8591 = vld [vmem:[#allocation8 + $0xbf0] sm:$0xff]
    %v8592 = vld [vmem:[#allocation8 + $0xbf8] sm:$0xff]
    %v8593 = vld [vmem:[#allocation8 + $0xc00] sm:$0xff]
    %v8594 = vld [vmem:[#allocation8 + $0xc08] sm:$0xff]
    %v8595 = vld [vmem:[#allocation8 + $0xc10] sm:$0xff]
    %v8596 = vld [vmem:[#allocation8 + $0xc18] sm:$0xff]
    %v8597 = vld [vmem:[#allocation8 + $0xc20] sm:$0xff]
    %v8598 = vld [vmem:[#allocation8 + $0xc28] sm:$0xff]
    %v8599 = vld [vmem:[#allocation8 + $0xc30] sm:$0xff]
    %v8600 = vld [vmem:[#allocation8 + $0xc38] sm:$0xff]
    %v8601 = vld [vmem:[#allocation8 + $0xc40] sm:$0xff]
    %v8602 = vld [vmem:[#allocation8 + $0xc48] sm:$0xff]
    %v8603 = vld [vmem:[#allocation8 + $0xc50] sm:$0xff]
    %v8604 = vld [vmem:[#allocation8 + $0xc58] sm:$0xff]
    %v8605 = vld [vmem:[#allocation8 + $0xc60] sm:$0xff]
    %v8606 = vld [vmem:[#allocation8 + $0xc68] sm:$0xff]
    %v8607 = vld [vmem:[#allocation8 + $0xc70] sm:$0xff]
    %v8608 = vld [vmem:[#allocation8 + $0xc78] sm:$0xff]
    %v8609 = vld [vmem:[#allocation8 + $0xc80] sm:$0xff]
    %v8610 = vld [vmem:[#allocation8 + $0xc88] sm:$0xff]
    %v8611 = vld [vmem:[#allocation8 + $0xc90] sm:$0xff]
    %v8612 = vld [vmem:[#allocation8 + $0xc98] sm:$0xff]
    %v8613 = vld [vmem:[#allocation8 + $0xca0] sm:$0xff]
    %v8614 = vld [vmem:[#allocation8 + $0xca8] sm:$0xff]
    %v8615 = vld [vmem:[#allocation8 + $0xcb0] sm:$0xff]
    %v8616 = vld [vmem:[#allocation8 + $0xcb8] sm:$0xff]
    %v8617 = vld [vmem:[#allocation8 + $0xcc0] sm:$0xff]
    %v8618 = vld [vmem:[#allocation8 + $0xcc8] sm:$0xff]
    %v8619 = vld [vmem:[#allocation8 + $0xcd0] sm:$0xff]
    %v8620 = vld [vmem:[#allocation8 + $0xcd8] sm:$0xff]
    %v8621 = vld [vmem:[#allocation8 + $0xce0] sm:$0xff]
    %v8622 = vld [vmem:[#allocation8 + $0xce8] sm:$0xff]
    %v8623 = vld [vmem:[#allocation8 + $0xcf0] sm:$0xff]
    %v8624 = vld [vmem:[#allocation8 + $0xcf8] sm:$0xff]
    %v8625 = vld [vmem:[#allocation8 + $0xd00] sm:$0xff]
    %v8626 = vld [vmem:[#allocation8 + $0xd08] sm:$0xff]
    %v8627 = vld [vmem:[#allocation8 + $0xd10] sm:$0xff]
    %v8628 = vld [vmem:[#allocation8 + $0xd18] sm:$0xff]
    %v8629 = vld [vmem:[#allocation8 + $0xd20] sm:$0xff]
    %v8630 = vld [vmem:[#allocation8 + $0xd28] sm:$0xff]
    %v8631 = vld [vmem:[#allocation8 + $0xd30] sm:$0xff]
    %v8632 = vld [vmem:[#allocation8 + $0xd38] sm:$0xff]
    %v8633 = vld [vmem:[#allocation8 + $0xd40] sm:$0xff]
    %v8634 = vld [vmem:[#allocation8 + $0xd48] sm:$0xff]
    %v8635 = vld [vmem:[#allocation8 + $0xd50] sm:$0xff]
    %v8636 = vld [vmem:[#allocation8 + $0xd58] sm:$0xff]
    %v8637 = vld [vmem:[#allocation8 + $0xd60] sm:$0xff]
    %v8638 = vld [vmem:[#allocation8 + $0xd68] sm:$0xff]
    %v8639 = vld [vmem:[#allocation8 + $0xd70] sm:$0xff]
    %v8640 = vld [vmem:[#allocation8 + $0xd78] sm:$0xff]
    %v8641 = vld [vmem:[#allocation8 + $0xd80] sm:$0xff]
    %v8642 = vld [vmem:[#allocation8 + $0xd88] sm:$0xff]
    %v8643 = vld [vmem:[#allocation8 + $0xd90] sm:$0xff]
    %v8644 = vld [vmem:[#allocation8 + $0xd98] sm:$0xff]
    %v8645 = vld [vmem:[#allocation8 + $0xda0] sm:$0xff]
    %v8646 = vld [vmem:[#allocation8 + $0xda8] sm:$0xff]
    %v8647 = vld [vmem:[#allocation8 + $0xdb0] sm:$0xff]
    %v8648 = vld [vmem:[#allocation8 + $0xdb8] sm:$0xff]
    %v8649 = vld [vmem:[#allocation8 + $0xdc0] sm:$0xff]
    %v8650 = vld [vmem:[#allocation8 + $0xdc8] sm:$0xff]
    %v8651 = vld [vmem:[#allocation8 + $0xdd0] sm:$0xff]
    %v8652 = vld [vmem:[#allocation8 + $0xdd8] sm:$0xff]
    %v8653 = vld [vmem:[#allocation8 + $0xde0] sm:$0xff]
    %v8654 = vld [vmem:[#allocation8 + $0xde8] sm:$0xff]
    %v8655 = vld [vmem:[#allocation8 + $0xdf0] sm:$0xff]
    %v8656 = vld [vmem:[#allocation8 + $0xdf8] sm:$0xff]
    %v8657 = vld [vmem:[#allocation8 + $0xe00] sm:$0xff]
    %v8658 = vld [vmem:[#allocation8 + $0xe08] sm:$0xff]
    %v8659 = vld [vmem:[#allocation8 + $0xe10] sm:$0xff]
    %v8660 = vld [vmem:[#allocation8 + $0xe18] sm:$0xff]
    %v8661 = vld [vmem:[#allocation8 + $0xe20] sm:$0xff]
    %v8662 = vld [vmem:[#allocation8 + $0xe28] sm:$0xff]
    %v8663 = vld [vmem:[#allocation8 + $0xe30] sm:$0xff]
    %v8664 = vld [vmem:[#allocation8 + $0xe38] sm:$0xff]
    %v8665 = vld [vmem:[#allocation8 + $0xe40] sm:$0xff]
    %v8666 = vld [vmem:[#allocation8 + $0xe48] sm:$0xff]
    %v8667 = vld [vmem:[#allocation8 + $0xe50] sm:$0xff]
    %v8668 = vld [vmem:[#allocation8 + $0xe58] sm:$0xff]
    %v8669 = vld [vmem:[#allocation8 + $0xe60] sm:$0xff]
    %v8670 = vld [vmem:[#allocation8 + $0xe68] sm:$0xff]
    %v8671 = vld [vmem:[#allocation8 + $0xe70] sm:$0xff]
    %v8672 = vld [vmem:[#allocation8 + $0xe78] sm:$0xff]
    %v8673 = vld [vmem:[#allocation8 + $0xe80] sm:$0xff]
    %v8674 = vld [vmem:[#allocation8 + $0xe88] sm:$0xff]
    %v8675 = vld [vmem:[#allocation8 + $0xe90] sm:$0xff]
    %v8676 = vld [vmem:[#allocation8 + $0xe98] sm:$0xff]
    %v8677 = vld [vmem:[#allocation8 + $0xea0] sm:$0xff]
    %v8678 = vld [vmem:[#allocation8 + $0xea8] sm:$0xff]
    %v8679 = vld [vmem:[#allocation8 + $0xeb0] sm:$0xff]
    %v8680 = vld [vmem:[#allocation8 + $0xeb8] sm:$0xff]
    %v8681 = vld [vmem:[#allocation8 + $0xec0] sm:$0xff]
    %v8682 = vld [vmem:[#allocation8 + $0xec8] sm:$0xff]
    %v8683 = vld [vmem:[#allocation8 + $0xed0] sm:$0xff]
    %v8684 = vld [vmem:[#allocation8 + $0xed8] sm:$0xff]
    %v8685 = vld [vmem:[#allocation8 + $0xee0] sm:$0xff]
    %v8686 = vld [vmem:[#allocation8 + $0xee8] sm:$0xff]
    %v8687 = vld [vmem:[#allocation8 + $0xef0] sm:$0xff]
    %v8688 = vld [vmem:[#allocation8 + $0xef8] sm:$0xff]
    %v8689 = vld [vmem:[#allocation8 + $0xf00] sm:$0xff]
    %v8690 = vld [vmem:[#allocation8 + $0xf08] sm:$0xff]
    %v8691 = vld [vmem:[#allocation8 + $0xf10] sm:$0xff]
    %v8692 = vld [vmem:[#allocation8 + $0xf18] sm:$0xff]
    %v8693 = vld [vmem:[#allocation8 + $0xf20] sm:$0xff]
    %v8694 = vld [vmem:[#allocation8 + $0xf28] sm:$0xff]
    %v8695 = vld [vmem:[#allocation8 + $0xf30] sm:$0xff]
    %v8696 = vld [vmem:[#allocation8 + $0xf38] sm:$0xff]
    %v8697 = vld [vmem:[#allocation8 + $0xf40] sm:$0xff]
    %v8698 = vld [vmem:[#allocation8 + $0xf48] sm:$0xff]
    %v8699 = vld [vmem:[#allocation8 + $0xf50] sm:$0xff]
    %v8700 = vld [vmem:[#allocation8 + $0xf58] sm:$0xff]
    %v8701 = vld [vmem:[#allocation8 + $0xf60] sm:$0xff]
    %v8702 = vld [vmem:[#allocation8 + $0xf68] sm:$0xff]
    %v8703 = vld [vmem:[#allocation8 + $0xf70] sm:$0xff]
    %v8704 = vld [vmem:[#allocation8 + $0xf78] sm:$0xff]
    %v8705 = vld [vmem:[#allocation8 + $0xf80] sm:$0xff]
    %v8706 = vld [vmem:[#allocation8 + $0xf88] sm:$0xff]
    %v8707 = vld [vmem:[#allocation8 + $0xf90] sm:$0xff]
    %v8708 = vld [vmem:[#allocation8 + $0xf98] sm:$0xff]
    %v8709 = vld [vmem:[#allocation8 + $0xfa0] sm:$0xff]
    %v8710 = vld [vmem:[#allocation8 + $0xfa8] sm:$0xff]
    %v8711 = vld [vmem:[#allocation8 + $0xfb0] sm:$0xff]
    %v8712 = vld [vmem:[#allocation8 + $0xfb8] sm:$0xff]
    %v8713 = vld [vmem:[#allocation8 + $0xfc0] sm:$0xff]
    %v8714 = vld [vmem:[#allocation8 + $0xfc8] sm:$0xff]
    %v8715 = vld [vmem:[#allocation8 + $0xfd0] sm:$0xff]
    %v8716 = vld [vmem:[#allocation8 + $0xfd8] sm:$0xff]
    %v8717 = vld [vmem:[#allocation8 + $0xfe0] sm:$0xff]
    %v8718 = vld [vmem:[#allocation8 + $0xfe8] sm:$0xff]
    %v8719 = vld [vmem:[#allocation8 + $0xff0] sm:$0xff]
    %v8720 = vld [vmem:[#allocation8 + $0xff8] sm:$0xff]
    %s8721 = scalar_lea.vmem [#allocation11], 4
    %v8722 = vld [vmem:[%s8721] ss:$8 sm:$0xf]
    %v8723 = vld [vmem:[%s8721] ss:$8 sm:$0xf0]
    %v8724 = vor.u32 %v8722, %v8723
    %v8726 = vlaneseq
    %v8727 = vshrl.u32 %v8726, 7
    %v8728 = vsub.s32 0, %v8727
    %v8729 = vrot.slane %v8724, %v8728
    %v8730 = vlaneseq
    %v8731 = vshrl.u32 %v8730, 7
    %v8732 = vsub.s32 1, %v8731
    %v8733 = vrot.slane %v8724, %v8732
    %v8734 = vlaneseq
    %v8735 = vshrl.u32 %v8734, 7
    %v8736 = vsub.s32 2, %v8735
    %v8737 = vrot.slane %v8724, %v8736
    %v8738 = vlaneseq
    %v8739 = vshrl.u32 %v8738, 7
    %v8740 = vsub.s32 3, %v8739
    %v8741 = vrot.slane %v8724, %v8740
    %v8742 = vlaneseq
    %v8743 = vshrl.u32 %v8742, 7
    %v8744 = vsub.s32 4, %v8743
    %v8745 = vrot.slane %v8724, %v8744
    %v8746 = vlaneseq
    %v8747 = vshrl.u32 %v8746, 7
    %v8748 = vsub.s32 5, %v8747
    %v8749 = vrot.slane %v8724, %v8748
    %v8750 = vlaneseq
    %v8751 = vshrl.u32 %v8750, 7
    %v8752 = vsub.s32 6, %v8751
    %v8753 = vrot.slane %v8724, %v8752
    %v8754 = vlaneseq
    %v8755 = vshrl.u32 %v8754, 7
    %v8756 = vsub.s32 7, %v8755
    %v8757 = vrot.slane %v8724, %v8756
    %v9278 = vunpack.c.l.b16 %v8209
    %v9279 = vunpack.c.h.b16 %v8209
    %v9280 = vunpack.c.l.b16 %v8210
    %v9281 = vunpack.c.h.b16 %v8210
    %v9282 = vunpack.c.l.b16 %v8211
    %v9283 = vunpack.c.h.b16 %v8211
    %v9284 = vunpack.c.l.b16 %v8212
    %v9285 = vunpack.c.h.b16 %v8212
    %v9286 = vunpack.c.l.b16 %v8213
    %v9287 = vunpack.c.h.b16 %v8213
    %v9288 = vunpack.c.l.b16 %v8214
    %v9289 = vunpack.c.h.b16 %v8214
    %v9290 = vunpack.c.l.b16 %v8215
    %v9291 = vunpack.c.h.b16 %v8215
    %v9292 = vunpack.c.l.b16 %v8216
    %v9293 = vunpack.c.h.b16 %v8216
    %v9294 = vunpack.c.l.b16 %v8217
    %v9295 = vunpack.c.h.b16 %v8217
    %v9296 = vunpack.c.l.b16 %v8218
    %v9297 = vunpack.c.h.b16 %v8218
    %v9298 = vunpack.c.l.b16 %v8219
    %v9299 = vunpack.c.h.b16 %v8219
    %v9300 = vunpack.c.l.b16 %v8220
    %v9301 = vunpack.c.h.b16 %v8220
    %v9302 = vunpack.c.l.b16 %v8221
    %v9303 = vunpack.c.h.b16 %v8221
    %v9304 = vunpack.c.l.b16 %v8222
    %v9305 = vunpack.c.h.b16 %v8222
    %v9306 = vunpack.c.l.b16 %v8223
    %v9307 = vunpack.c.h.b16 %v8223
    %v9308 = vunpack.c.l.b16 %v8224
    %v9309 = vunpack.c.h.b16 %v8224
    %v9310 = vunpack.c.l.b16 %v8225
    %v9311 = vunpack.c.h.b16 %v8225
    %v9312 = vunpack.c.l.b16 %v8226
    %v9313 = vunpack.c.h.b16 %v8226
    %v9314 = vunpack.c.l.b16 %v8227
    %v9315 = vunpack.c.h.b16 %v8227
    %v9316 = vunpack.c.l.b16 %v8228
    %v9317 = vunpack.c.h.b16 %v8228
    %v9318 = vunpack.c.l.b16 %v8229
    %v9319 = vunpack.c.h.b16 %v8229
    %v9320 = vunpack.c.l.b16 %v8230
    %v9321 = vunpack.c.h.b16 %v8230
    %v9322 = vunpack.c.l.b16 %v8231
    %v9323 = vunpack.c.h.b16 %v8231
    %v9324 = vunpack.c.l.b16 %v8232
    %v9325 = vunpack.c.h.b16 %v8232
    %v9326 = vunpack.c.l.b16 %v8233
    %v9327 = vunpack.c.h.b16 %v8233
    %v9328 = vunpack.c.l.b16 %v8234
    %v9329 = vunpack.c.h.b16 %v8234
    %v9330 = vunpack.c.l.b16 %v8235
    %v9331 = vunpack.c.h.b16 %v8235
    %v9332 = vunpack.c.l.b16 %v8236
    %v9333 = vunpack.c.h.b16 %v8236
    %v9334 = vunpack.c.l.b16 %v8237
    %v9335 = vunpack.c.h.b16 %v8237
    %v9336 = vunpack.c.l.b16 %v8238
    %v9337 = vunpack.c.h.b16 %v8238
    %v9338 = vunpack.c.l.b16 %v8239
    %v9339 = vunpack.c.h.b16 %v8239
    %v9340 = vunpack.c.l.b16 %v8240
    %v9341 = vunpack.c.h.b16 %v8240
    %v9342 = vunpack.c.l.b16 %v8241
    %v9343 = vunpack.c.h.b16 %v8241
    %v9344 = vunpack.c.l.b16 %v8242
    %v9345 = vunpack.c.h.b16 %v8242
    %v9346 = vunpack.c.l.b16 %v8243
    %v9347 = vunpack.c.h.b16 %v8243
    %v9348 = vunpack.c.l.b16 %v8244
    %v9349 = vunpack.c.h.b16 %v8244
    %v9350 = vunpack.c.l.b16 %v8245
    %v9351 = vunpack.c.h.b16 %v8245
    %v9352 = vunpack.c.l.b16 %v8246
    %v9353 = vunpack.c.h.b16 %v8246
    %v9354 = vunpack.c.l.b16 %v8247
    %v9355 = vunpack.c.h.b16 %v8247
    %v9356 = vunpack.c.l.b16 %v8248
    %v9357 = vunpack.c.h.b16 %v8248
    %v9358 = vunpack.c.l.b16 %v8249
    %v9359 = vunpack.c.h.b16 %v8249
    %v9360 = vunpack.c.l.b16 %v8250
    %v9361 = vunpack.c.h.b16 %v8250
    %v9362 = vunpack.c.l.b16 %v8251
    %v9363 = vunpack.c.h.b16 %v8251
    %v9364 = vunpack.c.l.b16 %v8252
    %v9365 = vunpack.c.h.b16 %v8252
    %v9366 = vunpack.c.l.b16 %v8253
    %v9367 = vunpack.c.h.b16 %v8253
    %v9368 = vunpack.c.l.b16 %v8254
    %v9369 = vunpack.c.h.b16 %v8254
    %v9370 = vunpack.c.l.b16 %v8255
    %v9371 = vunpack.c.h.b16 %v8255
    %v9372 = vunpack.c.l.b16 %v8256
    %v9373 = vunpack.c.h.b16 %v8256
    %v9374 = vunpack.c.l.b16 %v8257
    %v9375 = vunpack.c.h.b16 %v8257
    %v9376 = vunpack.c.l.b16 %v8258
    %v9377 = vunpack.c.h.b16 %v8258
    %v9378 = vunpack.c.l.b16 %v8259
    %v9379 = vunpack.c.h.b16 %v8259
    %v9380 = vunpack.c.l.b16 %v8260
    %v9381 = vunpack.c.h.b16 %v8260
    %v9382 = vunpack.c.l.b16 %v8261
    %v9383 = vunpack.c.h.b16 %v8261
    %v9384 = vunpack.c.l.b16 %v8262
    %v9385 = vunpack.c.h.b16 %v8262
    %v9386 = vunpack.c.l.b16 %v8263
    %v9387 = vunpack.c.h.b16 %v8263
    %v9388 = vunpack.c.l.b16 %v8264
    %v9389 = vunpack.c.h.b16 %v8264
    %v9390 = vunpack.c.l.b16 %v8265
    %v9391 = vunpack.c.h.b16 %v8265
    %v9392 = vunpack.c.l.b16 %v8266
    %v9393 = vunpack.c.h.b16 %v8266
    %v9394 = vunpack.c.l.b16 %v8267
    %v9395 = vunpack.c.h.b16 %v8267
    %v9396 = vunpack.c.l.b16 %v8268
    %v9397 = vunpack.c.h.b16 %v8268
    %v9398 = vunpack.c.l.b16 %v8269
    %v9399 = vunpack.c.h.b16 %v8269
    %v9400 = vunpack.c.l.b16 %v8270
    %v9401 = vunpack.c.h.b16 %v8270
    %v9402 = vunpack.c.l.b16 %v8271
    %v9403 = vunpack.c.h.b16 %v8271
    %v9404 = vunpack.c.l.b16 %v8272
    %v9405 = vunpack.c.h.b16 %v8272
    %v9406 = vunpack.c.l.b16 %v8273
    %v9407 = vunpack.c.h.b16 %v8273
    %v9408 = vunpack.c.l.b16 %v8274
    %v9409 = vunpack.c.h.b16 %v8274
    %v9410 = vunpack.c.l.b16 %v8275
    %v9411 = vunpack.c.h.b16 %v8275
    %v9412 = vunpack.c.l.b16 %v8276
    %v9413 = vunpack.c.h.b16 %v8276
    %v9414 = vunpack.c.l.b16 %v8277
    %v9415 = vunpack.c.h.b16 %v8277
    %v9416 = vunpack.c.l.b16 %v8278
    %v9417 = vunpack.c.h.b16 %v8278
    %v9418 = vunpack.c.l.b16 %v8279
    %v9419 = vunpack.c.h.b16 %v8279
    %v9420 = vunpack.c.l.b16 %v8280
    %v9421 = vunpack.c.h.b16 %v8280
    %v9422 = vunpack.c.l.b16 %v8281
    %v9423 = vunpack.c.h.b16 %v8281
    %v9424 = vunpack.c.l.b16 %v8282
    %v9425 = vunpack.c.h.b16 %v8282
    %v9426 = vunpack.c.l.b16 %v8283
    %v9427 = vunpack.c.h.b16 %v8283
    %v9428 = vunpack.c.l.b16 %v8284
    %v9429 = vunpack.c.h.b16 %v8284
    %v9430 = vunpack.c.l.b16 %v8285
    %v9431 = vunpack.c.h.b16 %v8285
    %v9432 = vunpack.c.l.b16 %v8286
    %v9433 = vunpack.c.h.b16 %v8286
    %v9434 = vunpack.c.l.b16 %v8287
    %v9435 = vunpack.c.h.b16 %v8287
    %v9436 = vunpack.c.l.b16 %v8288
    %v9437 = vunpack.c.h.b16 %v8288
    %v9438 = vunpack.c.l.b16 %v8289
    %v9439 = vunpack.c.h.b16 %v8289
    %v9440 = vunpack.c.l.b16 %v8290
    %v9441 = vunpack.c.h.b16 %v8290
    %v9442 = vunpack.c.l.b16 %v8291
    %v9443 = vunpack.c.h.b16 %v8291
    %v9444 = vunpack.c.l.b16 %v8292
    %v9445 = vunpack.c.h.b16 %v8292
    %v9446 = vunpack.c.l.b16 %v8293
    %v9447 = vunpack.c.h.b16 %v8293
    %v9448 = vunpack.c.l.b16 %v8294
    %v9449 = vunpack.c.h.b16 %v8294
    %v9450 = vunpack.c.l.b16 %v8295
    %v9451 = vunpack.c.h.b16 %v8295
    %v9452 = vunpack.c.l.b16 %v8296
    %v9453 = vunpack.c.h.b16 %v8296
    %v9454 = vunpack.c.l.b16 %v8297
    %v9455 = vunpack.c.h.b16 %v8297
    %v9456 = vunpack.c.l.b16 %v8298
    %v9457 = vunpack.c.h.b16 %v8298
    %v9458 = vunpack.c.l.b16 %v8299
    %v9459 = vunpack.c.h.b16 %v8299
    %v9460 = vunpack.c.l.b16 %v8300
    %v9461 = vunpack.c.h.b16 %v8300
    %v9462 = vunpack.c.l.b16 %v8301
    %v9463 = vunpack.c.h.b16 %v8301
    %v9464 = vunpack.c.l.b16 %v8302
    %v9465 = vunpack.c.h.b16 %v8302
    %v9466 = vunpack.c.l.b16 %v8303
    %v9467 = vunpack.c.h.b16 %v8303
    %v9468 = vunpack.c.l.b16 %v8304
    %v9469 = vunpack.c.h.b16 %v8304
    %v9470 = vunpack.c.l.b16 %v8305
    %v9471 = vunpack.c.h.b16 %v8305
    %v9472 = vunpack.c.l.b16 %v8306
    %v9473 = vunpack.c.h.b16 %v8306
    %v9474 = vunpack.c.l.b16 %v8307
    %v9475 = vunpack.c.h.b16 %v8307
    %v9476 = vunpack.c.l.b16 %v8308
    %v9477 = vunpack.c.h.b16 %v8308
    %v9478 = vunpack.c.l.b16 %v8309
    %v9479 = vunpack.c.h.b16 %v8309
    %v9480 = vunpack.c.l.b16 %v8310
    %v9481 = vunpack.c.h.b16 %v8310
    %v9482 = vunpack.c.l.b16 %v8311
    %v9483 = vunpack.c.h.b16 %v8311
    %v9484 = vunpack.c.l.b16 %v8312
    %v9485 = vunpack.c.h.b16 %v8312
    %v9486 = vunpack.c.l.b16 %v8313
    %v9487 = vunpack.c.h.b16 %v8313
    %v9488 = vunpack.c.l.b16 %v8314
    %v9489 = vunpack.c.h.b16 %v8314
    %v9490 = vunpack.c.l.b16 %v8315
    %v9491 = vunpack.c.h.b16 %v8315
    %v9492 = vunpack.c.l.b16 %v8316
    %v9493 = vunpack.c.h.b16 %v8316
    %v9494 = vunpack.c.l.b16 %v8317
    %v9495 = vunpack.c.h.b16 %v8317
    %v9496 = vunpack.c.l.b16 %v8318
    %v9497 = vunpack.c.h.b16 %v8318
    %v9498 = vunpack.c.l.b16 %v8319
    %v9499 = vunpack.c.h.b16 %v8319
    %v9500 = vunpack.c.l.b16 %v8320
    %v9501 = vunpack.c.h.b16 %v8320
    %v9502 = vunpack.c.l.b16 %v8321
    %v9503 = vunpack.c.h.b16 %v8321
    %v9504 = vunpack.c.l.b16 %v8322
    %v9505 = vunpack.c.h.b16 %v8322
    %v9506 = vunpack.c.l.b16 %v8323
    %v9507 = vunpack.c.h.b16 %v8323
    %v9508 = vunpack.c.l.b16 %v8324
    %v9509 = vunpack.c.h.b16 %v8324
    %v9510 = vunpack.c.l.b16 %v8325
    %v9511 = vunpack.c.h.b16 %v8325
    %v9512 = vunpack.c.l.b16 %v8326
    %v9513 = vunpack.c.h.b16 %v8326
    %v9514 = vunpack.c.l.b16 %v8327
    %v9515 = vunpack.c.h.b16 %v8327
    %v9516 = vunpack.c.l.b16 %v8328
    %v9517 = vunpack.c.h.b16 %v8328
    %v9518 = vunpack.c.l.b16 %v8329
    %v9519 = vunpack.c.h.b16 %v8329
    %v9520 = vunpack.c.l.b16 %v8330
    %v9521 = vunpack.c.h.b16 %v8330
    %v9522 = vunpack.c.l.b16 %v8331
    %v9523 = vunpack.c.h.b16 %v8331
    %v9524 = vunpack.c.l.b16 %v8332
    %v9525 = vunpack.c.h.b16 %v8332
    %v9526 = vunpack.c.l.b16 %v8333
    %v9527 = vunpack.c.h.b16 %v8333
    %v9528 = vunpack.c.l.b16 %v8334
    %v9529 = vunpack.c.h.b16 %v8334
    %v9530 = vunpack.c.l.b16 %v8335
    %v9531 = vunpack.c.h.b16 %v8335
    %v9532 = vunpack.c.l.b16 %v8336
    %v9533 = vunpack.c.h.b16 %v8336
    %v9534 = vunpack.c.l.b16 %v8337
    %v9535 = vunpack.c.h.b16 %v8337
    %v9536 = vunpack.c.l.b16 %v8338
    %v9537 = vunpack.c.h.b16 %v8338
    %v9538 = vunpack.c.l.b16 %v8339
    %v9539 = vunpack.c.h.b16 %v8339
    %v9540 = vunpack.c.l.b16 %v8340
    %v9541 = vunpack.c.h.b16 %v8340
    %v9542 = vunpack.c.l.b16 %v8341
    %v9543 = vunpack.c.h.b16 %v8341
    %v9544 = vunpack.c.l.b16 %v8342
    %v9545 = vunpack.c.h.b16 %v8342
    %v9546 = vunpack.c.l.b16 %v8343
    %v9547 = vunpack.c.h.b16 %v8343
    %v9548 = vunpack.c.l.b16 %v8344
    %v9549 = vunpack.c.h.b16 %v8344
    %v9550 = vunpack.c.l.b16 %v8345
    %v9551 = vunpack.c.h.b16 %v8345
    %v9552 = vunpack.c.l.b16 %v8346
    %v9553 = vunpack.c.h.b16 %v8346
    %v9554 = vunpack.c.l.b16 %v8347
    %v9555 = vunpack.c.h.b16 %v8347
    %v9556 = vunpack.c.l.b16 %v8348
    %v9557 = vunpack.c.h.b16 %v8348
    %v9558 = vunpack.c.l.b16 %v8349
    %v9559 = vunpack.c.h.b16 %v8349
    %v9560 = vunpack.c.l.b16 %v8350
    %v9561 = vunpack.c.h.b16 %v8350
    %v9562 = vunpack.c.l.b16 %v8351
    %v9563 = vunpack.c.h.b16 %v8351
    %v9564 = vunpack.c.l.b16 %v8352
    %v9565 = vunpack.c.h.b16 %v8352
    %v9566 = vunpack.c.l.b16 %v8353
    %v9567 = vunpack.c.h.b16 %v8353
    %v9568 = vunpack.c.l.b16 %v8354
    %v9569 = vunpack.c.h.b16 %v8354
    %v9570 = vunpack.c.l.b16 %v8355
    %v9571 = vunpack.c.h.b16 %v8355
    %v9572 = vunpack.c.l.b16 %v8356
    %v9573 = vunpack.c.h.b16 %v8356
    %v9574 = vunpack.c.l.b16 %v8357
    %v9575 = vunpack.c.h.b16 %v8357
    %v9576 = vunpack.c.l.b16 %v8358
    %v9577 = vunpack.c.h.b16 %v8358
    %v9578 = vunpack.c.l.b16 %v8359
    %v9579 = vunpack.c.h.b16 %v8359
    %v9580 = vunpack.c.l.b16 %v8360
    %v9581 = vunpack.c.h.b16 %v8360
    %v9582 = vunpack.c.l.b16 %v8361
    %v9583 = vunpack.c.h.b16 %v8361
    %v9584 = vunpack.c.l.b16 %v8362
    %v9585 = vunpack.c.h.b16 %v8362
    %v9586 = vunpack.c.l.b16 %v8363
    %v9587 = vunpack.c.h.b16 %v8363
    %v9588 = vunpack.c.l.b16 %v8364
    %v9589 = vunpack.c.h.b16 %v8364
    %v9590 = vunpack.c.l.b16 %v8365
    %v9591 = vunpack.c.h.b16 %v8365
    %v9592 = vunpack.c.l.b16 %v8366
    %v9593 = vunpack.c.h.b16 %v8366
    %v9594 = vunpack.c.l.b16 %v8367
    %v9595 = vunpack.c.h.b16 %v8367
    %v9596 = vunpack.c.l.b16 %v8368
    %v9597 = vunpack.c.h.b16 %v8368
    %v9598 = vunpack.c.l.b16 %v8369
    %v9599 = vunpack.c.h.b16 %v8369
    %v9600 = vunpack.c.l.b16 %v8370
    %v9601 = vunpack.c.h.b16 %v8370
    %v9602 = vunpack.c.l.b16 %v8371
    %v9603 = vunpack.c.h.b16 %v8371
    %v9604 = vunpack.c.l.b16 %v8372
    %v9605 = vunpack.c.h.b16 %v8372
    %v9606 = vunpack.c.l.b16 %v8373
    %v9607 = vunpack.c.h.b16 %v8373
    %v9608 = vunpack.c.l.b16 %v8374
    %v9609 = vunpack.c.h.b16 %v8374
    %v9610 = vunpack.c.l.b16 %v8375
    %v9611 = vunpack.c.h.b16 %v8375
    %v9612 = vunpack.c.l.b16 %v8376
    %v9613 = vunpack.c.h.b16 %v8376
    %v9614 = vunpack.c.l.b16 %v8377
    %v9615 = vunpack.c.h.b16 %v8377
    %v9616 = vunpack.c.l.b16 %v8378
    %v9617 = vunpack.c.h.b16 %v8378
    %v9618 = vunpack.c.l.b16 %v8379
    %v9619 = vunpack.c.h.b16 %v8379
    %v9620 = vunpack.c.l.b16 %v8380
    %v9621 = vunpack.c.h.b16 %v8380
    %v9622 = vunpack.c.l.b16 %v8381
    %v9623 = vunpack.c.h.b16 %v8381
    %v9624 = vunpack.c.l.b16 %v8382
    %v9625 = vunpack.c.h.b16 %v8382
    %v9626 = vunpack.c.l.b16 %v8383
    %v9627 = vunpack.c.h.b16 %v8383
    %v9628 = vunpack.c.l.b16 %v8384
    %v9629 = vunpack.c.h.b16 %v8384
    %v9630 = vunpack.c.l.b16 %v8385
    %v9631 = vunpack.c.h.b16 %v8385
    %v9632 = vunpack.c.l.b16 %v8386
    %v9633 = vunpack.c.h.b16 %v8386
    %v9634 = vunpack.c.l.b16 %v8387
    %v9635 = vunpack.c.h.b16 %v8387
    %v9636 = vunpack.c.l.b16 %v8388
    %v9637 = vunpack.c.h.b16 %v8388
    %v9638 = vunpack.c.l.b16 %v8389
    %v9639 = vunpack.c.h.b16 %v8389
    %v9640 = vunpack.c.l.b16 %v8390
    %v9641 = vunpack.c.h.b16 %v8390
    %v9642 = vunpack.c.l.b16 %v8391
    %v9643 = vunpack.c.h.b16 %v8391
    %v9644 = vunpack.c.l.b16 %v8392
    %v9645 = vunpack.c.h.b16 %v8392
    %v9646 = vunpack.c.l.b16 %v8393
    %v9647 = vunpack.c.h.b16 %v8393
    %v9648 = vunpack.c.l.b16 %v8394
    %v9649 = vunpack.c.h.b16 %v8394
    %v9650 = vunpack.c.l.b16 %v8395
    %v9651 = vunpack.c.h.b16 %v8395
    %v9652 = vunpack.c.l.b16 %v8396
    %v9653 = vunpack.c.h.b16 %v8396
    %v9654 = vunpack.c.l.b16 %v8397
    %v9655 = vunpack.c.h.b16 %v8397
    %v9656 = vunpack.c.l.b16 %v8398
    %v9657 = vunpack.c.h.b16 %v8398
    %v9658 = vunpack.c.l.b16 %v8399
    %v9659 = vunpack.c.h.b16 %v8399
    %v9660 = vunpack.c.l.b16 %v8400
    %v9661 = vunpack.c.h.b16 %v8400
    %v9662 = vunpack.c.l.b16 %v8401
    %v9663 = vunpack.c.h.b16 %v8401
    %v9664 = vunpack.c.l.b16 %v8402
    %v9665 = vunpack.c.h.b16 %v8402
    %v9666 = vunpack.c.l.b16 %v8403
    %v9667 = vunpack.c.h.b16 %v8403
    %v9668 = vunpack.c.l.b16 %v8404
    %v9669 = vunpack.c.h.b16 %v8404
    %v9670 = vunpack.c.l.b16 %v8405
    %v9671 = vunpack.c.h.b16 %v8405
    %v9672 = vunpack.c.l.b16 %v8406
    %v9673 = vunpack.c.h.b16 %v8406
    %v9674 = vunpack.c.l.b16 %v8407
    %v9675 = vunpack.c.h.b16 %v8407
    %v9676 = vunpack.c.l.b16 %v8408
    %v9677 = vunpack.c.h.b16 %v8408
    %v9678 = vunpack.c.l.b16 %v8409
    %v9679 = vunpack.c.h.b16 %v8409
    %v9680 = vunpack.c.l.b16 %v8410
    %v9681 = vunpack.c.h.b16 %v8410
    %v9682 = vunpack.c.l.b16 %v8411
    %v9683 = vunpack.c.h.b16 %v8411
    %v9684 = vunpack.c.l.b16 %v8412
    %v9685 = vunpack.c.h.b16 %v8412
    %v9686 = vunpack.c.l.b16 %v8413
    %v9687 = vunpack.c.h.b16 %v8413
    %v9688 = vunpack.c.l.b16 %v8414
    %v9689 = vunpack.c.h.b16 %v8414
    %v9690 = vunpack.c.l.b16 %v8415
    %v9691 = vunpack.c.h.b16 %v8415
    %v9692 = vunpack.c.l.b16 %v8416
    %v9693 = vunpack.c.h.b16 %v8416
    %v9694 = vunpack.c.l.b16 %v8417
    %v9695 = vunpack.c.h.b16 %v8417
    %v9696 = vunpack.c.l.b16 %v8418
    %v9697 = vunpack.c.h.b16 %v8418
    %v9698 = vunpack.c.l.b16 %v8419
    %v9699 = vunpack.c.h.b16 %v8419
    %v9700 = vunpack.c.l.b16 %v8420
    %v9701 = vunpack.c.h.b16 %v8420
    %v9702 = vunpack.c.l.b16 %v8421
    %v9703 = vunpack.c.h.b16 %v8421
    %v9704 = vunpack.c.l.b16 %v8422
    %v9705 = vunpack.c.h.b16 %v8422
    %v9706 = vunpack.c.l.b16 %v8423
    %v9707 = vunpack.c.h.b16 %v8423
    %v9708 = vunpack.c.l.b16 %v8424
    %v9709 = vunpack.c.h.b16 %v8424
    %v9710 = vunpack.c.l.b16 %v8425
    %v9711 = vunpack.c.h.b16 %v8425
    %v9712 = vunpack.c.l.b16 %v8426
    %v9713 = vunpack.c.h.b16 %v8426
    %v9714 = vunpack.c.l.b16 %v8427
    %v9715 = vunpack.c.h.b16 %v8427
    %v9716 = vunpack.c.l.b16 %v8428
    %v9717 = vunpack.c.h.b16 %v8428
    %v9718 = vunpack.c.l.b16 %v8429
    %v9719 = vunpack.c.h.b16 %v8429
    %v9720 = vunpack.c.l.b16 %v8430
    %v9721 = vunpack.c.h.b16 %v8430
    %v9722 = vunpack.c.l.b16 %v8431
    %v9723 = vunpack.c.h.b16 %v8431
    %v9724 = vunpack.c.l.b16 %v8432
    %v9725 = vunpack.c.h.b16 %v8432
    %v9726 = vunpack.c.l.b16 %v8433
    %v9727 = vunpack.c.h.b16 %v8433
    %v9728 = vunpack.c.l.b16 %v8434
    %v9729 = vunpack.c.h.b16 %v8434
    %v9730 = vunpack.c.l.b16 %v8435
    %v9731 = vunpack.c.h.b16 %v8435
    %v9732 = vunpack.c.l.b16 %v8436
    %v9733 = vunpack.c.h.b16 %v8436
    %v9734 = vunpack.c.l.b16 %v8437
    %v9735 = vunpack.c.h.b16 %v8437
    %v9736 = vunpack.c.l.b16 %v8438
    %v9737 = vunpack.c.h.b16 %v8438
    %v9738 = vunpack.c.l.b16 %v8439
    %v9739 = vunpack.c.h.b16 %v8439
    %v9740 = vunpack.c.l.b16 %v8440
    %v9741 = vunpack.c.h.b16 %v8440
    %v9742 = vunpack.c.l.b16 %v8441
    %v9743 = vunpack.c.h.b16 %v8441
    %v9744 = vunpack.c.l.b16 %v8442
    %v9745 = vunpack.c.h.b16 %v8442
    %v9746 = vunpack.c.l.b16 %v8443
    %v9747 = vunpack.c.h.b16 %v8443
    %v9748 = vunpack.c.l.b16 %v8444
    %v9749 = vunpack.c.h.b16 %v8444
    %v9750 = vunpack.c.l.b16 %v8445
    %v9751 = vunpack.c.h.b16 %v8445
    %v9752 = vunpack.c.l.b16 %v8446
    %v9753 = vunpack.c.h.b16 %v8446
    %v9754 = vunpack.c.l.b16 %v8447
    %v9755 = vunpack.c.h.b16 %v8447
    %v9756 = vunpack.c.l.b16 %v8448
    %v9757 = vunpack.c.h.b16 %v8448
    %v9758 = vunpack.c.l.b16 %v8449
    %v9759 = vunpack.c.h.b16 %v8449
    %v9760 = vunpack.c.l.b16 %v8450
    %v9761 = vunpack.c.h.b16 %v8450
    %v9762 = vunpack.c.l.b16 %v8451
    %v9763 = vunpack.c.h.b16 %v8451
    %v9764 = vunpack.c.l.b16 %v8452
    %v9765 = vunpack.c.h.b16 %v8452
    %v9766 = vunpack.c.l.b16 %v8453
    %v9767 = vunpack.c.h.b16 %v8453
    %v9768 = vunpack.c.l.b16 %v8454
    %v9769 = vunpack.c.h.b16 %v8454
    %v9770 = vunpack.c.l.b16 %v8455
    %v9771 = vunpack.c.h.b16 %v8455
    %v9772 = vunpack.c.l.b16 %v8456
    %v9773 = vunpack.c.h.b16 %v8456
    %v9774 = vunpack.c.l.b16 %v8457
    %v9775 = vunpack.c.h.b16 %v8457
    %v9776 = vunpack.c.l.b16 %v8458
    %v9777 = vunpack.c.h.b16 %v8458
    %v9778 = vunpack.c.l.b16 %v8459
    %v9779 = vunpack.c.h.b16 %v8459
    %v9780 = vunpack.c.l.b16 %v8460
    %v9781 = vunpack.c.h.b16 %v8460
    %v9782 = vunpack.c.l.b16 %v8461
    %v9783 = vunpack.c.h.b16 %v8461
    %v9784 = vunpack.c.l.b16 %v8462
    %v9785 = vunpack.c.h.b16 %v8462
    %v9786 = vunpack.c.l.b16 %v8463
    %v9787 = vunpack.c.h.b16 %v8463
    %v9788 = vunpack.c.l.b16 %v8464
    %v9789 = vunpack.c.h.b16 %v8464
    %v9790 = vunpack.c.l.b16 %v8465
    %v9791 = vunpack.c.h.b16 %v8465
    %v9792 = vunpack.c.l.b16 %v8466
    %v9793 = vunpack.c.h.b16 %v8466
    %v9794 = vunpack.c.l.b16 %v8467
    %v9795 = vunpack.c.h.b16 %v8467
    %v9796 = vunpack.c.l.b16 %v8468
    %v9797 = vunpack.c.h.b16 %v8468
    %v9798 = vunpack.c.l.b16 %v8469
    %v9799 = vunpack.c.h.b16 %v8469
    %v9800 = vunpack.c.l.b16 %v8470
    %v9801 = vunpack.c.h.b16 %v8470
    %v9802 = vunpack.c.l.b16 %v8471
    %v9803 = vunpack.c.h.b16 %v8471
    %v9804 = vunpack.c.l.b16 %v8472
    %v9805 = vunpack.c.h.b16 %v8472
    %v9806 = vunpack.c.l.b16 %v8473
    %v9807 = vunpack.c.h.b16 %v8473
    %v9808 = vunpack.c.l.b16 %v8474
    %v9809 = vunpack.c.h.b16 %v8474
    %v9810 = vunpack.c.l.b16 %v8475
    %v9811 = vunpack.c.h.b16 %v8475
    %v9812 = vunpack.c.l.b16 %v8476
    %v9813 = vunpack.c.h.b16 %v8476
    %v9814 = vunpack.c.l.b16 %v8477
    %v9815 = vunpack.c.h.b16 %v8477
    %v9816 = vunpack.c.l.b16 %v8478
    %v9817 = vunpack.c.h.b16 %v8478
    %v9818 = vunpack.c.l.b16 %v8479
    %v9819 = vunpack.c.h.b16 %v8479
    %v9820 = vunpack.c.l.b16 %v8480
    %v9821 = vunpack.c.h.b16 %v8480
    %v9822 = vunpack.c.l.b16 %v8481
    %v9823 = vunpack.c.h.b16 %v8481
    %v9824 = vunpack.c.l.b16 %v8482
    %v9825 = vunpack.c.h.b16 %v8482
    %v9826 = vunpack.c.l.b16 %v8483
    %v9827 = vunpack.c.h.b16 %v8483
    %v9828 = vunpack.c.l.b16 %v8484
    %v9829 = vunpack.c.h.b16 %v8484
    %v9830 = vunpack.c.l.b16 %v8485
    %v9831 = vunpack.c.h.b16 %v8485
    %v9832 = vunpack.c.l.b16 %v8486
    %v9833 = vunpack.c.h.b16 %v8486
    %v9834 = vunpack.c.l.b16 %v8487
    %v9835 = vunpack.c.h.b16 %v8487
    %v9836 = vunpack.c.l.b16 %v8488
    %v9837 = vunpack.c.h.b16 %v8488
    %v9838 = vunpack.c.l.b16 %v8489
    %v9839 = vunpack.c.h.b16 %v8489
    %v9840 = vunpack.c.l.b16 %v8490
    %v9841 = vunpack.c.h.b16 %v8490
    %v9842 = vunpack.c.l.b16 %v8491
    %v9843 = vunpack.c.h.b16 %v8491
    %v9844 = vunpack.c.l.b16 %v8492
    %v9845 = vunpack.c.h.b16 %v8492
    %v9846 = vunpack.c.l.b16 %v8493
    %v9847 = vunpack.c.h.b16 %v8493
    %v9848 = vunpack.c.l.b16 %v8494
    %v9849 = vunpack.c.h.b16 %v8494
    %v9850 = vunpack.c.l.b16 %v8495
    %v9851 = vunpack.c.h.b16 %v8495
    %v9852 = vunpack.c.l.b16 %v8496
    %v9853 = vunpack.c.h.b16 %v8496
    %v9854 = vunpack.c.l.b16 %v8497
    %v9855 = vunpack.c.h.b16 %v8497
    %v9856 = vunpack.c.l.b16 %v8498
    %v9857 = vunpack.c.h.b16 %v8498
    %v9858 = vunpack.c.l.b16 %v8499
    %v9859 = vunpack.c.h.b16 %v8499
    %v9860 = vunpack.c.l.b16 %v8500
    %v9861 = vunpack.c.h.b16 %v8500
    %v9862 = vunpack.c.l.b16 %v8501
    %v9863 = vunpack.c.h.b16 %v8501
    %v9864 = vunpack.c.l.b16 %v8502
    %v9865 = vunpack.c.h.b16 %v8502
    %v9866 = vunpack.c.l.b16 %v8503
    %v9867 = vunpack.c.h.b16 %v8503
    %v9868 = vunpack.c.l.b16 %v8504
    %v9869 = vunpack.c.h.b16 %v8504
    %v9870 = vunpack.c.l.b16 %v8505
    %v9871 = vunpack.c.h.b16 %v8505
    %v9872 = vunpack.c.l.b16 %v8506
    %v9873 = vunpack.c.h.b16 %v8506
    %v9874 = vunpack.c.l.b16 %v8507
    %v9875 = vunpack.c.h.b16 %v8507
    %v9876 = vunpack.c.l.b16 %v8508
    %v9877 = vunpack.c.h.b16 %v8508
    %v9878 = vunpack.c.l.b16 %v8509
    %v9879 = vunpack.c.h.b16 %v8509
    %v9880 = vunpack.c.l.b16 %v8510
    %v9881 = vunpack.c.h.b16 %v8510
    %v9882 = vunpack.c.l.b16 %v8511
    %v9883 = vunpack.c.h.b16 %v8511
    %v9884 = vunpack.c.l.b16 %v8512
    %v9885 = vunpack.c.h.b16 %v8512
    %v9886 = vunpack.c.l.b16 %v8513
    %v9887 = vunpack.c.h.b16 %v8513
    %v9888 = vunpack.c.l.b16 %v8514
    %v9889 = vunpack.c.h.b16 %v8514
    %v9890 = vunpack.c.l.b16 %v8515
    %v9891 = vunpack.c.h.b16 %v8515
    %v9892 = vunpack.c.l.b16 %v8516
    %v9893 = vunpack.c.h.b16 %v8516
    %v9894 = vunpack.c.l.b16 %v8517
    %v9895 = vunpack.c.h.b16 %v8517
    %v9896 = vunpack.c.l.b16 %v8518
    %v9897 = vunpack.c.h.b16 %v8518
    %v9898 = vunpack.c.l.b16 %v8519
    %v9899 = vunpack.c.h.b16 %v8519
    %v9900 = vunpack.c.l.b16 %v8520
    %v9901 = vunpack.c.h.b16 %v8520
    %v9902 = vunpack.c.l.b16 %v8521
    %v9903 = vunpack.c.h.b16 %v8521
    %v9904 = vunpack.c.l.b16 %v8522
    %v9905 = vunpack.c.h.b16 %v8522
    %v9906 = vunpack.c.l.b16 %v8523
    %v9907 = vunpack.c.h.b16 %v8523
    %v9908 = vunpack.c.l.b16 %v8524
    %v9909 = vunpack.c.h.b16 %v8524
    %v9910 = vunpack.c.l.b16 %v8525
    %v9911 = vunpack.c.h.b16 %v8525
    %v9912 = vunpack.c.l.b16 %v8526
    %v9913 = vunpack.c.h.b16 %v8526
    %v9914 = vunpack.c.l.b16 %v8527
    %v9915 = vunpack.c.h.b16 %v8527
    %v9916 = vunpack.c.l.b16 %v8528
    %v9917 = vunpack.c.h.b16 %v8528
    %v9918 = vunpack.c.l.b16 %v8529
    %v9919 = vunpack.c.h.b16 %v8529
    %v9920 = vunpack.c.l.b16 %v8530
    %v9921 = vunpack.c.h.b16 %v8530
    %v9922 = vunpack.c.l.b16 %v8531
    %v9923 = vunpack.c.h.b16 %v8531
    %v9924 = vunpack.c.l.b16 %v8532
    %v9925 = vunpack.c.h.b16 %v8532
    %v9926 = vunpack.c.l.b16 %v8533
    %v9927 = vunpack.c.h.b16 %v8533
    %v9928 = vunpack.c.l.b16 %v8534
    %v9929 = vunpack.c.h.b16 %v8534
    %v9930 = vunpack.c.l.b16 %v8535
    %v9931 = vunpack.c.h.b16 %v8535
    %v9932 = vunpack.c.l.b16 %v8536
    %v9933 = vunpack.c.h.b16 %v8536
    %v9934 = vunpack.c.l.b16 %v8537
    %v9935 = vunpack.c.h.b16 %v8537
    %v9936 = vunpack.c.l.b16 %v8538
    %v9937 = vunpack.c.h.b16 %v8538
    %v9938 = vunpack.c.l.b16 %v8539
    %v9939 = vunpack.c.h.b16 %v8539
    %v9940 = vunpack.c.l.b16 %v8540
    %v9941 = vunpack.c.h.b16 %v8540
    %v9942 = vunpack.c.l.b16 %v8541
    %v9943 = vunpack.c.h.b16 %v8541
    %v9944 = vunpack.c.l.b16 %v8542
    %v9945 = vunpack.c.h.b16 %v8542
    %v9946 = vunpack.c.l.b16 %v8543
    %v9947 = vunpack.c.h.b16 %v8543
    %v9948 = vunpack.c.l.b16 %v8544
    %v9949 = vunpack.c.h.b16 %v8544
    %v9950 = vunpack.c.l.b16 %v8545
    %v9951 = vunpack.c.h.b16 %v8545
    %v9952 = vunpack.c.l.b16 %v8546
    %v9953 = vunpack.c.h.b16 %v8546
    %v9954 = vunpack.c.l.b16 %v8547
    %v9955 = vunpack.c.h.b16 %v8547
    %v9956 = vunpack.c.l.b16 %v8548
    %v9957 = vunpack.c.h.b16 %v8548
    %v9958 = vunpack.c.l.b16 %v8549
    %v9959 = vunpack.c.h.b16 %v8549
    %v9960 = vunpack.c.l.b16 %v8550
    %v9961 = vunpack.c.h.b16 %v8550
    %v9962 = vunpack.c.l.b16 %v8551
    %v9963 = vunpack.c.h.b16 %v8551
    %v9964 = vunpack.c.l.b16 %v8552
    %v9965 = vunpack.c.h.b16 %v8552
    %v9966 = vunpack.c.l.b16 %v8553
    %v9967 = vunpack.c.h.b16 %v8553
    %v9968 = vunpack.c.l.b16 %v8554
    %v9969 = vunpack.c.h.b16 %v8554
    %v9970 = vunpack.c.l.b16 %v8555
    %v9971 = vunpack.c.h.b16 %v8555
    %v9972 = vunpack.c.l.b16 %v8556
    %v9973 = vunpack.c.h.b16 %v8556
    %v9974 = vunpack.c.l.b16 %v8557
    %v9975 = vunpack.c.h.b16 %v8557
    %v9976 = vunpack.c.l.b16 %v8558
    %v9977 = vunpack.c.h.b16 %v8558
    %v9978 = vunpack.c.l.b16 %v8559
    %v9979 = vunpack.c.h.b16 %v8559
    %v9980 = vunpack.c.l.b16 %v8560
    %v9981 = vunpack.c.h.b16 %v8560
    %v9982 = vunpack.c.l.b16 %v8561
    %v9983 = vunpack.c.h.b16 %v8561
    %v9984 = vunpack.c.l.b16 %v8562
    %v9985 = vunpack.c.h.b16 %v8562
    %v9986 = vunpack.c.l.b16 %v8563
    %v9987 = vunpack.c.h.b16 %v8563
    %v9988 = vunpack.c.l.b16 %v8564
    %v9989 = vunpack.c.h.b16 %v8564
    %v9990 = vunpack.c.l.b16 %v8565
    %v9991 = vunpack.c.h.b16 %v8565
    %v9992 = vunpack.c.l.b16 %v8566
    %v9993 = vunpack.c.h.b16 %v8566
    %v9994 = vunpack.c.l.b16 %v8567
    %v9995 = vunpack.c.h.b16 %v8567
    %v9996 = vunpack.c.l.b16 %v8568
    %v9997 = vunpack.c.h.b16 %v8568
    %v9998 = vunpack.c.l.b16 %v8569
    %v9999 = vunpack.c.h.b16 %v8569
    %v10000 = vunpack.c.l.b16 %v8570
    %v10001 = vunpack.c.h.b16 %v8570
    %v10002 = vunpack.c.l.b16 %v8571
    %v10003 = vunpack.c.h.b16 %v8571
    %v10004 = vunpack.c.l.b16 %v8572
    %v10005 = vunpack.c.h.b16 %v8572
    %v10006 = vunpack.c.l.b16 %v8573
    %v10007 = vunpack.c.h.b16 %v8573
    %v10008 = vunpack.c.l.b16 %v8574
    %v10009 = vunpack.c.h.b16 %v8574
    %v10010 = vunpack.c.l.b16 %v8575
    %v10011 = vunpack.c.h.b16 %v8575
    %v10012 = vunpack.c.l.b16 %v8576
    %v10013 = vunpack.c.h.b16 %v8576
    %v10014 = vunpack.c.l.b16 %v8577
    %v10015 = vunpack.c.h.b16 %v8577
    %v10016 = vunpack.c.l.b16 %v8578
    %v10017 = vunpack.c.h.b16 %v8578
    %v10018 = vunpack.c.l.b16 %v8579
    %v10019 = vunpack.c.h.b16 %v8579
    %v10020 = vunpack.c.l.b16 %v8580
    %v10021 = vunpack.c.h.b16 %v8580
    %v10022 = vunpack.c.l.b16 %v8581
    %v10023 = vunpack.c.h.b16 %v8581
    %v10024 = vunpack.c.l.b16 %v8582
    %v10025 = vunpack.c.h.b16 %v8582
    %v10026 = vunpack.c.l.b16 %v8583
    %v10027 = vunpack.c.h.b16 %v8583
    %v10028 = vunpack.c.l.b16 %v8584
    %v10029 = vunpack.c.h.b16 %v8584
    %v10030 = vunpack.c.l.b16 %v8585
    %v10031 = vunpack.c.h.b16 %v8585
    %v10032 = vunpack.c.l.b16 %v8586
    %v10033 = vunpack.c.h.b16 %v8586
    %v10034 = vunpack.c.l.b16 %v8587
    %v10035 = vunpack.c.h.b16 %v8587
    %v10036 = vunpack.c.l.b16 %v8588
    %v10037 = vunpack.c.h.b16 %v8588
    %v10038 = vunpack.c.l.b16 %v8589
    %v10039 = vunpack.c.h.b16 %v8589
    %v10040 = vunpack.c.l.b16 %v8590
    %v10041 = vunpack.c.h.b16 %v8590
    %v10042 = vunpack.c.l.b16 %v8591
    %v10043 = vunpack.c.h.b16 %v8591
    %v10044 = vunpack.c.l.b16 %v8592
    %v10045 = vunpack.c.h.b16 %v8592
    %v10046 = vunpack.c.l.b16 %v8593
    %v10047 = vunpack.c.h.b16 %v8593
    %v10048 = vunpack.c.l.b16 %v8594
    %v10049 = vunpack.c.h.b16 %v8594
    %v10050 = vunpack.c.l.b16 %v8595
    %v10051 = vunpack.c.h.b16 %v8595
    %v10052 = vunpack.c.l.b16 %v8596
    %v10053 = vunpack.c.h.b16 %v8596
    %v10054 = vunpack.c.l.b16 %v8597
    %v10055 = vunpack.c.h.b16 %v8597
    %v10056 = vunpack.c.l.b16 %v8598
    %v10057 = vunpack.c.h.b16 %v8598
    %v10058 = vunpack.c.l.b16 %v8599
    %v10059 = vunpack.c.h.b16 %v8599
    %v10060 = vunpack.c.l.b16 %v8600
    %v10061 = vunpack.c.h.b16 %v8600
    %v10062 = vunpack.c.l.b16 %v8601
    %v10063 = vunpack.c.h.b16 %v8601
    %v10064 = vunpack.c.l.b16 %v8602
    %v10065 = vunpack.c.h.b16 %v8602
    %v10066 = vunpack.c.l.b16 %v8603
    %v10067 = vunpack.c.h.b16 %v8603
    %v10068 = vunpack.c.l.b16 %v8604
    %v10069 = vunpack.c.h.b16 %v8604
    %v10070 = vunpack.c.l.b16 %v8605
    %v10071 = vunpack.c.h.b16 %v8605
    %v10072 = vunpack.c.l.b16 %v8606
    %v10073 = vunpack.c.h.b16 %v8606
    %v10074 = vunpack.c.l.b16 %v8607
    %v10075 = vunpack.c.h.b16 %v8607
    %v10076 = vunpack.c.l.b16 %v8608
    %v10077 = vunpack.c.h.b16 %v8608
    %v10078 = vunpack.c.l.b16 %v8609
    %v10079 = vunpack.c.h.b16 %v8609
    %v10080 = vunpack.c.l.b16 %v8610
    %v10081 = vunpack.c.h.b16 %v8610
    %v10082 = vunpack.c.l.b16 %v8611
    %v10083 = vunpack.c.h.b16 %v8611
    %v10084 = vunpack.c.l.b16 %v8612
    %v10085 = vunpack.c.h.b16 %v8612
    %v10086 = vunpack.c.l.b16 %v8613
    %v10087 = vunpack.c.h.b16 %v8613
    %v10088 = vunpack.c.l.b16 %v8614
    %v10089 = vunpack.c.h.b16 %v8614
    %v10090 = vunpack.c.l.b16 %v8615
    %v10091 = vunpack.c.h.b16 %v8615
    %v10092 = vunpack.c.l.b16 %v8616
    %v10093 = vunpack.c.h.b16 %v8616
    %v10094 = vunpack.c.l.b16 %v8617
    %v10095 = vunpack.c.h.b16 %v8617
    %v10096 = vunpack.c.l.b16 %v8618
    %v10097 = vunpack.c.h.b16 %v8618
    %v10098 = vunpack.c.l.b16 %v8619
    %v10099 = vunpack.c.h.b16 %v8619
    %v10100 = vunpack.c.l.b16 %v8620
    %v10101 = vunpack.c.h.b16 %v8620
    %v10102 = vunpack.c.l.b16 %v8621
    %v10103 = vunpack.c.h.b16 %v8621
    %v10104 = vunpack.c.l.b16 %v8622
    %v10105 = vunpack.c.h.b16 %v8622
    %v10106 = vunpack.c.l.b16 %v8623
    %v10107 = vunpack.c.h.b16 %v8623
    %v10108 = vunpack.c.l.b16 %v8624
    %v10109 = vunpack.c.h.b16 %v8624
    %v10110 = vunpack.c.l.b16 %v8625
    %v10111 = vunpack.c.h.b16 %v8625
    %v10112 = vunpack.c.l.b16 %v8626
    %v10113 = vunpack.c.h.b16 %v8626
    %v10114 = vunpack.c.l.b16 %v8627
    %v10115 = vunpack.c.h.b16 %v8627
    %v10116 = vunpack.c.l.b16 %v8628
    %v10117 = vunpack.c.h.b16 %v8628
    %v10118 = vunpack.c.l.b16 %v8629
    %v10119 = vunpack.c.h.b16 %v8629
    %v10120 = vunpack.c.l.b16 %v8630
    %v10121 = vunpack.c.h.b16 %v8630
    %v10122 = vunpack.c.l.b16 %v8631
    %v10123 = vunpack.c.h.b16 %v8631
    %v10124 = vunpack.c.l.b16 %v8632
    %v10125 = vunpack.c.h.b16 %v8632
    %v10126 = vunpack.c.l.b16 %v8633
    %v10127 = vunpack.c.h.b16 %v8633
    %v10128 = vunpack.c.l.b16 %v8634
    %v10129 = vunpack.c.h.b16 %v8634
    %v10130 = vunpack.c.l.b16 %v8635
    %v10131 = vunpack.c.h.b16 %v8635
    %v10132 = vunpack.c.l.b16 %v8636
    %v10133 = vunpack.c.h.b16 %v8636
    %v10134 = vunpack.c.l.b16 %v8637
    %v10135 = vunpack.c.h.b16 %v8637
    %v10136 = vunpack.c.l.b16 %v8638
    %v10137 = vunpack.c.h.b16 %v8638
    %v10138 = vunpack.c.l.b16 %v8639
    %v10139 = vunpack.c.h.b16 %v8639
    %v10140 = vunpack.c.l.b16 %v8640
    %v10141 = vunpack.c.h.b16 %v8640
    %v10142 = vunpack.c.l.b16 %v8641
    %v10143 = vunpack.c.h.b16 %v8641
    %v10144 = vunpack.c.l.b16 %v8642
    %v10145 = vunpack.c.h.b16 %v8642
    %v10146 = vunpack.c.l.b16 %v8643
    %v10147 = vunpack.c.h.b16 %v8643
    %v10148 = vunpack.c.l.b16 %v8644
    %v10149 = vunpack.c.h.b16 %v8644
    %v10150 = vunpack.c.l.b16 %v8645
    %v10151 = vunpack.c.h.b16 %v8645
    %v10152 = vunpack.c.l.b16 %v8646
    %v10153 = vunpack.c.h.b16 %v8646
    %v10154 = vunpack.c.l.b16 %v8647
    %v10155 = vunpack.c.h.b16 %v8647
    %v10156 = vunpack.c.l.b16 %v8648
    %v10157 = vunpack.c.h.b16 %v8648
    %v10158 = vunpack.c.l.b16 %v8649
    %v10159 = vunpack.c.h.b16 %v8649
    %v10160 = vunpack.c.l.b16 %v8650
    %v10161 = vunpack.c.h.b16 %v8650
    %v10162 = vunpack.c.l.b16 %v8651
    %v10163 = vunpack.c.h.b16 %v8651
    %v10164 = vunpack.c.l.b16 %v8652
    %v10165 = vunpack.c.h.b16 %v8652
    %v10166 = vunpack.c.l.b16 %v8653
    %v10167 = vunpack.c.h.b16 %v8653
    %v10168 = vunpack.c.l.b16 %v8654
    %v10169 = vunpack.c.h.b16 %v8654
    %v10170 = vunpack.c.l.b16 %v8655
    %v10171 = vunpack.c.h.b16 %v8655
    %v10172 = vunpack.c.l.b16 %v8656
    %v10173 = vunpack.c.h.b16 %v8656
    %v10174 = vunpack.c.l.b16 %v8657
    %v10175 = vunpack.c.h.b16 %v8657
    %v10176 = vunpack.c.l.b16 %v8658
    %v10177 = vunpack.c.h.b16 %v8658
    %v10178 = vunpack.c.l.b16 %v8659
    %v10179 = vunpack.c.h.b16 %v8659
    %v10180 = vunpack.c.l.b16 %v8660
    %v10181 = vunpack.c.h.b16 %v8660
    %v10182 = vunpack.c.l.b16 %v8661
    %v10183 = vunpack.c.h.b16 %v8661
    %v10184 = vunpack.c.l.b16 %v8662
    %v10185 = vunpack.c.h.b16 %v8662
    %v10186 = vunpack.c.l.b16 %v8663
    %v10187 = vunpack.c.h.b16 %v8663
    %v10188 = vunpack.c.l.b16 %v8664
    %v10189 = vunpack.c.h.b16 %v8664
    %v10190 = vunpack.c.l.b16 %v8665
    %v10191 = vunpack.c.h.b16 %v8665
    %v10192 = vunpack.c.l.b16 %v8666
    %v10193 = vunpack.c.h.b16 %v8666
    %v10194 = vunpack.c.l.b16 %v8667
    %v10195 = vunpack.c.h.b16 %v8667
    %v10196 = vunpack.c.l.b16 %v8668
    %v10197 = vunpack.c.h.b16 %v8668
    %v10198 = vunpack.c.l.b16 %v8669
    %v10199 = vunpack.c.h.b16 %v8669
    %v10200 = vunpack.c.l.b16 %v8670
    %v10201 = vunpack.c.h.b16 %v8670
    %v10202 = vunpack.c.l.b16 %v8671
    %v10203 = vunpack.c.h.b16 %v8671
    %v10204 = vunpack.c.l.b16 %v8672
    %v10205 = vunpack.c.h.b16 %v8672
    %v10206 = vunpack.c.l.b16 %v8673
    %v10207 = vunpack.c.h.b16 %v8673
    %v10208 = vunpack.c.l.b16 %v8674
    %v10209 = vunpack.c.h.b16 %v8674
    %v10210 = vunpack.c.l.b16 %v8675
    %v10211 = vunpack.c.h.b16 %v8675
    %v10212 = vunpack.c.l.b16 %v8676
    %v10213 = vunpack.c.h.b16 %v8676
    %v10214 = vunpack.c.l.b16 %v8677
    %v10215 = vunpack.c.h.b16 %v8677
    %v10216 = vunpack.c.l.b16 %v8678
    %v10217 = vunpack.c.h.b16 %v8678
    %v10218 = vunpack.c.l.b16 %v8679
    %v10219 = vunpack.c.h.b16 %v8679
    %v10220 = vunpack.c.l.b16 %v8680
    %v10221 = vunpack.c.h.b16 %v8680
    %v10222 = vunpack.c.l.b16 %v8681
    %v10223 = vunpack.c.h.b16 %v8681
    %v10224 = vunpack.c.l.b16 %v8682
    %v10225 = vunpack.c.h.b16 %v8682
    %v10226 = vunpack.c.l.b16 %v8683
    %v10227 = vunpack.c.h.b16 %v8683
    %v10228 = vunpack.c.l.b16 %v8684
    %v10229 = vunpack.c.h.b16 %v8684
    %v10230 = vunpack.c.l.b16 %v8685
    %v10231 = vunpack.c.h.b16 %v8685
    %v10232 = vunpack.c.l.b16 %v8686
    %v10233 = vunpack.c.h.b16 %v8686
    %v10234 = vunpack.c.l.b16 %v8687
    %v10235 = vunpack.c.h.b16 %v8687
    %v10236 = vunpack.c.l.b16 %v8688
    %v10237 = vunpack.c.h.b16 %v8688
    %v10238 = vunpack.c.l.b16 %v8689
    %v10239 = vunpack.c.h.b16 %v8689
    %v10240 = vunpack.c.l.b16 %v8690
    %v10241 = vunpack.c.h.b16 %v8690
    %v10242 = vunpack.c.l.b16 %v8691
    %v10243 = vunpack.c.h.b16 %v8691
    %v10244 = vunpack.c.l.b16 %v8692
    %v10245 = vunpack.c.h.b16 %v8692
    %v10246 = vunpack.c.l.b16 %v8693
    %v10247 = vunpack.c.h.b16 %v8693
    %v10248 = vunpack.c.l.b16 %v8694
    %v10249 = vunpack.c.h.b16 %v8694
    %v10250 = vunpack.c.l.b16 %v8695
    %v10251 = vunpack.c.h.b16 %v8695
    %v10252 = vunpack.c.l.b16 %v8696
    %v10253 = vunpack.c.h.b16 %v8696
    %v10254 = vunpack.c.l.b16 %v8697
    %v10255 = vunpack.c.h.b16 %v8697
    %v10256 = vunpack.c.l.b16 %v8698
    %v10257 = vunpack.c.h.b16 %v8698
    %v10258 = vunpack.c.l.b16 %v8699
    %v10259 = vunpack.c.h.b16 %v8699
    %v10260 = vunpack.c.l.b16 %v8700
    %v10261 = vunpack.c.h.b16 %v8700
    %v10262 = vunpack.c.l.b16 %v8701
    %v10263 = vunpack.c.h.b16 %v8701
    %v10264 = vunpack.c.l.b16 %v8702
    %v10265 = vunpack.c.h.b16 %v8702
    %v10266 = vunpack.c.l.b16 %v8703
    %v10267 = vunpack.c.h.b16 %v8703
    %v10268 = vunpack.c.l.b16 %v8704
    %v10269 = vunpack.c.h.b16 %v8704
    %v10270 = vunpack.c.l.b16 %v8705
    %v10271 = vunpack.c.h.b16 %v8705
    %v10272 = vunpack.c.l.b16 %v8706
    %v10273 = vunpack.c.h.b16 %v8706
    %v10274 = vunpack.c.l.b16 %v8707
    %v10275 = vunpack.c.h.b16 %v8707
    %v10276 = vunpack.c.l.b16 %v8708
    %v10277 = vunpack.c.h.b16 %v8708
    %v10278 = vunpack.c.l.b16 %v8709
    %v10279 = vunpack.c.h.b16 %v8709
    %v10280 = vunpack.c.l.b16 %v8710
    %v10281 = vunpack.c.h.b16 %v8710
    %v10282 = vunpack.c.l.b16 %v8711
    %v10283 = vunpack.c.h.b16 %v8711
    %v10284 = vunpack.c.l.b16 %v8712
    %v10285 = vunpack.c.h.b16 %v8712
    %v10286 = vunpack.c.l.b16 %v8713
    %v10287 = vunpack.c.h.b16 %v8713
    %v10288 = vunpack.c.l.b16 %v8714
    %v10289 = vunpack.c.h.b16 %v8714
    %v10290 = vunpack.c.l.b16 %v8715
    %v10291 = vunpack.c.h.b16 %v8715
    %v10292 = vunpack.c.l.b16 %v8716
    %v10293 = vunpack.c.h.b16 %v8716
    %v10294 = vunpack.c.l.b16 %v8717
    %v10295 = vunpack.c.h.b16 %v8717
    %v10296 = vunpack.c.l.b16 %v8718
    %v10297 = vunpack.c.h.b16 %v8718
    %v10298 = vunpack.c.l.b16 %v8719
    %v10299 = vunpack.c.h.b16 %v8719
    %v10300 = vunpack.c.l.b16 %v8720
    %v10301 = vunpack.c.h.b16 %v8720
    %v10302 = vpack.c.b16 %v9286, %v9278
    %v10303 = vpack.c.b16 %v9287, %v9279
    %v10304 = vpack.c.b16 %v9288, %v9280
    %v10305 = vpack.c.b16 %v9289, %v9281
    %v10306 = vpack.c.b16 %v9290, %v9282
    %v10307 = vpack.c.b16 %v9291, %v9283
    %v10308 = vpack.c.b16 %v9292, %v9284
    %v10309 = vpack.c.b16 %v9293, %v9285
    %v10310 = vpack.c.b16 %v9302, %v9294
    %v10311 = vpack.c.b16 %v9303, %v9295
    %v10312 = vpack.c.b16 %v9304, %v9296
    %v10313 = vpack.c.b16 %v9305, %v9297
    %v10314 = vpack.c.b16 %v9306, %v9298
    %v10315 = vpack.c.b16 %v9307, %v9299
    %v10316 = vpack.c.b16 %v9308, %v9300
    %v10317 = vpack.c.b16 %v9309, %v9301
    %v10318 = vpack.c.b16 %v9318, %v9310
    %v10319 = vpack.c.b16 %v9319, %v9311
    %v10320 = vpack.c.b16 %v9320, %v9312
    %v10321 = vpack.c.b16 %v9321, %v9313
    %v10322 = vpack.c.b16 %v9322, %v9314
    %v10323 = vpack.c.b16 %v9323, %v9315
    %v10324 = vpack.c.b16 %v9324, %v9316
    %v10325 = vpack.c.b16 %v9325, %v9317
    %v10326 = vpack.c.b16 %v9334, %v9326
    %v10327 = vpack.c.b16 %v9335, %v9327
    %v10328 = vpack.c.b16 %v9336, %v9328
    %v10329 = vpack.c.b16 %v9337, %v9329
    %v10330 = vpack.c.b16 %v9338, %v9330
    %v10331 = vpack.c.b16 %v9339, %v9331
    %v10332 = vpack.c.b16 %v9340, %v9332
    %v10333 = vpack.c.b16 %v9341, %v9333
    %v10334 = vpack.c.b16 %v9350, %v9342
    %v10335 = vpack.c.b16 %v9351, %v9343
    %v10336 = vpack.c.b16 %v9352, %v9344
    %v10337 = vpack.c.b16 %v9353, %v9345
    %v10338 = vpack.c.b16 %v9354, %v9346
    %v10339 = vpack.c.b16 %v9355, %v9347
    %v10340 = vpack.c.b16 %v9356, %v9348
    %v10341 = vpack.c.b16 %v9357, %v9349
    %v10342 = vpack.c.b16 %v9366, %v9358
    %v10343 = vpack.c.b16 %v9367, %v9359
    %v10344 = vpack.c.b16 %v9368, %v9360
    %v10345 = vpack.c.b16 %v9369, %v9361
    %v10346 = vpack.c.b16 %v9370, %v9362
    %v10347 = vpack.c.b16 %v9371, %v9363
    %v10348 = vpack.c.b16 %v9372, %v9364
    %v10349 = vpack.c.b16 %v9373, %v9365
    %v10350 = vpack.c.b16 %v9382, %v9374
    %v10351 = vpack.c.b16 %v9383, %v9375
    %v10352 = vpack.c.b16 %v9384, %v9376
    %v10353 = vpack.c.b16 %v9385, %v9377
    %v10354 = vpack.c.b16 %v9386, %v9378
    %v10355 = vpack.c.b16 %v9387, %v9379
    %v10356 = vpack.c.b16 %v9388, %v9380
    %v10357 = vpack.c.b16 %v9389, %v9381
    %v10358 = vpack.c.b16 %v9398, %v9390
    %v10359 = vpack.c.b16 %v9399, %v9391
    %v10360 = vpack.c.b16 %v9400, %v9392
    %v10361 = vpack.c.b16 %v9401, %v9393
    %v10362 = vpack.c.b16 %v9402, %v9394
    %v10363 = vpack.c.b16 %v9403, %v9395
    %v10364 = vpack.c.b16 %v9404, %v9396
    %v10365 = vpack.c.b16 %v9405, %v9397
    %v10366 = vpack.c.b16 %v9414, %v9406
    %v10367 = vpack.c.b16 %v9415, %v9407
    %v10368 = vpack.c.b16 %v9416, %v9408
    %v10369 = vpack.c.b16 %v9417, %v9409
    %v10370 = vpack.c.b16 %v9418, %v9410
    %v10371 = vpack.c.b16 %v9419, %v9411
    %v10372 = vpack.c.b16 %v9420, %v9412
    %v10373 = vpack.c.b16 %v9421, %v9413
    %v10374 = vpack.c.b16 %v9430, %v9422
    %v10375 = vpack.c.b16 %v9431, %v9423
    %v10376 = vpack.c.b16 %v9432, %v9424
    %v10377 = vpack.c.b16 %v9433, %v9425
    %v10378 = vpack.c.b16 %v9434, %v9426
    %v10379 = vpack.c.b16 %v9435, %v9427
    %v10380 = vpack.c.b16 %v9436, %v9428
    %v10381 = vpack.c.b16 %v9437, %v9429
    %v10382 = vpack.c.b16 %v9446, %v9438
    %v10383 = vpack.c.b16 %v9447, %v9439
    %v10384 = vpack.c.b16 %v9448, %v9440
    %v10385 = vpack.c.b16 %v9449, %v9441
    %v10386 = vpack.c.b16 %v9450, %v9442
    %v10387 = vpack.c.b16 %v9451, %v9443
    %v10388 = vpack.c.b16 %v9452, %v9444
    %v10389 = vpack.c.b16 %v9453, %v9445
    %v10390 = vpack.c.b16 %v9462, %v9454
    %v10391 = vpack.c.b16 %v9463, %v9455
    %v10392 = vpack.c.b16 %v9464, %v9456
    %v10393 = vpack.c.b16 %v9465, %v9457
    %v10394 = vpack.c.b16 %v9466, %v9458
    %v10395 = vpack.c.b16 %v9467, %v9459
    %v10396 = vpack.c.b16 %v9468, %v9460
    %v10397 = vpack.c.b16 %v9469, %v9461
    %v10398 = vpack.c.b16 %v9478, %v9470
    %v10399 = vpack.c.b16 %v9479, %v9471
    %v10400 = vpack.c.b16 %v9480, %v9472
    %v10401 = vpack.c.b16 %v9481, %v9473
    %v10402 = vpack.c.b16 %v9482, %v9474
    %v10403 = vpack.c.b16 %v9483, %v9475
    %v10404 = vpack.c.b16 %v9484, %v9476
    %v10405 = vpack.c.b16 %v9485, %v9477
    %v10406 = vpack.c.b16 %v9494, %v9486
    %v10407 = vpack.c.b16 %v9495, %v9487
    %v10408 = vpack.c.b16 %v9496, %v9488
    %v10409 = vpack.c.b16 %v9497, %v9489
    %v10410 = vpack.c.b16 %v9498, %v9490
    %v10411 = vpack.c.b16 %v9499, %v9491
    %v10412 = vpack.c.b16 %v9500, %v9492
    %v10413 = vpack.c.b16 %v9501, %v9493
    %v10414 = vpack.c.b16 %v9510, %v9502
    %v10415 = vpack.c.b16 %v9511, %v9503
    %v10416 = vpack.c.b16 %v9512, %v9504
    %v10417 = vpack.c.b16 %v9513, %v9505
    %v10418 = vpack.c.b16 %v9514, %v9506
    %v10419 = vpack.c.b16 %v9515, %v9507
    %v10420 = vpack.c.b16 %v9516, %v9508
    %v10421 = vpack.c.b16 %v9517, %v9509
    %v10422 = vpack.c.b16 %v9526, %v9518
    %v10423 = vpack.c.b16 %v9527, %v9519
    %v10424 = vpack.c.b16 %v9528, %v9520
    %v10425 = vpack.c.b16 %v9529, %v9521
    %v10426 = vpack.c.b16 %v9530, %v9522
    %v10427 = vpack.c.b16 %v9531, %v9523
    %v10428 = vpack.c.b16 %v9532, %v9524
    %v10429 = vpack.c.b16 %v9533, %v9525
    %v10430 = vpack.c.b16 %v9542, %v9534
    %v10431 = vpack.c.b16 %v9543, %v9535
    %v10432 = vpack.c.b16 %v9544, %v9536
    %v10433 = vpack.c.b16 %v9545, %v9537
    %v10434 = vpack.c.b16 %v9546, %v9538
    %v10435 = vpack.c.b16 %v9547, %v9539
    %v10436 = vpack.c.b16 %v9548, %v9540
    %v10437 = vpack.c.b16 %v9549, %v9541
    %v10438 = vpack.c.b16 %v9558, %v9550
    %v10439 = vpack.c.b16 %v9559, %v9551
    %v10440 = vpack.c.b16 %v9560, %v9552
    %v10441 = vpack.c.b16 %v9561, %v9553
    %v10442 = vpack.c.b16 %v9562, %v9554
    %v10443 = vpack.c.b16 %v9563, %v9555
    %v10444 = vpack.c.b16 %v9564, %v9556
    %v10445 = vpack.c.b16 %v9565, %v9557
    %v10446 = vpack.c.b16 %v9574, %v9566
    %v10447 = vpack.c.b16 %v9575, %v9567
    %v10448 = vpack.c.b16 %v9576, %v9568
    %v10449 = vpack.c.b16 %v9577, %v9569
    %v10450 = vpack.c.b16 %v9578, %v9570
    %v10451 = vpack.c.b16 %v9579, %v9571
    %v10452 = vpack.c.b16 %v9580, %v9572
    %v10453 = vpack.c.b16 %v9581, %v9573
    %v10454 = vpack.c.b16 %v9590, %v9582
    %v10455 = vpack.c.b16 %v9591, %v9583
    %v10456 = vpack.c.b16 %v9592, %v9584
    %v10457 = vpack.c.b16 %v9593, %v9585
    %v10458 = vpack.c.b16 %v9594, %v9586
    %v10459 = vpack.c.b16 %v9595, %v9587
    %v10460 = vpack.c.b16 %v9596, %v9588
    %v10461 = vpack.c.b16 %v9597, %v9589
    %v10462 = vpack.c.b16 %v9606, %v9598
    %v10463 = vpack.c.b16 %v9607, %v9599
    %v10464 = vpack.c.b16 %v9608, %v9600
    %v10465 = vpack.c.b16 %v9609, %v9601
    %v10466 = vpack.c.b16 %v9610, %v9602
    %v10467 = vpack.c.b16 %v9611, %v9603
    %v10468 = vpack.c.b16 %v9612, %v9604
    %v10469 = vpack.c.b16 %v9613, %v9605
    %v10470 = vpack.c.b16 %v9622, %v9614
    %v10471 = vpack.c.b16 %v9623, %v9615
    %v10472 = vpack.c.b16 %v9624, %v9616
    %v10473 = vpack.c.b16 %v9625, %v9617
    %v10474 = vpack.c.b16 %v9626, %v9618
    %v10475 = vpack.c.b16 %v9627, %v9619
    %v10476 = vpack.c.b16 %v9628, %v9620
    %v10477 = vpack.c.b16 %v9629, %v9621
    %v10478 = vpack.c.b16 %v9638, %v9630
    %v10479 = vpack.c.b16 %v9639, %v9631
    %v10480 = vpack.c.b16 %v9640, %v9632
    %v10481 = vpack.c.b16 %v9641, %v9633
    %v10482 = vpack.c.b16 %v9642, %v9634
    %v10483 = vpack.c.b16 %v9643, %v9635
    %v10484 = vpack.c.b16 %v9644, %v9636
    %v10485 = vpack.c.b16 %v9645, %v9637
    %v10486 = vpack.c.b16 %v9654, %v9646
    %v10487 = vpack.c.b16 %v9655, %v9647
    %v10488 = vpack.c.b16 %v9656, %v9648
    %v10489 = vpack.c.b16 %v9657, %v9649
    %v10490 = vpack.c.b16 %v9658, %v9650
    %v10491 = vpack.c.b16 %v9659, %v9651
    %v10492 = vpack.c.b16 %v9660, %v9652
    %v10493 = vpack.c.b16 %v9661, %v9653
    %v10494 = vpack.c.b16 %v9670, %v9662
    %v10495 = vpack.c.b16 %v9671, %v9663
    %v10496 = vpack.c.b16 %v9672, %v9664
    %v10497 = vpack.c.b16 %v9673, %v9665
    %v10498 = vpack.c.b16 %v9674, %v9666
    %v10499 = vpack.c.b16 %v9675, %v9667
    %v10500 = vpack.c.b16 %v9676, %v9668
    %v10501 = vpack.c.b16 %v9677, %v9669
    %v10502 = vpack.c.b16 %v9686, %v9678
    %v10503 = vpack.c.b16 %v9687, %v9679
    %v10504 = vpack.c.b16 %v9688, %v9680
    %v10505 = vpack.c.b16 %v9689, %v9681
    %v10506 = vpack.c.b16 %v9690, %v9682
    %v10507 = vpack.c.b16 %v9691, %v9683
    %v10508 = vpack.c.b16 %v9692, %v9684
    %v10509 = vpack.c.b16 %v9693, %v9685
    %v10510 = vpack.c.b16 %v9702, %v9694
    %v10511 = vpack.c.b16 %v9703, %v9695
    %v10512 = vpack.c.b16 %v9704, %v9696
    %v10513 = vpack.c.b16 %v9705, %v9697
    %v10514 = vpack.c.b16 %v9706, %v9698
    %v10515 = vpack.c.b16 %v9707, %v9699
    %v10516 = vpack.c.b16 %v9708, %v9700
    %v10517 = vpack.c.b16 %v9709, %v9701
    %v10518 = vpack.c.b16 %v9718, %v9710
    %v10519 = vpack.c.b16 %v9719, %v9711
    %v10520 = vpack.c.b16 %v9720, %v9712
    %v10521 = vpack.c.b16 %v9721, %v9713
    %v10522 = vpack.c.b16 %v9722, %v9714
    %v10523 = vpack.c.b16 %v9723, %v9715
    %v10524 = vpack.c.b16 %v9724, %v9716
    %v10525 = vpack.c.b16 %v9725, %v9717
    %v10526 = vpack.c.b16 %v9734, %v9726
    %v10527 = vpack.c.b16 %v9735, %v9727
    %v10528 = vpack.c.b16 %v9736, %v9728
    %v10529 = vpack.c.b16 %v9737, %v9729
    %v10530 = vpack.c.b16 %v9738, %v9730
    %v10531 = vpack.c.b16 %v9739, %v9731
    %v10532 = vpack.c.b16 %v9740, %v9732
    %v10533 = vpack.c.b16 %v9741, %v9733
    %v10534 = vpack.c.b16 %v9750, %v9742
    %v10535 = vpack.c.b16 %v9751, %v9743
    %v10536 = vpack.c.b16 %v9752, %v9744
    %v10537 = vpack.c.b16 %v9753, %v9745
    %v10538 = vpack.c.b16 %v9754, %v9746
    %v10539 = vpack.c.b16 %v9755, %v9747
    %v10540 = vpack.c.b16 %v9756, %v9748
    %v10541 = vpack.c.b16 %v9757, %v9749
    %v10542 = vpack.c.b16 %v9766, %v9758
    %v10543 = vpack.c.b16 %v9767, %v9759
    %v10544 = vpack.c.b16 %v9768, %v9760
    %v10545 = vpack.c.b16 %v9769, %v9761
    %v10546 = vpack.c.b16 %v9770, %v9762
    %v10547 = vpack.c.b16 %v9771, %v9763
    %v10548 = vpack.c.b16 %v9772, %v9764
    %v10549 = vpack.c.b16 %v9773, %v9765
    %v10550 = vpack.c.b16 %v9782, %v9774
    %v10551 = vpack.c.b16 %v9783, %v9775
    %v10552 = vpack.c.b16 %v9784, %v9776
    %v10553 = vpack.c.b16 %v9785, %v9777
    %v10554 = vpack.c.b16 %v9786, %v9778
    %v10555 = vpack.c.b16 %v9787, %v9779
    %v10556 = vpack.c.b16 %v9788, %v9780
    %v10557 = vpack.c.b16 %v9789, %v9781
    %v10558 = vpack.c.b16 %v9798, %v9790
    %v10559 = vpack.c.b16 %v9799, %v9791
    %v10560 = vpack.c.b16 %v9800, %v9792
    %v10561 = vpack.c.b16 %v9801, %v9793
    %v10562 = vpack.c.b16 %v9802, %v9794
    %v10563 = vpack.c.b16 %v9803, %v9795
    %v10564 = vpack.c.b16 %v9804, %v9796
    %v10565 = vpack.c.b16 %v9805, %v9797
    %v10566 = vpack.c.b16 %v9814, %v9806
    %v10567 = vpack.c.b16 %v9815, %v9807
    %v10568 = vpack.c.b16 %v9816, %v9808
    %v10569 = vpack.c.b16 %v9817, %v9809
    %v10570 = vpack.c.b16 %v9818, %v9810
    %v10571 = vpack.c.b16 %v9819, %v9811
    %v10572 = vpack.c.b16 %v9820, %v9812
    %v10573 = vpack.c.b16 %v9821, %v9813
    %v10574 = vpack.c.b16 %v9830, %v9822
    %v10575 = vpack.c.b16 %v9831, %v9823
    %v10576 = vpack.c.b16 %v9832, %v9824
    %v10577 = vpack.c.b16 %v9833, %v9825
    %v10578 = vpack.c.b16 %v9834, %v9826
    %v10579 = vpack.c.b16 %v9835, %v9827
    %v10580 = vpack.c.b16 %v9836, %v9828
    %v10581 = vpack.c.b16 %v9837, %v9829
    %v10582 = vpack.c.b16 %v9846, %v9838
    %v10583 = vpack.c.b16 %v9847, %v9839
    %v10584 = vpack.c.b16 %v9848, %v9840
    %v10585 = vpack.c.b16 %v9849, %v9841
    %v10586 = vpack.c.b16 %v9850, %v9842
    %v10587 = vpack.c.b16 %v9851, %v9843
    %v10588 = vpack.c.b16 %v9852, %v9844
    %v10589 = vpack.c.b16 %v9853, %v9845
    %v10590 = vpack.c.b16 %v9862, %v9854
    %v10591 = vpack.c.b16 %v9863, %v9855
    %v10592 = vpack.c.b16 %v9864, %v9856
    %v10593 = vpack.c.b16 %v9865, %v9857
    %v10594 = vpack.c.b16 %v9866, %v9858
    %v10595 = vpack.c.b16 %v9867, %v9859
    %v10596 = vpack.c.b16 %v9868, %v9860
    %v10597 = vpack.c.b16 %v9869, %v9861
    %v10598 = vpack.c.b16 %v9878, %v9870
    %v10599 = vpack.c.b16 %v9879, %v9871
    %v10600 = vpack.c.b16 %v9880, %v9872
    %v10601 = vpack.c.b16 %v9881, %v9873
    %v10602 = vpack.c.b16 %v9882, %v9874
    %v10603 = vpack.c.b16 %v9883, %v9875
    %v10604 = vpack.c.b16 %v9884, %v9876
    %v10605 = vpack.c.b16 %v9885, %v9877
    %v10606 = vpack.c.b16 %v9894, %v9886
    %v10607 = vpack.c.b16 %v9895, %v9887
    %v10608 = vpack.c.b16 %v9896, %v9888
    %v10609 = vpack.c.b16 %v9897, %v9889
    %v10610 = vpack.c.b16 %v9898, %v9890
    %v10611 = vpack.c.b16 %v9899, %v9891
    %v10612 = vpack.c.b16 %v9900, %v9892
    %v10613 = vpack.c.b16 %v9901, %v9893
    %v10614 = vpack.c.b16 %v9910, %v9902
    %v10615 = vpack.c.b16 %v9911, %v9903
    %v10616 = vpack.c.b16 %v9912, %v9904
    %v10617 = vpack.c.b16 %v9913, %v9905
    %v10618 = vpack.c.b16 %v9914, %v9906
    %v10619 = vpack.c.b16 %v9915, %v9907
    %v10620 = vpack.c.b16 %v9916, %v9908
    %v10621 = vpack.c.b16 %v9917, %v9909
    %v10622 = vpack.c.b16 %v9926, %v9918
    %v10623 = vpack.c.b16 %v9927, %v9919
    %v10624 = vpack.c.b16 %v9928, %v9920
    %v10625 = vpack.c.b16 %v9929, %v9921
    %v10626 = vpack.c.b16 %v9930, %v9922
    %v10627 = vpack.c.b16 %v9931, %v9923
    %v10628 = vpack.c.b16 %v9932, %v9924
    %v10629 = vpack.c.b16 %v9933, %v9925
    %v10630 = vpack.c.b16 %v9942, %v9934
    %v10631 = vpack.c.b16 %v9943, %v9935
    %v10632 = vpack.c.b16 %v9944, %v9936
    %v10633 = vpack.c.b16 %v9945, %v9937
    %v10634 = vpack.c.b16 %v9946, %v9938
    %v10635 = vpack.c.b16 %v9947, %v9939
    %v10636 = vpack.c.b16 %v9948, %v9940
    %v10637 = vpack.c.b16 %v9949, %v9941
    %v10638 = vpack.c.b16 %v9958, %v9950
    %v10639 = vpack.c.b16 %v9959, %v9951
    %v10640 = vpack.c.b16 %v9960, %v9952
    %v10641 = vpack.c.b16 %v9961, %v9953
    %v10642 = vpack.c.b16 %v9962, %v9954
    %v10643 = vpack.c.b16 %v9963, %v9955
    %v10644 = vpack.c.b16 %v9964, %v9956
    %v10645 = vpack.c.b16 %v9965, %v9957
    %v10646 = vpack.c.b16 %v9974, %v9966
    %v10647 = vpack.c.b16 %v9975, %v9967
    %v10648 = vpack.c.b16 %v9976, %v9968
    %v10649 = vpack.c.b16 %v9977, %v9969
    %v10650 = vpack.c.b16 %v9978, %v9970
    %v10651 = vpack.c.b16 %v9979, %v9971
    %v10652 = vpack.c.b16 %v9980, %v9972
    %v10653 = vpack.c.b16 %v9981, %v9973
    %v10654 = vpack.c.b16 %v9990, %v9982
    %v10655 = vpack.c.b16 %v9991, %v9983
    %v10656 = vpack.c.b16 %v9992, %v9984
    %v10657 = vpack.c.b16 %v9993, %v9985
    %v10658 = vpack.c.b16 %v9994, %v9986
    %v10659 = vpack.c.b16 %v9995, %v9987
    %v10660 = vpack.c.b16 %v9996, %v9988
    %v10661 = vpack.c.b16 %v9997, %v9989
    %v10662 = vpack.c.b16 %v10006, %v9998
    %v10663 = vpack.c.b16 %v10007, %v9999
    %v10664 = vpack.c.b16 %v10008, %v10000
    %v10665 = vpack.c.b16 %v10009, %v10001
    %v10666 = vpack.c.b16 %v10010, %v10002
    %v10667 = vpack.c.b16 %v10011, %v10003
    %v10668 = vpack.c.b16 %v10012, %v10004
    %v10669 = vpack.c.b16 %v10013, %v10005
    %v10670 = vpack.c.b16 %v10022, %v10014
    %v10671 = vpack.c.b16 %v10023, %v10015
    %v10672 = vpack.c.b16 %v10024, %v10016
    %v10673 = vpack.c.b16 %v10025, %v10017
    %v10674 = vpack.c.b16 %v10026, %v10018
    %v10675 = vpack.c.b16 %v10027, %v10019
    %v10676 = vpack.c.b16 %v10028, %v10020
    %v10677 = vpack.c.b16 %v10029, %v10021
    %v10678 = vpack.c.b16 %v10038, %v10030
    %v10679 = vpack.c.b16 %v10039, %v10031
    %v10680 = vpack.c.b16 %v10040, %v10032
    %v10681 = vpack.c.b16 %v10041, %v10033
    %v10682 = vpack.c.b16 %v10042, %v10034
    %v10683 = vpack.c.b16 %v10043, %v10035
    %v10684 = vpack.c.b16 %v10044, %v10036
    %v10685 = vpack.c.b16 %v10045, %v10037
    %v10686 = vpack.c.b16 %v10054, %v10046
    %v10687 = vpack.c.b16 %v10055, %v10047
    %v10688 = vpack.c.b16 %v10056, %v10048
    %v10689 = vpack.c.b16 %v10057, %v10049
    %v10690 = vpack.c.b16 %v10058, %v10050
    %v10691 = vpack.c.b16 %v10059, %v10051
    %v10692 = vpack.c.b16 %v10060, %v10052
    %v10693 = vpack.c.b16 %v10061, %v10053
    %v10694 = vpack.c.b16 %v10070, %v10062
    %v10695 = vpack.c.b16 %v10071, %v10063
    %v10696 = vpack.c.b16 %v10072, %v10064
    %v10697 = vpack.c.b16 %v10073, %v10065
    %v10698 = vpack.c.b16 %v10074, %v10066
    %v10699 = vpack.c.b16 %v10075, %v10067
    %v10700 = vpack.c.b16 %v10076, %v10068
    %v10701 = vpack.c.b16 %v10077, %v10069
    %v10702 = vpack.c.b16 %v10086, %v10078
    %v10703 = vpack.c.b16 %v10087, %v10079
    %v10704 = vpack.c.b16 %v10088, %v10080
    %v10705 = vpack.c.b16 %v10089, %v10081
    %v10706 = vpack.c.b16 %v10090, %v10082
    %v10707 = vpack.c.b16 %v10091, %v10083
    %v10708 = vpack.c.b16 %v10092, %v10084
    %v10709 = vpack.c.b16 %v10093, %v10085
    %v10710 = vpack.c.b16 %v10102, %v10094
    %v10711 = vpack.c.b16 %v10103, %v10095
    %v10712 = vpack.c.b16 %v10104, %v10096
    %v10713 = vpack.c.b16 %v10105, %v10097
    %v10714 = vpack.c.b16 %v10106, %v10098
    %v10715 = vpack.c.b16 %v10107, %v10099
    %v10716 = vpack.c.b16 %v10108, %v10100
    %v10717 = vpack.c.b16 %v10109, %v10101
    %v10718 = vpack.c.b16 %v10118, %v10110
    %v10719 = vpack.c.b16 %v10119, %v10111
    %v10720 = vpack.c.b16 %v10120, %v10112
    %v10721 = vpack.c.b16 %v10121, %v10113
    %v10722 = vpack.c.b16 %v10122, %v10114
    %v10723 = vpack.c.b16 %v10123, %v10115
    %v10724 = vpack.c.b16 %v10124, %v10116
    %v10725 = vpack.c.b16 %v10125, %v10117
    %v10726 = vpack.c.b16 %v10134, %v10126
    %v10727 = vpack.c.b16 %v10135, %v10127
    %v10728 = vpack.c.b16 %v10136, %v10128
    %v10729 = vpack.c.b16 %v10137, %v10129
    %v10730 = vpack.c.b16 %v10138, %v10130
    %v10731 = vpack.c.b16 %v10139, %v10131
    %v10732 = vpack.c.b16 %v10140, %v10132
    %v10733 = vpack.c.b16 %v10141, %v10133
    %v10734 = vpack.c.b16 %v10150, %v10142
    %v10735 = vpack.c.b16 %v10151, %v10143
    %v10736 = vpack.c.b16 %v10152, %v10144
    %v10737 = vpack.c.b16 %v10153, %v10145
    %v10738 = vpack.c.b16 %v10154, %v10146
    %v10739 = vpack.c.b16 %v10155, %v10147
    %v10740 = vpack.c.b16 %v10156, %v10148
    %v10741 = vpack.c.b16 %v10157, %v10149
    %v10742 = vpack.c.b16 %v10166, %v10158
    %v10743 = vpack.c.b16 %v10167, %v10159
    %v10744 = vpack.c.b16 %v10168, %v10160
    %v10745 = vpack.c.b16 %v10169, %v10161
    %v10746 = vpack.c.b16 %v10170, %v10162
    %v10747 = vpack.c.b16 %v10171, %v10163
    %v10748 = vpack.c.b16 %v10172, %v10164
    %v10749 = vpack.c.b16 %v10173, %v10165
    %v10750 = vpack.c.b16 %v10182, %v10174
    %v10751 = vpack.c.b16 %v10183, %v10175
    %v10752 = vpack.c.b16 %v10184, %v10176
    %v10753 = vpack.c.b16 %v10185, %v10177
    %v10754 = vpack.c.b16 %v10186, %v10178
    %v10755 = vpack.c.b16 %v10187, %v10179
    %v10756 = vpack.c.b16 %v10188, %v10180
    %v10757 = vpack.c.b16 %v10189, %v10181
    %v10758 = vpack.c.b16 %v10198, %v10190
    %v10759 = vpack.c.b16 %v10199, %v10191
    %v10760 = vpack.c.b16 %v10200, %v10192
    %v10761 = vpack.c.b16 %v10201, %v10193
    %v10762 = vpack.c.b16 %v10202, %v10194
    %v10763 = vpack.c.b16 %v10203, %v10195
    %v10764 = vpack.c.b16 %v10204, %v10196
    %v10765 = vpack.c.b16 %v10205, %v10197
    %v10766 = vpack.c.b16 %v10214, %v10206
    %v10767 = vpack.c.b16 %v10215, %v10207
    %v10768 = vpack.c.b16 %v10216, %v10208
    %v10769 = vpack.c.b16 %v10217, %v10209
    %v10770 = vpack.c.b16 %v10218, %v10210
    %v10771 = vpack.c.b16 %v10219, %v10211
    %v10772 = vpack.c.b16 %v10220, %v10212
    %v10773 = vpack.c.b16 %v10221, %v10213
    %v10774 = vpack.c.b16 %v10230, %v10222
    %v10775 = vpack.c.b16 %v10231, %v10223
    %v10776 = vpack.c.b16 %v10232, %v10224
    %v10777 = vpack.c.b16 %v10233, %v10225
    %v10778 = vpack.c.b16 %v10234, %v10226
    %v10779 = vpack.c.b16 %v10235, %v10227
    %v10780 = vpack.c.b16 %v10236, %v10228
    %v10781 = vpack.c.b16 %v10237, %v10229
    %v10782 = vpack.c.b16 %v10246, %v10238
    %v10783 = vpack.c.b16 %v10247, %v10239
    %v10784 = vpack.c.b16 %v10248, %v10240
    %v10785 = vpack.c.b16 %v10249, %v10241
    %v10786 = vpack.c.b16 %v10250, %v10242
    %v10787 = vpack.c.b16 %v10251, %v10243
    %v10788 = vpack.c.b16 %v10252, %v10244
    %v10789 = vpack.c.b16 %v10253, %v10245
    %v10790 = vpack.c.b16 %v10262, %v10254
    %v10791 = vpack.c.b16 %v10263, %v10255
    %v10792 = vpack.c.b16 %v10264, %v10256
    %v10793 = vpack.c.b16 %v10265, %v10257
    %v10794 = vpack.c.b16 %v10266, %v10258
    %v10795 = vpack.c.b16 %v10267, %v10259
    %v10796 = vpack.c.b16 %v10268, %v10260
    %v10797 = vpack.c.b16 %v10269, %v10261
    %v10798 = vpack.c.b16 %v10278, %v10270
    %v10799 = vpack.c.b16 %v10279, %v10271
    %v10800 = vpack.c.b16 %v10280, %v10272
    %v10801 = vpack.c.b16 %v10281, %v10273
    %v10802 = vpack.c.b16 %v10282, %v10274
    %v10803 = vpack.c.b16 %v10283, %v10275
    %v10804 = vpack.c.b16 %v10284, %v10276
    %v10805 = vpack.c.b16 %v10285, %v10277
    %v10806 = vpack.c.b16 %v10294, %v10286
    %v10807 = vpack.c.b16 %v10295, %v10287
    %v10808 = vpack.c.b16 %v10296, %v10288
    %v10809 = vpack.c.b16 %v10297, %v10289
    %v10810 = vpack.c.b16 %v10298, %v10290
    %v10811 = vpack.c.b16 %v10299, %v10291
    %v10812 = vpack.c.b16 %v10300, %v10292
    %v10813 = vpack.c.b16 %v10301, %v10293
    %11326 = vmatprep.subr.bf16.mxu0 %v10303
    %11327 = vmatpush1.bf16.msra.mxu0 %v10302
    %11328 = vmatprep.subr.bf16.mxu0 %v10311
    %11329 = vmatpush1.bf16.msra.mxu0 %v10310
    %11330 = vmatprep.subr.bf16.mxu0 %v10319
    %11331 = vmatpush1.bf16.msra.mxu0 %v10318
    %11332 = vmatprep.subr.bf16.mxu0 %v10327
    %11333 = vmatpush1.bf16.msra.mxu0 %v10326
    %11334 = vmatprep.subr.bf16.mxu0 %v10335
    %11335 = vmatpush1.bf16.msra.mxu0 %v10334
    %11336 = vmatprep.subr.bf16.mxu0 %v10343
    %11337 = vmatpush1.bf16.msra.mxu0 %v10342
    %11338 = vmatprep.subr.bf16.mxu0 %v10351
    %11339 = vmatpush1.bf16.msra.mxu0 %v10350
    %11340 = vmatprep.subr.bf16.mxu0 %v10359
    %11341 = vmatpush1.bf16.msra.mxu0 %v10358
    %11342 = vmatprep.subr.bf16.mxu0 %v10367
    %11343 = vmatpush1.bf16.msra.mxu0 %v10366
    %11344 = vmatprep.subr.bf16.mxu0 %v10375
    %11345 = vmatpush1.bf16.msra.mxu0 %v10374
    %11346 = vmatprep.subr.bf16.mxu0 %v10383
    %11347 = vmatpush1.bf16.msra.mxu0 %v10382
    %11348 = vmatprep.subr.bf16.mxu0 %v10391
    %11349 = vmatpush1.bf16.msra.mxu0 %v10390
    %11350 = vmatprep.subr.bf16.mxu0 %v10399
    %11351 = vmatpush1.bf16.msra.mxu0 %v10398
    %11352 = vmatprep.subr.bf16.mxu0 %v10407
    %11353 = vmatpush1.bf16.msra.mxu0 %v10406
    %11354 = vmatprep.subr.bf16.mxu0 %v10415
    %11355 = vmatpush1.bf16.msra.mxu0 %v10414
    %11356 = vmatprep.subr.bf16.mxu0 %v10423
    %11357 = vmatpush1.bf16.msra.mxu0 %v10422
    %11358 = vmatprep.mubr.bf16.mxu0 %v8202
    %11359 = vmatmul.mubr.bf16.gmra.mrb[0].mxu0 %v8201
    %v11360 = vpop.f32.mrb[0].mxu0
    %v11361 = vadd.f32 %v8729, %v11360
    %v11362 = vpop.f32.mrb[0].mxu0
    %v11363 = vadd.f32 %v8733, %v11362
    %v11364 = vpop.f32.mrb[0].mxu0
    %v11365 = vadd.f32 %v8729, %v11364
    %v11366 = vpop.f32.mrb[0].mxu0
    %v11367 = vadd.f32 %v8733, %v11366
    %11368 = vdwg.mxu0
    %11369 = vmatprep.subr.bf16.mxu0 %v10431
    %11370 = vmatpush1.bf16.msra.mxu0 %v10430
    %11371 = vmatprep.subr.bf16.mxu0 %v10439
    %11372 = vmatpush1.bf16.msra.mxu0 %v10438
    %11373 = vmatprep.subr.bf16.mxu0 %v10447
    %11374 = vmatpush1.bf16.msra.mxu0 %v10446
    %11375 = vmatprep.subr.bf16.mxu0 %v10455
    %11376 = vmatpush1.bf16.msra.mxu0 %v10454
    %11377 = vmatprep.subr.bf16.mxu0 %v10463
    %11378 = vmatpush1.bf16.msra.mxu0 %v10462
    %11379 = vmatprep.subr.bf16.mxu0 %v10471
    %11380 = vmatpush1.bf16.msra.mxu0 %v10470
    %11381 = vmatprep.subr.bf16.mxu0 %v10479
    %11382 = vmatpush1.bf16.msra.mxu0 %v10478
    %11383 = vmatprep.subr.bf16.mxu0 %v10487
    %11384 = vmatpush1.bf16.msra.mxu0 %v10486
    %11385 = vmatprep.subr.bf16.mxu0 %v10495
    %11386 = vmatpush1.bf16.msra.mxu0 %v10494
    %11387 = vmatprep.subr.bf16.mxu0 %v10503
    %11388 = vmatpush1.bf16.msra.mxu0 %v10502
    %11389 = vmatprep.subr.bf16.mxu0 %v10511
    %11390 = vmatpush1.bf16.msra.mxu0 %v10510
    %11391 = vmatprep.subr.bf16.mxu0 %v10519
    %11392 = vmatpush1.bf16.msra.mxu0 %v10518
    %11393 = vmatprep.subr.bf16.mxu0 %v10527
    %11394 = vmatpush1.bf16.msra.mxu0 %v10526
    %11395 = vmatprep.subr.bf16.mxu0 %v10535
    %11396 = vmatpush1.bf16.msra.mxu0 %v10534
    %11397 = vmatprep.subr.bf16.mxu0 %v10543
    %11398 = vmatpush1.bf16.msra.mxu0 %v10542
    %11399 = vmatprep.subr.bf16.mxu0 %v10551
    %11400 = vmatpush1.bf16.msra.mxu0 %v10550
    %11401 = vmatprep.mubr.bf16.mxu0 %v8204
    %11402 = vmatmul.mubr.bf16.gmra.mrb[0].mxu0 %v8203
    %v11403 = vpop.f32.mrb[0].mxu0
    %v11404 = vadd.f32 %v11361, %v11403
    %v11405 = vpop.f32.mrb[0].mxu0
    %v11406 = vadd.f32 %v11363, %v11405
    %v11407 = vpop.f32.mrb[0].mxu0
    %v11408 = vadd.f32 %v11365, %v11407
    %v11409 = vpop.f32.mrb[0].mxu0
    %v11410 = vadd.f32 %v11367, %v11409
    %11411 = vdwg.mxu0
    %11412 = vmatprep.subr.bf16.mxu0 %v10559
    %11413 = vmatpush1.bf16.msra.mxu0 %v10558
    %11414 = vmatprep.subr.bf16.mxu0 %v10567
    %11415 = vmatpush1.bf16.msra.mxu0 %v10566
    %11416 = vmatprep.subr.bf16.mxu0 %v10575
    %11417 = vmatpush1.bf16.msra.mxu0 %v10574
    %11418 = vmatprep.subr.bf16.mxu0 %v10583
    %11419 = vmatpush1.bf16.msra.mxu0 %v10582
    %11420 = vmatprep.subr.bf16.mxu0 %v10591
    %11421 = vmatpush1.bf16.msra.mxu0 %v10590
    %11422 = vmatprep.subr.bf16.mxu0 %v10599
    %11423 = vmatpush1.bf16.msra.mxu0 %v10598
    %11424 = vmatprep.subr.bf16.mxu0 %v10607
    %11425 = vmatpush1.bf16.msra.mxu0 %v10606
    %11426 = vmatprep.subr.bf16.mxu0 %v10615
    %11427 = vmatpush1.bf16.msra.mxu0 %v10614
    %11428 = vmatprep.subr.bf16.mxu0 %v10623
    %11429 = vmatpush1.bf16.msra.mxu0 %v10622
    %11430 = vmatprep.subr.bf16.mxu0 %v10631
    %11431 = vmatpush1.bf16.msra.mxu0 %v10630
    %11432 = vmatprep.subr.bf16.mxu0 %v10639
    %11433 = vmatpush1.bf16.msra.mxu0 %v10638
    %11434 = vmatprep.subr.bf16.mxu0 %v10647
    %11435 = vmatpush1.bf16.msra.mxu0 %v10646
    %11436 = vmatprep.subr.bf16.mxu0 %v10655
    %11437 = vmatpush1.bf16.msra.mxu0 %v10654
    %11438 = vmatprep.subr.bf16.mxu0 %v10663
    %11439 = vmatpush1.bf16.msra.mxu0 %v10662
    %11440 = vmatprep.subr.bf16.mxu0 %v10671
    %11441 = vmatpush1.bf16.msra.mxu0 %v10670
    %11442 = vmatprep.subr.bf16.mxu0 %v10679
    %11443 = vmatpush1.bf16.msra.mxu0 %v10678
    %11444 = vmatprep.mubr.bf16.mxu0 %v8206
    %11445 = vmatmul.mubr.bf16.gmra.mrb[0].mxu0 %v8205
    %v11446 = vpop.f32.mrb[0].mxu0
    %v11447 = vadd.f32 %v11404, %v11446
    %v11448 = vpop.f32.mrb[0].mxu0
    %v11449 = vadd.f32 %v11406, %v11448
    %v11450 = vpop.f32.mrb[0].mxu0
    %v11451 = vadd.f32 %v11408, %v11450
    %v11452 = vpop.f32.mrb[0].mxu0
    %v11453 = vadd.f32 %v11410, %v11452
    %11454 = vdwg.mxu0
    %11455 = vmatprep.subr.bf16.mxu0 %v10687
    %11456 = vmatpush1.bf16.msra.mxu0 %v10686
    %11457 = vmatprep.subr.bf16.mxu0 %v10695
    %11458 = vmatpush1.bf16.msra.mxu0 %v10694
    %11459 = vmatprep.subr.bf16.mxu0 %v10703
    %11460 = vmatpush1.bf16.msra.mxu0 %v10702
    %11461 = vmatprep.subr.bf16.mxu0 %v10711
    %11462 = vmatpush1.bf16.msra.mxu0 %v10710
    %11463 = vmatprep.subr.bf16.mxu0 %v10719
    %11464 = vmatpush1.bf16.msra.mxu0 %v10718
    %11465 = vmatprep.subr.bf16.mxu0 %v10727
    %11466 = vmatpush1.bf16.msra.mxu0 %v10726
    %11467 = vmatprep.subr.bf16.mxu0 %v10735
    %11468 = vmatpush1.bf16.msra.mxu0 %v10734
    %11469 = vmatprep.subr.bf16.mxu0 %v10743
    %11470 = vmatpush1.bf16.msra.mxu0 %v10742
    %11471 = vmatprep.subr.bf16.mxu0 %v10751
    %11472 = vmatpush1.bf16.msra.mxu0 %v10750
    %11473 = vmatprep.subr.bf16.mxu0 %v10759
    %11474 = vmatpush1.bf16.msra.mxu0 %v10758
    %11475 = vmatprep.subr.bf16.mxu0 %v10767
    %11476 = vmatpush1.bf16.msra.mxu0 %v10766
    %11477 = vmatprep.subr.bf16.mxu0 %v10775
    %11478 = vmatpush1.bf16.msra.mxu0 %v10774
    %11479 = vmatprep.subr.bf16.mxu0 %v10783
    %11480 = vmatpush1.bf16.msra.mxu0 %v10782
    %11481 = vmatprep.subr.bf16.mxu0 %v10791
    %11482 = vmatpush1.bf16.msra.mxu0 %v10790
    %11483 = vmatprep.subr.bf16.mxu0 %v10799
    %11484 = vmatpush1.bf16.msra.mxu0 %v10798
    %11485 = vmatprep.subr.bf16.mxu0 %v10807
    %11486 = vmatpush1.bf16.msra.mxu0 %v10806
    %11487 = vmatprep.mubr.bf16.mxu0 %v8208
    %11488 = vmatmul.mubr.bf16.gmra.mrb[0].mxu0 %v8207
    %v11489 = vpop.f32.mrb[0].mxu0
    %v11490 = vadd.f32 %v11447, %v11489
    %v11491 = vpop.f32.mrb[0].mxu0
    %v11492 = vadd.f32 %v11449, %v11491
    %v11493 = vpop.f32.mrb[0].mxu0
    %v11494 = vadd.f32 %v11451, %v11493
    %v11495 = vpop.f32.mrb[0].mxu0
    %v11496 = vadd.f32 %v11453, %v11495
    %11497 = vdwg.mxu0
    %11498 = vmatprep.subr.bf16.mxu0 %v10305
    %11499 = vmatpush1.bf16.msra.mxu0 %v10304
    %11500 = vmatprep.subr.bf16.mxu0 %v10313
    %11501 = vmatpush1.bf16.msra.mxu0 %v10312
    %11502 = vmatprep.subr.bf16.mxu0 %v10321
    %11503 = vmatpush1.bf16.msra.mxu0 %v10320
    %11504 = vmatprep.subr.bf16.mxu0 %v10329
    %11505 = vmatpush1.bf16.msra.mxu0 %v10328
    %11506 = vmatprep.subr.bf16.mxu0 %v10337
    %11507 = vmatpush1.bf16.msra.mxu0 %v10336
    %11508 = vmatprep.subr.bf16.mxu0 %v10345
    %11509 = vmatpush1.bf16.msra.mxu0 %v10344
    %11510 = vmatprep.subr.bf16.mxu0 %v10353
    %11511 = vmatpush1.bf16.msra.mxu0 %v10352
    %11512 = vmatprep.subr.bf16.mxu0 %v10361
    %11513 = vmatpush1.bf16.msra.mxu0 %v10360
    %11514 = vmatprep.subr.bf16.mxu0 %v10369
    %11515 = vmatpush1.bf16.msra.mxu0 %v10368
    %11516 = vmatprep.subr.bf16.mxu0 %v10377
    %11517 = vmatpush1.bf16.msra.mxu0 %v10376
    %11518 = vmatprep.subr.bf16.mxu0 %v10385
    %11519 = vmatpush1.bf16.msra.mxu0 %v10384
    %11520 = vmatprep.subr.bf16.mxu0 %v10393
    %11521 = vmatpush1.bf16.msra.mxu0 %v10392
    %11522 = vmatprep.subr.bf16.mxu0 %v10401
    %11523 = vmatpush1.bf16.msra.mxu0 %v10400
    %11524 = vmatprep.subr.bf16.mxu0 %v10409
    %11525 = vmatpush1.bf16.msra.mxu0 %v10408
    %11526 = vmatprep.subr.bf16.mxu0 %v10417
    %11527 = vmatpush1.bf16.msra.mxu0 %v10416
    %11528 = vmatprep.subr.bf16.mxu0 %v10425
    %11529 = vmatpush1.bf16.msra.mxu0 %v10424
    %11530 = vmatprep.mubr.bf16.mxu0 %v8202
    %11531 = vmatmul.mubr.bf16.gmra.mrb[0].mxu0 %v8201
    %v11532 = vpop.f32.mrb[0].mxu0
    %v11533 = vadd.f32 %v8737, %v11532
    %v11534 = vpop.f32.mrb[0].mxu0
    %v11535 = vadd.f32 %v8741, %v11534
    %v11536 = vpop.f32.mrb[0].mxu0
    %v11537 = vadd.f32 %v8737, %v11536
    %v11538 = vpop.f32.mrb[0].mxu0
    %v11539 = vadd.f32 %v8741, %v11538
    %11540 = vdwg.mxu0
    %11541 = vmatprep.subr.bf16.mxu0 %v10433
    %11542 = vmatpush1.bf16.msra.mxu0 %v10432
    %11543 = vmatprep.subr.bf16.mxu0 %v10441
    %11544 = vmatpush1.bf16.msra.mxu0 %v10440
    %11545 = vmatprep.subr.bf16.mxu0 %v10449
    %11546 = vmatpush1.bf16.msra.mxu0 %v10448
    %11547 = vmatprep.subr.bf16.mxu0 %v10457
    %11548 = vmatpush1.bf16.msra.mxu0 %v10456
    %11549 = vmatprep.subr.bf16.mxu0 %v10465
    %11550 = vmatpush1.bf16.msra.mxu0 %v10464
    %11551 = vmatprep.subr.bf16.mxu0 %v10473
    %11552 = vmatpush1.bf16.msra.mxu0 %v10472
    %11553 = vmatprep.subr.bf16.mxu0 %v10481
    %11554 = vmatpush1.bf16.msra.mxu0 %v10480
    %11555 = vmatprep.subr.bf16.mxu0 %v10489
    %11556 = vmatpush1.bf16.msra.mxu0 %v10488
    %11557 = vmatprep.subr.bf16.mxu0 %v10497
    %11558 = vmatpush1.bf16.msra.mxu0 %v10496
    %11559 = vmatprep.subr.bf16.mxu0 %v10505
    %11560 = vmatpush1.bf16.msra.mxu0 %v10504
    %11561 = vmatprep.subr.bf16.mxu0 %v10513
    %11562 = vmatpush1.bf16.msra.mxu0 %v10512
    %11563 = vmatprep.subr.bf16.mxu0 %v10521
    %11564 = vmatpush1.bf16.msra.mxu0 %v10520
    %11565 = vmatprep.subr.bf16.mxu0 %v10529
    %11566 = vmatpush1.bf16.msra.mxu0 %v10528
    %11567 = vmatprep.subr.bf16.mxu0 %v10537
    %11568 = vmatpush1.bf16.msra.mxu0 %v10536
    %11569 = vmatprep.subr.bf16.mxu0 %v10545
    %11570 = vmatpush1.bf16.msra.mxu0 %v10544
    %11571 = vmatprep.subr.bf16.mxu0 %v10553
    %11572 = vmatpush1.bf16.msra.mxu0 %v10552
    %11573 = vmatprep.mubr.bf16.mxu0 %v8204
    %11574 = vmatmul.mubr.bf16.gmra.mrb[0].mxu0 %v8203
    %v11575 = vpop.f32.mrb[0].mxu0
    %v11576 = vadd.f32 %v11533, %v11575
    %v11577 = vpop.f32.mrb[0].mxu0
    %v11578 = vadd.f32 %v11535, %v11577
    %v11579 = vpop.f32.mrb[0].mxu0
    %v11580 = vadd.f32 %v11537, %v11579
    %v11581 = vpop.f32.mrb[0].mxu0
    %v11582 = vadd.f32 %v11539, %v11581
    %11583 = vdwg.mxu0
    %11584 = vmatprep.subr.bf16.mxu0 %v10561
    %11585 = vmatpush1.bf16.msra.mxu0 %v10560
    %11586 = vmatprep.subr.bf16.mxu0 %v10569
    %11587 = vmatpush1.bf16.msra.mxu0 %v10568
    %11588 = vmatprep.subr.bf16.mxu0 %v10577
    %11589 = vmatpush1.bf16.msra.mxu0 %v10576
    %11590 = vmatprep.subr.bf16.mxu0 %v10585
    %11591 = vmatpush1.bf16.msra.mxu0 %v10584
    %11592 = vmatprep.subr.bf16.mxu0 %v10593
    %11593 = vmatpush1.bf16.msra.mxu0 %v10592
    %11594 = vmatprep.subr.bf16.mxu0 %v10601
    %11595 = vmatpush1.bf16.msra.mxu0 %v10600
    %11596 = vmatprep.subr.bf16.mxu0 %v10609
    %11597 = vmatpush1.bf16.msra.mxu0 %v10608
    %11598 = vmatprep.subr.bf16.mxu0 %v10617
    %11599 = vmatpush1.bf16.msra.mxu0 %v10616
    %11600 = vmatprep.subr.bf16.mxu0 %v10625
    %11601 = vmatpush1.bf16.msra.mxu0 %v10624
    %11602 = vmatprep.subr.bf16.mxu0 %v10633
    %11603 = vmatpush1.bf16.msra.mxu0 %v10632
    %11604 = vmatprep.subr.bf16.mxu0 %v10641
    %11605 = vmatpush1.bf16.msra.mxu0 %v10640
    %11606 = vmatprep.subr.bf16.mxu0 %v10649
    %11607 = vmatpush1.bf16.msra.mxu0 %v10648
    %11608 = vmatprep.subr.bf16.mxu0 %v10657
    %11609 = vmatpush1.bf16.msra.mxu0 %v10656
    %11610 = vmatprep.subr.bf16.mxu0 %v10665
    %11611 = vmatpush1.bf16.msra.mxu0 %v10664
    %11612 = vmatprep.subr.bf16.mxu0 %v10673
    %11613 = vmatpush1.bf16.msra.mxu0 %v10672
    %11614 = vmatprep.subr.bf16.mxu0 %v10681
    %11615 = vmatpush1.bf16.msra.mxu0 %v10680
    %11616 = vmatprep.mubr.bf16.mxu0 %v8206
    %11617 = vmatmul.mubr.bf16.gmra.mrb[0].mxu0 %v8205
    %v11618 = vpop.f32.mrb[0].mxu0
    %v11619 = vadd.f32 %v11576, %v11618
    %v11620 = vpop.f32.mrb[0].mxu0
    %v11621 = vadd.f32 %v11578, %v11620
    %v11622 = vpop.f32.mrb[0].mxu0
    %v11623 = vadd.f32 %v11580, %v11622
    %v11624 = vpop.f32.mrb[0].mxu0
    %v11625 = vadd.f32 %v11582, %v11624
    %11626 = vdwg.mxu0
    %11627 = vmatprep.subr.bf16.mxu0 %v10689
    %11628 = vmatpush1.bf16.msra.mxu0 %v10688
    %11629 = vmatprep.subr.bf16.mxu0 %v10697
    %11630 = vmatpush1.bf16.msra.mxu0 %v10696
    %11631 = vmatprep.subr.bf16.mxu0 %v10705
    %11632 = vmatpush1.bf16.msra.mxu0 %v10704
    %11633 = vmatprep.subr.bf16.mxu0 %v10713
    %11634 = vmatpush1.bf16.msra.mxu0 %v10712
    %11635 = vmatprep.subr.bf16.mxu0 %v10721
    %11636 = vmatpush1.bf16.msra.mxu0 %v10720
    %11637 = vmatprep.subr.bf16.mxu0 %v10729
    %11638 = vmatpush1.bf16.msra.mxu0 %v10728
    %11639 = vmatprep.subr.bf16.mxu0 %v10737
    %11640 = vmatpush1.bf16.msra.mxu0 %v10736
    %11641 = vmatprep.subr.bf16.mxu0 %v10745
    %11642 = vmatpush1.bf16.msra.mxu0 %v10744
    %11643 = vmatprep.subr.bf16.mxu0 %v10753
    %11644 = vmatpush1.bf16.msra.mxu0 %v10752
    %11645 = vmatprep.subr.bf16.mxu0 %v10761
    %11646 = vmatpush1.bf16.msra.mxu0 %v10760
    %11647 = vmatprep.subr.bf16.mxu0 %v10769
    %11648 = vmatpush1.bf16.msra.mxu0 %v10768
    %11649 = vmatprep.subr.bf16.mxu0 %v10777
    %11650 = vmatpush1.bf16.msra.mxu0 %v10776
    %11651 = vmatprep.subr.bf16.mxu0 %v10785
    %11652 = vmatpush1.bf16.msra.mxu0 %v10784
    %11653 = vmatprep.subr.bf16.mxu0 %v10793
    %11654 = vmatpush1.bf16.msra.mxu0 %v10792
    %11655 = vmatprep.subr.bf16.mxu0 %v10801
    %11656 = vmatpush1.bf16.msra.mxu0 %v10800
    %11657 = vmatprep.subr.bf16.mxu0 %v10809
    %11658 = vmatpush1.bf16.msra.mxu0 %v10808
    %11659 = vmatprep.mubr.bf16.mxu0 %v8208
    %11660 = vmatmul.mubr.bf16.gmra.mrb[0].mxu0 %v8207
    %v11661 = vpop.f32.mrb[0].mxu0
    %v11662 = vadd.f32 %v11619, %v11661
    %v11663 = vpop.f32.mrb[0].mxu0
    %v11664 = vadd.f32 %v11621, %v11663
    %v11665 = vpop.f32.mrb[0].mxu0
    %v11666 = vadd.f32 %v11623, %v11665
    %v11667 = vpop.f32.mrb[0].mxu0
    %v11668 = vadd.f32 %v11625, %v11667
    %11669 = vdwg.mxu0
    %11670 = vmatprep.subr.bf16.mxu0 %v10307
    %11671 = vmatpush1.bf16.msra.mxu0 %v10306
    %11672 = vmatprep.subr.bf16.mxu0 %v10315
    %11673 = vmatpush1.bf16.msra.mxu0 %v10314
    %11674 = vmatprep.subr.bf16.mxu0 %v10323
    %11675 = vmatpush1.bf16.msra.mxu0 %v10322
    %11676 = vmatprep.subr.bf16.mxu0 %v10331
    %11677 = vmatpush1.bf16.msra.mxu0 %v10330
    %11678 = vmatprep.subr.bf16.mxu0 %v10339
    %11679 = vmatpush1.bf16.msra.mxu0 %v10338
    %11680 = vmatprep.subr.bf16.mxu0 %v10347
    %11681 = vmatpush1.bf16.msra.mxu0 %v10346
    %11682 = vmatprep.subr.bf16.mxu0 %v10355
    %11683 = vmatpush1.bf16.msra.mxu0 %v10354
    %11684 = vmatprep.subr.bf16.mxu0 %v10363
    %11685 = vmatpush1.bf16.msra.mxu0 %v10362
    %11686 = vmatprep.subr.bf16.mxu0 %v10371
    %11687 = vmatpush1.bf16.msra.mxu0 %v10370
    %11688 = vmatprep.subr.bf16.mxu0 %v10379
    %11689 = vmatpush1.bf16.msra.mxu0 %v10378
    %11690 = vmatprep.subr.bf16.mxu0 %v10387
    %11691 = vmatpush1.bf16.msra.mxu0 %v10386
    %11692 = vmatprep.subr.bf16.mxu0 %v10395
    %11693 = vmatpush1.bf16.msra.mxu0 %v10394
    %11694 = vmatprep.subr.bf16.mxu0 %v10403
    %11695 = vmatpush1.bf16.msra.mxu0 %v10402
    %11696 = vmatprep.subr.bf16.mxu0 %v10411
    %11697 = vmatpush1.bf16.msra.mxu0 %v10410
    %11698 = vmatprep.subr.bf16.mxu0 %v10419
    %11699 = vmatpush1.bf16.msra.mxu0 %v10418
    %11700 = vmatprep.subr.bf16.mxu0 %v10427
    %11701 = vmatpush1.bf16.msra.mxu0 %v10426
    %11702 = vmatprep.mubr.bf16.mxu0 %v8202
    %11703 = vmatmul.mubr.bf16.gmra.mrb[0].mxu0 %v8201
    %v11704 = vpop.f32.mrb[0].mxu0
    %v11705 = vadd.f32 %v8745, %v11704
    %v11706 = vpop.f32.mrb[0].mxu0
    %v11707 = vadd.f32 %v8749, %v11706
    %v11708 = vpop.f32.mrb[0].mxu0
    %v11709 = vadd.f32 %v8745, %v11708
    %v11710 = vpop.f32.mrb[0].mxu0
    %v11711 = vadd.f32 %v8749, %v11710
    %11712 = vdwg.mxu0
    %11713 = vmatprep.subr.bf16.mxu0 %v10435
    %11714 = vmatpush1.bf16.msra.mxu0 %v10434
    %11715 = vmatprep.subr.bf16.mxu0 %v10443
    %11716 = vmatpush1.bf16.msra.mxu0 %v10442
    %11717 = vmatprep.subr.bf16.mxu0 %v10451
    %11718 = vmatpush1.bf16.msra.mxu0 %v10450
    %11719 = vmatprep.subr.bf16.mxu0 %v10459
    %11720 = vmatpush1.bf16.msra.mxu0 %v10458
    %11721 = vmatprep.subr.bf16.mxu0 %v10467
    %11722 = vmatpush1.bf16.msra.mxu0 %v10466
    %11723 = vmatprep.subr.bf16.mxu0 %v10475
    %11724 = vmatpush1.bf16.msra.mxu0 %v10474
    %11725 = vmatprep.subr.bf16.mxu0 %v10483
    %11726 = vmatpush1.bf16.msra.mxu0 %v10482
    %11727 = vmatprep.subr.bf16.mxu0 %v10491
    %11728 = vmatpush1.bf16.msra.mxu0 %v10490
    %11729 = vmatprep.subr.bf16.mxu0 %v10499
    %11730 = vmatpush1.bf16.msra.mxu0 %v10498
    %11731 = vmatprep.subr.bf16.mxu0 %v10507
    %11732 = vmatpush1.bf16.msra.mxu0 %v10506
    %11733 = vmatprep.subr.bf16.mxu0 %v10515
    %11734 = vmatpush1.bf16.msra.mxu0 %v10514
    %11735 = vmatprep.subr.bf16.mxu0 %v10523
    %11736 = vmatpush1.bf16.msra.mxu0 %v10522
    %11737 = vmatprep.subr.bf16.mxu0 %v10531
    %11738 = vmatpush1.bf16.msra.mxu0 %v10530
    %11739 = vmatprep.subr.bf16.mxu0 %v10539
    %11740 = vmatpush1.bf16.msra.mxu0 %v10538
    %11741 = vmatprep.subr.bf16.mxu0 %v10547
    %11742 = vmatpush1.bf16.msra.mxu0 %v10546
    %11743 = vmatprep.subr.bf16.mxu0 %v10555
    %11744 = vmatpush1.bf16.msra.mxu0 %v10554
    %11745 = vmatprep.mubr.bf16.mxu0 %v8204
    %11746 = vmatmul.mubr.bf16.gmra.mrb[0].mxu0 %v8203
    %v11747 = vpop.f32.mrb[0].mxu0
    %v11748 = vadd.f32 %v11705, %v11747
    %v11749 = vpop.f32.mrb[0].mxu0
    %v11750 = vadd.f32 %v11707, %v11749
    %v11751 = vpop.f32.mrb[0].mxu0
    %v11752 = vadd.f32 %v11709, %v11751
    %v11753 = vpop.f32.mrb[0].mxu0
    %v11754 = vadd.f32 %v11711, %v11753
    %11755 = vdwg.mxu0
    %11756 = vmatprep.subr.bf16.mxu0 %v10563
    %11757 = vmatpush1.bf16.msra.mxu0 %v10562
    %11758 = vmatprep.subr.bf16.mxu0 %v10571
    %11759 = vmatpush1.bf16.msra.mxu0 %v10570
    %11760 = vmatprep.subr.bf16.mxu0 %v10579
    %11761 = vmatpush1.bf16.msra.mxu0 %v10578
    %11762 = vmatprep.subr.bf16.mxu0 %v10587
    %11763 = vmatpush1.bf16.msra.mxu0 %v10586
    %11764 = vmatprep.subr.bf16.mxu0 %v10595
    %11765 = vmatpush1.bf16.msra.mxu0 %v10594
    %11766 = vmatprep.subr.bf16.mxu0 %v10603
    %11767 = vmatpush1.bf16.msra.mxu0 %v10602
    %11768 = vmatprep.subr.bf16.mxu0 %v10611
    %11769 = vmatpush1.bf16.msra.mxu0 %v10610
    %11770 = vmatprep.subr.bf16.mxu0 %v10619
    %11771 = vmatpush1.bf16.msra.mxu0 %v10618
    %11772 = vmatprep.subr.bf16.mxu0 %v10627
    %11773 = vmatpush1.bf16.msra.mxu0 %v10626
    %11774 = vmatprep.subr.bf16.mxu0 %v10635
    %11775 = vmatpush1.bf16.msra.mxu0 %v10634
    %11776 = vmatprep.subr.bf16.mxu0 %v10643
    %11777 = vmatpush1.bf16.msra.mxu0 %v10642
    %11778 = vmatprep.subr.bf16.mxu0 %v10651
    %11779 = vmatpush1.bf16.msra.mxu0 %v10650
    %11780 = vmatprep.subr.bf16.mxu0 %v10659
    %11781 = vmatpush1.bf16.msra.mxu0 %v10658
    %11782 = vmatprep.subr.bf16.mxu0 %v10667
    %11783 = vmatpush1.bf16.msra.mxu0 %v10666
    %11784 = vmatprep.subr.bf16.mxu0 %v10675
    %11785 = vmatpush1.bf16.msra.mxu0 %v10674
    %11786 = vmatprep.subr.bf16.mxu0 %v10683
    %11787 = vmatpush1.bf16.msra.mxu0 %v10682
    %11788 = vmatprep.mubr.bf16.mxu0 %v8206
    %11789 = vmatmul.mubr.bf16.gmra.mrb[0].mxu0 %v8205
    %v11790 = vpop.f32.mrb[0].mxu0
    %v11791 = vadd.f32 %v11748, %v11790
    %v11792 = vpop.f32.mrb[0].mxu0
    %v11793 = vadd.f32 %v11750, %v11792
    %v11794 = vpop.f32.mrb[0].mxu0
    %v11795 = vadd.f32 %v11752, %v11794
    %v11796 = vpop.f32.mrb[0].mxu0
    %v11797 = vadd.f32 %v11754, %v11796
    %11798 = vdwg.mxu0
    %11799 = vmatprep.subr.bf16.mxu0 %v10691
    %11800 = vmatpush1.bf16.msra.mxu0 %v10690
    %11801 = vmatprep.subr.bf16.mxu0 %v10699
    %11802 = vmatpush1.bf16.msra.mxu0 %v10698
    %11803 = vmatprep.subr.bf16.mxu0 %v10707
    %11804 = vmatpush1.bf16.msra.mxu0 %v10706
    %11805 = vmatprep.subr.bf16.mxu0 %v10715
    %11806 = vmatpush1.bf16.msra.mxu0 %v10714
    %11807 = vmatprep.subr.bf16.mxu0 %v10723
    %11808 = vmatpush1.bf16.msra.mxu0 %v10722
    %11809 = vmatprep.subr.bf16.mxu0 %v10731
    %11810 = vmatpush1.bf16.msra.mxu0 %v10730
    %11811 = vmatprep.subr.bf16.mxu0 %v10739
    %11812 = vmatpush1.bf16.msra.mxu0 %v10738
    %11813 = vmatprep.subr.bf16.mxu0 %v10747
    %11814 = vmatpush1.bf16.msra.mxu0 %v10746
    %11815 = vmatprep.subr.bf16.mxu0 %v10755
    %11816 = vmatpush1.bf16.msra.mxu0 %v10754
    %11817 = vmatprep.subr.bf16.mxu0 %v10763
    %11818 = vmatpush1.bf16.msra.mxu0 %v10762
    %11819 = vmatprep.subr.bf16.mxu0 %v10771
    %11820 = vmatpush1.bf16.msra.mxu0 %v10770
    %11821 = vmatprep.subr.bf16.mxu0 %v10779
    %11822 = vmatpush1.bf16.msra.mxu0 %v10778
    %11823 = vmatprep.subr.bf16.mxu0 %v10787
    %11824 = vmatpush1.bf16.msra.mxu0 %v10786
    %11825 = vmatprep.subr.bf16.mxu0 %v10795
    %11826 = vmatpush1.bf16.msra.mxu0 %v10794
    %11827 = vmatprep.subr.bf16.mxu0 %v10803
    %11828 = vmatpush1.bf16.msra.mxu0 %v10802
    %11829 = vmatprep.subr.bf16.mxu0 %v10811
    %11830 = vmatpush1.bf16.msra.mxu0 %v10810
    %11831 = vmatprep.mubr.bf16.mxu0 %v8208
    %11832 = vmatmul.mubr.bf16.gmra.mrb[0].mxu0 %v8207
    %v11833 = vpop.f32.mrb[0].mxu0
    %v11834 = vadd.f32 %v11791, %v11833
    %v11835 = vpop.f32.mrb[0].mxu0
    %v11836 = vadd.f32 %v11793, %v11835
    %v11837 = vpop.f32.mrb[0].mxu0
    %v11838 = vadd.f32 %v11795, %v11837
    %v11839 = vpop.f32.mrb[0].mxu0
    %v11840 = vadd.f32 %v11797, %v11839
    %11841 = vdwg.mxu0
    %11842 = vmatprep.subr.bf16.mxu0 %v10309
    %11843 = vmatpush1.bf16.msra.mxu0 %v10308
    %11844 = vmatprep.subr.bf16.mxu0 %v10317
    %11845 = vmatpush1.bf16.msra.mxu0 %v10316
    %11846 = vmatprep.subr.bf16.mxu0 %v10325
    %11847 = vmatpush1.bf16.msra.mxu0 %v10324
    %11848 = vmatprep.subr.bf16.mxu0 %v10333
    %11849 = vmatpush1.bf16.msra.mxu0 %v10332
    %11850 = vmatprep.subr.bf16.mxu0 %v10341
    %11851 = vmatpush1.bf16.msra.mxu0 %v10340
    %11852 = vmatprep.subr.bf16.mxu0 %v10349
    %11853 = vmatpush1.bf16.msra.mxu0 %v10348
    %11854 = vmatprep.subr.bf16.mxu0 %v10357
    %11855 = vmatpush1.bf16.msra.mxu0 %v10356
    %11856 = vmatprep.subr.bf16.mxu0 %v10365
    %11857 = vmatpush1.bf16.msra.mxu0 %v10364
    %11858 = vmatprep.subr.bf16.mxu0 %v10373
    %11859 = vmatpush1.bf16.msra.mxu0 %v10372
    %11860 = vmatprep.subr.bf16.mxu0 %v10381
    %11861 = vmatpush1.bf16.msra.mxu0 %v10380
    %11862 = vmatprep.subr.bf16.mxu0 %v10389
    %11863 = vmatpush1.bf16.msra.mxu0 %v10388
    %11864 = vmatprep.subr.bf16.mxu0 %v10397
    %11865 = vmatpush1.bf16.msra.mxu0 %v10396
    %11866 = vmatprep.subr.bf16.mxu0 %v10405
    %11867 = vmatpush1.bf16.msra.mxu0 %v10404
    %11868 = vmatprep.subr.bf16.mxu0 %v10413
    %11869 = vmatpush1.bf16.msra.mxu0 %v10412
    %11870 = vmatprep.subr.bf16.mxu0 %v10421
    %11871 = vmatpush1.bf16.msra.mxu0 %v10420
    %11872 = vmatprep.subr.bf16.mxu0 %v10429
    %11873 = vmatpush1.bf16.msra.mxu0 %v10428
    %11874 = vmatprep.mubr.bf16.mxu0 %v8202
    %11875 = vmatmul.mubr.bf16.gmra.mrb[0].mxu0 %v8201
    %v11876 = vpop.f32.mrb[0].mxu0
    %v11877 = vadd.f32 %v8753, %v11876
    %v11878 = vpop.f32.mrb[0].mxu0
    %v11879 = vadd.f32 %v8757, %v11878
    %v11880 = vpop.f32.mrb[0].mxu0
    %v11881 = vadd.f32 %v8753, %v11880
    %v11882 = vpop.f32.mrb[0].mxu0
    %v11883 = vadd.f32 %v8757, %v11882
    %11884 = vdwg.mxu0
    %11885 = vmatprep.subr.bf16.mxu0 %v10437
    %11886 = vmatpush1.bf16.msra.mxu0 %v10436
    %11887 = vmatprep.subr.bf16.mxu0 %v10445
    %11888 = vmatpush1.bf16.msra.mxu0 %v10444
    %11889 = vmatprep.subr.bf16.mxu0 %v10453
    %11890 = vmatpush1.bf16.msra.mxu0 %v10452
    %11891 = vmatprep.subr.bf16.mxu0 %v10461
    %11892 = vmatpush1.bf16.msra.mxu0 %v10460
    %11893 = vmatprep.subr.bf16.mxu0 %v10469
    %11894 = vmatpush1.bf16.msra.mxu0 %v10468
    %11895 = vmatprep.subr.bf16.mxu0 %v10477
    %11896 = vmatpush1.bf16.msra.mxu0 %v10476
    %11897 = vmatprep.subr.bf16.mxu0 %v10485
    %11898 = vmatpush1.bf16.msra.mxu0 %v10484
    %11899 = vmatprep.subr.bf16.mxu0 %v10493
    %11900 = vmatpush1.bf16.msra.mxu0 %v10492
    %11901 = vmatprep.subr.bf16.mxu0 %v10501
    %11902 = vmatpush1.bf16.msra.mxu0 %v10500
    %11903 = vmatprep.subr.bf16.mxu0 %v10509
    %11904 = vmatpush1.bf16.msra.mxu0 %v10508
    %11905 = vmatprep.subr.bf16.mxu0 %v10517
    %11906 = vmatpush1.bf16.msra.mxu0 %v10516
    %11907 = vmatprep.subr.bf16.mxu0 %v10525
    %11908 = vmatpush1.bf16.msra.mxu0 %v10524
    %11909 = vmatprep.subr.bf16.mxu0 %v10533
    %11910 = vmatpush1.bf16.msra.mxu0 %v10532
    %11911 = vmatprep.subr.bf16.mxu0 %v10541
    %11912 = vmatpush1.bf16.msra.mxu0 %v10540
    %11913 = vmatprep.subr.bf16.mxu0 %v10549
    %11914 = vmatpush1.bf16.msra.mxu0 %v10548
    %11915 = vmatprep.subr.bf16.mxu0 %v10557
    %11916 = vmatpush1.bf16.msra.mxu0 %v10556
    %11917 = vmatprep.mubr.bf16.mxu0 %v8204
    %11918 = vmatmul.mubr.bf16.gmra.mrb[0].mxu0 %v8203
    %v11919 = vpop.f32.mrb[0].mxu0
    %v11920 = vadd.f32 %v11877, %v11919
    %v11921 = vpop.f32.mrb[0].mxu0
    %v11922 = vadd.f32 %v11879, %v11921
    %v11923 = vpop.f32.mrb[0].mxu0
    %v11924 = vadd.f32 %v11881, %v11923
    %v11925 = vpop.f32.mrb[0].mxu0
    %v11926 = vadd.f32 %v11883, %v11925
    %11927 = vdwg.mxu0
    %11928 = vmatprep.subr.bf16.mxu0 %v10565
    %11929 = vmatpush1.bf16.msra.mxu0 %v10564
    %11930 = vmatprep.subr.bf16.mxu0 %v10573
    %11931 = vmatpush1.bf16.msra.mxu0 %v10572
    %11932 = vmatprep.subr.bf16.mxu0 %v10581
    %11933 = vmatpush1.bf16.msra.mxu0 %v10580
    %11934 = vmatprep.subr.bf16.mxu0 %v10589
    %11935 = vmatpush1.bf16.msra.mxu0 %v10588
    %11936 = vmatprep.subr.bf16.mxu0 %v10597
    %11937 = vmatpush1.bf16.msra.mxu0 %v10596
    %11938 = vmatprep.subr.bf16.mxu0 %v10605
    %11939 = vmatpush1.bf16.msra.mxu0 %v10604
    %11940 = vmatprep.subr.bf16.mxu0 %v10613
    %11941 = vmatpush1.bf16.msra.mxu0 %v10612
    %11942 = vmatprep.subr.bf16.mxu0 %v10621
    %11943 = vmatpush1.bf16.msra.mxu0 %v10620
    %11944 = vmatprep.subr.bf16.mxu0 %v10629
    %11945 = vmatpush1.bf16.msra.mxu0 %v10628
    %11946 = vmatprep.subr.bf16.mxu0 %v10637
    %11947 = vmatpush1.bf16.msra.mxu0 %v10636
    %11948 = vmatprep.subr.bf16.mxu0 %v10645
    %11949 = vmatpush1.bf16.msra.mxu0 %v10644
    %11950 = vmatprep.subr.bf16.mxu0 %v10653
    %11951 = vmatpush1.bf16.msra.mxu0 %v10652
    %11952 = vmatprep.subr.bf16.mxu0 %v10661
    %11953 = vmatpush1.bf16.msra.mxu0 %v10660
    %11954 = vmatprep.subr.bf16.mxu0 %v10669
    %11955 = vmatpush1.bf16.msra.mxu0 %v10668
    %11956 = vmatprep.subr.bf16.mxu0 %v10677
    %11957 = vmatpush1.bf16.msra.mxu0 %v10676
    %11958 = vmatprep.subr.bf16.mxu0 %v10685
    %11959 = vmatpush1.bf16.msra.mxu0 %v10684
    %11960 = vmatprep.mubr.bf16.mxu0 %v8206
    %11961 = vmatmul.mubr.bf16.gmra.mrb[0].mxu0 %v8205
    %v11962 = vpop.f32.mrb[0].mxu0
    %v11963 = vadd.f32 %v11920, %v11962
    %v11964 = vpop.f32.mrb[0].mxu0
    %v11965 = vadd.f32 %v11922, %v11964
    %v11966 = vpop.f32.mrb[0].mxu0
    %v11967 = vadd.f32 %v11924, %v11966
    %v11968 = vpop.f32.mrb[0].mxu0
    %v11969 = vadd.f32 %v11926, %v11968
    %11970 = vdwg.mxu0
    %11971 = vmatprep.subr.bf16.mxu0 %v10693
    %11972 = vmatpush1.bf16.msra.mxu0 %v10692
    %11973 = vmatprep.subr.bf16.mxu0 %v10701
    %11974 = vmatpush1.bf16.msra.mxu0 %v10700
    %11975 = vmatprep.subr.bf16.mxu0 %v10709
    %11976 = vmatpush1.bf16.msra.mxu0 %v10708
    %11977 = vmatprep.subr.bf16.mxu0 %v10717
    %11978 = vmatpush1.bf16.msra.mxu0 %v10716
    %11979 = vmatprep.subr.bf16.mxu0 %v10725
    %11980 = vmatpush1.bf16.msra.mxu0 %v10724
    %11981 = vmatprep.subr.bf16.mxu0 %v10733
    %11982 = vmatpush1.bf16.msra.mxu0 %v10732
    %11983 = vmatprep.subr.bf16.mxu0 %v10741
    %11984 = vmatpush1.bf16.msra.mxu0 %v10740
    %11985 = vmatprep.subr.bf16.mxu0 %v10749
    %11986 = vmatpush1.bf16.msra.mxu0 %v10748
    %11987 = vmatprep.subr.bf16.mxu0 %v10757
    %11988 = vmatpush1.bf16.msra.mxu0 %v10756
    %11989 = vmatprep.subr.bf16.mxu0 %v10765
    %11990 = vmatpush1.bf16.msra.mxu0 %v10764
    %11991 = vmatprep.subr.bf16.mxu0 %v10773
    %11992 = vmatpush1.bf16.msra.mxu0 %v10772
    %11993 = vmatprep.subr.bf16.mxu0 %v10781
    %11994 = vmatpush1.bf16.msra.mxu0 %v10780
    %11995 = vmatprep.subr.bf16.mxu0 %v10789
    %11996 = vmatpush1.bf16.msra.mxu0 %v10788
    %11997 = vmatprep.subr.bf16.mxu0 %v10797
    %11998 = vmatpush1.bf16.msra.mxu0 %v10796
    %11999 = vmatprep.subr.bf16.mxu0 %v10805
    %12000 = vmatpush1.bf16.msra.mxu0 %v10804
    %12001 = vmatprep.subr.bf16.mxu0 %v10813
    %12002 = vmatpush1.bf16.msra.mxu0 %v10812
    %12003 = vmatprep.mubr.bf16.mxu0 %v8208
    %12004 = vmatmul.mubr.bf16.gmra.mrb[0].mxu0 %v8207
    %v12005 = vpop.f32.mrb[0].mxu0
    %v12006 = vadd.f32 %v11963, %v12005
    %v12007 = vpop.f32.mrb[0].mxu0
    %v12008 = vadd.f32 %v11965, %v12007
    %v12009 = vpop.f32.mrb[0].mxu0
    %v12010 = vadd.f32 %v11967, %v12009
    %v12011 = vpop.f32.mrb[0].mxu0
    %v12012 = vadd.f32 %v11969, %v12011
    %12013 = vdwg.mxu0
    %v12014 = vmax.f32 %v11490, 0.0
    %v12015 = vmax.f32 %v11492, 0.0
    %v12016 = vmax.f32 %v11662, 0.0
    %v12017 = vmax.f32 %v11664, 0.0
    %v12018 = vmax.f32 %v11834, 0.0
    %v12019 = vmax.f32 %v11836, 0.0
    %v12020 = vmax.f32 %v12006, 0.0
    %v12021 = vmax.f32 %v12008, 0.0
    %v12022 = vmax.f32 %v11494, 0.0
    %v12023 = vmax.f32 %v11496, 0.0
    %v12024 = vmax.f32 %v11666, 0.0
    %v12025 = vmax.f32 %v11668, 0.0
    %v12026 = vmax.f32 %v11838, 0.0
    %v12027 = vmax.f32 %v11840, 0.0
    %v12028 = vmax.f32 %v12010, 0.0
    %v12029 = vmax.f32 %v12012, 0.0
    %v12030 = vpack.c.bf16 %v12022, %v12014
    %v12031 = vpack.c.bf16 %v12023, %v12015
    %v12032 = vpack.c.bf16 %v12024, %v12016
    %v12033 = vpack.c.bf16 %v12025, %v12017
    %v12034 = vpack.c.bf16 %v12026, %v12018
    %v12035 = vpack.c.bf16 %v12027, %v12019
    %v12036 = vpack.c.bf16 %v12028, %v12020
    %v12037 = vpack.c.bf16 %v12029, %v12021
    %v12038 = vld [vmem:[#allocation10] sm:$0xf]
    %v12039 = vld [vmem:[#allocation10 + $0x4] sm:$0xf]
    %v12040 = vld [vmem:[#allocation10 + $0x8] sm:$0xf]
    %v12041 = vld [vmem:[#allocation10 + $0xc] sm:$0xf]
    %v12042 = vld [vmem:[#allocation10 + $0x10] sm:$0xf]
    %v12043 = vld [vmem:[#allocation10 + $0x14] sm:$0xf]
    %v12044 = vld [vmem:[#allocation10 + $0x18] sm:$0xf]
    %v12045 = vld [vmem:[#allocation10 + $0x1c] sm:$0xf]
    %v12046 = vld [vmem:[#allocation10 + $0x20] sm:$0xf]
    %v12047 = vld [vmem:[#allocation10 + $0x24] sm:$0xf]
    %v12048 = vld [vmem:[#allocation10 + $0x28] sm:$0xf]
    %v12049 = vld [vmem:[#allocation10 + $0x2c] sm:$0xf]
    %v12050 = vld [vmem:[#allocation10 + $0x30] sm:$0xf]
    %v12051 = vld [vmem:[#allocation10 + $0x34] sm:$0xf]
    %v12052 = vld [vmem:[#allocation10 + $0x38] sm:$0xf]
    %v12053 = vld [vmem:[#allocation10 + $0x3c] sm:$0xf]
    %v12054 = vld [vmem:[#allocation10 + $0x40] sm:$0xf]
    %v12055 = vld [vmem:[#allocation10 + $0x44] sm:$0xf]
    %v12056 = vld [vmem:[#allocation10 + $0x48] sm:$0xf]
    %v12057 = vld [vmem:[#allocation10 + $0x4c] sm:$0xf]
    %v12058 = vld [vmem:[#allocation10 + $0x50] sm:$0xf]
    %v12059 = vld [vmem:[#allocation10 + $0x54] sm:$0xf]
    %v12060 = vld [vmem:[#allocation10 + $0x58] sm:$0xf]
    %v12061 = vld [vmem:[#allocation10 + $0x5c] sm:$0xf]
    %v12062 = vld [vmem:[#allocation10 + $0x60] sm:$0xf]
    %v12063 = vld [vmem:[#allocation10 + $0x64] sm:$0xf]
    %v12064 = vld [vmem:[#allocation10 + $0x68] sm:$0xf]
    %v12065 = vld [vmem:[#allocation10 + $0x6c] sm:$0xf]
    %v12066 = vld [vmem:[#allocation10 + $0x70] sm:$0xf]
    %v12067 = vld [vmem:[#allocation10 + $0x74] sm:$0xf]
    %v12068 = vld [vmem:[#allocation10 + $0x78] sm:$0xf]
    %v12069 = vld [vmem:[#allocation10 + $0x7c] sm:$0xf]
    %v12070 = vld [vmem:[#allocation10 + $0x80] sm:$0xf]
    %v12071 = vld [vmem:[#allocation10 + $0x84] sm:$0xf]
    %v12072 = vld [vmem:[#allocation10 + $0x88] sm:$0xf]
    %v12073 = vld [vmem:[#allocation10 + $0x8c] sm:$0xf]
    %v12074 = vld [vmem:[#allocation10 + $0x90] sm:$0xf]
    %v12075 = vld [vmem:[#allocation10 + $0x94] sm:$0xf]
    %v12076 = vld [vmem:[#allocation10 + $0x98] sm:$0xf]
    %v12077 = vld [vmem:[#allocation10 + $0x9c] sm:$0xf]
    %v12078 = vld [vmem:[#allocation10 + $0xa0] sm:$0xf]
    %v12079 = vld [vmem:[#allocation10 + $0xa4] sm:$0xf]
    %v12080 = vld [vmem:[#allocation10 + $0xa8] sm:$0xf]
    %v12081 = vld [vmem:[#allocation10 + $0xac] sm:$0xf]
    %v12082 = vld [vmem:[#allocation10 + $0xb0] sm:$0xf]
    %v12083 = vld [vmem:[#allocation10 + $0xb4] sm:$0xf]
    %v12084 = vld [vmem:[#allocation10 + $0xb8] sm:$0xf]
    %v12085 = vld [vmem:[#allocation10 + $0xbc] sm:$0xf]
    %v12086 = vld [vmem:[#allocation10 + $0xc0] sm:$0xf]
    %v12087 = vld [vmem:[#allocation10 + $0xc4] sm:$0xf]
    %v12088 = vld [vmem:[#allocation10 + $0xc8] sm:$0xf]
    %v12089 = vld [vmem:[#allocation10 + $0xcc] sm:$0xf]
    %v12090 = vld [vmem:[#allocation10 + $0xd0] sm:$0xf]
    %v12091 = vld [vmem:[#allocation10 + $0xd4] sm:$0xf]
    %v12092 = vld [vmem:[#allocation10 + $0xd8] sm:$0xf]
    %v12093 = vld [vmem:[#allocation10 + $0xdc] sm:$0xf]
    %v12094 = vld [vmem:[#allocation10 + $0xe0] sm:$0xf]
    %v12095 = vld [vmem:[#allocation10 + $0xe4] sm:$0xf]
    %v12096 = vld [vmem:[#allocation10 + $0xe8] sm:$0xf]
    %v12097 = vld [vmem:[#allocation10 + $0xec] sm:$0xf]
    %v12098 = vld [vmem:[#allocation10 + $0xf0] sm:$0xf]
    %v12099 = vld [vmem:[#allocation10 + $0xf4] sm:$0xf]
    %v12100 = vld [vmem:[#allocation10 + $0xf8] sm:$0xf]
    %v12101 = vld [vmem:[#allocation10 + $0xfc] sm:$0xf]
    %v12102 = vld [vmem:[#allocation10 + $0x100] sm:$0xf]
    %v12103 = vld [vmem:[#allocation10 + $0x104] sm:$0xf]
    %v12104 = vld [vmem:[#allocation10 + $0x108] sm:$0xf]
    %v12105 = vld [vmem:[#allocation10 + $0x10c] sm:$0xf]
    %v12106 = vld [vmem:[#allocation10 + $0x110] sm:$0xf]
    %v12107 = vld [vmem:[#allocation10 + $0x114] sm:$0xf]
    %v12108 = vld [vmem:[#allocation10 + $0x118] sm:$0xf]
    %v12109 = vld [vmem:[#allocation10 + $0x11c] sm:$0xf]
    %v12110 = vld [vmem:[#allocation10 + $0x120] sm:$0xf]
    %v12111 = vld [vmem:[#allocation10 + $0x124] sm:$0xf]
    %v12112 = vld [vmem:[#allocation10 + $0x128] sm:$0xf]
    %v12113 = vld [vmem:[#allocation10 + $0x12c] sm:$0xf]
    %v12114 = vld [vmem:[#allocation10 + $0x130] sm:$0xf]
    %v12115 = vld [vmem:[#allocation10 + $0x134] sm:$0xf]
    %v12116 = vld [vmem:[#allocation10 + $0x138] sm:$0xf]
    %v12117 = vld [vmem:[#allocation10 + $0x13c] sm:$0xf]
    %v12118 = vld [vmem:[#allocation10 + $0x140] sm:$0xf]
    %v12119 = vld [vmem:[#allocation10 + $0x144] sm:$0xf]
    %v12120 = vld [vmem:[#allocation10 + $0x148] sm:$0xf]
    %v12121 = vld [vmem:[#allocation10 + $0x14c] sm:$0xf]
    %v12122 = vld [vmem:[#allocation10 + $0x150] sm:$0xf]
    %v12123 = vld [vmem:[#allocation10 + $0x154] sm:$0xf]
    %v12124 = vld [vmem:[#allocation10 + $0x158] sm:$0xf]
    %v12125 = vld [vmem:[#allocation10 + $0x15c] sm:$0xf]
    %v12126 = vld [vmem:[#allocation10 + $0x160] sm:$0xf]
    %v12127 = vld [vmem:[#allocation10 + $0x164] sm:$0xf]
    %v12128 = vld [vmem:[#allocation10 + $0x168] sm:$0xf]
    %v12129 = vld [vmem:[#allocation10 + $0x16c] sm:$0xf]
    %v12130 = vld [vmem:[#allocation10 + $0x170] sm:$0xf]
    %v12131 = vld [vmem:[#allocation10 + $0x174] sm:$0xf]
    %v12132 = vld [vmem:[#allocation10 + $0x178] sm:$0xf]
    %v12133 = vld [vmem:[#allocation10 + $0x17c] sm:$0xf]
    %v12134 = vld [vmem:[#allocation10 + $0x180] sm:$0xf]
    %v12135 = vld [vmem:[#allocation10 + $0x184] sm:$0xf]
    %v12136 = vld [vmem:[#allocation10 + $0x188] sm:$0xf]
    %v12137 = vld [vmem:[#allocation10 + $0x18c] sm:$0xf]
    %v12138 = vld [vmem:[#allocation10 + $0x190] sm:$0xf]
    %v12139 = vld [vmem:[#allocation10 + $0x194] sm:$0xf]
    %v12140 = vld [vmem:[#allocation10 + $0x198] sm:$0xf]
    %v12141 = vld [vmem:[#allocation10 + $0x19c] sm:$0xf]
    %v12142 = vld [vmem:[#allocation10 + $0x1a0] sm:$0xf]
    %v12143 = vld [vmem:[#allocation10 + $0x1a4] sm:$0xf]
    %v12144 = vld [vmem:[#allocation10 + $0x1a8] sm:$0xf]
    %v12145 = vld [vmem:[#allocation10 + $0x1ac] sm:$0xf]
    %v12146 = vld [vmem:[#allocation10 + $0x1b0] sm:$0xf]
    %v12147 = vld [vmem:[#allocation10 + $0x1b4] sm:$0xf]
    %v12148 = vld [vmem:[#allocation10 + $0x1b8] sm:$0xf]
    %v12149 = vld [vmem:[#allocation10 + $0x1bc] sm:$0xf]
    %v12150 = vld [vmem:[#allocation10 + $0x1c0] sm:$0xf]
    %v12151 = vld [vmem:[#allocation10 + $0x1c4] sm:$0xf]
    %v12152 = vld [vmem:[#allocation10 + $0x1c8] sm:$0xf]
    %v12153 = vld [vmem:[#allocation10 + $0x1cc] sm:$0xf]
    %v12154 = vld [vmem:[#allocation10 + $0x1d0] sm:$0xf]
    %v12155 = vld [vmem:[#allocation10 + $0x1d4] sm:$0xf]
    %v12156 = vld [vmem:[#allocation10 + $0x1d8] sm:$0xf]
    %v12157 = vld [vmem:[#allocation10 + $0x1dc] sm:$0xf]
    %v12158 = vld [vmem:[#allocation10 + $0x1e0] sm:$0xf]
    %v12159 = vld [vmem:[#allocation10 + $0x1e4] sm:$0xf]
    %v12160 = vld [vmem:[#allocation10 + $0x1e8] sm:$0xf]
    %v12161 = vld [vmem:[#allocation10 + $0x1ec] sm:$0xf]
    %v12162 = vld [vmem:[#allocation10 + $0x1f0] sm:$0xf]
    %v12163 = vld [vmem:[#allocation10 + $0x1f4] sm:$0xf]
    %v12164 = vld [vmem:[#allocation10 + $0x1f8] sm:$0xf]
    %v12165 = vld [vmem:[#allocation10 + $0x1fc] sm:$0xf]
    %v12166 = vld [vmem:[#allocation13] sm:$0x1]
    %v12168 = vlaneseq
    %v12169 = vshrl.u32 %v12168, 7
    %v12170 = vsub.s32 0, %v12169
    %v12171 = vrot.slane %v12166, %v12170
    %v12301 = vunpack.c.l.b16 %v12038
    %v12302 = vunpack.c.l.b16 %v12039
    %v12303 = vunpack.c.l.b16 %v12040
    %v12304 = vunpack.c.l.b16 %v12041
    %v12305 = vunpack.c.l.b16 %v12042
    %v12306 = vunpack.c.l.b16 %v12043
    %v12307 = vunpack.c.l.b16 %v12044
    %v12308 = vunpack.c.l.b16 %v12045
    %v12309 = vunpack.c.l.b16 %v12046
    %v12310 = vunpack.c.l.b16 %v12047
    %v12311 = vunpack.c.l.b16 %v12048
    %v12312 = vunpack.c.l.b16 %v12049
    %v12313 = vunpack.c.l.b16 %v12050
    %v12314 = vunpack.c.l.b16 %v12051
    %v12315 = vunpack.c.l.b16 %v12052
    %v12316 = vunpack.c.l.b16 %v12053
    %v12317 = vunpack.c.l.b16 %v12054
    %v12318 = vunpack.c.l.b16 %v12055
    %v12319 = vunpack.c.l.b16 %v12056
    %v12320 = vunpack.c.l.b16 %v12057
    %v12321 = vunpack.c.l.b16 %v12058
    %v12322 = vunpack.c.l.b16 %v12059
    %v12323 = vunpack.c.l.b16 %v12060
    %v12324 = vunpack.c.l.b16 %v12061
    %v12325 = vunpack.c.l.b16 %v12062
    %v12326 = vunpack.c.l.b16 %v12063
    %v12327 = vunpack.c.l.b16 %v12064
    %v12328 = vunpack.c.l.b16 %v12065
    %v12329 = vunpack.c.l.b16 %v12066
    %v12330 = vunpack.c.l.b16 %v12067
    %v12331 = vunpack.c.l.b16 %v12068
    %v12332 = vunpack.c.l.b16 %v12069
    %v12333 = vunpack.c.l.b16 %v12070
    %v12334 = vunpack.c.l.b16 %v12071
    %v12335 = vunpack.c.l.b16 %v12072
    %v12336 = vunpack.c.l.b16 %v12073
    %v12337 = vunpack.c.l.b16 %v12074
    %v12338 = vunpack.c.l.b16 %v12075
    %v12339 = vunpack.c.l.b16 %v12076
    %v12340 = vunpack.c.l.b16 %v12077
    %v12341 = vunpack.c.l.b16 %v12078
    %v12342 = vunpack.c.l.b16 %v12079
    %v12343 = vunpack.c.l.b16 %v12080
    %v12344 = vunpack.c.l.b16 %v12081
    %v12345 = vunpack.c.l.b16 %v12082
    %v12346 = vunpack.c.l.b16 %v12083
    %v12347 = vunpack.c.l.b16 %v12084
    %v12348 = vunpack.c.l.b16 %v12085
    %v12349 = vunpack.c.l.b16 %v12086
    %v12350 = vunpack.c.l.b16 %v12087
    %v12351 = vunpack.c.l.b16 %v12088
    %v12352 = vunpack.c.l.b16 %v12089
    %v12353 = vunpack.c.l.b16 %v12090
    %v12354 = vunpack.c.l.b16 %v12091
    %v12355 = vunpack.c.l.b16 %v12092
    %v12356 = vunpack.c.l.b16 %v12093
    %v12357 = vunpack.c.l.b16 %v12094
    %v12358 = vunpack.c.l.b16 %v12095
    %v12359 = vunpack.c.l.b16 %v12096
    %v12360 = vunpack.c.l.b16 %v12097
    %v12361 = vunpack.c.l.b16 %v12098
    %v12362 = vunpack.c.l.b16 %v12099
    %v12363 = vunpack.c.l.b16 %v12100
    %v12364 = vunpack.c.l.b16 %v12101
    %v12365 = vunpack.c.l.b16 %v12102
    %v12366 = vunpack.c.l.b16 %v12103
    %v12367 = vunpack.c.l.b16 %v12104
    %v12368 = vunpack.c.l.b16 %v12105
    %v12369 = vunpack.c.l.b16 %v12106
    %v12370 = vunpack.c.l.b16 %v12107
    %v12371 = vunpack.c.l.b16 %v12108
    %v12372 = vunpack.c.l.b16 %v12109
    %v12373 = vunpack.c.l.b16 %v12110
    %v12374 = vunpack.c.l.b16 %v12111
    %v12375 = vunpack.c.l.b16 %v12112
    %v12376 = vunpack.c.l.b16 %v12113
    %v12377 = vunpack.c.l.b16 %v12114
    %v12378 = vunpack.c.l.b16 %v12115
    %v12379 = vunpack.c.l.b16 %v12116
    %v12380 = vunpack.c.l.b16 %v12117
    %v12381 = vunpack.c.l.b16 %v12118
    %v12382 = vunpack.c.l.b16 %v12119
    %v12383 = vunpack.c.l.b16 %v12120
    %v12384 = vunpack.c.l.b16 %v12121
    %v12385 = vunpack.c.l.b16 %v12122
    %v12386 = vunpack.c.l.b16 %v12123
    %v12387 = vunpack.c.l.b16 %v12124
    %v12388 = vunpack.c.l.b16 %v12125
    %v12389 = vunpack.c.l.b16 %v12126
    %v12390 = vunpack.c.l.b16 %v12127
    %v12391 = vunpack.c.l.b16 %v12128
    %v12392 = vunpack.c.l.b16 %v12129
    %v12393 = vunpack.c.l.b16 %v12130
    %v12394 = vunpack.c.l.b16 %v12131
    %v12395 = vunpack.c.l.b16 %v12132
    %v12396 = vunpack.c.l.b16 %v12133
    %v12397 = vunpack.c.l.b16 %v12134
    %v12398 = vunpack.c.l.b16 %v12135
    %v12399 = vunpack.c.l.b16 %v12136
    %v12400 = vunpack.c.l.b16 %v12137
    %v12401 = vunpack.c.l.b16 %v12138
    %v12402 = vunpack.c.l.b16 %v12139
    %v12403 = vunpack.c.l.b16 %v12140
    %v12404 = vunpack.c.l.b16 %v12141
    %v12405 = vunpack.c.l.b16 %v12142
    %v12406 = vunpack.c.l.b16 %v12143
    %v12407 = vunpack.c.l.b16 %v12144
    %v12408 = vunpack.c.l.b16 %v12145
    %v12409 = vunpack.c.l.b16 %v12146
    %v12410 = vunpack.c.l.b16 %v12147
    %v12411 = vunpack.c.l.b16 %v12148
    %v12412 = vunpack.c.l.b16 %v12149
    %v12413 = vunpack.c.l.b16 %v12150
    %v12414 = vunpack.c.l.b16 %v12151
    %v12415 = vunpack.c.l.b16 %v12152
    %v12416 = vunpack.c.l.b16 %v12153
    %v12417 = vunpack.c.l.b16 %v12154
    %v12418 = vunpack.c.l.b16 %v12155
    %v12419 = vunpack.c.l.b16 %v12156
    %v12420 = vunpack.c.l.b16 %v12157
    %v12421 = vunpack.c.l.b16 %v12158
    %v12422 = vunpack.c.l.b16 %v12159
    %v12423 = vunpack.c.l.b16 %v12160
    %v12424 = vunpack.c.l.b16 %v12161
    %v12425 = vunpack.c.l.b16 %v12162
    %v12426 = vunpack.c.l.b16 %v12163
    %v12427 = vunpack.c.l.b16 %v12164
    %v12428 = vunpack.c.l.b16 %v12165
    %v12429 = vpack.c.b16 %v12302, %v12301
    %v12430 = vpack.c.b16 %v12304, %v12303
    %v12431 = vpack.c.b16 %v12306, %v12305
    %v12432 = vpack.c.b16 %v12308, %v12307
    %v12433 = vpack.c.b16 %v12310, %v12309
    %v12434 = vpack.c.b16 %v12312, %v12311
    %v12435 = vpack.c.b16 %v12314, %v12313
    %v12436 = vpack.c.b16 %v12316, %v12315
    %v12437 = vpack.c.b16 %v12318, %v12317
    %v12438 = vpack.c.b16 %v12320, %v12319
    %v12439 = vpack.c.b16 %v12322, %v12321
    %v12440 = vpack.c.b16 %v12324, %v12323
    %v12441 = vpack.c.b16 %v12326, %v12325
    %v12442 = vpack.c.b16 %v12328, %v12327
    %v12443 = vpack.c.b16 %v12330, %v12329
    %v12444 = vpack.c.b16 %v12332, %v12331
    %v12445 = vpack.c.b16 %v12334, %v12333
    %v12446 = vpack.c.b16 %v12336, %v12335
    %v12447 = vpack.c.b16 %v12338, %v12337
    %v12448 = vpack.c.b16 %v12340, %v12339
    %v12449 = vpack.c.b16 %v12342, %v12341
    %v12450 = vpack.c.b16 %v12344, %v12343
    %v12451 = vpack.c.b16 %v12346, %v12345
    %v12452 = vpack.c.b16 %v12348, %v12347
    %v12453 = vpack.c.b16 %v12350, %v12349
    %v12454 = vpack.c.b16 %v12352, %v12351
    %v12455 = vpack.c.b16 %v12354, %v12353
    %v12456 = vpack.c.b16 %v12356, %v12355
    %v12457 = vpack.c.b16 %v12358, %v12357
    %v12458 = vpack.c.b16 %v12360, %v12359
    %v12459 = vpack.c.b16 %v12362, %v12361
    %v12460 = vpack.c.b16 %v12364, %v12363
    %v12461 = vpack.c.b16 %v12366, %v12365
    %v12462 = vpack.c.b16 %v12368, %v12367
    %v12463 = vpack.c.b16 %v12370, %v12369
    %v12464 = vpack.c.b16 %v12372, %v12371
    %v12465 = vpack.c.b16 %v12374, %v12373
    %v12466 = vpack.c.b16 %v12376, %v12375
    %v12467 = vpack.c.b16 %v12378, %v12377
    %v12468 = vpack.c.b16 %v12380, %v12379
    %v12469 = vpack.c.b16 %v12382, %v12381
    %v12470 = vpack.c.b16 %v12384, %v12383
    %v12471 = vpack.c.b16 %v12386, %v12385
    %v12472 = vpack.c.b16 %v12388, %v12387
    %v12473 = vpack.c.b16 %v12390, %v12389
    %v12474 = vpack.c.b16 %v12392, %v12391
    %v12475 = vpack.c.b16 %v12394, %v12393
    %v12476 = vpack.c.b16 %v12396, %v12395
    %v12477 = vpack.c.b16 %v12398, %v12397
    %v12478 = vpack.c.b16 %v12400, %v12399
    %v12479 = vpack.c.b16 %v12402, %v12401
    %v12480 = vpack.c.b16 %v12404, %v12403
    %v12481 = vpack.c.b16 %v12406, %v12405
    %v12482 = vpack.c.b16 %v12408, %v12407
    %v12483 = vpack.c.b16 %v12410, %v12409
    %v12484 = vpack.c.b16 %v12412, %v12411
    %v12485 = vpack.c.b16 %v12414, %v12413
    %v12486 = vpack.c.b16 %v12416, %v12415
    %v12487 = vpack.c.b16 %v12418, %v12417
    %v12488 = vpack.c.b16 %v12420, %v12419
    %v12489 = vpack.c.b16 %v12422, %v12421
    %v12490 = vpack.c.b16 %v12424, %v12423
    %v12491 = vpack.c.b16 %v12426, %v12425
    %v12492 = vpack.c.b16 %v12428, %v12427
    %12557 = vmatprep.subr.bf16.mxu0 0
    %12558 = vmatpush1.bf16.msra.mxu0 %v12429
    %12559 = vmatprep.subr.bf16.mxu0 0
    %12560 = vmatpush1.bf16.msra.mxu0 %v12430
    %12561 = vmatprep.subr.bf16.mxu0 0
    %12562 = vmatpush1.bf16.msra.mxu0 %v12431
    %12563 = vmatprep.subr.bf16.mxu0 0
    %12564 = vmatpush1.bf16.msra.mxu0 %v12432
    %12565 = vmatprep.subr.bf16.mxu0 0
    %12566 = vmatpush1.bf16.msra.mxu0 %v12433
    %12567 = vmatprep.subr.bf16.mxu0 0
    %12568 = vmatpush1.bf16.msra.mxu0 %v12434
    %12569 = vmatprep.subr.bf16.mxu0 0
    %12570 = vmatpush1.bf16.msra.mxu0 %v12435
    %12571 = vmatprep.subr.bf16.mxu0 0
    %12572 = vmatpush1.bf16.msra.mxu0 %v12436
    %12573 = vmatprep.subr.bf16.mxu0 0
    %12574 = vmatpush1.bf16.msra.mxu0 %v12437
    %12575 = vmatprep.subr.bf16.mxu0 0
    %12576 = vmatpush1.bf16.msra.mxu0 %v12438
    %12577 = vmatprep.subr.bf16.mxu0 0
    %12578 = vmatpush1.bf16.msra.mxu0 %v12439
    %12579 = vmatprep.subr.bf16.mxu0 0
    %12580 = vmatpush1.bf16.msra.mxu0 %v12440
    %12581 = vmatprep.subr.bf16.mxu0 0
    %12582 = vmatpush1.bf16.msra.mxu0 %v12441
    %12583 = vmatprep.subr.bf16.mxu0 0
    %12584 = vmatpush1.bf16.msra.mxu0 %v12442
    %12585 = vmatprep.subr.bf16.mxu0 0
    %12586 = vmatpush1.bf16.msra.mxu0 %v12443
    %12587 = vmatprep.subr.bf16.mxu0 0
    %12588 = vmatpush1.bf16.msra.mxu0 %v12444
    %12589 = vmatprep.mubr.bf16.mxu0 %v12031
    %12590 = vmatmul.mubr.bf16.gmra.mrb[0].mxu0 %v12030
    %v12591 = vpop.f32.mrb[0].mxu0
    %v12592 = vadd.f32 %v12171, %v12591
    %v12593 = vpop.f32.mrb[0].mxu0
    %v12594 = vpop.f32.mrb[0].mxu0
    %v12595 = vadd.f32 %v12171, %v12594
    %v12596 = vpop.f32.mrb[0].mxu0
    %12597 = vdwg.mxu0
    %12598 = vmatprep.subr.bf16.mxu0 0
    %12599 = vmatpush1.bf16.msra.mxu0 %v12445
    %12600 = vmatprep.subr.bf16.mxu0 0
    %12601 = vmatpush1.bf16.msra.mxu0 %v12446
    %12602 = vmatprep.subr.bf16.mxu0 0
    %12603 = vmatpush1.bf16.msra.mxu0 %v12447
    %12604 = vmatprep.subr.bf16.mxu0 0
    %12605 = vmatpush1.bf16.msra.mxu0 %v12448
    %12606 = vmatprep.subr.bf16.mxu0 0
    %12607 = vmatpush1.bf16.msra.mxu0 %v12449
    %12608 = vmatprep.subr.bf16.mxu0 0
    %12609 = vmatpush1.bf16.msra.mxu0 %v12450
    %12610 = vmatprep.subr.bf16.mxu0 0
    %12611 = vmatpush1.bf16.msra.mxu0 %v12451
    %12612 = vmatprep.subr.bf16.mxu0 0
    %12613 = vmatpush1.bf16.msra.mxu0 %v12452
    %12614 = vmatprep.subr.bf16.mxu0 0
    %12615 = vmatpush1.bf16.msra.mxu0 %v12453
    %12616 = vmatprep.subr.bf16.mxu0 0
    %12617 = vmatpush1.bf16.msra.mxu0 %v12454
    %12618 = vmatprep.subr.bf16.mxu0 0
    %12619 = vmatpush1.bf16.msra.mxu0 %v12455
    %12620 = vmatprep.subr.bf16.mxu0 0
    %12621 = vmatpush1.bf16.msra.mxu0 %v12456
    %12622 = vmatprep.subr.bf16.mxu0 0
    %12623 = vmatpush1.bf16.msra.mxu0 %v12457
    %12624 = vmatprep.subr.bf16.mxu0 0
    %12625 = vmatpush1.bf16.msra.mxu0 %v12458
    %12626 = vmatprep.subr.bf16.mxu0 0
    %12627 = vmatpush1.bf16.msra.mxu0 %v12459
    %12628 = vmatprep.subr.bf16.mxu0 0
    %12629 = vmatpush1.bf16.msra.mxu0 %v12460
    %12630 = vmatprep.mubr.bf16.mxu0 %v12033
    %12631 = vmatmul.mubr.bf16.gmra.mrb[0].mxu0 %v12032
    %v12632 = vpop.f32.mrb[0].mxu0
    %v12633 = vadd.f32 %v12592, %v12632
    %v12634 = vpop.f32.mrb[0].mxu0
    %v12635 = vpop.f32.mrb[0].mxu0
    %v12636 = vadd.f32 %v12595, %v12635
    %v12637 = vpop.f32.mrb[0].mxu0
    %12638 = vdwg.mxu0
    %12639 = vmatprep.subr.bf16.mxu0 0
    %12640 = vmatpush1.bf16.msra.mxu0 %v12461
    %12641 = vmatprep.subr.bf16.mxu0 0
    %12642 = vmatpush1.bf16.msra.mxu0 %v12462
    %12643 = vmatprep.subr.bf16.mxu0 0
    %12644 = vmatpush1.bf16.msra.mxu0 %v12463
    %12645 = vmatprep.subr.bf16.mxu0 0
    %12646 = vmatpush1.bf16.msra.mxu0 %v12464
    %12647 = vmatprep.subr.bf16.mxu0 0
    %12648 = vmatpush1.bf16.msra.mxu0 %v12465
    %12649 = vmatprep.subr.bf16.mxu0 0
    %12650 = vmatpush1.bf16.msra.mxu0 %v12466
    %12651 = vmatprep.subr.bf16.mxu0 0
    %12652 = vmatpush1.bf16.msra.mxu0 %v12467
    %12653 = vmatprep.subr.bf16.mxu0 0
    %12654 = vmatpush1.bf16.msra.mxu0 %v12468
    %12655 = vmatprep.subr.bf16.mxu0 0
    %12656 = vmatpush1.bf16.msra.mxu0 %v12469
    %12657 = vmatprep.subr.bf16.mxu0 0
    %12658 = vmatpush1.bf16.msra.mxu0 %v12470
    %12659 = vmatprep.subr.bf16.mxu0 0
    %12660 = vmatpush1.bf16.msra.mxu0 %v12471
    %12661 = vmatprep.subr.bf16.mxu0 0
    %12662 = vmatpush1.bf16.msra.mxu0 %v12472
    %12663 = vmatprep.subr.bf16.mxu0 0
    %12664 = vmatpush1.bf16.msra.mxu0 %v12473
    %12665 = vmatprep.subr.bf16.mxu0 0
    %12666 = vmatpush1.bf16.msra.mxu0 %v12474
    %12667 = vmatprep.subr.bf16.mxu0 0
    %12668 = vmatpush1.bf16.msra.mxu0 %v12475
    %12669 = vmatprep.subr.bf16.mxu0 0
    %12670 = vmatpush1.bf16.msra.mxu0 %v12476
    %12671 = vmatprep.mubr.bf16.mxu0 %v12035
    %12672 = vmatmul.mubr.bf16.gmra.mrb[0].mxu0 %v12034
    %v12673 = vpop.f32.mrb[0].mxu0
    %v12674 = vadd.f32 %v12633, %v12673
    %v12675 = vpop.f32.mrb[0].mxu0
    %v12676 = vpop.f32.mrb[0].mxu0
    %v12677 = vadd.f32 %v12636, %v12676
    %v12678 = vpop.f32.mrb[0].mxu0
    %12679 = vdwg.mxu0
    %12680 = vmatprep.subr.bf16.mxu0 0
    %12681 = vmatpush1.bf16.msra.mxu0 %v12477
    %12682 = vmatprep.subr.bf16.mxu0 0
    %12683 = vmatpush1.bf16.msra.mxu0 %v12478
    %12684 = vmatprep.subr.bf16.mxu0 0
    %12685 = vmatpush1.bf16.msra.mxu0 %v12479
    %12686 = vmatprep.subr.bf16.mxu0 0
    %12687 = vmatpush1.bf16.msra.mxu0 %v12480
    %12688 = vmatprep.subr.bf16.mxu0 0
    %12689 = vmatpush1.bf16.msra.mxu0 %v12481
    %12690 = vmatprep.subr.bf16.mxu0 0
    %12691 = vmatpush1.bf16.msra.mxu0 %v12482
    %12692 = vmatprep.subr.bf16.mxu0 0
    %12693 = vmatpush1.bf16.msra.mxu0 %v12483
    %12694 = vmatprep.subr.bf16.mxu0 0
    %12695 = vmatpush1.bf16.msra.mxu0 %v12484
    %12696 = vmatprep.subr.bf16.mxu0 0
    %12697 = vmatpush1.bf16.msra.mxu0 %v12485
    %12698 = vmatprep.subr.bf16.mxu0 0
    %12699 = vmatpush1.bf16.msra.mxu0 %v12486
    %12700 = vmatprep.subr.bf16.mxu0 0
    %12701 = vmatpush1.bf16.msra.mxu0 %v12487
    %12702 = vmatprep.subr.bf16.mxu0 0
    %12703 = vmatpush1.bf16.msra.mxu0 %v12488
    %12704 = vmatprep.subr.bf16.mxu0 0
    %12705 = vmatpush1.bf16.msra.mxu0 %v12489
    %12706 = vmatprep.subr.bf16.mxu0 0
    %12707 = vmatpush1.bf16.msra.mxu0 %v12490
    %12708 = vmatprep.subr.bf16.mxu0 0
    %12709 = vmatpush1.bf16.msra.mxu0 %v12491
    %12710 = vmatprep.subr.bf16.mxu0 0
    %12711 = vmatpush1.bf16.msra.mxu0 %v12492
    %12712 = vmatprep.mubr.bf16.mxu0 %v12037
    %12713 = vmatmul.mubr.bf16.gmra.mrb[0].mxu0 %v12036
    %v12714 = vpop.f32.mrb[0].mxu0
    %v12715 = vadd.f32 %v12674, %v12714
    %v12716 = vpop.f32.mrb[0].mxu0
    %v12717 = vpop.f32.mrb[0].mxu0
    %v12718 = vadd.f32 %v12677, %v12717
    %v12719 = vpop.f32.mrb[0].mxu0
    %12720 = vdwg.mxu0
    %vm12721 = vcmask 64512
    %v12722 = vsel %vm12721, %v12715, -inf
    %12723 = vmax.xlane.f32.xlu0 %v12722
    %v12724 = vpop.xlane.xlu0 %12723
    %v12725 = vsel %vm12721, %v12718, -inf
    %12726 = vmax.xlane.f32.xlu0 %v12725
    %v12727 = vpop.xlane.xlu0 %12726
    %v12728 = vsub.f32 %v12715, %v12724
    %v12729 = vsub.f32 %v12718, %v12727
    %v12730 = vmul.f32 %v12728, 1.442695
    %v12731 = vpow.pop %v12730
    %v12732 = vmul.f32 %v12729, 1.442695
    %v12733 = vpow.pop %v12732
    %v12734 = vsel %vm12721, %v12731, 0.0
    %12735 = vadd.xlane.f32.xlu0 %v12734
    %v12736 = vpop.xlane.xlu0 %12735
    %v12737 = vsel %vm12721, %v12733, 0.0
    %12738 = vadd.xlane.f32.xlu0 %v12737
    %v12739 = vpop.xlane.xlu0 %12738
    %v12740 = vrcp.pop %v12736
    %v12741 = vrcp.pop %v12739
    %v12742 = vmul.f32 %v12731, %v12740
    %v12743 = vmul.f32 %v12733, %v12741
    %12746 = vrot.lane.b32.xlu0 %v12742, 8
    %v12747 = vpop.permute.xlu0 %12746
    %12748 = vrot.lane.b32.xlu0 %v12743, 8
    %v12749 = vpop.permute.xlu0 %12748
    %12754 = vrot.lane.b32.xlu0 %v12715, 8
    %v12755 = vpop.permute.xlu0 %12754
    %12756 = vrot.lane.b32.xlu0 %v12718, 8
    %v12757 = vpop.permute.xlu0 %12756
    %v12760 = vsel %vm12721, %v12715, %v12747
    %v12761 = vsel %vm12721, %v12718, %v12749
    %vm12762 = vcmask 130048
    %v12763 = vsel %vm12762, %v12760, %v12755
    %v12764 = vsel %vm12762, %v12761, %v12757
    %vm12765 = vcmask 392192
    %v12766 = vsel %vm12765, %v12763, 0.0
    %v12767 = vsel %vm12765, %v12764, 0.0
    %12768 = vst [vmem:[#allocation14] sm:$0xff] %v12766
    %12769 = vst [vmem:[#allocation14 + $0x8] sm:$0xff] %v12767
    // Predicated region
    $region58: #{tpu_custom_call.1} parent=1 // pred_check
      _
    $region59: #{tpu_custom_call.1} parent=1 // pred_check_branch
      %12771 = sbr.rel (0) target = $region61
    $region60: #{tpu_custom_call.1} parent=1 // pred_region
      %s12773 = ssub.s32 256, 256
      %12774 = vsyncadd [#allocation4], %s12773
      %s12775 = sshll.u32 [#allocation14], 4
      %s12776 = int_to_ptr.vmem [resolvable:$true] %s12775
      %12781 = dma.vmem_to_hbm [thread:$0]  %s12776, 256, %s7, [#allocation4], 128, 128, 8
    $region61: #{tpu_custom_call.1} parent=1 // pred_fallthru
      _
    // Predicated region
    $region62: #{tpu_custom_call.1} parent=1 // pred_check
      _
    $region63: #{tpu_custom_call.1} parent=1 // pred_check_branch
      %12783 = sbr.rel (0) target = $region65
    $region64: #{tpu_custom_call.1} parent=1 // pred_region
      %12784 = dma.done [#allocation4], 256
    $region65: #{tpu_custom_call.1} parent=1 // pred_fallthru
      _
    %12785 = vsyncpa [#allocation3], 1
    %12786 = vsyncpa [#allocation6], 1
    %12787 = vsyncpa [#allocation9], 1
    %12788 = vsyncpa [#allocation12], 1
    %12789 = vsyncpa [#allocation4], 1

</llo_original>
